<compile_context>
chip_gen: v7x
topology: tpu7x:2x2x1
jax: 0.10.0
libtpu: 0.0.40
codegen_flags: <defaults>
</compile_context>

<pallas_src>
import numpy as np
import jax
import jax.numpy as jnp
from jax.experimental import pallas as pl
from jax.experimental.pallas import tpu as pltpu

IN_DIM = 256
NEG_SLOPE = 0.1
EPS = 1e-5

# layer geometry (fixed by the module); widths are the flattened C*H*W sizes
C1, S1, W1 = 64, 4, 256            # ConvT1 out: 64 ch * 2*2
C2, S2, W2 = 32, 25, 896           # ConvT2 out: 32 ch * 5*5 = 800, padded to 896 = 7*128
C3, S3, W3 = 8, 144, 1152          # ConvT3 out: 8 ch * 12*12
N_PIX = 144
OUT_HW = (12, 12)


def _round_up(a, m):
    return -(-a // m) * m


# --------------------- parameter setup (glue, plain numpy/JAX) ---------------------

def _uniform(key, shape, bound):
    return jax.random.uniform(key, shape, jnp.float32, -bound, bound)


def init_params(seed: int = 42):
    """Deterministic synthetic parameters (PyTorch-style uniform bounds)."""
    keys = jax.random.split(jax.random.PRNGKey(seed), 8)
    # ConvTranspose2d weight layout: (C_in, C_out, kH, kW)
    w1 = _uniform(keys[0], (IN_DIM, 64, 2, 2), 1.0 / np.sqrt(IN_DIM * 4))
    b1 = _uniform(keys[1], (64,),              1.0 / np.sqrt(IN_DIM * 4))
    w2 = _uniform(keys[2], (64, 32, 3, 3),     1.0 / np.sqrt(64 * 9))
    b2 = _uniform(keys[3], (32,),              1.0 / np.sqrt(64 * 9))
    w3 = _uniform(keys[4], (32, 8, 4, 4),      1.0 / np.sqrt(32 * 16))
    b3 = _uniform(keys[5], (8,),               1.0 / np.sqrt(32 * 16))
    # Conv2d(8, 1, kernel_size=1) weight layout: (C_out, C_in, 1, 1)
    w4 = _uniform(keys[6], (1, 8, 1, 1),       1.0 / np.sqrt(8))
    b4 = _uniform(keys[7], (1,),               1.0 / np.sqrt(8))
    return [np.asarray(p, np.float32) for p in (w1, b1, w2, b2, w3, b3, w4, b4)]


def convT_as_matrix(W, Hin, Win, stride):
    """Dense M so that out_flat = in_flat @ M implements ConvTranspose2d (no padding).
    in/out are flattened channel-major (c, h, w)."""
    Cin, Cout, kH, kW = W.shape
    Hout = (Hin - 1) * stride + kH
    Wout = (Win - 1) * stride + kW
    M = np.zeros((Cin, Hin, Win, Cout, Hout, Wout), np.float32)
    for i in range(Hin):
        for j in range(Win):
            for ki in range(kH):
                for kj in range(kW):
                    M[:, i, j, :, stride * i + ki, stride * j + kj] += W[:, :, ki, kj]
    return M.reshape(Cin * Hin * Win, Cout * Hout * Wout), (Hout, Wout)


def channel_sum_bcast(C, S, width):
    """Tiny 0/1 matrices: P (width, C) sums each channel's S pixels;
    E (C, width) broadcasts a per-channel scalar back to the flat layout.
    Columns/rows past C*S (lane padding) stay zero.  Exact in bf16."""
    P = np.zeros((width, C), np.float32)
    E = np.zeros((C, width), np.float32)
    for c in range(C):
        P[c * S:(c + 1) * S, c] = 1.0
        E[c, c * S:(c + 1) * S] = 1.0
    return P, E


def build_operands(params):
    w1, b1, w2, b2, w3, b3, w4, b4 = params
    M1, (h1, wd1) = convT_as_matrix(w1, 1, 1, 1)      # (256, 256),  out 2x2
    M2, (h2, wd2) = convT_as_matrix(w2, h1, wd1, 2)   # (256, 800),  out 5x5
    M3, (h3, wd3) = convT_as_matrix(w3, h2, wd2, 2)   # (800, 1152), out 12x12
    assert (h3, wd3) == OUT_HW and h3 * wd3 == N_PIX

    # pad the 800-wide intermediate to 896 (= 7*128) lanes with zeros
    pad2 = W2 - M2.shape[1]
    M2 = np.concatenate([M2, np.zeros((M2.shape[0], pad2), np.float32)], axis=1)
    M3 = np.concatenate([M3, np.zeros((pad2, M3.shape[1]), np.float32)], axis=0)

    bv1 = np.repeat(b1, h1 * wd1)[None, :].astype(np.float32)                 # (1, 256)
    bv2 = np.concatenate([np.repeat(b2, h2 * wd2),
                          np.zeros(pad2, np.float32)])[None, :].astype(np.float32)  # (1, 896)
    bv3 = np.repeat(b3, h3 * wd3)[None, :].astype(np.float32)                 # (1, 1152)

    p1, e1 = channel_sum_bcast(C1, S1, W1)
    p2, e2 = channel_sum_bcast(C2, S2, W2)
    p3, e3 = channel_sum_bcast(C3, S3, W3)

    # 1x1 conv (8 -> 1) as a small resident matrix: (1152, 144) with w4 folded in.
    M4 = np.zeros((W3, N_PIX), np.float32)
    eye = np.eye(N_PIX, dtype=np.float32)
    for c in range(C3):
        M4[c * N_PIX:(c + 1) * N_PIX, :] = w4[0, c, 0, 0] * eye
    bv4 = np.full((1, N_PIX), b4[0], np.float32)                              # (1, 144)

    f32, bf16 = jnp.float32, jnp.bfloat16
    return (jnp.asarray(M1, bf16), jnp.asarray(bv1, f32), jnp.asarray(p1, bf16), jnp.asarray(e1, bf16),
            jnp.asarray(M2, bf16), jnp.asarray(bv2, f32), jnp.asarray(p2, bf16), jnp.asarray(e2, bf16),
            jnp.asarray(M3, bf16), jnp.asarray(bv3, f32), jnp.asarray(p3, bf16), jnp.asarray(e3, bf16),
            jnp.asarray(M4, bf16), jnp.asarray(bv4, f32))


# ------------------------------- Pallas kernel -------------------------------

def mask_recreator_kernel(x_ref,
                          m1_ref, b1_ref, p1_ref, e1_ref,
                          m2_ref, b2_ref, p2_ref, e2_ref,
                          m3_ref, b3_ref, p3_ref, e3_ref,
                          m4_ref, b4_ref,
                          o_ref):
    f32, bf16 = jnp.float32, jnp.bfloat16

    def mm(a, w_ref):
        # single-pass bf16 MXU matmul, f32 accumulation.
        return jnp.dot(a.astype(bf16), w_ref[...], preferred_element_type=f32)

    def lrelu(y):
        # mul + max: 2 VALU ops per vreg (vs compare+select+mul).
        return jnp.maximum(y, NEG_SLOPE * y)

    def inst_norm(y, p_ref, e_ref, spatial):
        # Two-pass per-channel statistics via tiny 0/1 matrices (exact in bf16):
        # P sums each channel's pixels, E broadcasts the per-channel scalar back.
        inv_s = 1.0 / float(spatial)
        mean = mm(y, p_ref) * inv_s                    # (TB, C) per-channel mean
        d = y - mm(mean, e_ref)                        # centered activation
        var = mm(d * d, p_ref) * inv_s                 # biased variance (matches InstanceNorm2d)
        istd = jax.lax.rsqrt(var + EPS)
        return d * mm(istd, e_ref)

    y = mm(x_ref[...], m1_ref) + b1_ref[...]           # ConvT 256->64, k=2      -> (TB, 256)
    y = inst_norm(lrelu(y), p1_ref, e1_ref, S1)
    y = mm(y, m2_ref) + b2_ref[...]                    # ConvT 64->32, k=3, s=2  -> (TB, 896); lanes 800.. stay 0
    y = inst_norm(lrelu(y), p2_ref, e2_ref, S2)
    y = mm(y, m3_ref) + b3_ref[...]                    # ConvT 32->8, k=4, s=2   -> (TB, 1152)
    y = inst_norm(lrelu(y), p3_ref, e3_ref, S3)

    # Conv2d(8 -> 1, k=1): one small resident matmul (w4 folded into M4) + bias.
    acc = mm(y, m4_ref) + b4_ref[...]                  # (TB, 144)

    # sigmoid(x) = 0.5 * (tanh(x/2) + 1): routed to the EUP, no VALU divide sequence.
    o_ref[...] = 0.5 * (jnp.tanh(0.5 * acc) + 1.0)


def mask_recreator_forward(x, operands, *, max_batch_tile=512):
    B = x.shape[0]
    # Batch tile: multiple of 8 sublanes, capped at max_batch_tile, and chosen so
    # the batch grid has >= 2 steps whenever B allows it (lets "parallel" shard
    # the batch across v7x's two TensorCores and pipelines the x/out DMAs).
    B_pad8 = _round_up(B, 8)
    TB = min(max_batch_tile, max(8, _round_up(B_pad8 // 2, 8)))
    B_pad = _round_up(B_pad8, TB)
    xp = jnp.zeros((B_pad, IN_DIM), jnp.float32).at[:B].set(jnp.asarray(x, jnp.float32))

    def resident(arr):
        # full-array block with a constant index map: DMA'd once, stays in VMEM
        # across all batch-grid steps.
        return pl.BlockSpec(arr.shape, lambda i, a=arr: (0,) * a.ndim)

    grid_spec = pltpu.PrefetchScalarGridSpec(
        num_scalar_prefetch=0,
        grid=(B_pad // TB,),
        in_specs=[pl.BlockSpec((TB, IN_DIM), lambda i: (i, 0))]
                 + [resident(a) for a in operands],
        out_specs=pl.BlockSpec((TB, N_PIX), lambda i: (i, 0)),
    )
    out_flat = pl.pallas_call(
        mask_recreator_kernel,
        out_shape=jax.ShapeDtypeStruct((B_pad, N_PIX), jnp.float32),
        grid_spec=grid_spec,
        compiler_params=pltpu.CompilerParams(
            dimension_semantics=("parallel",),                   # megacore / v7x dual-TC batch split
            vmem_limit_bytes=32 * 1024 * 1024),                  # ~<20 MiB real footprint at TB=512 (v7x-safe)
    )(xp, *operands)
    return out_flat[:B].reshape(B, 1, *OUT_HW)


# ---------------------------- pure-numpy reference ----------------------------

def ref_forward(x, params):
    w1, b1, w2, b2, w3, b3, w4, b4 = params

    def convT(inp, W, b, s):
        Bn, Cin, Hin, Win = inp.shape
        _, Cout, kH, kW = W.shape
        Hout = (Hin - 1) * s + kH
        Wout = (Win - 1) * s + kW
        out = np.zeros((Bn, Cout, Hout, Wout), np.float32)
        for i in range(Hin):
            for j in range(Win):
                out[:, :, s * i:s * i + kH, s * j:s * j + kW] += np.einsum(
                    'bc,cokl->bokl', inp[:, :, i, j], W)
        return out + b.reshape(1, Cout, 1, 1)

    def lrelu(y):
        return np.where(y >= 0, y, NEG_SLOPE * y)

    def inorm(y):
        m = y.mean(axis=(2, 3), keepdims=True)
        v = y.var(axis=(2, 3), keepdims=True)
        return (y - m) / np.sqrt(v + EPS)

    h = x.reshape(-1, IN_DIM, 1, 1).astype(np.float32)
    h = inorm(lrelu(convT(h, w1, b1, 1)))
    h = inorm(lrelu(convT(h, w2, b2, 2)))
    h = inorm(lrelu(convT(h, w3, b3, 2)))
    h = np.einsum('bchw,oc->bohw', h, w4[:, :, 0, 0]) + b4.reshape(1, 1, 1, 1)
    return 1.0 / (1.0 + np.exp(-h))


# ------------------------------------ main ------------------------------------

if __name__ == "__main__":
    params = init_params()
    operands = build_operands(params)

    B = 2
    x = jax.random.uniform(jax.random.PRNGKey(0), (B, IN_DIM), jnp.float32)

    out = jax.block_until_ready(mask_recreator_forward(x, operands))
    assert out.shape == (B, 1, 12, 12), out.shape

    ref = ref_forward(np.asarray(x), params)
    # Conv weights/activations and the instance-norm stat matmuls go through the
    # MXU in bf16 (f32 accumulation), so allow a slightly looser tolerance than a
    # pure-f32 run (expected error ~1e-3).
    np.testing.assert_allclose(np.asarray(out), ref, rtol=1e-2, atol=1e-2)
    print("KERNEL_OK")
</pallas_src>

<mosaic_0001>
module attributes {stable_mosaic.version = 11 : i64} {
  func.func @mask_recreator_kernel(%arg0: i32, %arg1: memref<8x256xf32, #tpu.memory_space<vmem>>, %arg2: memref<256x256xbf16, #tpu.memory_space<vmem>>, %arg3: memref<1x256xf32, #tpu.memory_space<vmem>>, %arg4: memref<256x64xbf16, #tpu.memory_space<vmem>>, %arg5: memref<64x256xbf16, #tpu.memory_space<vmem>>, %arg6: memref<256x896xbf16, #tpu.memory_space<vmem>>, %arg7: memref<1x896xf32, #tpu.memory_space<vmem>>, %arg8: memref<896x32xbf16, #tpu.memory_space<vmem>>, %arg9: memref<32x896xbf16, #tpu.memory_space<vmem>>, %arg10: memref<896x1152xbf16, #tpu.memory_space<vmem>>, %arg11: memref<1x1152xf32, #tpu.memory_space<vmem>>, %arg12: memref<1152x8xbf16, #tpu.memory_space<vmem>>, %arg13: memref<8x1152xbf16, #tpu.memory_space<vmem>>, %arg14: memref<1152x144xbf16, #tpu.memory_space<vmem>>, %arg15: memref<1x144xf32, #tpu.memory_space<vmem>>, %arg16: memref<8x144xf32, #tpu.memory_space<vmem>>) attributes {dimension_semantics = [#tpu.dimension_semantics<parallel>], iteration_bounds = array<i64: 1>, scalar_prefetch = 0 : i64, scratch_operands = 0 : i64, tpu.core_type = #tpu.core_type<tc>, window_params = [{transform_indices = @transform_0, window_bounds = array<i64: 8, 256>}, {pipeline_mode = #tpu.pipeline_mode<synchronous>, transform_indices = @transform_1, window_bounds = array<i64: 256, 256>}, {pipeline_mode = #tpu.pipeline_mode<synchronous>, transform_indices = @transform_2, window_bounds = array<i64: 1, 256>}, {pipeline_mode = #tpu.pipeline_mode<synchronous>, transform_indices = @transform_3, window_bounds = array<i64: 256, 64>}, {pipeline_mode = #tpu.pipeline_mode<synchronous>, transform_indices = @transform_4, window_bounds = array<i64: 64, 256>}, {pipeline_mode = #tpu.pipeline_mode<synchronous>, transform_indices = @transform_5, window_bounds = array<i64: 256, 896>}, {pipeline_mode = #tpu.pipeline_mode<synchronous>, transform_indices = @transform_6, window_bounds = array<i64: 1, 896>}, {pipeline_mode = #tpu.pipeline_mode<synchronous>, transform_indices = @transform_7, window_bounds = array<i64: 896, 32>}, {pipeline_mode = #tpu.pipeline_mode<synchronous>, transform_indices = @transform_8, window_bounds = array<i64: 32, 896>}, {pipeline_mode = #tpu.pipeline_mode<synchronous>, transform_indices = @transform_9, window_bounds = array<i64: 896, 1152>}, {pipeline_mode = #tpu.pipeline_mode<synchronous>, transform_indices = @transform_10, window_bounds = array<i64: 1, 1152>}, {pipeline_mode = #tpu.pipeline_mode<synchronous>, transform_indices = @transform_11, window_bounds = array<i64: 1152, 8>}, {pipeline_mode = #tpu.pipeline_mode<synchronous>, transform_indices = @transform_12, window_bounds = array<i64: 8, 1152>}, {pipeline_mode = #tpu.pipeline_mode<synchronous>, transform_indices = @transform_13, window_bounds = array<i64: 1152, 144>}, {pipeline_mode = #tpu.pipeline_mode<synchronous>, transform_indices = @transform_14, window_bounds = array<i64: 1, 144>}, {transform_indices = @transform_15, window_bounds = array<i64: 8, 144>}]} {
    %c0 = arith.constant 0 : index
    %c0_0 = arith.constant 0 : index
    %0 = vector.load %arg1[%c0, %c0_0] : memref<8x256xf32, #tpu.memory_space<vmem>>, vector<8x256xf32>
    %1 = arith.truncf %0 : vector<8x256xf32> to vector<8x256xbf16>
    %c0_1 = arith.constant 0 : index
    %c0_2 = arith.constant 0 : index
    %2 = vector.load %arg2[%c0_1, %c0_2] : memref<256x256xbf16, #tpu.memory_space<vmem>>, vector<256x256xbf16>
    %cst = arith.constant dense<0.000000e+00> : vector<8x256xf32>
    %3 = tpu.matmul %1, %2, %cst {dimension_numbers = #tpu.dot_dimension_numbers<[1], [0], [0], [1], [0, 0, 1, 1], [], []>} : vector<8x256xbf16>, vector<256x256xbf16>, vector<8x256xf32> -> vector<8x256xf32>
    %c0_3 = arith.constant 0 : index
    %c0_4 = arith.constant 0 : index
    %4 = vector.load %arg3[%c0_3, %c0_4] : memref<1x256xf32, #tpu.memory_space<vmem>>, vector<1x256xf32>
    %5 = vector.broadcast %4 : vector<1x256xf32> to vector<8x256xf32>
    %6 = arith.addf %3, %5 : vector<8x256xf32>
    %cst_5 = arith.constant 1.000000e-01 : f32
    %7 = vector.broadcast %cst_5 : f32 to vector<8x256xf32>
    %8 = arith.mulf %7, %6 : vector<8x256xf32>
    %9 = arith.maximumf %6, %8 : vector<8x256xf32>
    %10 = arith.truncf %9 : vector<8x256xf32> to vector<8x256xbf16>
    %c0_6 = arith.constant 0 : index
    %c0_7 = arith.constant 0 : index
    %11 = vector.load %arg4[%c0_6, %c0_7] : memref<256x64xbf16, #tpu.memory_space<vmem>>, vector<256x64xbf16>
    %cst_8 = arith.constant dense<0.000000e+00> : vector<8x64xf32>
    %12 = tpu.matmul %10, %11, %cst_8 {dimension_numbers = #tpu.dot_dimension_numbers<[1], [0], [0], [1], [0, 0, 1, 1], [], []>} : vector<8x256xbf16>, vector<256x64xbf16>, vector<8x64xf32> -> vector<8x64xf32>
    %cst_9 = arith.constant 2.500000e-01 : f32
    %13 = vector.broadcast %cst_9 : f32 to vector<8x64xf32>
    %14 = arith.mulf %12, %13 : vector<8x64xf32>
    %15 = arith.truncf %14 : vector<8x64xf32> to vector<8x64xbf16>
    %c0_10 = arith.constant 0 : index
    %c0_11 = arith.constant 0 : index
    %16 = vector.load %arg5[%c0_10, %c0_11] : memref<64x256xbf16, #tpu.memory_space<vmem>>, vector<64x256xbf16>
    %cst_12 = arith.constant dense<0.000000e+00> : vector<8x256xf32>
    %17 = tpu.matmul %15, %16, %cst_12 {dimension_numbers = #tpu.dot_dimension_numbers<[1], [0], [0], [1], [0, 0, 1, 1], [], []>} : vector<8x64xbf16>, vector<64x256xbf16>, vector<8x256xf32> -> vector<8x256xf32>
    %18 = arith.subf %9, %17 : vector<8x256xf32>
    %19 = arith.mulf %18, %18 : vector<8x256xf32>
    %20 = arith.truncf %19 : vector<8x256xf32> to vector<8x256xbf16>
    %c0_13 = arith.constant 0 : index
    %c0_14 = arith.constant 0 : index
    %21 = vector.load %arg4[%c0_13, %c0_14] : memref<256x64xbf16, #tpu.memory_space<vmem>>, vector<256x64xbf16>
    %cst_15 = arith.constant dense<0.000000e+00> : vector<8x64xf32>
    %22 = tpu.matmul %20, %21, %cst_15 {dimension_numbers = #tpu.dot_dimension_numbers<[1], [0], [0], [1], [0, 0, 1, 1], [], []>} : vector<8x256xbf16>, vector<256x64xbf16>, vector<8x64xf32> -> vector<8x64xf32>
    %cst_16 = arith.constant 2.500000e-01 : f32
    %23 = vector.broadcast %cst_16 : f32 to vector<8x64xf32>
    %24 = arith.mulf %22, %23 : vector<8x64xf32>
    %cst_17 = arith.constant 9.99999974E-6 : f32
    %25 = vector.broadcast %cst_17 : f32 to vector<8x64xf32>
    %26 = arith.addf %24, %25 : vector<8x64xf32>
    %27 = math.rsqrt %26 : vector<8x64xf32>
    %28 = arith.truncf %27 : vector<8x64xf32> to vector<8x64xbf16>
    %c0_18 = arith.constant 0 : index
    %c0_19 = arith.constant 0 : index
    %29 = vector.load %arg5[%c0_18, %c0_19] : memref<64x256xbf16, #tpu.memory_space<vmem>>, vector<64x256xbf16>
    %cst_20 = arith.constant dense<0.000000e+00> : vector<8x256xf32>
    %30 = tpu.matmul %28, %29, %cst_20 {dimension_numbers = #tpu.dot_dimension_numbers<[1], [0], [0], [1], [0, 0, 1, 1], [], []>} : vector<8x64xbf16>, vector<64x256xbf16>, vector<8x256xf32> -> vector<8x256xf32>
    %31 = arith.mulf %18, %30 : vector<8x256xf32>
    %32 = arith.truncf %31 : vector<8x256xf32> to vector<8x256xbf16>
    %c0_21 = arith.constant 0 : index
    %c0_22 = arith.constant 0 : index
    %33 = vector.load %arg6[%c0_21, %c0_22] : memref<256x896xbf16, #tpu.memory_space<vmem>>, vector<256x896xbf16>
    %cst_23 = arith.constant dense<0.000000e+00> : vector<8x896xf32>
    %34 = tpu.matmul %32, %33, %cst_23 {dimension_numbers = #tpu.dot_dimension_numbers<[1], [0], [0], [1], [0, 0, 1, 1], [], []>} : vector<8x256xbf16>, vector<256x896xbf16>, vector<8x896xf32> -> vector<8x896xf32>
    %c0_24 = arith.constant 0 : index
    %c0_25 = arith.constant 0 : index
    %35 = vector.load %arg7[%c0_24, %c0_25] : memref<1x896xf32, #tpu.memory_space<vmem>>, vector<1x896xf32>
    %36 = vector.broadcast %35 : vector<1x896xf32> to vector<8x896xf32>
    %37 = arith.addf %34, %36 : vector<8x896xf32>
    %cst_26 = arith.constant 1.000000e-01 : f32
    %38 = vector.broadcast %cst_26 : f32 to vector<8x896xf32>
    %39 = arith.mulf %38, %37 : vector<8x896xf32>
    %40 = arith.maximumf %37, %39 : vector<8x896xf32>
    %41 = arith.truncf %40 : vector<8x896xf32> to vector<8x896xbf16>
    %c0_27 = arith.constant 0 : index
    %c0_28 = arith.constant 0 : index
    %42 = vector.load %arg8[%c0_27, %c0_28] : memref<896x32xbf16, #tpu.memory_space<vmem>>, vector<896x32xbf16>
    %cst_29 = arith.constant dense<0.000000e+00> : vector<8x32xf32>
    %43 = tpu.matmul %41, %42, %cst_29 {dimension_numbers = #tpu.dot_dimension_numbers<[1], [0], [0], [1], [0, 0, 1, 1], [], []>} : vector<8x896xbf16>, vector<896x32xbf16>, vector<8x32xf32> -> vector<8x32xf32>
    %cst_30 = arith.constant 4.000000e-02 : f32
    %44 = vector.broadcast %cst_30 : f32 to vector<8x32xf32>
    %45 = arith.mulf %43, %44 : vector<8x32xf32>
    %46 = arith.truncf %45 : vector<8x32xf32> to vector<8x32xbf16>
    %c0_31 = arith.constant 0 : index
    %c0_32 = arith.constant 0 : index
    %47 = vector.load %arg9[%c0_31, %c0_32] : memref<32x896xbf16, #tpu.memory_space<vmem>>, vector<32x896xbf16>
    %cst_33 = arith.constant dense<0.000000e+00> : vector<8x896xf32>
    %48 = tpu.matmul %46, %47, %cst_33 {dimension_numbers = #tpu.dot_dimension_numbers<[1], [0], [0], [1], [0, 0, 1, 1], [], []>} : vector<8x32xbf16>, vector<32x896xbf16>, vector<8x896xf32> -> vector<8x896xf32>
    %49 = arith.subf %40, %48 : vector<8x896xf32>
    %50 = arith.mulf %49, %49 : vector<8x896xf32>
    %51 = arith.truncf %50 : vector<8x896xf32> to vector<8x896xbf16>
    %c0_34 = arith.constant 0 : index
    %c0_35 = arith.constant 0 : index
    %52 = vector.load %arg8[%c0_34, %c0_35] : memref<896x32xbf16, #tpu.memory_space<vmem>>, vector<896x32xbf16>
    %cst_36 = arith.constant dense<0.000000e+00> : vector<8x32xf32>
    %53 = tpu.matmul %51, %52, %cst_36 {dimension_numbers = #tpu.dot_dimension_numbers<[1], [0], [0], [1], [0, 0, 1, 1], [], []>} : vector<8x896xbf16>, vector<896x32xbf16>, vector<8x32xf32> -> vector<8x32xf32>
    %cst_37 = arith.constant 4.000000e-02 : f32
    %54 = vector.broadcast %cst_37 : f32 to vector<8x32xf32>
    %55 = arith.mulf %53, %54 : vector<8x32xf32>
    %cst_38 = arith.constant 9.99999974E-6 : f32
    %56 = vector.broadcast %cst_38 : f32 to vector<8x32xf32>
    %57 = arith.addf %55, %56 : vector<8x32xf32>
    %58 = math.rsqrt %57 : vector<8x32xf32>
    %59 = arith.truncf %58 : vector<8x32xf32> to vector<8x32xbf16>
    %c0_39 = arith.constant 0 : index
    %c0_40 = arith.constant 0 : index
    %60 = vector.load %arg9[%c0_39, %c0_40] : memref<32x896xbf16, #tpu.memory_space<vmem>>, vector<32x896xbf16>
    %cst_41 = arith.constant dense<0.000000e+00> : vector<8x896xf32>
    %61 = tpu.matmul %59, %60, %cst_41 {dimension_numbers = #tpu.dot_dimension_numbers<[1], [0], [0], [1], [0, 0, 1, 1], [], []>} : vector<8x32xbf16>, vector<32x896xbf16>, vector<8x896xf32> -> vector<8x896xf32>
    %62 = arith.mulf %49, %61 : vector<8x896xf32>
    %63 = arith.truncf %62 : vector<8x896xf32> to vector<8x896xbf16>
    %c0_42 = arith.constant 0 : index
    %c0_43 = arith.constant 0 : index
    %64 = vector.load %arg10[%c0_42, %c0_43] : memref<896x1152xbf16, #tpu.memory_space<vmem>>, vector<896x1152xbf16>
    %cst_44 = arith.constant dense<0.000000e+00> : vector<8x1152xf32>
    %65 = tpu.matmul %63, %64, %cst_44 {dimension_numbers = #tpu.dot_dimension_numbers<[1], [0], [0], [1], [0, 0, 1, 1], [], []>} : vector<8x896xbf16>, vector<896x1152xbf16>, vector<8x1152xf32> -> vector<8x1152xf32>
    %c0_45 = arith.constant 0 : index
    %c0_46 = arith.constant 0 : index
    %66 = vector.load %arg11[%c0_45, %c0_46] : memref<1x1152xf32, #tpu.memory_space<vmem>>, vector<1x1152xf32>
    %67 = vector.broadcast %66 : vector<1x1152xf32> to vector<8x1152xf32>
    %68 = arith.addf %65, %67 : vector<8x1152xf32>
    %cst_47 = arith.constant 1.000000e-01 : f32
    %69 = vector.broadcast %cst_47 : f32 to vector<8x1152xf32>
    %70 = arith.mulf %69, %68 : vector<8x1152xf32>
    %71 = arith.maximumf %68, %70 : vector<8x1152xf32>
    %72 = arith.truncf %71 : vector<8x1152xf32> to vector<8x1152xbf16>
    %c0_48 = arith.constant 0 : index
    %c0_49 = arith.constant 0 : index
    %73 = vector.load %arg12[%c0_48, %c0_49] : memref<1152x8xbf16, #tpu.memory_space<vmem>>, vector<1152x8xbf16>
    %cst_50 = arith.constant dense<0.000000e+00> : vector<8x8xf32>
    %74 = tpu.matmul %72, %73, %cst_50 {dimension_numbers = #tpu.dot_dimension_numbers<[1], [0], [0], [1], [0, 0, 1, 1], [], []>} : vector<8x1152xbf16>, vector<1152x8xbf16>, vector<8x8xf32> -> vector<8x8xf32>
    %cst_51 = arith.constant 0.0069444445 : f32
    %75 = vector.broadcast %cst_51 : f32 to vector<8x8xf32>
    %76 = arith.mulf %74, %75 : vector<8x8xf32>
    %77 = arith.truncf %76 : vector<8x8xf32> to vector<8x8xbf16>
    %c0_52 = arith.constant 0 : index
    %c0_53 = arith.constant 0 : index
    %78 = vector.load %arg13[%c0_52, %c0_53] : memref<8x1152xbf16, #tpu.memory_space<vmem>>, vector<8x1152xbf16>
    %cst_54 = arith.constant dense<0.000000e+00> : vector<8x1152xf32>
    %79 = tpu.matmul %77, %78, %cst_54 {dimension_numbers = #tpu.dot_dimension_numbers<[1], [0], [0], [1], [0, 0, 1, 1], [], []>} : vector<8x8xbf16>, vector<8x1152xbf16>, vector<8x1152xf32> -> vector<8x1152xf32>
    %80 = arith.subf %71, %79 : vector<8x1152xf32>
    %81 = arith.mulf %80, %80 : vector<8x1152xf32>
    %82 = arith.truncf %81 : vector<8x1152xf32> to vector<8x1152xbf16>
    %c0_55 = arith.constant 0 : index
    %c0_56 = arith.constant 0 : index
    %83 = vector.load %arg12[%c0_55, %c0_56] : memref<1152x8xbf16, #tpu.memory_space<vmem>>, vector<1152x8xbf16>
    %cst_57 = arith.constant dense<0.000000e+00> : vector<8x8xf32>
    %84 = tpu.matmul %82, %83, %cst_57 {dimension_numbers = #tpu.dot_dimension_numbers<[1], [0], [0], [1], [0, 0, 1, 1], [], []>} : vector<8x1152xbf16>, vector<1152x8xbf16>, vector<8x8xf32> -> vector<8x8xf32>
    %cst_58 = arith.constant 0.0069444445 : f32
    %85 = vector.broadcast %cst_58 : f32 to vector<8x8xf32>
    %86 = arith.mulf %84, %85 : vector<8x8xf32>
    %cst_59 = arith.constant 9.99999974E-6 : f32
    %87 = vector.broadcast %cst_59 : f32 to vector<8x8xf32>
    %88 = arith.addf %86, %87 : vector<8x8xf32>
    %89 = math.rsqrt %88 : vector<8x8xf32>
    %90 = arith.truncf %89 : vector<8x8xf32> to vector<8x8xbf16>
    %c0_60 = arith.constant 0 : index
    %c0_61 = arith.constant 0 : index
    %91 = vector.load %arg13[%c0_60, %c0_61] : memref<8x1152xbf16, #tpu.memory_space<vmem>>, vector<8x1152xbf16>
    %cst_62 = arith.constant dense<0.000000e+00> : vector<8x1152xf32>
    %92 = tpu.matmul %90, %91, %cst_62 {dimension_numbers = #tpu.dot_dimension_numbers<[1], [0], [0], [1], [0, 0, 1, 1], [], []>} : vector<8x8xbf16>, vector<8x1152xbf16>, vector<8x1152xf32> -> vector<8x1152xf32>
    %93 = arith.mulf %80, %92 : vector<8x1152xf32>
    %94 = arith.truncf %93 : vector<8x1152xf32> to vector<8x1152xbf16>
    %c0_63 = arith.constant 0 : index
    %c0_64 = arith.constant 0 : index
    %95 = vector.load %arg14[%c0_63, %c0_64] : memref<1152x144xbf16, #tpu.memory_space<vmem>>, vector<1152x144xbf16>
    %cst_65 = arith.constant dense<0.000000e+00> : vector<8x144xf32>
    %96 = tpu.matmul %94, %95, %cst_65 {dimension_numbers = #tpu.dot_dimension_numbers<[1], [0], [0], [1], [0, 0, 1, 1], [], []>} : vector<8x1152xbf16>, vector<1152x144xbf16>, vector<8x144xf32> -> vector<8x144xf32>
    %c0_66 = arith.constant 0 : index
    %c0_67 = arith.constant 0 : index
    %97 = vector.load %arg15[%c0_66, %c0_67] : memref<1x144xf32, #tpu.memory_space<vmem>>, vector<1x144xf32>
    %98 = vector.broadcast %97 : vector<1x144xf32> to vector<8x144xf32>
    %99 = arith.addf %96, %98 : vector<8x144xf32>
    %cst_68 = arith.constant 5.000000e-01 : f32
    %100 = vector.broadcast %cst_68 : f32 to vector<8x144xf32>
    %101 = arith.mulf %100, %99 : vector<8x144xf32>
    %102 = math.tanh %101 : vector<8x144xf32>
    %cst_69 = arith.constant 1.000000e+00 : f32
    %103 = vector.broadcast %cst_69 : f32 to vector<8x144xf32>
    %104 = arith.addf %102, %103 : vector<8x144xf32>
    %cst_70 = arith.constant 5.000000e-01 : f32
    %105 = vector.broadcast %cst_70 : f32 to vector<8x144xf32>
    %106 = arith.mulf %105, %104 : vector<8x144xf32>
    %c0_71 = arith.constant 0 : index
    %c0_72 = arith.constant 0 : index
    %107 = vector.load %arg16[%c0_71, %c0_72] : memref<8x144xf32, #tpu.memory_space<vmem>>, vector<8x144xf32>
    tpu.vector_store %arg16[%c0_71, %c0_72], %106 {strides = array<i32>} : memref<8x144xf32, #tpu.memory_space<vmem>>, vector<8x144xf32>,
    return
  }
  func.func @transform_0(%arg0: i32) -> (i32, i32) {
    %c0_i32 = arith.constant 0 : i32
    %c0_i32_0 = arith.constant 0 : i32
    return %arg0, %c0_i32 : i32, i32
  }
  func.func @transform_1(%arg0: i32) -> (i32, i32) {
    %c0_i32 = arith.constant 0 : i32
    %c0_i32_0 = arith.constant 0 : i32
    %c0_i32_1 = arith.constant 0 : i32
    return %c0_i32, %c0_i32_0 : i32, i32
  }
  func.func @transform_2(%arg0: i32) -> (i32, i32) {
    %c0_i32 = arith.constant 0 : i32
    %c0_i32_0 = arith.constant 0 : i32
    %c0_i32_1 = arith.constant 0 : i32
    return %c0_i32, %c0_i32_0 : i32, i32
  }
  func.func @transform_3(%arg0: i32) -> (i32, i32) {
    %c0_i32 = arith.constant 0 : i32
    %c0_i32_0 = arith.constant 0 : i32
    %c0_i32_1 = arith.constant 0 : i32
    return %c0_i32, %c0_i32_0 : i32, i32
  }
  func.func @transform_4(%arg0: i32) -> (i32, i32) {
    %c0_i32 = arith.constant 0 : i32
    %c0_i32_0 = arith.constant 0 : i32
    %c0_i32_1 = arith.constant 0 : i32
    return %c0_i32, %c0_i32_0 : i32, i32
  }
  func.func @transform_5(%arg0: i32) -> (i32, i32) {
    %c0_i32 = arith.constant 0 : i32
    %c0_i32_0 = arith.constant 0 : i32
    %c0_i32_1 = arith.constant 0 : i32
    return %c0_i32, %c0_i32_0 : i32, i32
  }
  func.func @transform_6(%arg0: i32) -> (i32, i32) {
    %c0_i32 = arith.constant 0 : i32
    %c0_i32_0 = arith.constant 0 : i32
    %c0_i32_1 = arith.constant 0 : i32
    return %c0_i32, %c0_i32_0 : i32, i32
  }
  func.func @transform_7(%arg0: i32) -> (i32, i32) {
    %c0_i32 = arith.constant 0 : i32
    %c0_i32_0 = arith.constant 0 : i32
    %c0_i32_1 = arith.constant 0 : i32
    return %c0_i32, %c0_i32_0 : i32, i32
  }
  func.func @transform_8(%arg0: i32) -> (i32, i32) {
    %c0_i32 = arith.constant 0 : i32
    %c0_i32_0 = arith.constant 0 : i32
    %c0_i32_1 = arith.constant 0 : i32
    return %c0_i32, %c0_i32_0 : i32, i32
  }
  func.func @transform_9(%arg0: i32) -> (i32, i32) {
    %c0_i32 = arith.constant 0 : i32
    %c0_i32_0 = arith.constant 0 : i32
    %c0_i32_1 = arith.constant 0 : i32
    return %c0_i32, %c0_i32_0 : i32, i32
  }
  func.func @transform_10(%arg0: i32) -> (i32, i32) {
    %c0_i32 = arith.constant 0 : i32
    %c0_i32_0 = arith.constant 0 : i32
    %c0_i32_1 = arith.constant 0 : i32
    return %c0_i32, %c0_i32_0 : i32, i32
  }
  func.func @transform_11(%arg0: i32) -> (i32, i32) {
    %c0_i32 = arith.constant 0 : i32
    %c0_i32_0 = arith.constant 0 : i32
    %c0_i32_1 = arith.constant 0 : i32
    return %c0_i32, %c0_i32_0 : i32, i32
  }
  func.func @transform_12(%arg0: i32) -> (i32, i32) {
    %c0_i32 = arith.constant 0 : i32
    %c0_i32_0 = arith.constant 0 : i32
    %c0_i32_1 = arith.constant 0 : i32
    return %c0_i32, %c0_i32_0 : i32, i32
  }
  func.func @transform_13(%arg0: i32) -> (i32, i32) {
    %c0_i32 = arith.constant 0 : i32
    %c0_i32_0 = arith.constant 0 : i32
    %c0_i32_1 = arith.constant 0 : i32
    return %c0_i32, %c0_i32_0 : i32, i32
  }
  func.func @transform_14(%arg0: i32) -> (i32, i32) {
    %c0_i32 = arith.constant 0 : i32
    %c0_i32_0 = arith.constant 0 : i32
    %c0_i32_1 = arith.constant 0 : i32
    return %c0_i32, %c0_i32_0 : i32, i32
  }
  func.func @transform_15(%arg0: i32) -> (i32, i32) {
    %c0_i32 = arith.constant 0 : i32
    %c0_i32_0 = arith.constant 0 : i32
    return %arg0, %c0_i32 : i32, i32
  }
}

</mosaic_0001>

<llo_original>
// kernel: tpu_custom_call.1
$region0: #{tpu_custom_call.1}
  #allocation0 [shape = 'u32[]', space=smem, size = 0x4, offset = 0x4, fixed_abs, tag = 'smem constant byte address 0x4 - core index']
  #allocation1 [shape = 'u32[144,128]{1,0:T(1,128)}', space=vmem, size = 0x12000, scoped, tag = 'internal scratch']
  %s0 = inlined_call_operand.hbm [shape: f32[8,256], index: 0, kind: input, shape index: {}]
  %s1 = inlined_call_operand.hbm [shape: bf16[256,256], index: 1, kind: input, shape index: {}]
  %s2 = inlined_call_operand.hbm [shape: f32[1,256], index: 2, kind: input, shape index: {}]
  %s3 = inlined_call_operand.vmem [shape: bf16[256,64], index: 3, kind: input, shape index: {}]
  %s4 = inlined_call_operand.hbm [shape: bf16[64,256], index: 4, kind: input, shape index: {}]
  %s5 = inlined_call_operand.hbm [shape: bf16[256,896], index: 5, kind: input, shape index: {}]
  %s6 = inlined_call_operand.hbm [shape: f32[1,896], index: 6, kind: input, shape index: {}]
  %s7 = inlined_call_operand.vmem [shape: bf16[896,32], index: 7, kind: input, shape index: {}]
  %s8 = inlined_call_operand.hbm [shape: bf16[32,896], index: 8, kind: input, shape index: {}]
  %s9 = inlined_call_operand.hbm [shape: bf16[896,1152], index: 9, kind: input, shape index: {}]
  %s10 = inlined_call_operand.hbm [shape: f32[1,1152], index: 10, kind: input, shape index: {}]
  %s11 = inlined_call_operand.vmem [shape: bf16[1152,8], index: 11, kind: input, shape index: {}]
  %s12 = inlined_call_operand.hbm [shape: bf16[8,1152], index: 12, kind: input, shape index: {}]
  %s13 = inlined_call_operand.vmem [shape: bf16[1152,144], index: 13, kind: input, shape index: {}]
  %s14 = inlined_call_operand.hbm [shape: f32[1,144], index: 14, kind: input, shape index: {}]
  %s15 = inlined_call_operand.hbm [shape: f32[8,144], index: 15, kind: output, shape index: {}]
  %s16 = sld [smem:[#allocation0]]
  $region114: #{tpu_custom_call.1} parent=0
    _
  %s18 = ssub.s32 1, %s16
  %s19 = scalar_select 0, %s18, %s16
  $region1: #{tpu_custom_call.1} parent=0
    #allocation2 [shape = 'u8[8192]{0}', space=vmem, size = 0x2000, scoped, tag = 'input window, operand 0, single buffered']
    #allocation3 [shape = 's32[1]{0}', space=sflag, size = 0x4, scoped, tag = 'scoped memory for tpu_custom_call.1']
    #allocation4 [shape = 's32[1]{0}', space=sflag, size = 0x4, scoped, tag = 'scoped memory for tpu_custom_call.1']
    #allocation5 [shape = 'u8[131072]{0}', space=vmem, size = 0x20000, scoped, tag = 'input window, operand 1, single buffered']
    #allocation6 [shape = 's32[1]{0}', space=sflag, size = 0x4, scoped, tag = 'scoped memory for tpu_custom_call.1']
    #allocation7 [shape = 'u8[1024]{0}', space=vmem, size = 0x400, scoped, tag = 'input window, operand 2, single buffered']
    #allocation8 [shape = 'u8[32768]{0}', space=vmem, size = 0x8000, scoped, tag = 'input window, operand 4, single buffered']
    #allocation9 [shape = 's32[1]{0}', space=sflag, size = 0x4, scoped, tag = 'scoped memory for tpu_custom_call.1']
    #allocation10 [shape = 'u8[458752]{0}', space=vmem, size = 0x70000, scoped, tag = 'input window, operand 5, single buffered']
    #allocation11 [shape = 'u8[3584]{0}', space=vmem, size = 0x1000, scoped, tag = 'input window, operand 6, single buffered']
    #allocation12 [shape = 's32[1]{0}', space=sflag, size = 0x4, scoped, tag = 'scoped memory for tpu_custom_call.1']
    #allocation13 [shape = 'u8[57344]{0}', space=vmem, size = 0xe000, scoped, tag = 'input window, operand 8, single buffered']
    #allocation14 [shape = 'u8[2064384]{0}', space=vmem, size = 0x1f8000, scoped, tag = 'input window, operand 9, single buffered']
    #allocation15 [shape = 's32[1]{0}', space=sflag, size = 0x4, scoped, tag = 'scoped memory for tpu_custom_call.1']
    #allocation16 [shape = 'u8[4608]{0}', space=vmem, size = 0x1400, scoped, tag = 'input window, operand 10, single buffered']
    #allocation17 [shape = 'u8[18432]{0}', space=vmem, size = 0x4800, scoped, tag = 'input window, operand 12, single buffered']
    #allocation18 [shape = 's32[1]{0}', space=sflag, size = 0x4, scoped, tag = 'scoped memory for tpu_custom_call.1']
    #allocation19 [shape = 'u8[1024]{0}', space=vmem, size = 0x400, scoped, tag = 'input window, operand 14, single buffered']
    #allocation20 [shape = 'u8[8192]{0}', space=vmem, size = 0x2000, scoped, tag = 'output window, operand 0, single buffered']
    %20 = vsyncpa [#allocation3], 0
    %21 = vsyncpa [#allocation6], 0
    %22 = vsyncpa [#allocation9], 0
    %23 = vsyncpa [#allocation12], 0
    %24 = vsyncpa [#allocation15], 0
    %25 = vsyncpa [#allocation18], 0
    %26 = vsyncpa [#allocation4], 0
    // Predicated region
    $region2: #{tpu_custom_call.1} parent=1 // pred_check
      _
    $region3: #{tpu_custom_call.1} parent=1 // pred_check_branch
      %28 = sbr.rel (0) target = $region5
    $region4: #{tpu_custom_call.1} parent=1 // pred_region
      %s30 = ssub.s32 256, 256
      %31 = vsyncadd [#allocation3], %s30
      %s33 = sshll.u32 [#allocation2], 4
      %s34 = int_to_ptr.vmem [resolvable:$true] %s33
      %36 = dma.hbm_to_vmem [thread:$0]  %s0, 256, %s34, [#allocation3]
    $region5: #{tpu_custom_call.1} parent=1 // pred_fallthru
      _
    // Predicated region
    $region6: #{tpu_custom_call.1} parent=1 // pred_check
      _
    $region7: #{tpu_custom_call.1} parent=1 // pred_check_branch
      %38 = sbr.rel (0) target = $region9
    $region8: #{tpu_custom_call.1} parent=1 // pred_region
      %s40 = ssub.s32 4096, 4096
      %41 = vsyncadd [#allocation6], %s40
      %s42 = sshll.u32 [#allocation5], 4
      %s43 = int_to_ptr.vmem [resolvable:$true] %s42
      %48 = dma.hbm_to_vmem [thread:$0]  %s1, 4096, %s43, [#allocation6], 128, 128, 8
    $region9: #{tpu_custom_call.1} parent=1 // pred_fallthru
      _
    // Predicated region
    $region10: #{tpu_custom_call.1} parent=1 // pred_check
      _
    $region11: #{tpu_custom_call.1} parent=1 // pred_check_branch
      %50 = sbr.rel (0) target = $region13
    $region12: #{tpu_custom_call.1} parent=1 // pred_region
      %s52 = ssub.s32 32, 32
      %53 = vsyncadd [#allocation6], %s52
      %s55 = sshll.u32 [#allocation7], 4
      %s56 = int_to_ptr.vmem [resolvable:$true] %s55
      %58 = dma.hbm_to_vmem [thread:$0]  %s2, 32, %s56, [#allocation6]
    $region13: #{tpu_custom_call.1} parent=1 // pred_fallthru
      _
    // Predicated region
    $region14: #{tpu_custom_call.1} parent=1 // pred_check
      _
    $region15: #{tpu_custom_call.1} parent=1 // pred_check_branch
      %60 = sbr.rel (0) target = $region17
    $region16: #{tpu_custom_call.1} parent=1 // pred_region
      _
    $region17: #{tpu_custom_call.1} parent=1 // pred_fallthru
      _
    // Predicated region
    $region18: #{tpu_custom_call.1} parent=1 // pred_check
      _
    $region19: #{tpu_custom_call.1} parent=1 // pred_check_branch
      %62 = sbr.rel (0) target = $region21
    $region20: #{tpu_custom_call.1} parent=1 // pred_region
      %s64 = ssub.s32 1024, 1024
      %65 = vsyncadd [#allocation9], %s64
      %s66 = sshll.u32 [#allocation8], 4
      %s67 = int_to_ptr.vmem [resolvable:$true] %s66
      %72 = dma.hbm_to_vmem [thread:$0]  %s4, 1024, %s67, [#allocation9], 128, 128, 8
    $region21: #{tpu_custom_call.1} parent=1 // pred_fallthru
      _
    // Predicated region
    $region22: #{tpu_custom_call.1} parent=1 // pred_check
      _
    $region23: #{tpu_custom_call.1} parent=1 // pred_check_branch
      %74 = sbr.rel (0) target = $region25
    $region24: #{tpu_custom_call.1} parent=1 // pred_region
      %s76 = ssub.s32 14336, 14336
      %77 = vsyncadd [#allocation9], %s76
      %s78 = sshll.u32 [#allocation10], 4
      %s79 = int_to_ptr.vmem [resolvable:$true] %s78
      %84 = dma.hbm_to_vmem [thread:$0]  %s5, 14336, %s79, [#allocation9], 448, 448, 28
    $region25: #{tpu_custom_call.1} parent=1 // pred_fallthru
      _
    // Predicated region
    $region26: #{tpu_custom_call.1} parent=1 // pred_check
      _
    $region27: #{tpu_custom_call.1} parent=1 // pred_check_branch
      %86 = sbr.rel (0) target = $region29
    $region28: #{tpu_custom_call.1} parent=1 // pred_region
      %s88 = ssub.s32 112, 112
      %89 = vsyncadd [#allocation12], %s88
      %s91 = sshll.u32 [#allocation11], 4
      %s92 = int_to_ptr.vmem [resolvable:$true] %s91
      %94 = dma.hbm_to_vmem [thread:$0]  %s6, 112, %s92, [#allocation12]
    $region29: #{tpu_custom_call.1} parent=1 // pred_fallthru
      _
    // Predicated region
    $region30: #{tpu_custom_call.1} parent=1 // pred_check
      _
    $region31: #{tpu_custom_call.1} parent=1 // pred_check_branch
      %96 = sbr.rel (0) target = $region33
    $region32: #{tpu_custom_call.1} parent=1 // pred_region
      _
    $region33: #{tpu_custom_call.1} parent=1 // pred_fallthru
      _
    // Predicated region
    $region34: #{tpu_custom_call.1} parent=1 // pred_check
      _
    $region35: #{tpu_custom_call.1} parent=1 // pred_check_branch
      %98 = sbr.rel (0) target = $region37
    $region36: #{tpu_custom_call.1} parent=1 // pred_region
      %s100 = ssub.s32 1792, 1792
      %101 = vsyncadd [#allocation12], %s100
      %s102 = sshll.u32 [#allocation13], 4
      %s103 = int_to_ptr.vmem [resolvable:$true] %s102
      %108 = dma.hbm_to_vmem [thread:$0]  %s8, 1792, %s103, [#allocation12], 448, 448, 28
    $region37: #{tpu_custom_call.1} parent=1 // pred_fallthru
      _
    // Predicated region
    $region38: #{tpu_custom_call.1} parent=1 // pred_check
      _
    $region39: #{tpu_custom_call.1} parent=1 // pred_check_branch
      %110 = sbr.rel (0) target = $region41
    $region40: #{tpu_custom_call.1} parent=1 // pred_region
      %s112 = ssub.s32 64512, 64512
      %113 = vsyncadd [#allocation15], %s112
      %s114 = sshll.u32 [#allocation14], 4
      %s115 = int_to_ptr.vmem [resolvable:$true] %s114
      %120 = dma.hbm_to_vmem [thread:$0]  %s9, 64512, %s115, [#allocation15], 576, 576, 36
    $region41: #{tpu_custom_call.1} parent=1 // pred_fallthru
      _
    // Predicated region
    $region42: #{tpu_custom_call.1} parent=1 // pred_check
      _
    $region43: #{tpu_custom_call.1} parent=1 // pred_check_branch
      %122 = sbr.rel (0) target = $region45
    $region44: #{tpu_custom_call.1} parent=1 // pred_region
      %s124 = ssub.s32 144, 144
      %125 = vsyncadd [#allocation15], %s124
      %s127 = sshll.u32 [#allocation16], 4
      %s128 = int_to_ptr.vmem [resolvable:$true] %s127
      %130 = dma.hbm_to_vmem [thread:$0]  %s10, 144, %s128, [#allocation15]
    $region45: #{tpu_custom_call.1} parent=1 // pred_fallthru
      _
    // Predicated region
    $region46: #{tpu_custom_call.1} parent=1 // pred_check
      _
    $region47: #{tpu_custom_call.1} parent=1 // pred_check_branch
      %132 = sbr.rel (0) target = $region49
    $region48: #{tpu_custom_call.1} parent=1 // pred_region
      _
    $region49: #{tpu_custom_call.1} parent=1 // pred_fallthru
      _
    // Predicated region
    $region50: #{tpu_custom_call.1} parent=1 // pred_check
      _
    $region51: #{tpu_custom_call.1} parent=1 // pred_check_branch
      %134 = sbr.rel (0) target = $region53
    $region52: #{tpu_custom_call.1} parent=1 // pred_region
      %s136 = ssub.s32 576, 576
      %137 = vsyncadd [#allocation18], %s136
      %s139 = sshll.u32 [#allocation17], 4
      %s140 = int_to_ptr.vmem [resolvable:$true] %s139
      %142 = dma.hbm_to_vmem [thread:$0]  %s12, 576, %s140, [#allocation18]
    $region53: #{tpu_custom_call.1} parent=1 // pred_fallthru
      _
    // Predicated region
    $region54: #{tpu_custom_call.1} parent=1 // pred_check
      _
    $region55: #{tpu_custom_call.1} parent=1 // pred_check_branch
      %144 = sbr.rel (0) target = $region57
    $region56: #{tpu_custom_call.1} parent=1 // pred_region
      _
    $region57: #{tpu_custom_call.1} parent=1 // pred_fallthru
      _
    // Predicated region
    $region58: #{tpu_custom_call.1} parent=1 // pred_check
      _
    $region59: #{tpu_custom_call.1} parent=1 // pred_check_branch
      %146 = sbr.rel (0) target = $region61
    $region60: #{tpu_custom_call.1} parent=1 // pred_region
      %s148 = ssub.s32 32, 32
      %149 = vsyncadd [#allocation18], %s148
      %s151 = sshll.u32 [#allocation19], 4
      %s152 = int_to_ptr.vmem [resolvable:$true] %s151
      %154 = dma.hbm_to_vmem [thread:$0]  %s14, 32, %s152, [#allocation18]
    $region61: #{tpu_custom_call.1} parent=1 // pred_fallthru
      _
    // Predicated region
    $region62: #{tpu_custom_call.1} parent=1 // pred_check
      _
    $region63: #{tpu_custom_call.1} parent=1 // pred_check_branch
      %156 = sbr.rel (0) target = $region65
    $region64: #{tpu_custom_call.1} parent=1 // pred_region
      %157 = dma.done [#allocation3], 256
    $region65: #{tpu_custom_call.1} parent=1 // pred_fallthru
      _
    // Predicated region
    $region66: #{tpu_custom_call.1} parent=1 // pred_check
      _
    $region67: #{tpu_custom_call.1} parent=1 // pred_check_branch
      %159 = sbr.rel (0) target = $region69
    $region68: #{tpu_custom_call.1} parent=1 // pred_region
      %160 = dma.done [#allocation6], 4096
    $region69: #{tpu_custom_call.1} parent=1 // pred_fallthru
      _
    // Predicated region
    $region70: #{tpu_custom_call.1} parent=1 // pred_check
      _
    $region71: #{tpu_custom_call.1} parent=1 // pred_check_branch
      %162 = sbr.rel (0) target = $region73
    $region72: #{tpu_custom_call.1} parent=1 // pred_region
      %163 = dma.done [#allocation6], 32
    $region73: #{tpu_custom_call.1} parent=1 // pred_fallthru
      _
    // Predicated region
    $region74: #{tpu_custom_call.1} parent=1 // pred_check
      _
    $region75: #{tpu_custom_call.1} parent=1 // pred_check_branch
      %165 = sbr.rel (0) target = $region77
    $region76: #{tpu_custom_call.1} parent=1 // pred_region
      %166 = dma.done [#allocation9], 1024
    $region77: #{tpu_custom_call.1} parent=1 // pred_fallthru
      _
    // Predicated region
    $region78: #{tpu_custom_call.1} parent=1 // pred_check
      _
    $region79: #{tpu_custom_call.1} parent=1 // pred_check_branch
      %168 = sbr.rel (0) target = $region81
    $region80: #{tpu_custom_call.1} parent=1 // pred_region
      %169 = dma.done [#allocation9], 14336
    $region81: #{tpu_custom_call.1} parent=1 // pred_fallthru
      _
    // Predicated region
    $region82: #{tpu_custom_call.1} parent=1 // pred_check
      _
    $region83: #{tpu_custom_call.1} parent=1 // pred_check_branch
      %171 = sbr.rel (0) target = $region85
    $region84: #{tpu_custom_call.1} parent=1 // pred_region
      %172 = dma.done [#allocation12], 112
    $region85: #{tpu_custom_call.1} parent=1 // pred_fallthru
      _
    // Predicated region
    $region86: #{tpu_custom_call.1} parent=1 // pred_check
      _
    $region87: #{tpu_custom_call.1} parent=1 // pred_check_branch
      %174 = sbr.rel (0) target = $region89
    $region88: #{tpu_custom_call.1} parent=1 // pred_region
      %175 = dma.done [#allocation12], 1792
    $region89: #{tpu_custom_call.1} parent=1 // pred_fallthru
      _
    // Predicated region
    $region90: #{tpu_custom_call.1} parent=1 // pred_check
      _
    $region91: #{tpu_custom_call.1} parent=1 // pred_check_branch
      %177 = sbr.rel (0) target = $region93
    $region92: #{tpu_custom_call.1} parent=1 // pred_region
      %178 = dma.done [#allocation15], 64512
    $region93: #{tpu_custom_call.1} parent=1 // pred_fallthru
      _
    // Predicated region
    $region94: #{tpu_custom_call.1} parent=1 // pred_check
      _
    $region95: #{tpu_custom_call.1} parent=1 // pred_check_branch
      %180 = sbr.rel (0) target = $region97
    $region96: #{tpu_custom_call.1} parent=1 // pred_region
      %181 = dma.done [#allocation15], 144
    $region97: #{tpu_custom_call.1} parent=1 // pred_fallthru
      _
    // Predicated region
    $region98: #{tpu_custom_call.1} parent=1 // pred_check
      _
    $region99: #{tpu_custom_call.1} parent=1 // pred_check_branch
      %183 = sbr.rel (0) target = $region101
    $region100: #{tpu_custom_call.1} parent=1 // pred_region
      %184 = dma.done [#allocation18], 576
    $region101: #{tpu_custom_call.1} parent=1 // pred_fallthru
      _
    // Predicated region
    $region102: #{tpu_custom_call.1} parent=1 // pred_check
      _
    $region103: #{tpu_custom_call.1} parent=1 // pred_check_branch
      %186 = sbr.rel (0) target = $region105
    $region104: #{tpu_custom_call.1} parent=1 // pred_region
      %187 = dma.done [#allocation18], 32
    $region105: #{tpu_custom_call.1} parent=1 // pred_fallthru
      _
    %v189 = vld [vmem:[#allocation2] sm:$0xff]
    %v190 = vld [vmem:[#allocation2 + $0x8] sm:$0xff]
    %v191 = vpack.c.bf16 %v189, %v189
    %v192 = vpack.c.bf16 %v190, %v190
    %v193 = vld [vmem:[#allocation5] sm:$0xff]
    %v194 = vld [vmem:[#allocation5 + $0x8] sm:$0xff]
    %v195 = vld [vmem:[#allocation5 + $0x10] sm:$0xff]
    %v196 = vld [vmem:[#allocation5 + $0x18] sm:$0xff]
    %v197 = vld [vmem:[#allocation5 + $0x20] sm:$0xff]
    %v198 = vld [vmem:[#allocation5 + $0x28] sm:$0xff]
    %v199 = vld [vmem:[#allocation5 + $0x30] sm:$0xff]
    %v200 = vld [vmem:[#allocation5 + $0x38] sm:$0xff]
    %v201 = vld [vmem:[#allocation5 + $0x40] sm:$0xff]
    %v202 = vld [vmem:[#allocation5 + $0x48] sm:$0xff]
    %v203 = vld [vmem:[#allocation5 + $0x50] sm:$0xff]
    %v204 = vld [vmem:[#allocation5 + $0x58] sm:$0xff]
    %v205 = vld [vmem:[#allocation5 + $0x60] sm:$0xff]
    %v206 = vld [vmem:[#allocation5 + $0x68] sm:$0xff]
    %v207 = vld [vmem:[#allocation5 + $0x70] sm:$0xff]
    %v208 = vld [vmem:[#allocation5 + $0x78] sm:$0xff]
    %v209 = vld [vmem:[#allocation5 + $0x80] sm:$0xff]
    %v210 = vld [vmem:[#allocation5 + $0x88] sm:$0xff]
    %v211 = vld [vmem:[#allocation5 + $0x90] sm:$0xff]
    %v212 = vld [vmem:[#allocation5 + $0x98] sm:$0xff]
    %v213 = vld [vmem:[#allocation5 + $0xa0] sm:$0xff]
    %v214 = vld [vmem:[#allocation5 + $0xa8] sm:$0xff]
    %v215 = vld [vmem:[#allocation5 + $0xb0] sm:$0xff]
    %v216 = vld [vmem:[#allocation5 + $0xb8] sm:$0xff]
    %v217 = vld [vmem:[#allocation5 + $0xc0] sm:$0xff]
    %v218 = vld [vmem:[#allocation5 + $0xc8] sm:$0xff]
    %v219 = vld [vmem:[#allocation5 + $0xd0] sm:$0xff]
    %v220 = vld [vmem:[#allocation5 + $0xd8] sm:$0xff]
    %v221 = vld [vmem:[#allocation5 + $0xe0] sm:$0xff]
    %v222 = vld [vmem:[#allocation5 + $0xe8] sm:$0xff]
    %v223 = vld [vmem:[#allocation5 + $0xf0] sm:$0xff]
    %v224 = vld [vmem:[#allocation5 + $0xf8] sm:$0xff]
    %v225 = vld [vmem:[#allocation7] sm:$0x3]
    %v227 = vlaneseq
    %v228 = vshrl.u32 %v227, 7
    %v229 = vsub.s32 0, %v228
    %v230 = vrot.slane %v225, %v229
    %v231 = vlaneseq
    %v232 = vshrl.u32 %v231, 7
    %v233 = vsub.s32 1, %v232
    %v234 = vrot.slane %v225, %v233
    %v269 = vunpack.c.l.b16 %v193
    %v270 = vunpack.c.h.b16 %v193
    %v271 = vunpack.c.l.b16 %v194
    %v272 = vunpack.c.h.b16 %v194
    %v273 = vunpack.c.l.b16 %v195
    %v274 = vunpack.c.h.b16 %v195
    %v275 = vunpack.c.l.b16 %v196
    %v276 = vunpack.c.h.b16 %v196
    %v277 = vunpack.c.l.b16 %v197
    %v278 = vunpack.c.h.b16 %v197
    %v279 = vunpack.c.l.b16 %v198
    %v280 = vunpack.c.h.b16 %v198
    %v281 = vunpack.c.l.b16 %v199
    %v282 = vunpack.c.h.b16 %v199
    %v283 = vunpack.c.l.b16 %v200
    %v284 = vunpack.c.h.b16 %v200
    %v285 = vunpack.c.l.b16 %v201
    %v286 = vunpack.c.h.b16 %v201
    %v287 = vunpack.c.l.b16 %v202
    %v288 = vunpack.c.h.b16 %v202
    %v289 = vunpack.c.l.b16 %v203
    %v290 = vunpack.c.h.b16 %v203
    %v291 = vunpack.c.l.b16 %v204
    %v292 = vunpack.c.h.b16 %v204
    %v293 = vunpack.c.l.b16 %v205
    %v294 = vunpack.c.h.b16 %v205
    %v295 = vunpack.c.l.b16 %v206
    %v296 = vunpack.c.h.b16 %v206
    %v297 = vunpack.c.l.b16 %v207
    %v298 = vunpack.c.h.b16 %v207
    %v299 = vunpack.c.l.b16 %v208
    %v300 = vunpack.c.h.b16 %v208
    %v301 = vunpack.c.l.b16 %v209
    %v302 = vunpack.c.h.b16 %v209
    %v303 = vunpack.c.l.b16 %v210
    %v304 = vunpack.c.h.b16 %v210
    %v305 = vunpack.c.l.b16 %v211
    %v306 = vunpack.c.h.b16 %v211
    %v307 = vunpack.c.l.b16 %v212
    %v308 = vunpack.c.h.b16 %v212
    %v309 = vunpack.c.l.b16 %v213
    %v310 = vunpack.c.h.b16 %v213
    %v311 = vunpack.c.l.b16 %v214
    %v312 = vunpack.c.h.b16 %v214
    %v313 = vunpack.c.l.b16 %v215
    %v314 = vunpack.c.h.b16 %v215
    %v315 = vunpack.c.l.b16 %v216
    %v316 = vunpack.c.h.b16 %v216
    %v317 = vunpack.c.l.b16 %v217
    %v318 = vunpack.c.h.b16 %v217
    %v319 = vunpack.c.l.b16 %v218
    %v320 = vunpack.c.h.b16 %v218
    %v321 = vunpack.c.l.b16 %v219
    %v322 = vunpack.c.h.b16 %v219
    %v323 = vunpack.c.l.b16 %v220
    %v324 = vunpack.c.h.b16 %v220
    %v325 = vunpack.c.l.b16 %v221
    %v326 = vunpack.c.h.b16 %v221
    %v327 = vunpack.c.l.b16 %v222
    %v328 = vunpack.c.h.b16 %v222
    %v329 = vunpack.c.l.b16 %v223
    %v330 = vunpack.c.h.b16 %v223
    %v331 = vunpack.c.l.b16 %v224
    %v332 = vunpack.c.h.b16 %v224
    %v333 = vpack.c.b16 %v271, %v269
    %v334 = vpack.c.b16 %v272, %v270
    %v335 = vpack.c.b16 %v275, %v273
    %v336 = vpack.c.b16 %v276, %v274
    %v337 = vpack.c.b16 %v279, %v277
    %v338 = vpack.c.b16 %v280, %v278
    %v339 = vpack.c.b16 %v283, %v281
    %v340 = vpack.c.b16 %v284, %v282
    %v341 = vpack.c.b16 %v287, %v285
    %v342 = vpack.c.b16 %v288, %v286
    %v343 = vpack.c.b16 %v291, %v289
    %v344 = vpack.c.b16 %v292, %v290
    %v345 = vpack.c.b16 %v295, %v293
    %v346 = vpack.c.b16 %v296, %v294
    %v347 = vpack.c.b16 %v299, %v297
    %v348 = vpack.c.b16 %v300, %v298
    %v349 = vpack.c.b16 %v303, %v301
    %v350 = vpack.c.b16 %v304, %v302
    %v351 = vpack.c.b16 %v307, %v305
    %v352 = vpack.c.b16 %v308, %v306
    %v353 = vpack.c.b16 %v311, %v309
    %v354 = vpack.c.b16 %v312, %v310
    %v355 = vpack.c.b16 %v315, %v313
    %v356 = vpack.c.b16 %v316, %v314
    %v357 = vpack.c.b16 %v319, %v317
    %v358 = vpack.c.b16 %v320, %v318
    %v359 = vpack.c.b16 %v323, %v321
    %v360 = vpack.c.b16 %v324, %v322
    %v361 = vpack.c.b16 %v327, %v325
    %v362 = vpack.c.b16 %v328, %v326
    %v363 = vpack.c.b16 %v331, %v329
    %v364 = vpack.c.b16 %v332, %v330
    %397 = vmatprep.subr.bf16.mxu0 %v334
    %398 = vmatpush1.bf16.msra.mxu0 %v333
    %399 = vmatprep.subr.bf16.mxu0 %v336
    %400 = vmatpush1.bf16.msra.mxu0 %v335
    %401 = vmatprep.subr.bf16.mxu0 %v338
    %402 = vmatpush1.bf16.msra.mxu0 %v337
    %403 = vmatprep.subr.bf16.mxu0 %v340
    %404 = vmatpush1.bf16.msra.mxu0 %v339
    %405 = vmatprep.subr.bf16.mxu0 %v342
    %406 = vmatpush1.bf16.msra.mxu0 %v341
    %407 = vmatprep.subr.bf16.mxu0 %v344
    %408 = vmatpush1.bf16.msra.mxu0 %v343
    %409 = vmatprep.subr.bf16.mxu0 %v346
    %410 = vmatpush1.bf16.msra.mxu0 %v345
    %411 = vmatprep.subr.bf16.mxu0 %v348
    %412 = vmatpush1.bf16.msra.mxu0 %v347
    %413 = vmatprep.subr.bf16.mxu0 %v350
    %414 = vmatpush1.bf16.msra.mxu0 %v349
    %415 = vmatprep.subr.bf16.mxu0 %v352
    %416 = vmatpush1.bf16.msra.mxu0 %v351
    %417 = vmatprep.subr.bf16.mxu0 %v354
    %418 = vmatpush1.bf16.msra.mxu0 %v353
    %419 = vmatprep.subr.bf16.mxu0 %v356
    %420 = vmatpush1.bf16.msra.mxu0 %v355
    %421 = vmatprep.subr.bf16.mxu0 %v358
    %422 = vmatpush1.bf16.msra.mxu0 %v357
    %423 = vmatprep.subr.bf16.mxu0 %v360
    %424 = vmatpush1.bf16.msra.mxu0 %v359
    %425 = vmatprep.subr.bf16.mxu0 %v362
    %426 = vmatpush1.bf16.msra.mxu0 %v361
    %427 = vmatprep.subr.bf16.mxu0 %v364
    %428 = vmatpush1.bf16.msra.mxu0 %v363
    %429 = vmatprep.mubr.bf16.mxu0 %v192
    %430 = vmatmul.mubr.bf16.gmra.mrb[0].mxu0 %v191
    %v431 = vpop.f32.mrb[0].mxu0
    %v432 = vadd.f32 %v230, %v431
    %v433 = vpop.f32.mrb[0].mxu0
    %v434 = vadd.f32 %v234, %v433
    %v435 = vpop.f32.mrb[0].mxu0
    %v436 = vpop.f32.mrb[0].mxu0
    %437 = vdwg.mxu0
    %v438 = vmul.f32 %v432, 0.1
    %v439 = vmul.f32 %v434, 0.1
    %v440 = vmax.f32 %v432, %v438
    %v441 = vmax.f32 %v434, %v439
    %v442 = vpack.c.bf16 %v440, %v440
    %v443 = vpack.c.bf16 %v441, %v441
    %v444 = vld [vmem:[%s3] sm:$0xf]
    %v445 = vld [vmem:[%s3 + $0x4] sm:$0xf]
    %v446 = vld [vmem:[%s3 + $0x8] sm:$0xf]
    %v447 = vld [vmem:[%s3 + $0xc] sm:$0xf]
    %v448 = vld [vmem:[%s3 + $0x10] sm:$0xf]
    %v449 = vld [vmem:[%s3 + $0x14] sm:$0xf]
    %v450 = vld [vmem:[%s3 + $0x18] sm:$0xf]
    %v451 = vld [vmem:[%s3 + $0x1c] sm:$0xf]
    %v452 = vld [vmem:[%s3 + $0x20] sm:$0xf]
    %v453 = vld [vmem:[%s3 + $0x24] sm:$0xf]
    %v454 = vld [vmem:[%s3 + $0x28] sm:$0xf]
    %v455 = vld [vmem:[%s3 + $0x2c] sm:$0xf]
    %v456 = vld [vmem:[%s3 + $0x30] sm:$0xf]
    %v457 = vld [vmem:[%s3 + $0x34] sm:$0xf]
    %v458 = vld [vmem:[%s3 + $0x38] sm:$0xf]
    %v459 = vld [vmem:[%s3 + $0x3c] sm:$0xf]
    %v460 = vld [vmem:[%s3 + $0x40] sm:$0xf]
    %v461 = vld [vmem:[%s3 + $0x44] sm:$0xf]
    %v462 = vld [vmem:[%s3 + $0x48] sm:$0xf]
    %v463 = vld [vmem:[%s3 + $0x4c] sm:$0xf]
    %v464 = vld [vmem:[%s3 + $0x50] sm:$0xf]
    %v465 = vld [vmem:[%s3 + $0x54] sm:$0xf]
    %v466 = vld [vmem:[%s3 + $0x58] sm:$0xf]
    %v467 = vld [vmem:[%s3 + $0x5c] sm:$0xf]
    %v468 = vld [vmem:[%s3 + $0x60] sm:$0xf]
    %v469 = vld [vmem:[%s3 + $0x64] sm:$0xf]
    %v470 = vld [vmem:[%s3 + $0x68] sm:$0xf]
    %v471 = vld [vmem:[%s3 + $0x6c] sm:$0xf]
    %v472 = vld [vmem:[%s3 + $0x70] sm:$0xf]
    %v473 = vld [vmem:[%s3 + $0x74] sm:$0xf]
    %v474 = vld [vmem:[%s3 + $0x78] sm:$0xf]
    %v475 = vld [vmem:[%s3 + $0x7c] sm:$0xf]
    %v508 = vunpack.c.l.b16 %v444
    %v509 = vunpack.c.l.b16 %v445
    %v510 = vunpack.c.l.b16 %v446
    %v511 = vunpack.c.l.b16 %v447
    %v512 = vunpack.c.l.b16 %v448
    %v513 = vunpack.c.l.b16 %v449
    %v514 = vunpack.c.l.b16 %v450
    %v515 = vunpack.c.l.b16 %v451
    %v516 = vunpack.c.l.b16 %v452
    %v517 = vunpack.c.l.b16 %v453
    %v518 = vunpack.c.l.b16 %v454
    %v519 = vunpack.c.l.b16 %v455
    %v520 = vunpack.c.l.b16 %v456
    %v521 = vunpack.c.l.b16 %v457
    %v522 = vunpack.c.l.b16 %v458
    %v523 = vunpack.c.l.b16 %v459
    %v524 = vunpack.c.l.b16 %v460
    %v525 = vunpack.c.l.b16 %v461
    %v526 = vunpack.c.l.b16 %v462
    %v527 = vunpack.c.l.b16 %v463
    %v528 = vunpack.c.l.b16 %v464
    %v529 = vunpack.c.l.b16 %v465
    %v530 = vunpack.c.l.b16 %v466
    %v531 = vunpack.c.l.b16 %v467
    %v532 = vunpack.c.l.b16 %v468
    %v533 = vunpack.c.l.b16 %v469
    %v534 = vunpack.c.l.b16 %v470
    %v535 = vunpack.c.l.b16 %v471
    %v536 = vunpack.c.l.b16 %v472
    %v537 = vunpack.c.l.b16 %v473
    %v538 = vunpack.c.l.b16 %v474
    %v539 = vunpack.c.l.b16 %v475
    %v540 = vpack.c.b16 %v509, %v508
    %v541 = vpack.c.b16 %v511, %v510
    %v542 = vpack.c.b16 %v513, %v512
    %v543 = vpack.c.b16 %v515, %v514
    %v544 = vpack.c.b16 %v517, %v516
    %v545 = vpack.c.b16 %v519, %v518
    %v546 = vpack.c.b16 %v521, %v520
    %v547 = vpack.c.b16 %v523, %v522
    %v548 = vpack.c.b16 %v525, %v524
    %v549 = vpack.c.b16 %v527, %v526
    %v550 = vpack.c.b16 %v529, %v528
    %v551 = vpack.c.b16 %v531, %v530
    %v552 = vpack.c.b16 %v533, %v532
    %v553 = vpack.c.b16 %v535, %v534
    %v554 = vpack.c.b16 %v537, %v536
    %v555 = vpack.c.b16 %v539, %v538
    %572 = vmatprep.subr.bf16.mxu0 0
    %573 = vmatpush1.bf16.msra.mxu0 %v540
    %574 = vmatprep.subr.bf16.mxu0 0
    %575 = vmatpush1.bf16.msra.mxu0 %v541
    %576 = vmatprep.subr.bf16.mxu0 0
    %577 = vmatpush1.bf16.msra.mxu0 %v542
    %578 = vmatprep.subr.bf16.mxu0 0
    %579 = vmatpush1.bf16.msra.mxu0 %v543
    %580 = vmatprep.subr.bf16.mxu0 0
    %581 = vmatpush1.bf16.msra.mxu0 %v544
    %582 = vmatprep.subr.bf16.mxu0 0
    %583 = vmatpush1.bf16.msra.mxu0 %v545
    %584 = vmatprep.subr.bf16.mxu0 0
    %585 = vmatpush1.bf16.msra.mxu0 %v546
    %586 = vmatprep.subr.bf16.mxu0 0
    %587 = vmatpush1.bf16.msra.mxu0 %v547
    %588 = vmatprep.subr.bf16.mxu0 0
    %589 = vmatpush1.bf16.msra.mxu0 %v548
    %590 = vmatprep.subr.bf16.mxu0 0
    %591 = vmatpush1.bf16.msra.mxu0 %v549
    %592 = vmatprep.subr.bf16.mxu0 0
    %593 = vmatpush1.bf16.msra.mxu0 %v550
    %594 = vmatprep.subr.bf16.mxu0 0
    %595 = vmatpush1.bf16.msra.mxu0 %v551
    %596 = vmatprep.subr.bf16.mxu0 0
    %597 = vmatpush1.bf16.msra.mxu0 %v552
    %598 = vmatprep.subr.bf16.mxu0 0
    %599 = vmatpush1.bf16.msra.mxu0 %v553
    %600 = vmatprep.subr.bf16.mxu0 0
    %601 = vmatpush1.bf16.msra.mxu0 %v554
    %602 = vmatprep.subr.bf16.mxu0 0
    %603 = vmatpush1.bf16.msra.mxu0 %v555
    %604 = vmatprep.mubr.bf16.mxu0 %v443
    %605 = vmatmul.mubr.bf16.gmra.mrb[0].mxu0 %v442
    %v606 = vpop.f32.mrb[0].mxu0
    %v607 = vadd.f32 0.0, %v606
    %v608 = vpop.f32.mrb[0].mxu0
    %v609 = vpop.f32.mrb[0].mxu0
    %v610 = vpop.f32.mrb[0].mxu0
    %611 = vdwg.mxu0
    %v612 = vmul.f32 %v607, 0.25
    %v613 = vpack.c.bf16 %v612, %v612
    %v614 = vld [vmem:[#allocation8] sm:$0xff]
    %v615 = vld [vmem:[#allocation8 + $0x8] sm:$0xff]
    %v616 = vld [vmem:[#allocation8 + $0x10] sm:$0xff]
    %v617 = vld [vmem:[#allocation8 + $0x18] sm:$0xff]
    %v618 = vld [vmem:[#allocation8 + $0x20] sm:$0xff]
    %v619 = vld [vmem:[#allocation8 + $0x28] sm:$0xff]
    %v620 = vld [vmem:[#allocation8 + $0x30] sm:$0xff]
    %v621 = vld [vmem:[#allocation8 + $0x38] sm:$0xff]
    %v630 = vunpack.c.l.b16 %v614
    %v631 = vunpack.c.h.b16 %v614
    %v632 = vunpack.c.l.b16 %v615
    %v633 = vunpack.c.h.b16 %v615
    %v634 = vunpack.c.l.b16 %v616
    %v635 = vunpack.c.h.b16 %v616
    %v636 = vunpack.c.l.b16 %v617
    %v637 = vunpack.c.h.b16 %v617
    %v638 = vunpack.c.l.b16 %v618
    %v639 = vunpack.c.h.b16 %v618
    %v640 = vunpack.c.l.b16 %v619
    %v641 = vunpack.c.h.b16 %v619
    %v642 = vunpack.c.l.b16 %v620
    %v643 = vunpack.c.h.b16 %v620
    %v644 = vunpack.c.l.b16 %v621
    %v645 = vunpack.c.h.b16 %v621
    %v646 = vpack.c.b16 %v632, %v630
    %v647 = vpack.c.b16 %v633, %v631
    %v648 = vpack.c.b16 %v636, %v634
    %v649 = vpack.c.b16 %v637, %v635
    %v650 = vpack.c.b16 %v640, %v638
    %v651 = vpack.c.b16 %v641, %v639
    %v652 = vpack.c.b16 %v644, %v642
    %v653 = vpack.c.b16 %v645, %v643
    %vm662 = vcmask 523264
    %v664 = vsel %vm662, %v613, 0
    %666 = vmatprep.subr.bf16.mxu0 %v647
    %667 = vmatpush1.bf16.msra.mxu0 %v646
    %668 = vmatprep.subr.bf16.mxu0 %v649
    %669 = vmatpush1.bf16.msra.mxu0 %v648
    %670 = vmatprep.subr.bf16.mxu0 %v651
    %671 = vmatpush1.bf16.msra.mxu0 %v650
    %672 = vmatprep.subr.bf16.mxu0 %v653
    %673 = vmatpush1.bf16.msra.mxu0 %v652
    %674 = vmatprep.subr.bf16.mxu0 0
    %675 = vmatpush1.bf16.msra.mxu0 0
    %676 = vmatprep.subr.bf16.mxu0 0
    %677 = vmatpush1.bf16.msra.mxu0 0
    %678 = vmatprep.subr.bf16.mxu0 0
    %679 = vmatpush1.bf16.msra.mxu0 0
    %680 = vmatprep.subr.bf16.mxu0 0
    %681 = vmatpush1.bf16.msra.mxu0 0
    %682 = vmatprep.subr.bf16.mxu0 0
    %683 = vmatpush1.bf16.msra.mxu0 0
    %684 = vmatprep.subr.bf16.mxu0 0
    %685 = vmatpush1.bf16.msra.mxu0 0
    %686 = vmatprep.subr.bf16.mxu0 0
    %687 = vmatpush1.bf16.msra.mxu0 0
    %688 = vmatprep.subr.bf16.mxu0 0
    %689 = vmatpush1.bf16.msra.mxu0 0
    %690 = vmatprep.subr.bf16.mxu0 0
    %691 = vmatpush1.bf16.msra.mxu0 0
    %692 = vmatprep.subr.bf16.mxu0 0
    %693 = vmatpush1.bf16.msra.mxu0 0
    %694 = vmatprep.subr.bf16.mxu0 0
    %695 = vmatpush1.bf16.msra.mxu0 0
    %696 = vmatprep.subr.bf16.mxu0 0
    %697 = vmatpush1.bf16.msra.mxu0 0
    %698 = vmatprep.mubr.bf16.mxu0 0
    %699 = vmatmul.mubr.bf16.gmra.mrb[0].mxu0 %v664
    %v700 = vpop.f32.mrb[0].mxu0
    %v701 = vadd.f32 0.0, %v700
    %v702 = vpop.f32.mrb[0].mxu0
    %v703 = vadd.f32 0.0, %v702
    %v704 = vpop.f32.mrb[0].mxu0
    %v705 = vpop.f32.mrb[0].mxu0
    %706 = vdwg.mxu0
    %v707 = vsub.f32 %v440, %v701
    %v708 = vsub.f32 %v441, %v703
    %v709 = vmul.f32 %v707, %v707
    %v710 = vmul.f32 %v708, %v708
    %v711 = vpack.c.bf16 %v709, %v709
    %v712 = vpack.c.bf16 %v710, %v710
    %713 = vmatprep.subr.bf16.mxu0 0
    %714 = vmatpush1.bf16.msra.mxu0 %v540
    %715 = vmatprep.subr.bf16.mxu0 0
    %716 = vmatpush1.bf16.msra.mxu0 %v541
    %717 = vmatprep.subr.bf16.mxu0 0
    %718 = vmatpush1.bf16.msra.mxu0 %v542
    %719 = vmatprep.subr.bf16.mxu0 0
    %720 = vmatpush1.bf16.msra.mxu0 %v543
    %721 = vmatprep.subr.bf16.mxu0 0
    %722 = vmatpush1.bf16.msra.mxu0 %v544
    %723 = vmatprep.subr.bf16.mxu0 0
    %724 = vmatpush1.bf16.msra.mxu0 %v545
    %725 = vmatprep.subr.bf16.mxu0 0
    %726 = vmatpush1.bf16.msra.mxu0 %v546
    %727 = vmatprep.subr.bf16.mxu0 0
    %728 = vmatpush1.bf16.msra.mxu0 %v547
    %729 = vmatprep.subr.bf16.mxu0 0
    %730 = vmatpush1.bf16.msra.mxu0 %v548
    %731 = vmatprep.subr.bf16.mxu0 0
    %732 = vmatpush1.bf16.msra.mxu0 %v549
    %733 = vmatprep.subr.bf16.mxu0 0
    %734 = vmatpush1.bf16.msra.mxu0 %v550
    %735 = vmatprep.subr.bf16.mxu0 0
    %736 = vmatpush1.bf16.msra.mxu0 %v551
    %737 = vmatprep.subr.bf16.mxu0 0
    %738 = vmatpush1.bf16.msra.mxu0 %v552
    %739 = vmatprep.subr.bf16.mxu0 0
    %740 = vmatpush1.bf16.msra.mxu0 %v553
    %741 = vmatprep.subr.bf16.mxu0 0
    %742 = vmatpush1.bf16.msra.mxu0 %v554
    %743 = vmatprep.subr.bf16.mxu0 0
    %744 = vmatpush1.bf16.msra.mxu0 %v555
    %745 = vmatprep.mubr.bf16.mxu0 %v712
    %746 = vmatmul.mubr.bf16.gmra.mrb[0].mxu0 %v711
    %v747 = vpop.f32.mrb[0].mxu0
    %v748 = vadd.f32 0.0, %v747
    %v749 = vpop.f32.mrb[0].mxu0
    %v750 = vpop.f32.mrb[0].mxu0
    %v751 = vpop.f32.mrb[0].mxu0
    %752 = vdwg.mxu0
    %v753 = vmul.f32 %v748, 0.25
    %v754 = vadd.f32 %v753, 1e-05
    %v755 = vrsqrt.pop %v754
    %v756 = vpack.c.bf16 %v755, %v755
    %v758 = vsel %vm662, %v756, 0
    %760 = vmatprep.subr.bf16.mxu0 %v647
    %761 = vmatpush1.bf16.msra.mxu0 %v646
    %762 = vmatprep.subr.bf16.mxu0 %v649
    %763 = vmatpush1.bf16.msra.mxu0 %v648
    %764 = vmatprep.subr.bf16.mxu0 %v651
    %765 = vmatpush1.bf16.msra.mxu0 %v650
    %766 = vmatprep.subr.bf16.mxu0 %v653
    %767 = vmatpush1.bf16.msra.mxu0 %v652
    %768 = vmatprep.subr.bf16.mxu0 0
    %769 = vmatpush1.bf16.msra.mxu0 0
    %770 = vmatprep.subr.bf16.mxu0 0
    %771 = vmatpush1.bf16.msra.mxu0 0
    %772 = vmatprep.subr.bf16.mxu0 0
    %773 = vmatpush1.bf16.msra.mxu0 0
    %774 = vmatprep.subr.bf16.mxu0 0
    %775 = vmatpush1.bf16.msra.mxu0 0
    %776 = vmatprep.subr.bf16.mxu0 0
    %777 = vmatpush1.bf16.msra.mxu0 0
    %778 = vmatprep.subr.bf16.mxu0 0
    %779 = vmatpush1.bf16.msra.mxu0 0
    %780 = vmatprep.subr.bf16.mxu0 0
    %781 = vmatpush1.bf16.msra.mxu0 0
    %782 = vmatprep.subr.bf16.mxu0 0
    %783 = vmatpush1.bf16.msra.mxu0 0
    %784 = vmatprep.subr.bf16.mxu0 0
    %785 = vmatpush1.bf16.msra.mxu0 0
    %786 = vmatprep.subr.bf16.mxu0 0
    %787 = vmatpush1.bf16.msra.mxu0 0
    %788 = vmatprep.subr.bf16.mxu0 0
    %789 = vmatpush1.bf16.msra.mxu0 0
    %790 = vmatprep.subr.bf16.mxu0 0
    %791 = vmatpush1.bf16.msra.mxu0 0
    %792 = vmatprep.mubr.bf16.mxu0 0
    %793 = vmatmul.mubr.bf16.gmra.mrb[0].mxu0 %v758
    %v794 = vpop.f32.mrb[0].mxu0
    %v795 = vadd.f32 0.0, %v794
    %v796 = vpop.f32.mrb[0].mxu0
    %v797 = vadd.f32 0.0, %v796
    %v798 = vpop.f32.mrb[0].mxu0
    %v799 = vpop.f32.mrb[0].mxu0
    %800 = vdwg.mxu0
    %v801 = vmul.f32 %v707, %v795
    %v802 = vmul.f32 %v708, %v797
    %v803 = vpack.c.bf16 %v801, %v801
    %v804 = vpack.c.bf16 %v802, %v802
    %v805 = vld [vmem:[#allocation10] sm:$0xff]
    %v806 = vld [vmem:[#allocation10 + $0x8] sm:$0xff]
    %v807 = vld [vmem:[#allocation10 + $0x10] sm:$0xff]
    %v808 = vld [vmem:[#allocation10 + $0x18] sm:$0xf]
    %v809 = vld [vmem:[#allocation10 + $0x1c] sm:$0xff]
    %v810 = vld [vmem:[#allocation10 + $0x24] sm:$0xff]
    %v811 = vld [vmem:[#allocation10 + $0x2c] sm:$0xff]
    %v812 = vld [vmem:[#allocation10 + $0x34] sm:$0xf]
    %v813 = vld [vmem:[#allocation10 + $0x38] sm:$0xff]
    %v814 = vld [vmem:[#allocation10 + $0x40] sm:$0xff]
    %v815 = vld [vmem:[#allocation10 + $0x48] sm:$0xff]
    %v816 = vld [vmem:[#allocation10 + $0x50] sm:$0xf]
    %v817 = vld [vmem:[#allocation10 + $0x54] sm:$0xff]
    %v818 = vld [vmem:[#allocation10 + $0x5c] sm:$0xff]
    %v819 = vld [vmem:[#allocation10 + $0x64] sm:$0xff]
    %v820 = vld [vmem:[#allocation10 + $0x6c] sm:$0xf]
    %v821 = vld [vmem:[#allocation10 + $0x70] sm:$0xff]
    %v822 = vld [vmem:[#allocation10 + $0x78] sm:$0xff]
    %v823 = vld [vmem:[#allocation10 + $0x80] sm:$0xff]
    %v824 = vld [vmem:[#allocation10 + $0x88] sm:$0xf]
    %v825 = vld [vmem:[#allocation10 + $0x8c] sm:$0xff]
    %v826 = vld [vmem:[#allocation10 + $0x94] sm:$0xff]
    %v827 = vld [vmem:[#allocation10 + $0x9c] sm:$0xff]
    %v828 = vld [vmem:[#allocation10 + $0xa4] sm:$0xf]
    %v829 = vld [vmem:[#allocation10 + $0xa8] sm:$0xff]
    %v830 = vld [vmem:[#allocation10 + $0xb0] sm:$0xff]
    %v831 = vld [vmem:[#allocation10 + $0xb8] sm:$0xff]
    %v832 = vld [vmem:[#allocation10 + $0xc0] sm:$0xf]
    %v833 = vld [vmem:[#allocation10 + $0xc4] sm:$0xff]
    %v834 = vld [vmem:[#allocation10 + $0xcc] sm:$0xff]
    %v835 = vld [vmem:[#allocation10 + $0xd4] sm:$0xff]
    %v836 = vld [vmem:[#allocation10 + $0xdc] sm:$0xf]
    %v837 = vld [vmem:[#allocation10 + $0xe0] sm:$0xff]
    %v838 = vld [vmem:[#allocation10 + $0xe8] sm:$0xff]
    %v839 = vld [vmem:[#allocation10 + $0xf0] sm:$0xff]
    %v840 = vld [vmem:[#allocation10 + $0xf8] sm:$0xf]
    %v841 = vld [vmem:[#allocation10 + $0xfc] sm:$0xff]
    %v842 = vld [vmem:[#allocation10 + $0x104] sm:$0xff]
    %v843 = vld [vmem:[#allocation10 + $0x10c] sm:$0xff]
    %v844 = vld [vmem:[#allocation10 + $0x114] sm:$0xf]
    %v845 = vld [vmem:[#allocation10 + $0x118] sm:$0xff]
    %v846 = vld [vmem:[#allocation10 + $0x120] sm:$0xff]
    %v847 = vld [vmem:[#allocation10 + $0x128] sm:$0xff]
    %v848 = vld [vmem:[#allocation10 + $0x130] sm:$0xf]
    %v849 = vld [vmem:[#allocation10 + $0x134] sm:$0xff]
    %v850 = vld [vmem:[#allocation10 + $0x13c] sm:$0xff]
    %v851 = vld [vmem:[#allocation10 + $0x144] sm:$0xff]
    %v852 = vld [vmem:[#allocation10 + $0x14c] sm:$0xf]
    %v853 = vld [vmem:[#allocation10 + $0x150] sm:$0xff]
    %v854 = vld [vmem:[#allocation10 + $0x158] sm:$0xff]
    %v855 = vld [vmem:[#allocation10 + $0x160] sm:$0xff]
    %v856 = vld [vmem:[#allocation10 + $0x168] sm:$0xf]
    %v857 = vld [vmem:[#allocation10 + $0x16c] sm:$0xff]
    %v858 = vld [vmem:[#allocation10 + $0x174] sm:$0xff]
    %v859 = vld [vmem:[#allocation10 + $0x17c] sm:$0xff]
    %v860 = vld [vmem:[#allocation10 + $0x184] sm:$0xf]
    %v861 = vld [vmem:[#allocation10 + $0x188] sm:$0xff]
    %v862 = vld [vmem:[#allocation10 + $0x190] sm:$0xff]
    %v863 = vld [vmem:[#allocation10 + $0x198] sm:$0xff]
    %v864 = vld [vmem:[#allocation10 + $0x1a0] sm:$0xf]
    %v865 = vld [vmem:[#allocation10 + $0x1a4] sm:$0xff]
    %v866 = vld [vmem:[#allocation10 + $0x1ac] sm:$0xff]
    %v867 = vld [vmem:[#allocation10 + $0x1b4] sm:$0xff]
    %v868 = vld [vmem:[#allocation10 + $0x1bc] sm:$0xf]
    %v869 = vld [vmem:[#allocation10 + $0x1c0] sm:$0xff]
    %v870 = vld [vmem:[#allocation10 + $0x1c8] sm:$0xff]
    %v871 = vld [vmem:[#allocation10 + $0x1d0] sm:$0xff]
    %v872 = vld [vmem:[#allocation10 + $0x1d8] sm:$0xf]
    %v873 = vld [vmem:[#allocation10 + $0x1dc] sm:$0xff]
    %v874 = vld [vmem:[#allocation10 + $0x1e4] sm:$0xff]
    %v875 = vld [vmem:[#allocation10 + $0x1ec] sm:$0xff]
    %v876 = vld [vmem:[#allocation10 + $0x1f4] sm:$0xf]
    %v877 = vld [vmem:[#allocation10 + $0x1f8] sm:$0xff]
    %v878 = vld [vmem:[#allocation10 + $0x200] sm:$0xff]
    %v879 = vld [vmem:[#allocation10 + $0x208] sm:$0xff]
    %v880 = vld [vmem:[#allocation10 + $0x210] sm:$0xf]
    %v881 = vld [vmem:[#allocation10 + $0x214] sm:$0xff]
    %v882 = vld [vmem:[#allocation10 + $0x21c] sm:$0xff]
    %v883 = vld [vmem:[#allocation10 + $0x224] sm:$0xff]
    %v884 = vld [vmem:[#allocation10 + $0x22c] sm:$0xf]
    %v885 = vld [vmem:[#allocation10 + $0x230] sm:$0xff]
    %v886 = vld [vmem:[#allocation10 + $0x238] sm:$0xff]
    %v887 = vld [vmem:[#allocation10 + $0x240] sm:$0xff]
    %v888 = vld [vmem:[#allocation10 + $0x248] sm:$0xf]
    %v889 = vld [vmem:[#allocation10 + $0x24c] sm:$0xff]
    %v890 = vld [vmem:[#allocation10 + $0x254] sm:$0xff]
    %v891 = vld [vmem:[#allocation10 + $0x25c] sm:$0xff]
    %v892 = vld [vmem:[#allocation10 + $0x264] sm:$0xf]
    %v893 = vld [vmem:[#allocation10 + $0x268] sm:$0xff]
    %v894 = vld [vmem:[#allocation10 + $0x270] sm:$0xff]
    %v895 = vld [vmem:[#allocation10 + $0x278] sm:$0xff]
    %v896 = vld [vmem:[#allocation10 + $0x280] sm:$0xf]
    %v897 = vld [vmem:[#allocation10 + $0x284] sm:$0xff]
    %v898 = vld [vmem:[#allocation10 + $0x28c] sm:$0xff]
    %v899 = vld [vmem:[#allocation10 + $0x294] sm:$0xff]
    %v900 = vld [vmem:[#allocation10 + $0x29c] sm:$0xf]
    %v901 = vld [vmem:[#allocation10 + $0x2a0] sm:$0xff]
    %v902 = vld [vmem:[#allocation10 + $0x2a8] sm:$0xff]
    %v903 = vld [vmem:[#allocation10 + $0x2b0] sm:$0xff]
    %v904 = vld [vmem:[#allocation10 + $0x2b8] sm:$0xf]
    %v905 = vld [vmem:[#allocation10 + $0x2bc] sm:$0xff]
    %v906 = vld [vmem:[#allocation10 + $0x2c4] sm:$0xff]
    %v907 = vld [vmem:[#allocation10 + $0x2cc] sm:$0xff]
    %v908 = vld [vmem:[#allocation10 + $0x2d4] sm:$0xf]
    %v909 = vld [vmem:[#allocation10 + $0x2d8] sm:$0xff]
    %v910 = vld [vmem:[#allocation10 + $0x2e0] sm:$0xff]
    %v911 = vld [vmem:[#allocation10 + $0x2e8] sm:$0xff]
    %v912 = vld [vmem:[#allocation10 + $0x2f0] sm:$0xf]
    %v913 = vld [vmem:[#allocation10 + $0x2f4] sm:$0xff]
    %v914 = vld [vmem:[#allocation10 + $0x2fc] sm:$0xff]
    %v915 = vld [vmem:[#allocation10 + $0x304] sm:$0xff]
    %v916 = vld [vmem:[#allocation10 + $0x30c] sm:$0xf]
    %v917 = vld [vmem:[#allocation10 + $0x310] sm:$0xff]
    %v918 = vld [vmem:[#allocation10 + $0x318] sm:$0xff]
    %v919 = vld [vmem:[#allocation10 + $0x320] sm:$0xff]
    %v920 = vld [vmem:[#allocation10 + $0x328] sm:$0xf]
    %v921 = vld [vmem:[#allocation10 + $0x32c] sm:$0xff]
    %v922 = vld [vmem:[#allocation10 + $0x334] sm:$0xff]
    %v923 = vld [vmem:[#allocation10 + $0x33c] sm:$0xff]
    %v924 = vld [vmem:[#allocation10 + $0x344] sm:$0xf]
    %v925 = vld [vmem:[#allocation10 + $0x348] sm:$0xff]
    %v926 = vld [vmem:[#allocation10 + $0x350] sm:$0xff]
    %v927 = vld [vmem:[#allocation10 + $0x358] sm:$0xff]
    %v928 = vld [vmem:[#allocation10 + $0x360] sm:$0xf]
    %v929 = vld [vmem:[#allocation10 + $0x364] sm:$0xff]
    %v930 = vld [vmem:[#allocation10 + $0x36c] sm:$0xff]
    %v931 = vld [vmem:[#allocation10 + $0x374] sm:$0xff]
    %v932 = vld [vmem:[#allocation10 + $0x37c] sm:$0xf]
    %v933 = vld [vmem:[#allocation11] sm:$0xff]
    %v935 = vlaneseq
    %v936 = vshrl.u32 %v935, 7
    %v937 = vsub.s32 0, %v936
    %v938 = vrot.slane %v933, %v937
    %v939 = vlaneseq
    %v940 = vshrl.u32 %v939, 7
    %v941 = vsub.s32 1, %v940
    %v942 = vrot.slane %v933, %v941
    %v943 = vlaneseq
    %v944 = vshrl.u32 %v943, 7
    %v945 = vsub.s32 2, %v944
    %v946 = vrot.slane %v933, %v945
    %v947 = vlaneseq
    %v948 = vshrl.u32 %v947, 7
    %v949 = vsub.s32 3, %v948
    %v950 = vrot.slane %v933, %v949
    %v951 = vlaneseq
    %v952 = vshrl.u32 %v951, 7
    %v953 = vsub.s32 4, %v952
    %v954 = vrot.slane %v933, %v953
    %v955 = vlaneseq
    %v956 = vshrl.u32 %v955, 7
    %v957 = vsub.s32 5, %v956
    %v958 = vrot.slane %v933, %v957
    %v959 = vlaneseq
    %v960 = vshrl.u32 %v959, 7
    %v961 = vsub.s32 6, %v960
    %v962 = vrot.slane %v933, %v961
    %v1098 = vunpack.c.l.b16 %v805
    %v1099 = vunpack.c.h.b16 %v805
    %v1100 = vunpack.c.l.b16 %v806
    %v1101 = vunpack.c.h.b16 %v806
    %v1102 = vunpack.c.l.b16 %v807
    %v1103 = vunpack.c.h.b16 %v807
    %v1104 = vunpack.c.l.b16 %v808
    %v1105 = vunpack.c.l.b16 %v809
    %v1106 = vunpack.c.h.b16 %v809
    %v1107 = vunpack.c.l.b16 %v810
    %v1108 = vunpack.c.h.b16 %v810
    %v1109 = vunpack.c.l.b16 %v811
    %v1110 = vunpack.c.h.b16 %v811
    %v1111 = vunpack.c.l.b16 %v812
    %v1112 = vunpack.c.l.b16 %v813
    %v1113 = vunpack.c.h.b16 %v813
    %v1114 = vunpack.c.l.b16 %v814
    %v1115 = vunpack.c.h.b16 %v814
    %v1116 = vunpack.c.l.b16 %v815
    %v1117 = vunpack.c.h.b16 %v815
    %v1118 = vunpack.c.l.b16 %v816
    %v1119 = vunpack.c.l.b16 %v817
    %v1120 = vunpack.c.h.b16 %v817
    %v1121 = vunpack.c.l.b16 %v818
    %v1122 = vunpack.c.h.b16 %v818
    %v1123 = vunpack.c.l.b16 %v819
    %v1124 = vunpack.c.h.b16 %v819
    %v1125 = vunpack.c.l.b16 %v820
    %v1126 = vunpack.c.l.b16 %v821
    %v1127 = vunpack.c.h.b16 %v821
    %v1128 = vunpack.c.l.b16 %v822
    %v1129 = vunpack.c.h.b16 %v822
    %v1130 = vunpack.c.l.b16 %v823
    %v1131 = vunpack.c.h.b16 %v823
    %v1132 = vunpack.c.l.b16 %v824
    %v1133 = vunpack.c.l.b16 %v825
    %v1134 = vunpack.c.h.b16 %v825
    %v1135 = vunpack.c.l.b16 %v826
    %v1136 = vunpack.c.h.b16 %v826
    %v1137 = vunpack.c.l.b16 %v827
    %v1138 = vunpack.c.h.b16 %v827
    %v1139 = vunpack.c.l.b16 %v828
    %v1140 = vunpack.c.l.b16 %v829
    %v1141 = vunpack.c.h.b16 %v829
    %v1142 = vunpack.c.l.b16 %v830
    %v1143 = vunpack.c.h.b16 %v830
    %v1144 = vunpack.c.l.b16 %v831
    %v1145 = vunpack.c.h.b16 %v831
    %v1146 = vunpack.c.l.b16 %v832
    %v1147 = vunpack.c.l.b16 %v833
    %v1148 = vunpack.c.h.b16 %v833
    %v1149 = vunpack.c.l.b16 %v834
    %v1150 = vunpack.c.h.b16 %v834
    %v1151 = vunpack.c.l.b16 %v835
    %v1152 = vunpack.c.h.b16 %v835
    %v1153 = vunpack.c.l.b16 %v836
    %v1154 = vunpack.c.l.b16 %v837
    %v1155 = vunpack.c.h.b16 %v837
    %v1156 = vunpack.c.l.b16 %v838
    %v1157 = vunpack.c.h.b16 %v838
    %v1158 = vunpack.c.l.b16 %v839
    %v1159 = vunpack.c.h.b16 %v839
    %v1160 = vunpack.c.l.b16 %v840
    %v1161 = vunpack.c.l.b16 %v841
    %v1162 = vunpack.c.h.b16 %v841
    %v1163 = vunpack.c.l.b16 %v842
    %v1164 = vunpack.c.h.b16 %v842
    %v1165 = vunpack.c.l.b16 %v843
    %v1166 = vunpack.c.h.b16 %v843
    %v1167 = vunpack.c.l.b16 %v844
    %v1168 = vunpack.c.l.b16 %v845
    %v1169 = vunpack.c.h.b16 %v845
    %v1170 = vunpack.c.l.b16 %v846
    %v1171 = vunpack.c.h.b16 %v846
    %v1172 = vunpack.c.l.b16 %v847
    %v1173 = vunpack.c.h.b16 %v847
    %v1174 = vunpack.c.l.b16 %v848
    %v1175 = vunpack.c.l.b16 %v849
    %v1176 = vunpack.c.h.b16 %v849
    %v1177 = vunpack.c.l.b16 %v850
    %v1178 = vunpack.c.h.b16 %v850
    %v1179 = vunpack.c.l.b16 %v851
    %v1180 = vunpack.c.h.b16 %v851
    %v1181 = vunpack.c.l.b16 %v852
    %v1182 = vunpack.c.l.b16 %v853
    %v1183 = vunpack.c.h.b16 %v853
    %v1184 = vunpack.c.l.b16 %v854
    %v1185 = vunpack.c.h.b16 %v854
    %v1186 = vunpack.c.l.b16 %v855
    %v1187 = vunpack.c.h.b16 %v855
    %v1188 = vunpack.c.l.b16 %v856
    %v1189 = vunpack.c.l.b16 %v857
    %v1190 = vunpack.c.h.b16 %v857
    %v1191 = vunpack.c.l.b16 %v858
    %v1192 = vunpack.c.h.b16 %v858
    %v1193 = vunpack.c.l.b16 %v859
    %v1194 = vunpack.c.h.b16 %v859
    %v1195 = vunpack.c.l.b16 %v860
    %v1196 = vunpack.c.l.b16 %v861
    %v1197 = vunpack.c.h.b16 %v861
    %v1198 = vunpack.c.l.b16 %v862
    %v1199 = vunpack.c.h.b16 %v862
    %v1200 = vunpack.c.l.b16 %v863
    %v1201 = vunpack.c.h.b16 %v863
    %v1202 = vunpack.c.l.b16 %v864
    %v1203 = vunpack.c.l.b16 %v865
    %v1204 = vunpack.c.h.b16 %v865
    %v1205 = vunpack.c.l.b16 %v866
    %v1206 = vunpack.c.h.b16 %v866
    %v1207 = vunpack.c.l.b16 %v867
    %v1208 = vunpack.c.h.b16 %v867
    %v1209 = vunpack.c.l.b16 %v868
    %v1210 = vunpack.c.l.b16 %v869
    %v1211 = vunpack.c.h.b16 %v869
    %v1212 = vunpack.c.l.b16 %v870
    %v1213 = vunpack.c.h.b16 %v870
    %v1214 = vunpack.c.l.b16 %v871
    %v1215 = vunpack.c.h.b16 %v871
    %v1216 = vunpack.c.l.b16 %v872
    %v1217 = vunpack.c.l.b16 %v873
    %v1218 = vunpack.c.h.b16 %v873
    %v1219 = vunpack.c.l.b16 %v874
    %v1220 = vunpack.c.h.b16 %v874
    %v1221 = vunpack.c.l.b16 %v875
    %v1222 = vunpack.c.h.b16 %v875
    %v1223 = vunpack.c.l.b16 %v876
    %v1224 = vunpack.c.l.b16 %v877
    %v1225 = vunpack.c.h.b16 %v877
    %v1226 = vunpack.c.l.b16 %v878
    %v1227 = vunpack.c.h.b16 %v878
    %v1228 = vunpack.c.l.b16 %v879
    %v1229 = vunpack.c.h.b16 %v879
    %v1230 = vunpack.c.l.b16 %v880
    %v1231 = vunpack.c.l.b16 %v881
    %v1232 = vunpack.c.h.b16 %v881
    %v1233 = vunpack.c.l.b16 %v882
    %v1234 = vunpack.c.h.b16 %v882
    %v1235 = vunpack.c.l.b16 %v883
    %v1236 = vunpack.c.h.b16 %v883
    %v1237 = vunpack.c.l.b16 %v884
    %v1238 = vunpack.c.l.b16 %v885
    %v1239 = vunpack.c.h.b16 %v885
    %v1240 = vunpack.c.l.b16 %v886
    %v1241 = vunpack.c.h.b16 %v886
    %v1242 = vunpack.c.l.b16 %v887
    %v1243 = vunpack.c.h.b16 %v887
    %v1244 = vunpack.c.l.b16 %v888
    %v1245 = vunpack.c.l.b16 %v889
    %v1246 = vunpack.c.h.b16 %v889
    %v1247 = vunpack.c.l.b16 %v890
    %v1248 = vunpack.c.h.b16 %v890
    %v1249 = vunpack.c.l.b16 %v891
    %v1250 = vunpack.c.h.b16 %v891
    %v1251 = vunpack.c.l.b16 %v892
    %v1252 = vunpack.c.l.b16 %v893
    %v1253 = vunpack.c.h.b16 %v893
    %v1254 = vunpack.c.l.b16 %v894
    %v1255 = vunpack.c.h.b16 %v894
    %v1256 = vunpack.c.l.b16 %v895
    %v1257 = vunpack.c.h.b16 %v895
    %v1258 = vunpack.c.l.b16 %v896
    %v1259 = vunpack.c.l.b16 %v897
    %v1260 = vunpack.c.h.b16 %v897
    %v1261 = vunpack.c.l.b16 %v898
    %v1262 = vunpack.c.h.b16 %v898
    %v1263 = vunpack.c.l.b16 %v899
    %v1264 = vunpack.c.h.b16 %v899
    %v1265 = vunpack.c.l.b16 %v900
    %v1266 = vunpack.c.l.b16 %v901
    %v1267 = vunpack.c.h.b16 %v901
    %v1268 = vunpack.c.l.b16 %v902
    %v1269 = vunpack.c.h.b16 %v902
    %v1270 = vunpack.c.l.b16 %v903
    %v1271 = vunpack.c.h.b16 %v903
    %v1272 = vunpack.c.l.b16 %v904
    %v1273 = vunpack.c.l.b16 %v905
    %v1274 = vunpack.c.h.b16 %v905
    %v1275 = vunpack.c.l.b16 %v906
    %v1276 = vunpack.c.h.b16 %v906
    %v1277 = vunpack.c.l.b16 %v907
    %v1278 = vunpack.c.h.b16 %v907
    %v1279 = vunpack.c.l.b16 %v908
    %v1280 = vunpack.c.l.b16 %v909
    %v1281 = vunpack.c.h.b16 %v909
    %v1282 = vunpack.c.l.b16 %v910
    %v1283 = vunpack.c.h.b16 %v910
    %v1284 = vunpack.c.l.b16 %v911
    %v1285 = vunpack.c.h.b16 %v911
    %v1286 = vunpack.c.l.b16 %v912
    %v1287 = vunpack.c.l.b16 %v913
    %v1288 = vunpack.c.h.b16 %v913
    %v1289 = vunpack.c.l.b16 %v914
    %v1290 = vunpack.c.h.b16 %v914
    %v1291 = vunpack.c.l.b16 %v915
    %v1292 = vunpack.c.h.b16 %v915
    %v1293 = vunpack.c.l.b16 %v916
    %v1294 = vunpack.c.l.b16 %v917
    %v1295 = vunpack.c.h.b16 %v917
    %v1296 = vunpack.c.l.b16 %v918
    %v1297 = vunpack.c.h.b16 %v918
    %v1298 = vunpack.c.l.b16 %v919
    %v1299 = vunpack.c.h.b16 %v919
    %v1300 = vunpack.c.l.b16 %v920
    %v1301 = vunpack.c.l.b16 %v921
    %v1302 = vunpack.c.h.b16 %v921
    %v1303 = vunpack.c.l.b16 %v922
    %v1304 = vunpack.c.h.b16 %v922
    %v1305 = vunpack.c.l.b16 %v923
    %v1306 = vunpack.c.h.b16 %v923
    %v1307 = vunpack.c.l.b16 %v924
    %v1308 = vunpack.c.l.b16 %v925
    %v1309 = vunpack.c.h.b16 %v925
    %v1310 = vunpack.c.l.b16 %v926
    %v1311 = vunpack.c.h.b16 %v926
    %v1312 = vunpack.c.l.b16 %v927
    %v1313 = vunpack.c.h.b16 %v927
    %v1314 = vunpack.c.l.b16 %v928
    %v1315 = vunpack.c.l.b16 %v929
    %v1316 = vunpack.c.h.b16 %v929
    %v1317 = vunpack.c.l.b16 %v930
    %v1318 = vunpack.c.h.b16 %v930
    %v1319 = vunpack.c.l.b16 %v931
    %v1320 = vunpack.c.h.b16 %v931
    %v1321 = vunpack.c.l.b16 %v932
    %v1322 = vpack.c.b16 %v1105, %v1098
    %v1323 = vpack.c.b16 %v1106, %v1099
    %v1324 = vpack.c.b16 %v1107, %v1100
    %v1325 = vpack.c.b16 %v1108, %v1101
    %v1326 = vpack.c.b16 %v1109, %v1102
    %v1327 = vpack.c.b16 %v1110, %v1103
    %v1328 = vpack.c.b16 %v1111, %v1104
    %v1329 = vpack.c.b16 %v1119, %v1112
    %v1330 = vpack.c.b16 %v1120, %v1113
    %v1331 = vpack.c.b16 %v1121, %v1114
    %v1332 = vpack.c.b16 %v1122, %v1115
    %v1333 = vpack.c.b16 %v1123, %v1116
    %v1334 = vpack.c.b16 %v1124, %v1117
    %v1335 = vpack.c.b16 %v1125, %v1118
    %v1336 = vpack.c.b16 %v1133, %v1126
    %v1337 = vpack.c.b16 %v1134, %v1127
    %v1338 = vpack.c.b16 %v1135, %v1128
    %v1339 = vpack.c.b16 %v1136, %v1129
    %v1340 = vpack.c.b16 %v1137, %v1130
    %v1341 = vpack.c.b16 %v1138, %v1131
    %v1342 = vpack.c.b16 %v1139, %v1132
    %v1343 = vpack.c.b16 %v1147, %v1140
    %v1344 = vpack.c.b16 %v1148, %v1141
    %v1345 = vpack.c.b16 %v1149, %v1142
    %v1346 = vpack.c.b16 %v1150, %v1143
    %v1347 = vpack.c.b16 %v1151, %v1144
    %v1348 = vpack.c.b16 %v1152, %v1145
    %v1349 = vpack.c.b16 %v1153, %v1146
    %v1350 = vpack.c.b16 %v1161, %v1154
    %v1351 = vpack.c.b16 %v1162, %v1155
    %v1352 = vpack.c.b16 %v1163, %v1156
    %v1353 = vpack.c.b16 %v1164, %v1157
    %v1354 = vpack.c.b16 %v1165, %v1158
    %v1355 = vpack.c.b16 %v1166, %v1159
    %v1356 = vpack.c.b16 %v1167, %v1160
    %v1357 = vpack.c.b16 %v1175, %v1168
    %v1358 = vpack.c.b16 %v1176, %v1169
    %v1359 = vpack.c.b16 %v1177, %v1170
    %v1360 = vpack.c.b16 %v1178, %v1171
    %v1361 = vpack.c.b16 %v1179, %v1172
    %v1362 = vpack.c.b16 %v1180, %v1173
    %v1363 = vpack.c.b16 %v1181, %v1174
    %v1364 = vpack.c.b16 %v1189, %v1182
    %v1365 = vpack.c.b16 %v1190, %v1183
    %v1366 = vpack.c.b16 %v1191, %v1184
    %v1367 = vpack.c.b16 %v1192, %v1185
    %v1368 = vpack.c.b16 %v1193, %v1186
    %v1369 = vpack.c.b16 %v1194, %v1187
    %v1370 = vpack.c.b16 %v1195, %v1188
    %v1371 = vpack.c.b16 %v1203, %v1196
    %v1372 = vpack.c.b16 %v1204, %v1197
    %v1373 = vpack.c.b16 %v1205, %v1198
    %v1374 = vpack.c.b16 %v1206, %v1199
    %v1375 = vpack.c.b16 %v1207, %v1200
    %v1376 = vpack.c.b16 %v1208, %v1201
    %v1377 = vpack.c.b16 %v1209, %v1202
    %v1378 = vpack.c.b16 %v1217, %v1210
    %v1379 = vpack.c.b16 %v1218, %v1211
    %v1380 = vpack.c.b16 %v1219, %v1212
    %v1381 = vpack.c.b16 %v1220, %v1213
    %v1382 = vpack.c.b16 %v1221, %v1214
    %v1383 = vpack.c.b16 %v1222, %v1215
    %v1384 = vpack.c.b16 %v1223, %v1216
    %v1385 = vpack.c.b16 %v1231, %v1224
    %v1386 = vpack.c.b16 %v1232, %v1225
    %v1387 = vpack.c.b16 %v1233, %v1226
    %v1388 = vpack.c.b16 %v1234, %v1227
    %v1389 = vpack.c.b16 %v1235, %v1228
    %v1390 = vpack.c.b16 %v1236, %v1229
    %v1391 = vpack.c.b16 %v1237, %v1230
    %v1392 = vpack.c.b16 %v1245, %v1238
    %v1393 = vpack.c.b16 %v1246, %v1239
    %v1394 = vpack.c.b16 %v1247, %v1240
    %v1395 = vpack.c.b16 %v1248, %v1241
    %v1396 = vpack.c.b16 %v1249, %v1242
    %v1397 = vpack.c.b16 %v1250, %v1243
    %v1398 = vpack.c.b16 %v1251, %v1244
    %v1399 = vpack.c.b16 %v1259, %v1252
    %v1400 = vpack.c.b16 %v1260, %v1253
    %v1401 = vpack.c.b16 %v1261, %v1254
    %v1402 = vpack.c.b16 %v1262, %v1255
    %v1403 = vpack.c.b16 %v1263, %v1256
    %v1404 = vpack.c.b16 %v1264, %v1257
    %v1405 = vpack.c.b16 %v1265, %v1258
    %v1406 = vpack.c.b16 %v1273, %v1266
    %v1407 = vpack.c.b16 %v1274, %v1267
    %v1408 = vpack.c.b16 %v1275, %v1268
    %v1409 = vpack.c.b16 %v1276, %v1269
    %v1410 = vpack.c.b16 %v1277, %v1270
    %v1411 = vpack.c.b16 %v1278, %v1271
    %v1412 = vpack.c.b16 %v1279, %v1272
    %v1413 = vpack.c.b16 %v1287, %v1280
    %v1414 = vpack.c.b16 %v1288, %v1281
    %v1415 = vpack.c.b16 %v1289, %v1282
    %v1416 = vpack.c.b16 %v1290, %v1283
    %v1417 = vpack.c.b16 %v1291, %v1284
    %v1418 = vpack.c.b16 %v1292, %v1285
    %v1419 = vpack.c.b16 %v1293, %v1286
    %v1420 = vpack.c.b16 %v1301, %v1294
    %v1421 = vpack.c.b16 %v1302, %v1295
    %v1422 = vpack.c.b16 %v1303, %v1296
    %v1423 = vpack.c.b16 %v1304, %v1297
    %v1424 = vpack.c.b16 %v1305, %v1298
    %v1425 = vpack.c.b16 %v1306, %v1299
    %v1426 = vpack.c.b16 %v1307, %v1300
    %v1427 = vpack.c.b16 %v1315, %v1308
    %v1428 = vpack.c.b16 %v1316, %v1309
    %v1429 = vpack.c.b16 %v1317, %v1310
    %v1430 = vpack.c.b16 %v1318, %v1311
    %v1431 = vpack.c.b16 %v1319, %v1312
    %v1432 = vpack.c.b16 %v1320, %v1313
    %v1433 = vpack.c.b16 %v1321, %v1314
    %1546 = vmatprep.subr.bf16.mxu0 %v1323
    %1547 = vmatpush1.bf16.msra.mxu0 %v1322
    %1548 = vmatprep.subr.bf16.mxu0 %v1330
    %1549 = vmatpush1.bf16.msra.mxu0 %v1329
    %1550 = vmatprep.subr.bf16.mxu0 %v1337
    %1551 = vmatpush1.bf16.msra.mxu0 %v1336
    %1552 = vmatprep.subr.bf16.mxu0 %v1344
    %1553 = vmatpush1.bf16.msra.mxu0 %v1343
    %1554 = vmatprep.subr.bf16.mxu0 %v1351
    %1555 = vmatpush1.bf16.msra.mxu0 %v1350
    %1556 = vmatprep.subr.bf16.mxu0 %v1358
    %1557 = vmatpush1.bf16.msra.mxu0 %v1357
    %1558 = vmatprep.subr.bf16.mxu0 %v1365
    %1559 = vmatpush1.bf16.msra.mxu0 %v1364
    %1560 = vmatprep.subr.bf16.mxu0 %v1372
    %1561 = vmatpush1.bf16.msra.mxu0 %v1371
    %1562 = vmatprep.subr.bf16.mxu0 %v1379
    %1563 = vmatpush1.bf16.msra.mxu0 %v1378
    %1564 = vmatprep.subr.bf16.mxu0 %v1386
    %1565 = vmatpush1.bf16.msra.mxu0 %v1385
    %1566 = vmatprep.subr.bf16.mxu0 %v1393
    %1567 = vmatpush1.bf16.msra.mxu0 %v1392
    %1568 = vmatprep.subr.bf16.mxu0 %v1400
    %1569 = vmatpush1.bf16.msra.mxu0 %v1399
    %1570 = vmatprep.subr.bf16.mxu0 %v1407
    %1571 = vmatpush1.bf16.msra.mxu0 %v1406
    %1572 = vmatprep.subr.bf16.mxu0 %v1414
    %1573 = vmatpush1.bf16.msra.mxu0 %v1413
    %1574 = vmatprep.subr.bf16.mxu0 %v1421
    %1575 = vmatpush1.bf16.msra.mxu0 %v1420
    %1576 = vmatprep.subr.bf16.mxu0 %v1428
    %1577 = vmatpush1.bf16.msra.mxu0 %v1427
    %1578 = vmatprep.mubr.bf16.mxu0 %v804
    %1579 = vmatmul.mubr.bf16.gmra.mrb[0].mxu0 %v803
    %v1580 = vpop.f32.mrb[0].mxu0
    %v1581 = vadd.f32 %v938, %v1580
    %v1582 = vpop.f32.mrb[0].mxu0
    %v1583 = vadd.f32 %v942, %v1582
    %v1584 = vpop.f32.mrb[0].mxu0
    %v1585 = vpop.f32.mrb[0].mxu0
    %1586 = vdwg.mxu0
    %1587 = vmatprep.subr.bf16.mxu0 %v1325
    %1588 = vmatpush1.bf16.msra.mxu0 %v1324
    %1589 = vmatprep.subr.bf16.mxu0 %v1332
    %1590 = vmatpush1.bf16.msra.mxu0 %v1331
    %1591 = vmatprep.subr.bf16.mxu0 %v1339
    %1592 = vmatpush1.bf16.msra.mxu0 %v1338
    %1593 = vmatprep.subr.bf16.mxu0 %v1346
    %1594 = vmatpush1.bf16.msra.mxu0 %v1345
    %1595 = vmatprep.subr.bf16.mxu0 %v1353
    %1596 = vmatpush1.bf16.msra.mxu0 %v1352
    %1597 = vmatprep.subr.bf16.mxu0 %v1360
    %1598 = vmatpush1.bf16.msra.mxu0 %v1359
    %1599 = vmatprep.subr.bf16.mxu0 %v1367
    %1600 = vmatpush1.bf16.msra.mxu0 %v1366
    %1601 = vmatprep.subr.bf16.mxu0 %v1374
    %1602 = vmatpush1.bf16.msra.mxu0 %v1373
    %1603 = vmatprep.subr.bf16.mxu0 %v1381
    %1604 = vmatpush1.bf16.msra.mxu0 %v1380
    %1605 = vmatprep.subr.bf16.mxu0 %v1388
    %1606 = vmatpush1.bf16.msra.mxu0 %v1387
    %1607 = vmatprep.subr.bf16.mxu0 %v1395
    %1608 = vmatpush1.bf16.msra.mxu0 %v1394
    %1609 = vmatprep.subr.bf16.mxu0 %v1402
    %1610 = vmatpush1.bf16.msra.mxu0 %v1401
    %1611 = vmatprep.subr.bf16.mxu0 %v1409
    %1612 = vmatpush1.bf16.msra.mxu0 %v1408
    %1613 = vmatprep.subr.bf16.mxu0 %v1416
    %1614 = vmatpush1.bf16.msra.mxu0 %v1415
    %1615 = vmatprep.subr.bf16.mxu0 %v1423
    %1616 = vmatpush1.bf16.msra.mxu0 %v1422
    %1617 = vmatprep.subr.bf16.mxu0 %v1430
    %1618 = vmatpush1.bf16.msra.mxu0 %v1429
    %1619 = vmatprep.mubr.bf16.mxu0 %v804
    %1620 = vmatmul.mubr.bf16.gmra.mrb[0].mxu0 %v803
    %v1621 = vpop.f32.mrb[0].mxu0
    %v1622 = vadd.f32 %v946, %v1621
    %v1623 = vpop.f32.mrb[0].mxu0
    %v1624 = vadd.f32 %v950, %v1623
    %v1625 = vpop.f32.mrb[0].mxu0
    %v1626 = vpop.f32.mrb[0].mxu0
    %1627 = vdwg.mxu0
    %1628 = vmatprep.subr.bf16.mxu0 %v1327
    %1629 = vmatpush1.bf16.msra.mxu0 %v1326
    %1630 = vmatprep.subr.bf16.mxu0 %v1334
    %1631 = vmatpush1.bf16.msra.mxu0 %v1333
    %1632 = vmatprep.subr.bf16.mxu0 %v1341
    %1633 = vmatpush1.bf16.msra.mxu0 %v1340
    %1634 = vmatprep.subr.bf16.mxu0 %v1348
    %1635 = vmatpush1.bf16.msra.mxu0 %v1347
    %1636 = vmatprep.subr.bf16.mxu0 %v1355
    %1637 = vmatpush1.bf16.msra.mxu0 %v1354
    %1638 = vmatprep.subr.bf16.mxu0 %v1362
    %1639 = vmatpush1.bf16.msra.mxu0 %v1361
    %1640 = vmatprep.subr.bf16.mxu0 %v1369
    %1641 = vmatpush1.bf16.msra.mxu0 %v1368
    %1642 = vmatprep.subr.bf16.mxu0 %v1376
    %1643 = vmatpush1.bf16.msra.mxu0 %v1375
    %1644 = vmatprep.subr.bf16.mxu0 %v1383
    %1645 = vmatpush1.bf16.msra.mxu0 %v1382
    %1646 = vmatprep.subr.bf16.mxu0 %v1390
    %1647 = vmatpush1.bf16.msra.mxu0 %v1389
    %1648 = vmatprep.subr.bf16.mxu0 %v1397
    %1649 = vmatpush1.bf16.msra.mxu0 %v1396
    %1650 = vmatprep.subr.bf16.mxu0 %v1404
    %1651 = vmatpush1.bf16.msra.mxu0 %v1403
    %1652 = vmatprep.subr.bf16.mxu0 %v1411
    %1653 = vmatpush1.bf16.msra.mxu0 %v1410
    %1654 = vmatprep.subr.bf16.mxu0 %v1418
    %1655 = vmatpush1.bf16.msra.mxu0 %v1417
    %1656 = vmatprep.subr.bf16.mxu0 %v1425
    %1657 = vmatpush1.bf16.msra.mxu0 %v1424
    %1658 = vmatprep.subr.bf16.mxu0 %v1432
    %1659 = vmatpush1.bf16.msra.mxu0 %v1431
    %1660 = vmatprep.mubr.bf16.mxu0 %v804
    %1661 = vmatmul.mubr.bf16.gmra.mrb[0].mxu0 %v803
    %v1662 = vpop.f32.mrb[0].mxu0
    %v1663 = vadd.f32 %v954, %v1662
    %v1664 = vpop.f32.mrb[0].mxu0
    %v1665 = vadd.f32 %v958, %v1664
    %v1666 = vpop.f32.mrb[0].mxu0
    %v1667 = vpop.f32.mrb[0].mxu0
    %1668 = vdwg.mxu0
    %1669 = vmatprep.subr.bf16.mxu0 0
    %1670 = vmatpush1.bf16.msra.mxu0 %v1328
    %1671 = vmatprep.subr.bf16.mxu0 0
    %1672 = vmatpush1.bf16.msra.mxu0 %v1335
    %1673 = vmatprep.subr.bf16.mxu0 0
    %1674 = vmatpush1.bf16.msra.mxu0 %v1342
    %1675 = vmatprep.subr.bf16.mxu0 0
    %1676 = vmatpush1.bf16.msra.mxu0 %v1349
    %1677 = vmatprep.subr.bf16.mxu0 0
    %1678 = vmatpush1.bf16.msra.mxu0 %v1356
    %1679 = vmatprep.subr.bf16.mxu0 0
    %1680 = vmatpush1.bf16.msra.mxu0 %v1363
    %1681 = vmatprep.subr.bf16.mxu0 0
    %1682 = vmatpush1.bf16.msra.mxu0 %v1370
    %1683 = vmatprep.subr.bf16.mxu0 0
    %1684 = vmatpush1.bf16.msra.mxu0 %v1377
    %1685 = vmatprep.subr.bf16.mxu0 0
    %1686 = vmatpush1.bf16.msra.mxu0 %v1384
    %1687 = vmatprep.subr.bf16.mxu0 0
    %1688 = vmatpush1.bf16.msra.mxu0 %v1391
    %1689 = vmatprep.subr.bf16.mxu0 0
    %1690 = vmatpush1.bf16.msra.mxu0 %v1398
    %1691 = vmatprep.subr.bf16.mxu0 0
    %1692 = vmatpush1.bf16.msra.mxu0 %v1405
    %1693 = vmatprep.subr.bf16.mxu0 0
    %1694 = vmatpush1.bf16.msra.mxu0 %v1412
    %1695 = vmatprep.subr.bf16.mxu0 0
    %1696 = vmatpush1.bf16.msra.mxu0 %v1419
    %1697 = vmatprep.subr.bf16.mxu0 0
    %1698 = vmatpush1.bf16.msra.mxu0 %v1426
    %1699 = vmatprep.subr.bf16.mxu0 0
    %1700 = vmatpush1.bf16.msra.mxu0 %v1433
    %1701 = vmatprep.mubr.bf16.mxu0 %v804
    %1702 = vmatmul.mubr.bf16.gmra.mrb[0].mxu0 %v803
    %v1703 = vpop.f32.mrb[0].mxu0
    %v1704 = vadd.f32 %v962, %v1703
    %v1705 = vpop.f32.mrb[0].mxu0
    %v1706 = vpop.f32.mrb[0].mxu0
    %v1707 = vpop.f32.mrb[0].mxu0
    %1708 = vdwg.mxu0
    %v1709 = vmul.f32 %v1581, 0.1
    %v1710 = vmul.f32 %v1583, 0.1
    %v1711 = vmul.f32 %v1622, 0.1
    %v1712 = vmul.f32 %v1624, 0.1
    %v1713 = vmul.f32 %v1663, 0.1
    %v1714 = vmul.f32 %v1665, 0.1
    %v1715 = vmul.f32 %v1704, 0.1
    %v1716 = vmax.f32 %v1581, %v1709
    %v1717 = vmax.f32 %v1583, %v1710
    %v1718 = vmax.f32 %v1622, %v1711
    %v1719 = vmax.f32 %v1624, %v1712
    %v1720 = vmax.f32 %v1663, %v1713
    %v1721 = vmax.f32 %v1665, %v1714
    %v1722 = vmax.f32 %v1704, %v1715
    %v1723 = vpack.c.bf16 %v1716, %v1716
    %v1724 = vpack.c.bf16 %v1717, %v1717
    %v1725 = vpack.c.bf16 %v1718, %v1718
    %v1726 = vpack.c.bf16 %v1719, %v1719
    %v1727 = vpack.c.bf16 %v1720, %v1720
    %v1728 = vpack.c.bf16 %v1721, %v1721
    %v1729 = vpack.c.bf16 %v1722, %v1722
    %v1730 = vld [vmem:[%s7] sm:$0xf]
    %v1731 = vld [vmem:[%s7 + $0x4] sm:$0xf]
    %v1732 = vld [vmem:[%s7 + $0x8] sm:$0xf]
    %v1733 = vld [vmem:[%s7 + $0xc] sm:$0xf]
    %v1734 = vld [vmem:[%s7 + $0x10] sm:$0xf]
    %v1735 = vld [vmem:[%s7 + $0x14] sm:$0xf]
    %v1736 = vld [vmem:[%s7 + $0x18] sm:$0xf]
    %v1737 = vld [vmem:[%s7 + $0x1c] sm:$0xf]
    %v1738 = vld [vmem:[%s7 + $0x20] sm:$0xf]
    %v1739 = vld [vmem:[%s7 + $0x24] sm:$0xf]
    %v1740 = vld [vmem:[%s7 + $0x28] sm:$0xf]
    %v1741 = vld [vmem:[%s7 + $0x2c] sm:$0xf]
    %v1742 = vld [vmem:[%s7 + $0x30] sm:$0xf]
    %v1743 = vld [vmem:[%s7 + $0x34] sm:$0xf]
    %v1744 = vld [vmem:[%s7 + $0x38] sm:$0xf]
    %v1745 = vld [vmem:[%s7 + $0x3c] sm:$0xf]
    %v1746 = vld [vmem:[%s7 + $0x40] sm:$0xf]
    %v1747 = vld [vmem:[%s7 + $0x44] sm:$0xf]
    %v1748 = vld [vmem:[%s7 + $0x48] sm:$0xf]
    %v1749 = vld [vmem:[%s7 + $0x4c] sm:$0xf]
    %v1750 = vld [vmem:[%s7 + $0x50] sm:$0xf]
    %v1751 = vld [vmem:[%s7 + $0x54] sm:$0xf]
    %v1752 = vld [vmem:[%s7 + $0x58] sm:$0xf]
    %v1753 = vld [vmem:[%s7 + $0x5c] sm:$0xf]
    %v1754 = vld [vmem:[%s7 + $0x60] sm:$0xf]
    %v1755 = vld [vmem:[%s7 + $0x64] sm:$0xf]
    %v1756 = vld [vmem:[%s7 + $0x68] sm:$0xf]
    %v1757 = vld [vmem:[%s7 + $0x6c] sm:$0xf]
    %v1758 = vld [vmem:[%s7 + $0x70] sm:$0xf]
    %v1759 = vld [vmem:[%s7 + $0x74] sm:$0xf]
    %v1760 = vld [vmem:[%s7 + $0x78] sm:$0xf]
    %v1761 = vld [vmem:[%s7 + $0x7c] sm:$0xf]
    %v1762 = vld [vmem:[%s7 + $0x80] sm:$0xf]
    %v1763 = vld [vmem:[%s7 + $0x84] sm:$0xf]
    %v1764 = vld [vmem:[%s7 + $0x88] sm:$0xf]
    %v1765 = vld [vmem:[%s7 + $0x8c] sm:$0xf]
    %v1766 = vld [vmem:[%s7 + $0x90] sm:$0xf]
    %v1767 = vld [vmem:[%s7 + $0x94] sm:$0xf]
    %v1768 = vld [vmem:[%s7 + $0x98] sm:$0xf]
    %v1769 = vld [vmem:[%s7 + $0x9c] sm:$0xf]
    %v1770 = vld [vmem:[%s7 + $0xa0] sm:$0xf]
    %v1771 = vld [vmem:[%s7 + $0xa4] sm:$0xf]
    %v1772 = vld [vmem:[%s7 + $0xa8] sm:$0xf]
    %v1773 = vld [vmem:[%s7 + $0xac] sm:$0xf]
    %v1774 = vld [vmem:[%s7 + $0xb0] sm:$0xf]
    %v1775 = vld [vmem:[%s7 + $0xb4] sm:$0xf]
    %v1776 = vld [vmem:[%s7 + $0xb8] sm:$0xf]
    %v1777 = vld [vmem:[%s7 + $0xbc] sm:$0xf]
    %v1778 = vld [vmem:[%s7 + $0xc0] sm:$0xf]
    %v1779 = vld [vmem:[%s7 + $0xc4] sm:$0xf]
    %v1780 = vld [vmem:[%s7 + $0xc8] sm:$0xf]
    %v1781 = vld [vmem:[%s7 + $0xcc] sm:$0xf]
    %v1782 = vld [vmem:[%s7 + $0xd0] sm:$0xf]
    %v1783 = vld [vmem:[%s7 + $0xd4] sm:$0xf]
    %v1784 = vld [vmem:[%s7 + $0xd8] sm:$0xf]
    %v1785 = vld [vmem:[%s7 + $0xdc] sm:$0xf]
    %v1786 = vld [vmem:[%s7 + $0xe0] sm:$0xf]
    %v1787 = vld [vmem:[%s7 + $0xe4] sm:$0xf]
    %v1788 = vld [vmem:[%s7 + $0xe8] sm:$0xf]
    %v1789 = vld [vmem:[%s7 + $0xec] sm:$0xf]
    %v1790 = vld [vmem:[%s7 + $0xf0] sm:$0xf]
    %v1791 = vld [vmem:[%s7 + $0xf4] sm:$0xf]
    %v1792 = vld [vmem:[%s7 + $0xf8] sm:$0xf]
    %v1793 = vld [vmem:[%s7 + $0xfc] sm:$0xf]
    %v1794 = vld [vmem:[%s7 + $0x100] sm:$0xf]
    %v1795 = vld [vmem:[%s7 + $0x104] sm:$0xf]
    %v1796 = vld [vmem:[%s7 + $0x108] sm:$0xf]
    %v1797 = vld [vmem:[%s7 + $0x10c] sm:$0xf]
    %v1798 = vld [vmem:[%s7 + $0x110] sm:$0xf]
    %v1799 = vld [vmem:[%s7 + $0x114] sm:$0xf]
    %v1800 = vld [vmem:[%s7 + $0x118] sm:$0xf]
    %v1801 = vld [vmem:[%s7 + $0x11c] sm:$0xf]
    %v1802 = vld [vmem:[%s7 + $0x120] sm:$0xf]
    %v1803 = vld [vmem:[%s7 + $0x124] sm:$0xf]
    %v1804 = vld [vmem:[%s7 + $0x128] sm:$0xf]
    %v1805 = vld [vmem:[%s7 + $0x12c] sm:$0xf]
    %v1806 = vld [vmem:[%s7 + $0x130] sm:$0xf]
    %v1807 = vld [vmem:[%s7 + $0x134] sm:$0xf]
    %v1808 = vld [vmem:[%s7 + $0x138] sm:$0xf]
    %v1809 = vld [vmem:[%s7 + $0x13c] sm:$0xf]
    %v1810 = vld [vmem:[%s7 + $0x140] sm:$0xf]
    %v1811 = vld [vmem:[%s7 + $0x144] sm:$0xf]
    %v1812 = vld [vmem:[%s7 + $0x148] sm:$0xf]
    %v1813 = vld [vmem:[%s7 + $0x14c] sm:$0xf]
    %v1814 = vld [vmem:[%s7 + $0x150] sm:$0xf]
    %v1815 = vld [vmem:[%s7 + $0x154] sm:$0xf]
    %v1816 = vld [vmem:[%s7 + $0x158] sm:$0xf]
    %v1817 = vld [vmem:[%s7 + $0x15c] sm:$0xf]
    %v1818 = vld [vmem:[%s7 + $0x160] sm:$0xf]
    %v1819 = vld [vmem:[%s7 + $0x164] sm:$0xf]
    %v1820 = vld [vmem:[%s7 + $0x168] sm:$0xf]
    %v1821 = vld [vmem:[%s7 + $0x16c] sm:$0xf]
    %v1822 = vld [vmem:[%s7 + $0x170] sm:$0xf]
    %v1823 = vld [vmem:[%s7 + $0x174] sm:$0xf]
    %v1824 = vld [vmem:[%s7 + $0x178] sm:$0xf]
    %v1825 = vld [vmem:[%s7 + $0x17c] sm:$0xf]
    %v1826 = vld [vmem:[%s7 + $0x180] sm:$0xf]
    %v1827 = vld [vmem:[%s7 + $0x184] sm:$0xf]
    %v1828 = vld [vmem:[%s7 + $0x188] sm:$0xf]
    %v1829 = vld [vmem:[%s7 + $0x18c] sm:$0xf]
    %v1830 = vld [vmem:[%s7 + $0x190] sm:$0xf]
    %v1831 = vld [vmem:[%s7 + $0x194] sm:$0xf]
    %v1832 = vld [vmem:[%s7 + $0x198] sm:$0xf]
    %v1833 = vld [vmem:[%s7 + $0x19c] sm:$0xf]
    %v1834 = vld [vmem:[%s7 + $0x1a0] sm:$0xf]
    %v1835 = vld [vmem:[%s7 + $0x1a4] sm:$0xf]
    %v1836 = vld [vmem:[%s7 + $0x1a8] sm:$0xf]
    %v1837 = vld [vmem:[%s7 + $0x1ac] sm:$0xf]
    %v1838 = vld [vmem:[%s7 + $0x1b0] sm:$0xf]
    %v1839 = vld [vmem:[%s7 + $0x1b4] sm:$0xf]
    %v1840 = vld [vmem:[%s7 + $0x1b8] sm:$0xf]
    %v1841 = vld [vmem:[%s7 + $0x1bc] sm:$0xf]
    %v1954 = vunpack.c.l.b16 %v1730
    %v1955 = vunpack.c.l.b16 %v1731
    %v1956 = vunpack.c.l.b16 %v1732
    %v1957 = vunpack.c.l.b16 %v1733
    %v1958 = vunpack.c.l.b16 %v1734
    %v1959 = vunpack.c.l.b16 %v1735
    %v1960 = vunpack.c.l.b16 %v1736
    %v1961 = vunpack.c.l.b16 %v1737
    %v1962 = vunpack.c.l.b16 %v1738
    %v1963 = vunpack.c.l.b16 %v1739
    %v1964 = vunpack.c.l.b16 %v1740
    %v1965 = vunpack.c.l.b16 %v1741
    %v1966 = vunpack.c.l.b16 %v1742
    %v1967 = vunpack.c.l.b16 %v1743
    %v1968 = vunpack.c.l.b16 %v1744
    %v1969 = vunpack.c.l.b16 %v1745
    %v1970 = vunpack.c.l.b16 %v1746
    %v1971 = vunpack.c.l.b16 %v1747
    %v1972 = vunpack.c.l.b16 %v1748
    %v1973 = vunpack.c.l.b16 %v1749
    %v1974 = vunpack.c.l.b16 %v1750
    %v1975 = vunpack.c.l.b16 %v1751
    %v1976 = vunpack.c.l.b16 %v1752
    %v1977 = vunpack.c.l.b16 %v1753
    %v1978 = vunpack.c.l.b16 %v1754
    %v1979 = vunpack.c.l.b16 %v1755
    %v1980 = vunpack.c.l.b16 %v1756
    %v1981 = vunpack.c.l.b16 %v1757
    %v1982 = vunpack.c.l.b16 %v1758
    %v1983 = vunpack.c.l.b16 %v1759
    %v1984 = vunpack.c.l.b16 %v1760
    %v1985 = vunpack.c.l.b16 %v1761
    %v1986 = vunpack.c.l.b16 %v1762
    %v1987 = vunpack.c.l.b16 %v1763
    %v1988 = vunpack.c.l.b16 %v1764
    %v1989 = vunpack.c.l.b16 %v1765
    %v1990 = vunpack.c.l.b16 %v1766
    %v1991 = vunpack.c.l.b16 %v1767
    %v1992 = vunpack.c.l.b16 %v1768
    %v1993 = vunpack.c.l.b16 %v1769
    %v1994 = vunpack.c.l.b16 %v1770
    %v1995 = vunpack.c.l.b16 %v1771
    %v1996 = vunpack.c.l.b16 %v1772
    %v1997 = vunpack.c.l.b16 %v1773
    %v1998 = vunpack.c.l.b16 %v1774
    %v1999 = vunpack.c.l.b16 %v1775
    %v2000 = vunpack.c.l.b16 %v1776
    %v2001 = vunpack.c.l.b16 %v1777
    %v2002 = vunpack.c.l.b16 %v1778
    %v2003 = vunpack.c.l.b16 %v1779
    %v2004 = vunpack.c.l.b16 %v1780
    %v2005 = vunpack.c.l.b16 %v1781
    %v2006 = vunpack.c.l.b16 %v1782
    %v2007 = vunpack.c.l.b16 %v1783
    %v2008 = vunpack.c.l.b16 %v1784
    %v2009 = vunpack.c.l.b16 %v1785
    %v2010 = vunpack.c.l.b16 %v1786
    %v2011 = vunpack.c.l.b16 %v1787
    %v2012 = vunpack.c.l.b16 %v1788
    %v2013 = vunpack.c.l.b16 %v1789
    %v2014 = vunpack.c.l.b16 %v1790
    %v2015 = vunpack.c.l.b16 %v1791
    %v2016 = vunpack.c.l.b16 %v1792
    %v2017 = vunpack.c.l.b16 %v1793
    %v2018 = vunpack.c.l.b16 %v1794
    %v2019 = vunpack.c.l.b16 %v1795
    %v2020 = vunpack.c.l.b16 %v1796
    %v2021 = vunpack.c.l.b16 %v1797
    %v2022 = vunpack.c.l.b16 %v1798
    %v2023 = vunpack.c.l.b16 %v1799
    %v2024 = vunpack.c.l.b16 %v1800
    %v2025 = vunpack.c.l.b16 %v1801
    %v2026 = vunpack.c.l.b16 %v1802
    %v2027 = vunpack.c.l.b16 %v1803
    %v2028 = vunpack.c.l.b16 %v1804
    %v2029 = vunpack.c.l.b16 %v1805
    %v2030 = vunpack.c.l.b16 %v1806
    %v2031 = vunpack.c.l.b16 %v1807
    %v2032 = vunpack.c.l.b16 %v1808
    %v2033 = vunpack.c.l.b16 %v1809
    %v2034 = vunpack.c.l.b16 %v1810
    %v2035 = vunpack.c.l.b16 %v1811
    %v2036 = vunpack.c.l.b16 %v1812
    %v2037 = vunpack.c.l.b16 %v1813
    %v2038 = vunpack.c.l.b16 %v1814
    %v2039 = vunpack.c.l.b16 %v1815
    %v2040 = vunpack.c.l.b16 %v1816
    %v2041 = vunpack.c.l.b16 %v1817
    %v2042 = vunpack.c.l.b16 %v1818
    %v2043 = vunpack.c.l.b16 %v1819
    %v2044 = vunpack.c.l.b16 %v1820
    %v2045 = vunpack.c.l.b16 %v1821
    %v2046 = vunpack.c.l.b16 %v1822
    %v2047 = vunpack.c.l.b16 %v1823
    %v2048 = vunpack.c.l.b16 %v1824
    %v2049 = vunpack.c.l.b16 %v1825
    %v2050 = vunpack.c.l.b16 %v1826
    %v2051 = vunpack.c.l.b16 %v1827
    %v2052 = vunpack.c.l.b16 %v1828
    %v2053 = vunpack.c.l.b16 %v1829
    %v2054 = vunpack.c.l.b16 %v1830
    %v2055 = vunpack.c.l.b16 %v1831
    %v2056 = vunpack.c.l.b16 %v1832
    %v2057 = vunpack.c.l.b16 %v1833
    %v2058 = vunpack.c.l.b16 %v1834
    %v2059 = vunpack.c.l.b16 %v1835
    %v2060 = vunpack.c.l.b16 %v1836
    %v2061 = vunpack.c.l.b16 %v1837
    %v2062 = vunpack.c.l.b16 %v1838
    %v2063 = vunpack.c.l.b16 %v1839
    %v2064 = vunpack.c.l.b16 %v1840
    %v2065 = vunpack.c.l.b16 %v1841
    %v2066 = vpack.c.b16 %v1955, %v1954
    %v2067 = vpack.c.b16 %v1957, %v1956
    %v2068 = vpack.c.b16 %v1959, %v1958
    %v2069 = vpack.c.b16 %v1961, %v1960
    %v2070 = vpack.c.b16 %v1963, %v1962
    %v2071 = vpack.c.b16 %v1965, %v1964
    %v2072 = vpack.c.b16 %v1967, %v1966
    %v2073 = vpack.c.b16 %v1969, %v1968
    %v2074 = vpack.c.b16 %v1971, %v1970
    %v2075 = vpack.c.b16 %v1973, %v1972
    %v2076 = vpack.c.b16 %v1975, %v1974
    %v2077 = vpack.c.b16 %v1977, %v1976
    %v2078 = vpack.c.b16 %v1979, %v1978
    %v2079 = vpack.c.b16 %v1981, %v1980
    %v2080 = vpack.c.b16 %v1983, %v1982
    %v2081 = vpack.c.b16 %v1985, %v1984
    %v2082 = vpack.c.b16 %v1987, %v1986
    %v2083 = vpack.c.b16 %v1989, %v1988
    %v2084 = vpack.c.b16 %v1991, %v1990
    %v2085 = vpack.c.b16 %v1993, %v1992
    %v2086 = vpack.c.b16 %v1995, %v1994
    %v2087 = vpack.c.b16 %v1997, %v1996
    %v2088 = vpack.c.b16 %v1999, %v1998
    %v2089 = vpack.c.b16 %v2001, %v2000
    %v2090 = vpack.c.b16 %v2003, %v2002
    %v2091 = vpack.c.b16 %v2005, %v2004
    %v2092 = vpack.c.b16 %v2007, %v2006
    %v2093 = vpack.c.b16 %v2009, %v2008
    %v2094 = vpack.c.b16 %v2011, %v2010
    %v2095 = vpack.c.b16 %v2013, %v2012
    %v2096 = vpack.c.b16 %v2015, %v2014
    %v2097 = vpack.c.b16 %v2017, %v2016
    %v2098 = vpack.c.b16 %v2019, %v2018
    %v2099 = vpack.c.b16 %v2021, %v2020
    %v2100 = vpack.c.b16 %v2023, %v2022
    %v2101 = vpack.c.b16 %v2025, %v2024
    %v2102 = vpack.c.b16 %v2027, %v2026
    %v2103 = vpack.c.b16 %v2029, %v2028
    %v2104 = vpack.c.b16 %v2031, %v2030
    %v2105 = vpack.c.b16 %v2033, %v2032
    %v2106 = vpack.c.b16 %v2035, %v2034
    %v2107 = vpack.c.b16 %v2037, %v2036
    %v2108 = vpack.c.b16 %v2039, %v2038
    %v2109 = vpack.c.b16 %v2041, %v2040
    %v2110 = vpack.c.b16 %v2043, %v2042
    %v2111 = vpack.c.b16 %v2045, %v2044
    %v2112 = vpack.c.b16 %v2047, %v2046
    %v2113 = vpack.c.b16 %v2049, %v2048
    %v2114 = vpack.c.b16 %v2051, %v2050
    %v2115 = vpack.c.b16 %v2053, %v2052
    %v2116 = vpack.c.b16 %v2055, %v2054
    %v2117 = vpack.c.b16 %v2057, %v2056
    %v2118 = vpack.c.b16 %v2059, %v2058
    %v2119 = vpack.c.b16 %v2061, %v2060
    %v2120 = vpack.c.b16 %v2063, %v2062
    %v2121 = vpack.c.b16 %v2065, %v2064
    %2178 = vmatprep.subr.bf16.mxu0 0
    %2179 = vmatpush1.bf16.msra.mxu0 %v2066
    %2180 = vmatprep.subr.bf16.mxu0 0
    %2181 = vmatpush1.bf16.msra.mxu0 %v2067
    %2182 = vmatprep.subr.bf16.mxu0 0
    %2183 = vmatpush1.bf16.msra.mxu0 %v2068
    %2184 = vmatprep.subr.bf16.mxu0 0
    %2185 = vmatpush1.bf16.msra.mxu0 %v2069
    %2186 = vmatprep.subr.bf16.mxu0 0
    %2187 = vmatpush1.bf16.msra.mxu0 %v2070
    %2188 = vmatprep.subr.bf16.mxu0 0
    %2189 = vmatpush1.bf16.msra.mxu0 %v2071
    %2190 = vmatprep.subr.bf16.mxu0 0
    %2191 = vmatpush1.bf16.msra.mxu0 %v2072
    %2192 = vmatprep.subr.bf16.mxu0 0
    %2193 = vmatpush1.bf16.msra.mxu0 %v2073
    %2194 = vmatprep.subr.bf16.mxu0 0
    %2195 = vmatpush1.bf16.msra.mxu0 %v2074
    %2196 = vmatprep.subr.bf16.mxu0 0
    %2197 = vmatpush1.bf16.msra.mxu0 %v2075
    %2198 = vmatprep.subr.bf16.mxu0 0
    %2199 = vmatpush1.bf16.msra.mxu0 %v2076
    %2200 = vmatprep.subr.bf16.mxu0 0
    %2201 = vmatpush1.bf16.msra.mxu0 %v2077
    %2202 = vmatprep.subr.bf16.mxu0 0
    %2203 = vmatpush1.bf16.msra.mxu0 %v2078
    %2204 = vmatprep.subr.bf16.mxu0 0
    %2205 = vmatpush1.bf16.msra.mxu0 %v2079
    %2206 = vmatprep.subr.bf16.mxu0 0
    %2207 = vmatpush1.bf16.msra.mxu0 %v2080
    %2208 = vmatprep.subr.bf16.mxu0 0
    %2209 = vmatpush1.bf16.msra.mxu0 %v2081
    %2210 = vmatprep.mubr.bf16.mxu0 %v1724
    %2211 = vmatmul.mubr.bf16.gmra.mrb[0].mxu0 %v1723
    %v2212 = vpop.f32.mrb[0].mxu0
    %v2213 = vadd.f32 0.0, %v2212
    %v2214 = vpop.f32.mrb[0].mxu0
    %v2215 = vpop.f32.mrb[0].mxu0
    %v2216 = vpop.f32.mrb[0].mxu0
    %2217 = vdwg.mxu0
    %2218 = vmatprep.subr.bf16.mxu0 0
    %2219 = vmatpush1.bf16.msra.mxu0 %v2082
    %2220 = vmatprep.subr.bf16.mxu0 0
    %2221 = vmatpush1.bf16.msra.mxu0 %v2083
    %2222 = vmatprep.subr.bf16.mxu0 0
    %2223 = vmatpush1.bf16.msra.mxu0 %v2084
    %2224 = vmatprep.subr.bf16.mxu0 0
    %2225 = vmatpush1.bf16.msra.mxu0 %v2085
    %2226 = vmatprep.subr.bf16.mxu0 0
    %2227 = vmatpush1.bf16.msra.mxu0 %v2086
    %2228 = vmatprep.subr.bf16.mxu0 0
    %2229 = vmatpush1.bf16.msra.mxu0 %v2087
    %2230 = vmatprep.subr.bf16.mxu0 0
    %2231 = vmatpush1.bf16.msra.mxu0 %v2088
    %2232 = vmatprep.subr.bf16.mxu0 0
    %2233 = vmatpush1.bf16.msra.mxu0 %v2089
    %2234 = vmatprep.subr.bf16.mxu0 0
    %2235 = vmatpush1.bf16.msra.mxu0 %v2090
    %2236 = vmatprep.subr.bf16.mxu0 0
    %2237 = vmatpush1.bf16.msra.mxu0 %v2091
    %2238 = vmatprep.subr.bf16.mxu0 0
    %2239 = vmatpush1.bf16.msra.mxu0 %v2092
    %2240 = vmatprep.subr.bf16.mxu0 0
    %2241 = vmatpush1.bf16.msra.mxu0 %v2093
    %2242 = vmatprep.subr.bf16.mxu0 0
    %2243 = vmatpush1.bf16.msra.mxu0 %v2094
    %2244 = vmatprep.subr.bf16.mxu0 0
    %2245 = vmatpush1.bf16.msra.mxu0 %v2095
    %2246 = vmatprep.subr.bf16.mxu0 0
    %2247 = vmatpush1.bf16.msra.mxu0 %v2096
    %2248 = vmatprep.subr.bf16.mxu0 0
    %2249 = vmatpush1.bf16.msra.mxu0 %v2097
    %2250 = vmatprep.mubr.bf16.mxu0 %v1726
    %2251 = vmatmul.mubr.bf16.gmra.mrb[0].mxu0 %v1725
    %v2252 = vpop.f32.mrb[0].mxu0
    %v2253 = vadd.f32 %v2213, %v2252
    %v2254 = vpop.f32.mrb[0].mxu0
    %v2255 = vpop.f32.mrb[0].mxu0
    %v2256 = vpop.f32.mrb[0].mxu0
    %2257 = vdwg.mxu0
    %2258 = vmatprep.subr.bf16.mxu0 0
    %2259 = vmatpush1.bf16.msra.mxu0 %v2098
    %2260 = vmatprep.subr.bf16.mxu0 0
    %2261 = vmatpush1.bf16.msra.mxu0 %v2099
    %2262 = vmatprep.subr.bf16.mxu0 0
    %2263 = vmatpush1.bf16.msra.mxu0 %v2100
    %2264 = vmatprep.subr.bf16.mxu0 0
    %2265 = vmatpush1.bf16.msra.mxu0 %v2101
    %2266 = vmatprep.subr.bf16.mxu0 0
    %2267 = vmatpush1.bf16.msra.mxu0 %v2102
    %2268 = vmatprep.subr.bf16.mxu0 0
    %2269 = vmatpush1.bf16.msra.mxu0 %v2103
    %2270 = vmatprep.subr.bf16.mxu0 0
    %2271 = vmatpush1.bf16.msra.mxu0 %v2104
    %2272 = vmatprep.subr.bf16.mxu0 0
    %2273 = vmatpush1.bf16.msra.mxu0 %v2105
    %2274 = vmatprep.subr.bf16.mxu0 0
    %2275 = vmatpush1.bf16.msra.mxu0 %v2106
    %2276 = vmatprep.subr.bf16.mxu0 0
    %2277 = vmatpush1.bf16.msra.mxu0 %v2107
    %2278 = vmatprep.subr.bf16.mxu0 0
    %2279 = vmatpush1.bf16.msra.mxu0 %v2108
    %2280 = vmatprep.subr.bf16.mxu0 0
    %2281 = vmatpush1.bf16.msra.mxu0 %v2109
    %2282 = vmatprep.subr.bf16.mxu0 0
    %2283 = vmatpush1.bf16.msra.mxu0 %v2110
    %2284 = vmatprep.subr.bf16.mxu0 0
    %2285 = vmatpush1.bf16.msra.mxu0 %v2111
    %2286 = vmatprep.subr.bf16.mxu0 0
    %2287 = vmatpush1.bf16.msra.mxu0 %v2112
    %2288 = vmatprep.subr.bf16.mxu0 0
    %2289 = vmatpush1.bf16.msra.mxu0 %v2113
    %2290 = vmatprep.mubr.bf16.mxu0 %v1728
    %2291 = vmatmul.mubr.bf16.gmra.mrb[0].mxu0 %v1727
    %v2292 = vpop.f32.mrb[0].mxu0
    %v2293 = vadd.f32 %v2253, %v2292
    %v2294 = vpop.f32.mrb[0].mxu0
    %v2295 = vpop.f32.mrb[0].mxu0
    %v2296 = vpop.f32.mrb[0].mxu0
    %2297 = vdwg.mxu0
    %2298 = vmatprep.subr.bf16.mxu0 0
    %2299 = vmatpush1.bf16.msra.mxu0 %v2114
    %2300 = vmatprep.subr.bf16.mxu0 0
    %2301 = vmatpush1.bf16.msra.mxu0 %v2115
    %2302 = vmatprep.subr.bf16.mxu0 0
    %2303 = vmatpush1.bf16.msra.mxu0 %v2116
    %2304 = vmatprep.subr.bf16.mxu0 0
    %2305 = vmatpush1.bf16.msra.mxu0 %v2117
    %2306 = vmatprep.subr.bf16.mxu0 0
    %2307 = vmatpush1.bf16.msra.mxu0 %v2118
    %2308 = vmatprep.subr.bf16.mxu0 0
    %2309 = vmatpush1.bf16.msra.mxu0 %v2119
    %2310 = vmatprep.subr.bf16.mxu0 0
    %2311 = vmatpush1.bf16.msra.mxu0 %v2120
    %2312 = vmatprep.subr.bf16.mxu0 0
    %2313 = vmatpush1.bf16.msra.mxu0 %v2121
    %2314 = vmatprep.subr.bf16.mxu0 0
    %2315 = vmatpush1.bf16.msra.mxu0 0
    %2316 = vmatprep.subr.bf16.mxu0 0
    %2317 = vmatpush1.bf16.msra.mxu0 0
    %2318 = vmatprep.subr.bf16.mxu0 0
    %2319 = vmatpush1.bf16.msra.mxu0 0
    %2320 = vmatprep.subr.bf16.mxu0 0
    %2321 = vmatpush1.bf16.msra.mxu0 0
    %2322 = vmatprep.subr.bf16.mxu0 0
    %2323 = vmatpush1.bf16.msra.mxu0 0
    %2324 = vmatprep.subr.bf16.mxu0 0
    %2325 = vmatpush1.bf16.msra.mxu0 0
    %2326 = vmatprep.subr.bf16.mxu0 0
    %2327 = vmatpush1.bf16.msra.mxu0 0
    %2328 = vmatprep.subr.bf16.mxu0 0
    %2329 = vmatpush1.bf16.msra.mxu0 0
    %2330 = vmatprep.mubr.bf16.mxu0 0
    %2331 = vmatmul.mubr.bf16.gmra.mrb[0].mxu0 %v1729
    %v2332 = vpop.f32.mrb[0].mxu0
    %v2333 = vadd.f32 %v2293, %v2332
    %v2334 = vpop.f32.mrb[0].mxu0
    %v2335 = vpop.f32.mrb[0].mxu0
    %v2336 = vpop.f32.mrb[0].mxu0
    %2337 = vdwg.mxu0
    %v2338 = vmul.f32 %v2333, 0.04
    %v2339 = vpack.c.bf16 %v2338, %v2338
    %v2340 = vld [vmem:[#allocation13] sm:$0xff]
    %v2341 = vld [vmem:[#allocation13 + $0x8] sm:$0xff]
    %v2342 = vld [vmem:[#allocation13 + $0x10] sm:$0xff]
    %v2343 = vld [vmem:[#allocation13 + $0x18] sm:$0xf]
    %v2344 = vld [vmem:[#allocation13 + $0x1c] sm:$0xff]
    %v2345 = vld [vmem:[#allocation13 + $0x24] sm:$0xff]
    %v2346 = vld [vmem:[#allocation13 + $0x2c] sm:$0xff]
    %v2347 = vld [vmem:[#allocation13 + $0x34] sm:$0xf]
    %v2348 = vld [vmem:[#allocation13 + $0x38] sm:$0xff]
    %v2349 = vld [vmem:[#allocation13 + $0x40] sm:$0xff]
    %v2350 = vld [vmem:[#allocation13 + $0x48] sm:$0xff]
    %v2351 = vld [vmem:[#allocation13 + $0x50] sm:$0xf]
    %v2352 = vld [vmem:[#allocation13 + $0x54] sm:$0xff]
    %v2353 = vld [vmem:[#allocation13 + $0x5c] sm:$0xff]
    %v2354 = vld [vmem:[#allocation13 + $0x64] sm:$0xff]
    %v2355 = vld [vmem:[#allocation13 + $0x6c] sm:$0xf]
    %v2372 = vunpack.c.l.b16 %v2340
    %v2373 = vunpack.c.h.b16 %v2340
    %v2374 = vunpack.c.l.b16 %v2341
    %v2375 = vunpack.c.h.b16 %v2341
    %v2376 = vunpack.c.l.b16 %v2342
    %v2377 = vunpack.c.h.b16 %v2342
    %v2378 = vunpack.c.l.b16 %v2343
    %v2379 = vunpack.c.l.b16 %v2344
    %v2380 = vunpack.c.h.b16 %v2344
    %v2381 = vunpack.c.l.b16 %v2345
    %v2382 = vunpack.c.h.b16 %v2345
    %v2383 = vunpack.c.l.b16 %v2346
    %v2384 = vunpack.c.h.b16 %v2346
    %v2385 = vunpack.c.l.b16 %v2347
    %v2386 = vunpack.c.l.b16 %v2348
    %v2387 = vunpack.c.h.b16 %v2348
    %v2388 = vunpack.c.l.b16 %v2349
    %v2389 = vunpack.c.h.b16 %v2349
    %v2390 = vunpack.c.l.b16 %v2350
    %v2391 = vunpack.c.h.b16 %v2350
    %v2392 = vunpack.c.l.b16 %v2351
    %v2393 = vunpack.c.l.b16 %v2352
    %v2394 = vunpack.c.h.b16 %v2352
    %v2395 = vunpack.c.l.b16 %v2353
    %v2396 = vunpack.c.h.b16 %v2353
    %v2397 = vunpack.c.l.b16 %v2354
    %v2398 = vunpack.c.h.b16 %v2354
    %v2399 = vunpack.c.l.b16 %v2355
    %v2400 = vpack.c.b16 %v2379, %v2372
    %v2401 = vpack.c.b16 %v2380, %v2373
    %v2402 = vpack.c.b16 %v2381, %v2374
    %v2403 = vpack.c.b16 %v2382, %v2375
    %v2404 = vpack.c.b16 %v2383, %v2376
    %v2405 = vpack.c.b16 %v2384, %v2377
    %v2406 = vpack.c.b16 %v2385, %v2378
    %v2407 = vpack.c.b16 %v2393, %v2386
    %v2408 = vpack.c.b16 %v2394, %v2387
    %v2409 = vpack.c.b16 %v2395, %v2388
    %v2410 = vpack.c.b16 %v2396, %v2389
    %v2411 = vpack.c.b16 %v2397, %v2390
    %v2412 = vpack.c.b16 %v2398, %v2391
    %v2413 = vpack.c.b16 %v2399, %v2392
    %vm2428 = vcmask 261120
    %v2430 = vsel %vm2428, %v2339, 0
    %2432 = vmatprep.subr.bf16.mxu0 %v2401
    %2433 = vmatpush1.bf16.msra.mxu0 %v2400
    %2434 = vmatprep.subr.bf16.mxu0 %v2408
    %2435 = vmatpush1.bf16.msra.mxu0 %v2407
    %2436 = vmatprep.subr.bf16.mxu0 0
    %2437 = vmatpush1.bf16.msra.mxu0 0
    %2438 = vmatprep.subr.bf16.mxu0 0
    %2439 = vmatpush1.bf16.msra.mxu0 0
    %2440 = vmatprep.subr.bf16.mxu0 0
    %2441 = vmatpush1.bf16.msra.mxu0 0
    %2442 = vmatprep.subr.bf16.mxu0 0
    %2443 = vmatpush1.bf16.msra.mxu0 0
    %2444 = vmatprep.subr.bf16.mxu0 0
    %2445 = vmatpush1.bf16.msra.mxu0 0
    %2446 = vmatprep.subr.bf16.mxu0 0
    %2447 = vmatpush1.bf16.msra.mxu0 0
    %2448 = vmatprep.subr.bf16.mxu0 0
    %2449 = vmatpush1.bf16.msra.mxu0 0
    %2450 = vmatprep.subr.bf16.mxu0 0
    %2451 = vmatpush1.bf16.msra.mxu0 0
    %2452 = vmatprep.subr.bf16.mxu0 0
    %2453 = vmatpush1.bf16.msra.mxu0 0
    %2454 = vmatprep.subr.bf16.mxu0 0
    %2455 = vmatpush1.bf16.msra.mxu0 0
    %2456 = vmatprep.subr.bf16.mxu0 0
    %2457 = vmatpush1.bf16.msra.mxu0 0
    %2458 = vmatprep.subr.bf16.mxu0 0
    %2459 = vmatpush1.bf16.msra.mxu0 0
    %2460 = vmatprep.subr.bf16.mxu0 0
    %2461 = vmatpush1.bf16.msra.mxu0 0
    %2462 = vmatprep.subr.bf16.mxu0 0
    %2463 = vmatpush1.bf16.msra.mxu0 0
    %2464 = vmatprep.mubr.bf16.mxu0 0
    %2465 = vmatmul.mubr.bf16.gmra.mrb[0].mxu0 %v2430
    %v2466 = vpop.f32.mrb[0].mxu0
    %v2467 = vadd.f32 0.0, %v2466
    %v2468 = vpop.f32.mrb[0].mxu0
    %v2469 = vadd.f32 0.0, %v2468
    %v2470 = vpop.f32.mrb[0].mxu0
    %v2471 = vpop.f32.mrb[0].mxu0
    %2472 = vdwg.mxu0
    %2473 = vmatprep.subr.bf16.mxu0 %v2403
    %2474 = vmatpush1.bf16.msra.mxu0 %v2402
    %2475 = vmatprep.subr.bf16.mxu0 %v2410
    %2476 = vmatpush1.bf16.msra.mxu0 %v2409
    %2477 = vmatprep.subr.bf16.mxu0 0
    %2478 = vmatpush1.bf16.msra.mxu0 0
    %2479 = vmatprep.subr.bf16.mxu0 0
    %2480 = vmatpush1.bf16.msra.mxu0 0
    %2481 = vmatprep.subr.bf16.mxu0 0
    %2482 = vmatpush1.bf16.msra.mxu0 0
    %2483 = vmatprep.subr.bf16.mxu0 0
    %2484 = vmatpush1.bf16.msra.mxu0 0
    %2485 = vmatprep.subr.bf16.mxu0 0
    %2486 = vmatpush1.bf16.msra.mxu0 0
    %2487 = vmatprep.subr.bf16.mxu0 0
    %2488 = vmatpush1.bf16.msra.mxu0 0
    %2489 = vmatprep.subr.bf16.mxu0 0
    %2490 = vmatpush1.bf16.msra.mxu0 0
    %2491 = vmatprep.subr.bf16.mxu0 0
    %2492 = vmatpush1.bf16.msra.mxu0 0
    %2493 = vmatprep.subr.bf16.mxu0 0
    %2494 = vmatpush1.bf16.msra.mxu0 0
    %2495 = vmatprep.subr.bf16.mxu0 0
    %2496 = vmatpush1.bf16.msra.mxu0 0
    %2497 = vmatprep.subr.bf16.mxu0 0
    %2498 = vmatpush1.bf16.msra.mxu0 0
    %2499 = vmatprep.subr.bf16.mxu0 0
    %2500 = vmatpush1.bf16.msra.mxu0 0
    %2501 = vmatprep.subr.bf16.mxu0 0
    %2502 = vmatpush1.bf16.msra.mxu0 0
    %2503 = vmatprep.subr.bf16.mxu0 0
    %2504 = vmatpush1.bf16.msra.mxu0 0
    %2505 = vmatprep.mubr.bf16.mxu0 0
    %2506 = vmatmul.mubr.bf16.gmra.mrb[0].mxu0 %v2430
    %v2507 = vpop.f32.mrb[0].mxu0
    %v2508 = vadd.f32 0.0, %v2507
    %v2509 = vpop.f32.mrb[0].mxu0
    %v2510 = vadd.f32 0.0, %v2509
    %v2511 = vpop.f32.mrb[0].mxu0
    %v2512 = vpop.f32.mrb[0].mxu0
    %2513 = vdwg.mxu0
    %2514 = vmatprep.subr.bf16.mxu0 %v2405
    %2515 = vmatpush1.bf16.msra.mxu0 %v2404
    %2516 = vmatprep.subr.bf16.mxu0 %v2412
    %2517 = vmatpush1.bf16.msra.mxu0 %v2411
    %2518 = vmatprep.subr.bf16.mxu0 0
    %2519 = vmatpush1.bf16.msra.mxu0 0
    %2520 = vmatprep.subr.bf16.mxu0 0
    %2521 = vmatpush1.bf16.msra.mxu0 0
    %2522 = vmatprep.subr.bf16.mxu0 0
    %2523 = vmatpush1.bf16.msra.mxu0 0
    %2524 = vmatprep.subr.bf16.mxu0 0
    %2525 = vmatpush1.bf16.msra.mxu0 0
    %2526 = vmatprep.subr.bf16.mxu0 0
    %2527 = vmatpush1.bf16.msra.mxu0 0
    %2528 = vmatprep.subr.bf16.mxu0 0
    %2529 = vmatpush1.bf16.msra.mxu0 0
    %2530 = vmatprep.subr.bf16.mxu0 0
    %2531 = vmatpush1.bf16.msra.mxu0 0
    %2532 = vmatprep.subr.bf16.mxu0 0
    %2533 = vmatpush1.bf16.msra.mxu0 0
    %2534 = vmatprep.subr.bf16.mxu0 0
    %2535 = vmatpush1.bf16.msra.mxu0 0
    %2536 = vmatprep.subr.bf16.mxu0 0
    %2537 = vmatpush1.bf16.msra.mxu0 0
    %2538 = vmatprep.subr.bf16.mxu0 0
    %2539 = vmatpush1.bf16.msra.mxu0 0
    %2540 = vmatprep.subr.bf16.mxu0 0
    %2541 = vmatpush1.bf16.msra.mxu0 0
    %2542 = vmatprep.subr.bf16.mxu0 0
    %2543 = vmatpush1.bf16.msra.mxu0 0
    %2544 = vmatprep.subr.bf16.mxu0 0
    %2545 = vmatpush1.bf16.msra.mxu0 0
    %2546 = vmatprep.mubr.bf16.mxu0 0
    %2547 = vmatmul.mubr.bf16.gmra.mrb[0].mxu0 %v2430
    %v2548 = vpop.f32.mrb[0].mxu0
    %v2549 = vadd.f32 0.0, %v2548
    %v2550 = vpop.f32.mrb[0].mxu0
    %v2551 = vadd.f32 0.0, %v2550
    %v2552 = vpop.f32.mrb[0].mxu0
    %v2553 = vpop.f32.mrb[0].mxu0
    %2554 = vdwg.mxu0
    %2555 = vmatprep.subr.bf16.mxu0 0
    %2556 = vmatpush1.bf16.msra.mxu0 %v2406
    %2557 = vmatprep.subr.bf16.mxu0 0
    %2558 = vmatpush1.bf16.msra.mxu0 %v2413
    %2559 = vmatprep.subr.bf16.mxu0 0
    %2560 = vmatpush1.bf16.msra.mxu0 0
    %2561 = vmatprep.subr.bf16.mxu0 0
    %2562 = vmatpush1.bf16.msra.mxu0 0
    %2563 = vmatprep.subr.bf16.mxu0 0
    %2564 = vmatpush1.bf16.msra.mxu0 0
    %2565 = vmatprep.subr.bf16.mxu0 0
    %2566 = vmatpush1.bf16.msra.mxu0 0
    %2567 = vmatprep.subr.bf16.mxu0 0
    %2568 = vmatpush1.bf16.msra.mxu0 0
    %2569 = vmatprep.subr.bf16.mxu0 0
    %2570 = vmatpush1.bf16.msra.mxu0 0
    %2571 = vmatprep.subr.bf16.mxu0 0
    %2572 = vmatpush1.bf16.msra.mxu0 0
    %2573 = vmatprep.subr.bf16.mxu0 0
    %2574 = vmatpush1.bf16.msra.mxu0 0
    %2575 = vmatprep.subr.bf16.mxu0 0
    %2576 = vmatpush1.bf16.msra.mxu0 0
    %2577 = vmatprep.subr.bf16.mxu0 0
    %2578 = vmatpush1.bf16.msra.mxu0 0
    %2579 = vmatprep.subr.bf16.mxu0 0
    %2580 = vmatpush1.bf16.msra.mxu0 0
    %2581 = vmatprep.subr.bf16.mxu0 0
    %2582 = vmatpush1.bf16.msra.mxu0 0
    %2583 = vmatprep.subr.bf16.mxu0 0
    %2584 = vmatpush1.bf16.msra.mxu0 0
    %2585 = vmatprep.subr.bf16.mxu0 0
    %2586 = vmatpush1.bf16.msra.mxu0 0
    %2587 = vmatprep.mubr.bf16.mxu0 0
    %2588 = vmatmul.mubr.bf16.gmra.mrb[0].mxu0 %v2430
    %v2589 = vpop.f32.mrb[0].mxu0
    %v2590 = vadd.f32 0.0, %v2589
    %v2591 = vpop.f32.mrb[0].mxu0
    %v2592 = vpop.f32.mrb[0].mxu0
    %v2593 = vpop.f32.mrb[0].mxu0
    %2594 = vdwg.mxu0
    %v2595 = vsub.f32 %v1716, %v2467
    %v2596 = vsub.f32 %v1717, %v2469
    %v2597 = vsub.f32 %v1718, %v2508
    %v2598 = vsub.f32 %v1719, %v2510
    %v2599 = vsub.f32 %v1720, %v2549
    %v2600 = vsub.f32 %v1721, %v2551
    %v2601 = vsub.f32 %v1722, %v2590
    %v2602 = vmul.f32 %v2595, %v2595
    %v2603 = vmul.f32 %v2596, %v2596
    %v2604 = vmul.f32 %v2597, %v2597
    %v2605 = vmul.f32 %v2598, %v2598
    %v2606 = vmul.f32 %v2599, %v2599
    %v2607 = vmul.f32 %v2600, %v2600
    %v2608 = vmul.f32 %v2601, %v2601
    %v2609 = vpack.c.bf16 %v2602, %v2602
    %v2610 = vpack.c.bf16 %v2603, %v2603
    %v2611 = vpack.c.bf16 %v2604, %v2604
    %v2612 = vpack.c.bf16 %v2605, %v2605
    %v2613 = vpack.c.bf16 %v2606, %v2606
    %v2614 = vpack.c.bf16 %v2607, %v2607
    %v2615 = vpack.c.bf16 %v2608, %v2608
    %2616 = vmatprep.subr.bf16.mxu0 0
    %2617 = vmatpush1.bf16.msra.mxu0 %v2066
    %2618 = vmatprep.subr.bf16.mxu0 0
    %2619 = vmatpush1.bf16.msra.mxu0 %v2067
    %2620 = vmatprep.subr.bf16.mxu0 0
    %2621 = vmatpush1.bf16.msra.mxu0 %v2068
    %2622 = vmatprep.subr.bf16.mxu0 0
    %2623 = vmatpush1.bf16.msra.mxu0 %v2069
    %2624 = vmatprep.subr.bf16.mxu0 0
    %2625 = vmatpush1.bf16.msra.mxu0 %v2070
    %2626 = vmatprep.subr.bf16.mxu0 0
    %2627 = vmatpush1.bf16.msra.mxu0 %v2071
    %2628 = vmatprep.subr.bf16.mxu0 0
    %2629 = vmatpush1.bf16.msra.mxu0 %v2072
    %2630 = vmatprep.subr.bf16.mxu0 0
    %2631 = vmatpush1.bf16.msra.mxu0 %v2073
    %2632 = vmatprep.subr.bf16.mxu0 0
    %2633 = vmatpush1.bf16.msra.mxu0 %v2074
    %2634 = vmatprep.subr.bf16.mxu0 0
    %2635 = vmatpush1.bf16.msra.mxu0 %v2075
    %2636 = vmatprep.subr.bf16.mxu0 0
    %2637 = vmatpush1.bf16.msra.mxu0 %v2076
    %2638 = vmatprep.subr.bf16.mxu0 0
    %2639 = vmatpush1.bf16.msra.mxu0 %v2077
    %2640 = vmatprep.subr.bf16.mxu0 0
    %2641 = vmatpush1.bf16.msra.mxu0 %v2078
    %2642 = vmatprep.subr.bf16.mxu0 0
    %2643 = vmatpush1.bf16.msra.mxu0 %v2079
    %2644 = vmatprep.subr.bf16.mxu0 0
    %2645 = vmatpush1.bf16.msra.mxu0 %v2080
    %2646 = vmatprep.subr.bf16.mxu0 0
    %2647 = vmatpush1.bf16.msra.mxu0 %v2081
    %2648 = vmatprep.mubr.bf16.mxu0 %v2610
    %2649 = vmatmul.mubr.bf16.gmra.mrb[0].mxu0 %v2609
    %v2650 = vpop.f32.mrb[0].mxu0
    %v2651 = vadd.f32 0.0, %v2650
    %v2652 = vpop.f32.mrb[0].mxu0
    %v2653 = vpop.f32.mrb[0].mxu0
    %v2654 = vpop.f32.mrb[0].mxu0
    %2655 = vdwg.mxu0
    %2656 = vmatprep.subr.bf16.mxu0 0
    %2657 = vmatpush1.bf16.msra.mxu0 %v2082
    %2658 = vmatprep.subr.bf16.mxu0 0
    %2659 = vmatpush1.bf16.msra.mxu0 %v2083
    %2660 = vmatprep.subr.bf16.mxu0 0
    %2661 = vmatpush1.bf16.msra.mxu0 %v2084
    %2662 = vmatprep.subr.bf16.mxu0 0
    %2663 = vmatpush1.bf16.msra.mxu0 %v2085
    %2664 = vmatprep.subr.bf16.mxu0 0
    %2665 = vmatpush1.bf16.msra.mxu0 %v2086
    %2666 = vmatprep.subr.bf16.mxu0 0
    %2667 = vmatpush1.bf16.msra.mxu0 %v2087
    %2668 = vmatprep.subr.bf16.mxu0 0
    %2669 = vmatpush1.bf16.msra.mxu0 %v2088
    %2670 = vmatprep.subr.bf16.mxu0 0
    %2671 = vmatpush1.bf16.msra.mxu0 %v2089
    %2672 = vmatprep.subr.bf16.mxu0 0
    %2673 = vmatpush1.bf16.msra.mxu0 %v2090
    %2674 = vmatprep.subr.bf16.mxu0 0
    %2675 = vmatpush1.bf16.msra.mxu0 %v2091
    %2676 = vmatprep.subr.bf16.mxu0 0
    %2677 = vmatpush1.bf16.msra.mxu0 %v2092
    %2678 = vmatprep.subr.bf16.mxu0 0
    %2679 = vmatpush1.bf16.msra.mxu0 %v2093
    %2680 = vmatprep.subr.bf16.mxu0 0
    %2681 = vmatpush1.bf16.msra.mxu0 %v2094
    %2682 = vmatprep.subr.bf16.mxu0 0
    %2683 = vmatpush1.bf16.msra.mxu0 %v2095
    %2684 = vmatprep.subr.bf16.mxu0 0
    %2685 = vmatpush1.bf16.msra.mxu0 %v2096
    %2686 = vmatprep.subr.bf16.mxu0 0
    %2687 = vmatpush1.bf16.msra.mxu0 %v2097
    %2688 = vmatprep.mubr.bf16.mxu0 %v2612
    %2689 = vmatmul.mubr.bf16.gmra.mrb[0].mxu0 %v2611
    %v2690 = vpop.f32.mrb[0].mxu0
    %v2691 = vadd.f32 %v2651, %v2690
    %v2692 = vpop.f32.mrb[0].mxu0
    %v2693 = vpop.f32.mrb[0].mxu0
    %v2694 = vpop.f32.mrb[0].mxu0
    %2695 = vdwg.mxu0
    %2696 = vmatprep.subr.bf16.mxu0 0
    %2697 = vmatpush1.bf16.msra.mxu0 %v2098
    %2698 = vmatprep.subr.bf16.mxu0 0
    %2699 = vmatpush1.bf16.msra.mxu0 %v2099
    %2700 = vmatprep.subr.bf16.mxu0 0
    %2701 = vmatpush1.bf16.msra.mxu0 %v2100
    %2702 = vmatprep.subr.bf16.mxu0 0
    %2703 = vmatpush1.bf16.msra.mxu0 %v2101
    %2704 = vmatprep.subr.bf16.mxu0 0
    %2705 = vmatpush1.bf16.msra.mxu0 %v2102
    %2706 = vmatprep.subr.bf16.mxu0 0
    %2707 = vmatpush1.bf16.msra.mxu0 %v2103
    %2708 = vmatprep.subr.bf16.mxu0 0
    %2709 = vmatpush1.bf16.msra.mxu0 %v2104
    %2710 = vmatprep.subr.bf16.mxu0 0
    %2711 = vmatpush1.bf16.msra.mxu0 %v2105
    %2712 = vmatprep.subr.bf16.mxu0 0
    %2713 = vmatpush1.bf16.msra.mxu0 %v2106
    %2714 = vmatprep.subr.bf16.mxu0 0
    %2715 = vmatpush1.bf16.msra.mxu0 %v2107
    %2716 = vmatprep.subr.bf16.mxu0 0
    %2717 = vmatpush1.bf16.msra.mxu0 %v2108
    %2718 = vmatprep.subr.bf16.mxu0 0
    %2719 = vmatpush1.bf16.msra.mxu0 %v2109
    %2720 = vmatprep.subr.bf16.mxu0 0
    %2721 = vmatpush1.bf16.msra.mxu0 %v2110
    %2722 = vmatprep.subr.bf16.mxu0 0
    %2723 = vmatpush1.bf16.msra.mxu0 %v2111
    %2724 = vmatprep.subr.bf16.mxu0 0
    %2725 = vmatpush1.bf16.msra.mxu0 %v2112
    %2726 = vmatprep.subr.bf16.mxu0 0
    %2727 = vmatpush1.bf16.msra.mxu0 %v2113
    %2728 = vmatprep.mubr.bf16.mxu0 %v2614
    %2729 = vmatmul.mubr.bf16.gmra.mrb[0].mxu0 %v2613
    %v2730 = vpop.f32.mrb[0].mxu0
    %v2731 = vadd.f32 %v2691, %v2730
    %v2732 = vpop.f32.mrb[0].mxu0
    %v2733 = vpop.f32.mrb[0].mxu0
    %v2734 = vpop.f32.mrb[0].mxu0
    %2735 = vdwg.mxu0
    %2736 = vmatprep.subr.bf16.mxu0 0
    %2737 = vmatpush1.bf16.msra.mxu0 %v2114
    %2738 = vmatprep.subr.bf16.mxu0 0
    %2739 = vmatpush1.bf16.msra.mxu0 %v2115
    %2740 = vmatprep.subr.bf16.mxu0 0
    %2741 = vmatpush1.bf16.msra.mxu0 %v2116
    %2742 = vmatprep.subr.bf16.mxu0 0
    %2743 = vmatpush1.bf16.msra.mxu0 %v2117
    %2744 = vmatprep.subr.bf16.mxu0 0
    %2745 = vmatpush1.bf16.msra.mxu0 %v2118
    %2746 = vmatprep.subr.bf16.mxu0 0
    %2747 = vmatpush1.bf16.msra.mxu0 %v2119
    %2748 = vmatprep.subr.bf16.mxu0 0
    %2749 = vmatpush1.bf16.msra.mxu0 %v2120
    %2750 = vmatprep.subr.bf16.mxu0 0
    %2751 = vmatpush1.bf16.msra.mxu0 %v2121
    %2752 = vmatprep.subr.bf16.mxu0 0
    %2753 = vmatpush1.bf16.msra.mxu0 0
    %2754 = vmatprep.subr.bf16.mxu0 0
    %2755 = vmatpush1.bf16.msra.mxu0 0
    %2756 = vmatprep.subr.bf16.mxu0 0
    %2757 = vmatpush1.bf16.msra.mxu0 0
    %2758 = vmatprep.subr.bf16.mxu0 0
    %2759 = vmatpush1.bf16.msra.mxu0 0
    %2760 = vmatprep.subr.bf16.mxu0 0
    %2761 = vmatpush1.bf16.msra.mxu0 0
    %2762 = vmatprep.subr.bf16.mxu0 0
    %2763 = vmatpush1.bf16.msra.mxu0 0
    %2764 = vmatprep.subr.bf16.mxu0 0
    %2765 = vmatpush1.bf16.msra.mxu0 0
    %2766 = vmatprep.subr.bf16.mxu0 0
    %2767 = vmatpush1.bf16.msra.mxu0 0
    %2768 = vmatprep.mubr.bf16.mxu0 0
    %2769 = vmatmul.mubr.bf16.gmra.mrb[0].mxu0 %v2615
    %v2770 = vpop.f32.mrb[0].mxu0
    %v2771 = vadd.f32 %v2731, %v2770
    %v2772 = vpop.f32.mrb[0].mxu0
    %v2773 = vpop.f32.mrb[0].mxu0
    %v2774 = vpop.f32.mrb[0].mxu0
    %2775 = vdwg.mxu0
    %v2776 = vmul.f32 %v2771, 0.04
    %v2777 = vadd.f32 %v2776, 1e-05
    %v2778 = vrsqrt.pop %v2777
    %v2779 = vpack.c.bf16 %v2778, %v2778
    %v2781 = vsel %vm2428, %v2779, 0
    %2783 = vmatprep.subr.bf16.mxu0 %v2401
    %2784 = vmatpush1.bf16.msra.mxu0 %v2400
    %2785 = vmatprep.subr.bf16.mxu0 %v2408
    %2786 = vmatpush1.bf16.msra.mxu0 %v2407
    %2787 = vmatprep.subr.bf16.mxu0 0
    %2788 = vmatpush1.bf16.msra.mxu0 0
    %2789 = vmatprep.subr.bf16.mxu0 0
    %2790 = vmatpush1.bf16.msra.mxu0 0
    %2791 = vmatprep.subr.bf16.mxu0 0
    %2792 = vmatpush1.bf16.msra.mxu0 0
    %2793 = vmatprep.subr.bf16.mxu0 0
    %2794 = vmatpush1.bf16.msra.mxu0 0
    %2795 = vmatprep.subr.bf16.mxu0 0
    %2796 = vmatpush1.bf16.msra.mxu0 0
    %2797 = vmatprep.subr.bf16.mxu0 0
    %2798 = vmatpush1.bf16.msra.mxu0 0
    %2799 = vmatprep.subr.bf16.mxu0 0
    %2800 = vmatpush1.bf16.msra.mxu0 0
    %2801 = vmatprep.subr.bf16.mxu0 0
    %2802 = vmatpush1.bf16.msra.mxu0 0
    %2803 = vmatprep.subr.bf16.mxu0 0
    %2804 = vmatpush1.bf16.msra.mxu0 0
    %2805 = vmatprep.subr.bf16.mxu0 0
    %2806 = vmatpush1.bf16.msra.mxu0 0
    %2807 = vmatprep.subr.bf16.mxu0 0
    %2808 = vmatpush1.bf16.msra.mxu0 0
    %2809 = vmatprep.subr.bf16.mxu0 0
    %2810 = vmatpush1.bf16.msra.mxu0 0
    %2811 = vmatprep.subr.bf16.mxu0 0
    %2812 = vmatpush1.bf16.msra.mxu0 0
    %2813 = vmatprep.subr.bf16.mxu0 0
    %2814 = vmatpush1.bf16.msra.mxu0 0
    %2815 = vmatprep.mubr.bf16.mxu0 0
    %2816 = vmatmul.mubr.bf16.gmra.mrb[0].mxu0 %v2781
    %v2817 = vpop.f32.mrb[0].mxu0
    %v2818 = vadd.f32 0.0, %v2817
    %v2819 = vpop.f32.mrb[0].mxu0
    %v2820 = vadd.f32 0.0, %v2819
    %v2821 = vpop.f32.mrb[0].mxu0
    %v2822 = vpop.f32.mrb[0].mxu0
    %2823 = vdwg.mxu0
    %2824 = vmatprep.subr.bf16.mxu0 %v2403
    %2825 = vmatpush1.bf16.msra.mxu0 %v2402
    %2826 = vmatprep.subr.bf16.mxu0 %v2410
    %2827 = vmatpush1.bf16.msra.mxu0 %v2409
    %2828 = vmatprep.subr.bf16.mxu0 0
    %2829 = vmatpush1.bf16.msra.mxu0 0
    %2830 = vmatprep.subr.bf16.mxu0 0
    %2831 = vmatpush1.bf16.msra.mxu0 0
    %2832 = vmatprep.subr.bf16.mxu0 0
    %2833 = vmatpush1.bf16.msra.mxu0 0
    %2834 = vmatprep.subr.bf16.mxu0 0
    %2835 = vmatpush1.bf16.msra.mxu0 0
    %2836 = vmatprep.subr.bf16.mxu0 0
    %2837 = vmatpush1.bf16.msra.mxu0 0
    %2838 = vmatprep.subr.bf16.mxu0 0
    %2839 = vmatpush1.bf16.msra.mxu0 0
    %2840 = vmatprep.subr.bf16.mxu0 0
    %2841 = vmatpush1.bf16.msra.mxu0 0
    %2842 = vmatprep.subr.bf16.mxu0 0
    %2843 = vmatpush1.bf16.msra.mxu0 0
    %2844 = vmatprep.subr.bf16.mxu0 0
    %2845 = vmatpush1.bf16.msra.mxu0 0
    %2846 = vmatprep.subr.bf16.mxu0 0
    %2847 = vmatpush1.bf16.msra.mxu0 0
    %2848 = vmatprep.subr.bf16.mxu0 0
    %2849 = vmatpush1.bf16.msra.mxu0 0
    %2850 = vmatprep.subr.bf16.mxu0 0
    %2851 = vmatpush1.bf16.msra.mxu0 0
    %2852 = vmatprep.subr.bf16.mxu0 0
    %2853 = vmatpush1.bf16.msra.mxu0 0
    %2854 = vmatprep.subr.bf16.mxu0 0
    %2855 = vmatpush1.bf16.msra.mxu0 0
    %2856 = vmatprep.mubr.bf16.mxu0 0
    %2857 = vmatmul.mubr.bf16.gmra.mrb[0].mxu0 %v2781
    %v2858 = vpop.f32.mrb[0].mxu0
    %v2859 = vadd.f32 0.0, %v2858
    %v2860 = vpop.f32.mrb[0].mxu0
    %v2861 = vadd.f32 0.0, %v2860
    %v2862 = vpop.f32.mrb[0].mxu0
    %v2863 = vpop.f32.mrb[0].mxu0
    %2864 = vdwg.mxu0
    %2865 = vmatprep.subr.bf16.mxu0 %v2405
    %2866 = vmatpush1.bf16.msra.mxu0 %v2404
    %2867 = vmatprep.subr.bf16.mxu0 %v2412
    %2868 = vmatpush1.bf16.msra.mxu0 %v2411
    %2869 = vmatprep.subr.bf16.mxu0 0
    %2870 = vmatpush1.bf16.msra.mxu0 0
    %2871 = vmatprep.subr.bf16.mxu0 0
    %2872 = vmatpush1.bf16.msra.mxu0 0
    %2873 = vmatprep.subr.bf16.mxu0 0
    %2874 = vmatpush1.bf16.msra.mxu0 0
    %2875 = vmatprep.subr.bf16.mxu0 0
    %2876 = vmatpush1.bf16.msra.mxu0 0
    %2877 = vmatprep.subr.bf16.mxu0 0
    %2878 = vmatpush1.bf16.msra.mxu0 0
    %2879 = vmatprep.subr.bf16.mxu0 0
    %2880 = vmatpush1.bf16.msra.mxu0 0
    %2881 = vmatprep.subr.bf16.mxu0 0
    %2882 = vmatpush1.bf16.msra.mxu0 0
    %2883 = vmatprep.subr.bf16.mxu0 0
    %2884 = vmatpush1.bf16.msra.mxu0 0
    %2885 = vmatprep.subr.bf16.mxu0 0
    %2886 = vmatpush1.bf16.msra.mxu0 0
    %2887 = vmatprep.subr.bf16.mxu0 0
    %2888 = vmatpush1.bf16.msra.mxu0 0
    %2889 = vmatprep.subr.bf16.mxu0 0
    %2890 = vmatpush1.bf16.msra.mxu0 0
    %2891 = vmatprep.subr.bf16.mxu0 0
    %2892 = vmatpush1.bf16.msra.mxu0 0
    %2893 = vmatprep.subr.bf16.mxu0 0
    %2894 = vmatpush1.bf16.msra.mxu0 0
    %2895 = vmatprep.subr.bf16.mxu0 0
    %2896 = vmatpush1.bf16.msra.mxu0 0
    %2897 = vmatprep.mubr.bf16.mxu0 0
    %2898 = vmatmul.mubr.bf16.gmra.mrb[0].mxu0 %v2781
    %v2899 = vpop.f32.mrb[0].mxu0
    %v2900 = vadd.f32 0.0, %v2899
    %v2901 = vpop.f32.mrb[0].mxu0
    %v2902 = vadd.f32 0.0, %v2901
    %v2903 = vpop.f32.mrb[0].mxu0
    %v2904 = vpop.f32.mrb[0].mxu0
    %2905 = vdwg.mxu0
    %2906 = vmatprep.subr.bf16.mxu0 0
    %2907 = vmatpush1.bf16.msra.mxu0 %v2406
    %2908 = vmatprep.subr.bf16.mxu0 0
    %2909 = vmatpush1.bf16.msra.mxu0 %v2413
    %2910 = vmatprep.subr.bf16.mxu0 0
    %2911 = vmatpush1.bf16.msra.mxu0 0
    %2912 = vmatprep.subr.bf16.mxu0 0
    %2913 = vmatpush1.bf16.msra.mxu0 0
    %2914 = vmatprep.subr.bf16.mxu0 0
    %2915 = vmatpush1.bf16.msra.mxu0 0
    %2916 = vmatprep.subr.bf16.mxu0 0
    %2917 = vmatpush1.bf16.msra.mxu0 0
    %2918 = vmatprep.subr.bf16.mxu0 0
    %2919 = vmatpush1.bf16.msra.mxu0 0
    %2920 = vmatprep.subr.bf16.mxu0 0
    %2921 = vmatpush1.bf16.msra.mxu0 0
    %2922 = vmatprep.subr.bf16.mxu0 0
    %2923 = vmatpush1.bf16.msra.mxu0 0
    %2924 = vmatprep.subr.bf16.mxu0 0
    %2925 = vmatpush1.bf16.msra.mxu0 0
    %2926 = vmatprep.subr.bf16.mxu0 0
    %2927 = vmatpush1.bf16.msra.mxu0 0
    %2928 = vmatprep.subr.bf16.mxu0 0
    %2929 = vmatpush1.bf16.msra.mxu0 0
    %2930 = vmatprep.subr.bf16.mxu0 0
    %2931 = vmatpush1.bf16.msra.mxu0 0
    %2932 = vmatprep.subr.bf16.mxu0 0
    %2933 = vmatpush1.bf16.msra.mxu0 0
    %2934 = vmatprep.subr.bf16.mxu0 0
    %2935 = vmatpush1.bf16.msra.mxu0 0
    %2936 = vmatprep.subr.bf16.mxu0 0
    %2937 = vmatpush1.bf16.msra.mxu0 0
    %2938 = vmatprep.mubr.bf16.mxu0 0
    %2939 = vmatmul.mubr.bf16.gmra.mrb[0].mxu0 %v2781
    %v2940 = vpop.f32.mrb[0].mxu0
    %v2941 = vadd.f32 0.0, %v2940
    %v2942 = vpop.f32.mrb[0].mxu0
    %v2943 = vpop.f32.mrb[0].mxu0
    %v2944 = vpop.f32.mrb[0].mxu0
    %2945 = vdwg.mxu0
    %v2946 = vmul.f32 %v2595, %v2818
    %v2947 = vmul.f32 %v2596, %v2820
    %v2948 = vmul.f32 %v2597, %v2859
    %v2949 = vmul.f32 %v2598, %v2861
    %v2950 = vmul.f32 %v2599, %v2900
    %v2951 = vmul.f32 %v2600, %v2902
    %v2952 = vmul.f32 %v2601, %v2941
    %v2953 = vpack.c.bf16 %v2946, %v2946
    %v2954 = vpack.c.bf16 %v2947, %v2947
    %v2955 = vpack.c.bf16 %v2948, %v2948
    %v2956 = vpack.c.bf16 %v2949, %v2949
    %v2957 = vpack.c.bf16 %v2950, %v2950
    %v2958 = vpack.c.bf16 %v2951, %v2951
    %v2959 = vpack.c.bf16 %v2952, %v2952
    %v2960 = vld [vmem:[#allocation14] sm:$0xff]
    %v2961 = vld [vmem:[#allocation14 + $0x8] sm:$0xff]
    %v2962 = vld [vmem:[#allocation14 + $0x10] sm:$0xff]
    %v2963 = vld [vmem:[#allocation14 + $0x18] sm:$0xff]
    %v2964 = vld [vmem:[#allocation14 + $0x20] sm:$0xf]
    %v2965 = vld [vmem:[#allocation14 + $0x24] sm:$0xff]
    %v2966 = vld [vmem:[#allocation14 + $0x2c] sm:$0xff]
    %v2967 = vld [vmem:[#allocation14 + $0x34] sm:$0xff]
    %v2968 = vld [vmem:[#allocation14 + $0x3c] sm:$0xff]
    %v2969 = vld [vmem:[#allocation14 + $0x44] sm:$0xf]
    %v2970 = vld [vmem:[#allocation14 + $0x48] sm:$0xff]
    %v2971 = vld [vmem:[#allocation14 + $0x50] sm:$0xff]
    %v2972 = vld [vmem:[#allocation14 + $0x58] sm:$0xff]
    %v2973 = vld [vmem:[#allocation14 + $0x60] sm:$0xff]
    %v2974 = vld [vmem:[#allocation14 + $0x68] sm:$0xf]
    %v2975 = vld [vmem:[#allocation14 + $0x6c] sm:$0xff]
    %v2976 = vld [vmem:[#allocation14 + $0x74] sm:$0xff]
    %v2977 = vld [vmem:[#allocation14 + $0x7c] sm:$0xff]
    %v2978 = vld [vmem:[#allocation14 + $0x84] sm:$0xff]
    %v2979 = vld [vmem:[#allocation14 + $0x8c] sm:$0xf]
    %v2980 = vld [vmem:[#allocation14 + $0x90] sm:$0xff]
    %v2981 = vld [vmem:[#allocation14 + $0x98] sm:$0xff]
    %v2982 = vld [vmem:[#allocation14 + $0xa0] sm:$0xff]
    %v2983 = vld [vmem:[#allocation14 + $0xa8] sm:$0xff]
    %v2984 = vld [vmem:[#allocation14 + $0xb0] sm:$0xf]
    %v2985 = vld [vmem:[#allocation14 + $0xb4] sm:$0xff]
    %v2986 = vld [vmem:[#allocation14 + $0xbc] sm:$0xff]
    %v2987 = vld [vmem:[#allocation14 + $0xc4] sm:$0xff]
    %v2988 = vld [vmem:[#allocation14 + $0xcc] sm:$0xff]
    %v2989 = vld [vmem:[#allocation14 + $0xd4] sm:$0xf]
    %v2990 = vld [vmem:[#allocation14 + $0xd8] sm:$0xff]
    %v2991 = vld [vmem:[#allocation14 + $0xe0] sm:$0xff]
    %v2992 = vld [vmem:[#allocation14 + $0xe8] sm:$0xff]
    %v2993 = vld [vmem:[#allocation14 + $0xf0] sm:$0xff]
    %v2994 = vld [vmem:[#allocation14 + $0xf8] sm:$0xf]
    %v2995 = vld [vmem:[#allocation14 + $0xfc] sm:$0xff]
    %v2996 = vld [vmem:[#allocation14 + $0x104] sm:$0xff]
    %v2997 = vld [vmem:[#allocation14 + $0x10c] sm:$0xff]
    %v2998 = vld [vmem:[#allocation14 + $0x114] sm:$0xff]
    %v2999 = vld [vmem:[#allocation14 + $0x11c] sm:$0xf]
    %v3000 = vld [vmem:[#allocation14 + $0x120] sm:$0xff]
    %v3001 = vld [vmem:[#allocation14 + $0x128] sm:$0xff]
    %v3002 = vld [vmem:[#allocation14 + $0x130] sm:$0xff]
    %v3003 = vld [vmem:[#allocation14 + $0x138] sm:$0xff]
    %v3004 = vld [vmem:[#allocation14 + $0x140] sm:$0xf]
    %v3005 = vld [vmem:[#allocation14 + $0x144] sm:$0xff]
    %v3006 = vld [vmem:[#allocation14 + $0x14c] sm:$0xff]
    %v3007 = vld [vmem:[#allocation14 + $0x154] sm:$0xff]
    %v3008 = vld [vmem:[#allocation14 + $0x15c] sm:$0xff]
    %v3009 = vld [vmem:[#allocation14 + $0x164] sm:$0xf]
    %v3010 = vld [vmem:[#allocation14 + $0x168] sm:$0xff]
    %v3011 = vld [vmem:[#allocation14 + $0x170] sm:$0xff]
    %v3012 = vld [vmem:[#allocation14 + $0x178] sm:$0xff]
    %v3013 = vld [vmem:[#allocation14 + $0x180] sm:$0xff]
    %v3014 = vld [vmem:[#allocation14 + $0x188] sm:$0xf]
    %v3015 = vld [vmem:[#allocation14 + $0x18c] sm:$0xff]
    %v3016 = vld [vmem:[#allocation14 + $0x194] sm:$0xff]
    %v3017 = vld [vmem:[#allocation14 + $0x19c] sm:$0xff]
    %v3018 = vld [vmem:[#allocation14 + $0x1a4] sm:$0xff]
    %v3019 = vld [vmem:[#allocation14 + $0x1ac] sm:$0xf]
    %v3020 = vld [vmem:[#allocation14 + $0x1b0] sm:$0xff]
    %v3021 = vld [vmem:[#allocation14 + $0x1b8] sm:$0xff]
    %v3022 = vld [vmem:[#allocation14 + $0x1c0] sm:$0xff]
    %v3023 = vld [vmem:[#allocation14 + $0x1c8] sm:$0xff]
    %v3024 = vld [vmem:[#allocation14 + $0x1d0] sm:$0xf]
    %v3025 = vld [vmem:[#allocation14 + $0x1d4] sm:$0xff]
    %v3026 = vld [vmem:[#allocation14 + $0x1dc] sm:$0xff]
    %v3027 = vld [vmem:[#allocation14 + $0x1e4] sm:$0xff]
    %v3028 = vld [vmem:[#allocation14 + $0x1ec] sm:$0xff]
    %v3029 = vld [vmem:[#allocation14 + $0x1f4] sm:$0xf]
    %v3030 = vld [vmem:[#allocation14 + $0x1f8] sm:$0xff]
    %v3031 = vld [vmem:[#allocation14 + $0x200] sm:$0xff]
    %v3032 = vld [vmem:[#allocation14 + $0x208] sm:$0xff]
    %v3033 = vld [vmem:[#allocation14 + $0x210] sm:$0xff]
    %v3034 = vld [vmem:[#allocation14 + $0x218] sm:$0xf]
    %v3035 = vld [vmem:[#allocation14 + $0x21c] sm:$0xff]
    %v3036 = vld [vmem:[#allocation14 + $0x224] sm:$0xff]
    %v3037 = vld [vmem:[#allocation14 + $0x22c] sm:$0xff]
    %v3038 = vld [vmem:[#allocation14 + $0x234] sm:$0xff]
    %v3039 = vld [vmem:[#allocation14 + $0x23c] sm:$0xf]
    %v3040 = vld [vmem:[#allocation14 + $0x240] sm:$0xff]
    %v3041 = vld [vmem:[#allocation14 + $0x248] sm:$0xff]
    %v3042 = vld [vmem:[#allocation14 + $0x250] sm:$0xff]
    %v3043 = vld [vmem:[#allocation14 + $0x258] sm:$0xff]
    %v3044 = vld [vmem:[#allocation14 + $0x260] sm:$0xf]
    %v3045 = vld [vmem:[#allocation14 + $0x264] sm:$0xff]
    %v3046 = vld [vmem:[#allocation14 + $0x26c] sm:$0xff]
    %v3047 = vld [vmem:[#allocation14 + $0x274] sm:$0xff]
    %v3048 = vld [vmem:[#allocation14 + $0x27c] sm:$0xff]
    %v3049 = vld [vmem:[#allocation14 + $0x284] sm:$0xf]
    %v3050 = vld [vmem:[#allocation14 + $0x288] sm:$0xff]
    %v3051 = vld [vmem:[#allocation14 + $0x290] sm:$0xff]
    %v3052 = vld [vmem:[#allocation14 + $0x298] sm:$0xff]
    %v3053 = vld [vmem:[#allocation14 + $0x2a0] sm:$0xff]
    %v3054 = vld [vmem:[#allocation14 + $0x2a8] sm:$0xf]
    %v3055 = vld [vmem:[#allocation14 + $0x2ac] sm:$0xff]
    %v3056 = vld [vmem:[#allocation14 + $0x2b4] sm:$0xff]
    %v3057 = vld [vmem:[#allocation14 + $0x2bc] sm:$0xff]
    %v3058 = vld [vmem:[#allocation14 + $0x2c4] sm:$0xff]
    %v3059 = vld [vmem:[#allocation14 + $0x2cc] sm:$0xf]
    %v3060 = vld [vmem:[#allocation14 + $0x2d0] sm:$0xff]
    %v3061 = vld [vmem:[#allocation14 + $0x2d8] sm:$0xff]
    %v3062 = vld [vmem:[#allocation14 + $0x2e0] sm:$0xff]
    %v3063 = vld [vmem:[#allocation14 + $0x2e8] sm:$0xff]
    %v3064 = vld [vmem:[#allocation14 + $0x2f0] sm:$0xf]
    %v3065 = vld [vmem:[#allocation14 + $0x2f4] sm:$0xff]
    %v3066 = vld [vmem:[#allocation14 + $0x2fc] sm:$0xff]
    %v3067 = vld [vmem:[#allocation14 + $0x304] sm:$0xff]
    %v3068 = vld [vmem:[#allocation14 + $0x30c] sm:$0xff]
    %v3069 = vld [vmem:[#allocation14 + $0x314] sm:$0xf]
    %v3070 = vld [vmem:[#allocation14 + $0x318] sm:$0xff]
    %v3071 = vld [vmem:[#allocation14 + $0x320] sm:$0xff]
    %v3072 = vld [vmem:[#allocation14 + $0x328] sm:$0xff]
    %v3073 = vld [vmem:[#allocation14 + $0x330] sm:$0xff]
    %v3074 = vld [vmem:[#allocation14 + $0x338] sm:$0xf]
    %v3075 = vld [vmem:[#allocation14 + $0x33c] sm:$0xff]
    %v3076 = vld [vmem:[#allocation14 + $0x344] sm:$0xff]
    %v3077 = vld [vmem:[#allocation14 + $0x34c] sm:$0xff]
    %v3078 = vld [vmem:[#allocation14 + $0x354] sm:$0xff]
    %v3079 = vld [vmem:[#allocation14 + $0x35c] sm:$0xf]
    %v3080 = vld [vmem:[#allocation14 + $0x360] sm:$0xff]
    %v3081 = vld [vmem:[#allocation14 + $0x368] sm:$0xff]
    %v3082 = vld [vmem:[#allocation14 + $0x370] sm:$0xff]
    %v3083 = vld [vmem:[#allocation14 + $0x378] sm:$0xff]
    %v3084 = vld [vmem:[#allocation14 + $0x380] sm:$0xf]
    %v3085 = vld [vmem:[#allocation14 + $0x384] sm:$0xff]
    %v3086 = vld [vmem:[#allocation14 + $0x38c] sm:$0xff]
    %v3087 = vld [vmem:[#allocation14 + $0x394] sm:$0xff]
    %v3088 = vld [vmem:[#allocation14 + $0x39c] sm:$0xff]
    %v3089 = vld [vmem:[#allocation14 + $0x3a4] sm:$0xf]
    %v3090 = vld [vmem:[#allocation14 + $0x3a8] sm:$0xff]
    %v3091 = vld [vmem:[#allocation14 + $0x3b0] sm:$0xff]
    %v3092 = vld [vmem:[#allocation14 + $0x3b8] sm:$0xff]
    %v3093 = vld [vmem:[#allocation14 + $0x3c0] sm:$0xff]
    %v3094 = vld [vmem:[#allocation14 + $0x3c8] sm:$0xf]
    %v3095 = vld [vmem:[#allocation14 + $0x3cc] sm:$0xff]
    %v3096 = vld [vmem:[#allocation14 + $0x3d4] sm:$0xff]
    %v3097 = vld [vmem:[#allocation14 + $0x3dc] sm:$0xff]
    %v3098 = vld [vmem:[#allocation14 + $0x3e4] sm:$0xff]
    %v3099 = vld [vmem:[#allocation14 + $0x3ec] sm:$0xf]
    %v3100 = vld [vmem:[#allocation14 + $0x3f0] sm:$0xff]
    %v3101 = vld [vmem:[#allocation14 + $0x3f8] sm:$0xff]
    %v3102 = vld [vmem:[#allocation14 + $0x400] sm:$0xff]
    %v3103 = vld [vmem:[#allocation14 + $0x408] sm:$0xff]
    %v3104 = vld [vmem:[#allocation14 + $0x410] sm:$0xf]
    %v3105 = vld [vmem:[#allocation14 + $0x414] sm:$0xff]
    %v3106 = vld [vmem:[#allocation14 + $0x41c] sm:$0xff]
    %v3107 = vld [vmem:[#allocation14 + $0x424] sm:$0xff]
    %v3108 = vld [vmem:[#allocation14 + $0x42c] sm:$0xff]
    %v3109 = vld [vmem:[#allocation14 + $0x434] sm:$0xf]
    %v3110 = vld [vmem:[#allocation14 + $0x438] sm:$0xff]
    %v3111 = vld [vmem:[#allocation14 + $0x440] sm:$0xff]
    %v3112 = vld [vmem:[#allocation14 + $0x448] sm:$0xff]
    %v3113 = vld [vmem:[#allocation14 + $0x450] sm:$0xff]
    %v3114 = vld [vmem:[#allocation14 + $0x458] sm:$0xf]
    %v3115 = vld [vmem:[#allocation14 + $0x45c] sm:$0xff]
    %v3116 = vld [vmem:[#allocation14 + $0x464] sm:$0xff]
    %v3117 = vld [vmem:[#allocation14 + $0x46c] sm:$0xff]
    %v3118 = vld [vmem:[#allocation14 + $0x474] sm:$0xff]
    %v3119 = vld [vmem:[#allocation14 + $0x47c] sm:$0xf]
    %v3120 = vld [vmem:[#allocation14 + $0x480] sm:$0xff]
    %v3121 = vld [vmem:[#allocation14 + $0x488] sm:$0xff]
    %v3122 = vld [vmem:[#allocation14 + $0x490] sm:$0xff]
    %v3123 = vld [vmem:[#allocation14 + $0x498] sm:$0xff]
    %v3124 = vld [vmem:[#allocation14 + $0x4a0] sm:$0xf]
    %v3125 = vld [vmem:[#allocation14 + $0x4a4] sm:$0xff]
    %v3126 = vld [vmem:[#allocation14 + $0x4ac] sm:$0xff]
    %v3127 = vld [vmem:[#allocation14 + $0x4b4] sm:$0xff]
    %v3128 = vld [vmem:[#allocation14 + $0x4bc] sm:$0xff]
    %v3129 = vld [vmem:[#allocation14 + $0x4c4] sm:$0xf]
    %v3130 = vld [vmem:[#allocation14 + $0x4c8] sm:$0xff]
    %v3131 = vld [vmem:[#allocation14 + $0x4d0] sm:$0xff]
    %v3132 = vld [vmem:[#allocation14 + $0x4d8] sm:$0xff]
    %v3133 = vld [vmem:[#allocation14 + $0x4e0] sm:$0xff]
    %v3134 = vld [vmem:[#allocation14 + $0x4e8] sm:$0xf]
    %v3135 = vld [vmem:[#allocation14 + $0x4ec] sm:$0xff]
    %v3136 = vld [vmem:[#allocation14 + $0x4f4] sm:$0xff]
    %v3137 = vld [vmem:[#allocation14 + $0x4fc] sm:$0xff]
    %v3138 = vld [vmem:[#allocation14 + $0x504] sm:$0xff]
    %v3139 = vld [vmem:[#allocation14 + $0x50c] sm:$0xf]
    %v3140 = vld [vmem:[#allocation14 + $0x510] sm:$0xff]
    %v3141 = vld [vmem:[#allocation14 + $0x518] sm:$0xff]
    %v3142 = vld [vmem:[#allocation14 + $0x520] sm:$0xff]
    %v3143 = vld [vmem:[#allocation14 + $0x528] sm:$0xff]
    %v3144 = vld [vmem:[#allocation14 + $0x530] sm:$0xf]
    %v3145 = vld [vmem:[#allocation14 + $0x534] sm:$0xff]
    %v3146 = vld [vmem:[#allocation14 + $0x53c] sm:$0xff]
    %v3147 = vld [vmem:[#allocation14 + $0x544] sm:$0xff]
    %v3148 = vld [vmem:[#allocation14 + $0x54c] sm:$0xff]
    %v3149 = vld [vmem:[#allocation14 + $0x554] sm:$0xf]
    %v3150 = vld [vmem:[#allocation14 + $0x558] sm:$0xff]
    %v3151 = vld [vmem:[#allocation14 + $0x560] sm:$0xff]
    %v3152 = vld [vmem:[#allocation14 + $0x568] sm:$0xff]
    %v3153 = vld [vmem:[#allocation14 + $0x570] sm:$0xff]
    %v3154 = vld [vmem:[#allocation14 + $0x578] sm:$0xf]
    %v3155 = vld [vmem:[#allocation14 + $0x57c] sm:$0xff]
    %v3156 = vld [vmem:[#allocation14 + $0x584] sm:$0xff]
    %v3157 = vld [vmem:[#allocation14 + $0x58c] sm:$0xff]
    %v3158 = vld [vmem:[#allocation14 + $0x594] sm:$0xff]
    %v3159 = vld [vmem:[#allocation14 + $0x59c] sm:$0xf]
    %v3160 = vld [vmem:[#allocation14 + $0x5a0] sm:$0xff]
    %v3161 = vld [vmem:[#allocation14 + $0x5a8] sm:$0xff]
    %v3162 = vld [vmem:[#allocation14 + $0x5b0] sm:$0xff]
    %v3163 = vld [vmem:[#allocation14 + $0x5b8] sm:$0xff]
    %v3164 = vld [vmem:[#allocation14 + $0x5c0] sm:$0xf]
    %v3165 = vld [vmem:[#allocation14 + $0x5c4] sm:$0xff]
    %v3166 = vld [vmem:[#allocation14 + $0x5cc] sm:$0xff]
    %v3167 = vld [vmem:[#allocation14 + $0x5d4] sm:$0xff]
    %v3168 = vld [vmem:[#allocation14 + $0x5dc] sm:$0xff]
    %v3169 = vld [vmem:[#allocation14 + $0x5e4] sm:$0xf]
    %v3170 = vld [vmem:[#allocation14 + $0x5e8] sm:$0xff]
    %v3171 = vld [vmem:[#allocation14 + $0x5f0] sm:$0xff]
    %v3172 = vld [vmem:[#allocation14 + $0x5f8] sm:$0xff]
    %v3173 = vld [vmem:[#allocation14 + $0x600] sm:$0xff]
    %v3174 = vld [vmem:[#allocation14 + $0x608] sm:$0xf]
    %v3175 = vld [vmem:[#allocation14 + $0x60c] sm:$0xff]
    %v3176 = vld [vmem:[#allocation14 + $0x614] sm:$0xff]
    %v3177 = vld [vmem:[#allocation14 + $0x61c] sm:$0xff]
    %v3178 = vld [vmem:[#allocation14 + $0x624] sm:$0xff]
    %v3179 = vld [vmem:[#allocation14 + $0x62c] sm:$0xf]
    %v3180 = vld [vmem:[#allocation14 + $0x630] sm:$0xff]
    %v3181 = vld [vmem:[#allocation14 + $0x638] sm:$0xff]
    %v3182 = vld [vmem:[#allocation14 + $0x640] sm:$0xff]
    %v3183 = vld [vmem:[#allocation14 + $0x648] sm:$0xff]
    %v3184 = vld [vmem:[#allocation14 + $0x650] sm:$0xf]
    %v3185 = vld [vmem:[#allocation14 + $0x654] sm:$0xff]
    %v3186 = vld [vmem:[#allocation14 + $0x65c] sm:$0xff]
    %v3187 = vld [vmem:[#allocation14 + $0x664] sm:$0xff]
    %v3188 = vld [vmem:[#allocation14 + $0x66c] sm:$0xff]
    %v3189 = vld [vmem:[#allocation14 + $0x674] sm:$0xf]
    %v3190 = vld [vmem:[#allocation14 + $0x678] sm:$0xff]
    %v3191 = vld [vmem:[#allocation14 + $0x680] sm:$0xff]
    %v3192 = vld [vmem:[#allocation14 + $0x688] sm:$0xff]
    %v3193 = vld [vmem:[#allocation14 + $0x690] sm:$0xff]
    %v3194 = vld [vmem:[#allocation14 + $0x698] sm:$0xf]
    %v3195 = vld [vmem:[#allocation14 + $0x69c] sm:$0xff]
    %v3196 = vld [vmem:[#allocation14 + $0x6a4] sm:$0xff]
    %v3197 = vld [vmem:[#allocation14 + $0x6ac] sm:$0xff]
    %v3198 = vld [vmem:[#allocation14 + $0x6b4] sm:$0xff]
    %v3199 = vld [vmem:[#allocation14 + $0x6bc] sm:$0xf]
    %v3200 = vld [vmem:[#allocation14 + $0x6c0] sm:$0xff]
    %v3201 = vld [vmem:[#allocation14 + $0x6c8] sm:$0xff]
    %v3202 = vld [vmem:[#allocation14 + $0x6d0] sm:$0xff]
    %v3203 = vld [vmem:[#allocation14 + $0x6d8] sm:$0xff]
    %v3204 = vld [vmem:[#allocation14 + $0x6e0] sm:$0xf]
    %v3205 = vld [vmem:[#allocation14 + $0x6e4] sm:$0xff]
    %v3206 = vld [vmem:[#allocation14 + $0x6ec] sm:$0xff]
    %v3207 = vld [vmem:[#allocation14 + $0x6f4] sm:$0xff]
    %v3208 = vld [vmem:[#allocation14 + $0x6fc] sm:$0xff]
    %v3209 = vld [vmem:[#allocation14 + $0x704] sm:$0xf]
    %v3210 = vld [vmem:[#allocation14 + $0x708] sm:$0xff]
    %v3211 = vld [vmem:[#allocation14 + $0x710] sm:$0xff]
    %v3212 = vld [vmem:[#allocation14 + $0x718] sm:$0xff]
    %v3213 = vld [vmem:[#allocation14 + $0x720] sm:$0xff]
    %v3214 = vld [vmem:[#allocation14 + $0x728] sm:$0xf]
    %v3215 = vld [vmem:[#allocation14 + $0x72c] sm:$0xff]
    %v3216 = vld [vmem:[#allocation14 + $0x734] sm:$0xff]
    %v3217 = vld [vmem:[#allocation14 + $0x73c] sm:$0xff]
    %v3218 = vld [vmem:[#allocation14 + $0x744] sm:$0xff]
    %v3219 = vld [vmem:[#allocation14 + $0x74c] sm:$0xf]
    %v3220 = vld [vmem:[#allocation14 + $0x750] sm:$0xff]
    %v3221 = vld [vmem:[#allocation14 + $0x758] sm:$0xff]
    %v3222 = vld [vmem:[#allocation14 + $0x760] sm:$0xff]
    %v3223 = vld [vmem:[#allocation14 + $0x768] sm:$0xff]
    %v3224 = vld [vmem:[#allocation14 + $0x770] sm:$0xf]
    %v3225 = vld [vmem:[#allocation14 + $0x774] sm:$0xff]
    %v3226 = vld [vmem:[#allocation14 + $0x77c] sm:$0xff]
    %v3227 = vld [vmem:[#allocation14 + $0x784] sm:$0xff]
    %v3228 = vld [vmem:[#allocation14 + $0x78c] sm:$0xff]
    %v3229 = vld [vmem:[#allocation14 + $0x794] sm:$0xf]
    %v3230 = vld [vmem:[#allocation14 + $0x798] sm:$0xff]
    %v3231 = vld [vmem:[#allocation14 + $0x7a0] sm:$0xff]
    %v3232 = vld [vmem:[#allocation14 + $0x7a8] sm:$0xff]
    %v3233 = vld [vmem:[#allocation14 + $0x7b0] sm:$0xff]
    %v3234 = vld [vmem:[#allocation14 + $0x7b8] sm:$0xf]
    %v3235 = vld [vmem:[#allocation14 + $0x7bc] sm:$0xff]
    %v3236 = vld [vmem:[#allocation14 + $0x7c4] sm:$0xff]
    %v3237 = vld [vmem:[#allocation14 + $0x7cc] sm:$0xff]
    %v3238 = vld [vmem:[#allocation14 + $0x7d4] sm:$0xff]
    %v3239 = vld [vmem:[#allocation14 + $0x7dc] sm:$0xf]
    %v3240 = vld [vmem:[#allocation14 + $0x7e0] sm:$0xff]
    %v3241 = vld [vmem:[#allocation14 + $0x7e8] sm:$0xff]
    %v3242 = vld [vmem:[#allocation14 + $0x7f0] sm:$0xff]
    %v3243 = vld [vmem:[#allocation14 + $0x7f8] sm:$0xff]
    %v3244 = vld [vmem:[#allocation14 + $0x800] sm:$0xf]
    %v3245 = vld [vmem:[#allocation14 + $0x804] sm:$0xff]
    %v3246 = vld [vmem:[#allocation14 + $0x80c] sm:$0xff]
    %v3247 = vld [vmem:[#allocation14 + $0x814] sm:$0xff]
    %v3248 = vld [vmem:[#allocation14 + $0x81c] sm:$0xff]
    %v3249 = vld [vmem:[#allocation14 + $0x824] sm:$0xf]
    %v3250 = vld [vmem:[#allocation14 + $0x828] sm:$0xff]
    %v3251 = vld [vmem:[#allocation14 + $0x830] sm:$0xff]
    %v3252 = vld [vmem:[#allocation14 + $0x838] sm:$0xff]
    %v3253 = vld [vmem:[#allocation14 + $0x840] sm:$0xff]
    %v3254 = vld [vmem:[#allocation14 + $0x848] sm:$0xf]
    %v3255 = vld [vmem:[#allocation14 + $0x84c] sm:$0xff]
    %v3256 = vld [vmem:[#allocation14 + $0x854] sm:$0xff]
    %v3257 = vld [vmem:[#allocation14 + $0x85c] sm:$0xff]
    %v3258 = vld [vmem:[#allocation14 + $0x864] sm:$0xff]
    %v3259 = vld [vmem:[#allocation14 + $0x86c] sm:$0xf]
    %v3260 = vld [vmem:[#allocation14 + $0x870] sm:$0xff]
    %v3261 = vld [vmem:[#allocation14 + $0x878] sm:$0xff]
    %v3262 = vld [vmem:[#allocation14 + $0x880] sm:$0xff]
    %v3263 = vld [vmem:[#allocation14 + $0x888] sm:$0xff]
    %v3264 = vld [vmem:[#allocation14 + $0x890] sm:$0xf]
    %v3265 = vld [vmem:[#allocation14 + $0x894] sm:$0xff]
    %v3266 = vld [vmem:[#allocation14 + $0x89c] sm:$0xff]
    %v3267 = vld [vmem:[#allocation14 + $0x8a4] sm:$0xff]
    %v3268 = vld [vmem:[#allocation14 + $0x8ac] sm:$0xff]
    %v3269 = vld [vmem:[#allocation14 + $0x8b4] sm:$0xf]
    %v3270 = vld [vmem:[#allocation14 + $0x8b8] sm:$0xff]
    %v3271 = vld [vmem:[#allocation14 + $0x8c0] sm:$0xff]
    %v3272 = vld [vmem:[#allocation14 + $0x8c8] sm:$0xff]
    %v3273 = vld [vmem:[#allocation14 + $0x8d0] sm:$0xff]
    %v3274 = vld [vmem:[#allocation14 + $0x8d8] sm:$0xf]
    %v3275 = vld [vmem:[#allocation14 + $0x8dc] sm:$0xff]
    %v3276 = vld [vmem:[#allocation14 + $0x8e4] sm:$0xff]
    %v3277 = vld [vmem:[#allocation14 + $0x8ec] sm:$0xff]
    %v3278 = vld [vmem:[#allocation14 + $0x8f4] sm:$0xff]
    %v3279 = vld [vmem:[#allocation14 + $0x8fc] sm:$0xf]
    %v3280 = vld [vmem:[#allocation14 + $0x900] sm:$0xff]
    %v3281 = vld [vmem:[#allocation14 + $0x908] sm:$0xff]
    %v3282 = vld [vmem:[#allocation14 + $0x910] sm:$0xff]
    %v3283 = vld [vmem:[#allocation14 + $0x918] sm:$0xff]
    %v3284 = vld [vmem:[#allocation14 + $0x920] sm:$0xf]
    %v3285 = vld [vmem:[#allocation14 + $0x924] sm:$0xff]
    %v3286 = vld [vmem:[#allocation14 + $0x92c] sm:$0xff]
    %v3287 = vld [vmem:[#allocation14 + $0x934] sm:$0xff]
    %v3288 = vld [vmem:[#allocation14 + $0x93c] sm:$0xff]
    %v3289 = vld [vmem:[#allocation14 + $0x944] sm:$0xf]
    %v3290 = vld [vmem:[#allocation14 + $0x948] sm:$0xff]
    %v3291 = vld [vmem:[#allocation14 + $0x950] sm:$0xff]
    %v3292 = vld [vmem:[#allocation14 + $0x958] sm:$0xff]
    %v3293 = vld [vmem:[#allocation14 + $0x960] sm:$0xff]
    %v3294 = vld [vmem:[#allocation14 + $0x968] sm:$0xf]
    %v3295 = vld [vmem:[#allocation14 + $0x96c] sm:$0xff]
    %v3296 = vld [vmem:[#allocation14 + $0x974] sm:$0xff]
    %v3297 = vld [vmem:[#allocation14 + $0x97c] sm:$0xff]
    %v3298 = vld [vmem:[#allocation14 + $0x984] sm:$0xff]
    %v3299 = vld [vmem:[#allocation14 + $0x98c] sm:$0xf]
    %v3300 = vld [vmem:[#allocation14 + $0x990] sm:$0xff]
    %v3301 = vld [vmem:[#allocation14 + $0x998] sm:$0xff]
    %v3302 = vld [vmem:[#allocation14 + $0x9a0] sm:$0xff]
    %v3303 = vld [vmem:[#allocation14 + $0x9a8] sm:$0xff]
    %v3304 = vld [vmem:[#allocation14 + $0x9b0] sm:$0xf]
    %v3305 = vld [vmem:[#allocation14 + $0x9b4] sm:$0xff]
    %v3306 = vld [vmem:[#allocation14 + $0x9bc] sm:$0xff]
    %v3307 = vld [vmem:[#allocation14 + $0x9c4] sm:$0xff]
    %v3308 = vld [vmem:[#allocation14 + $0x9cc] sm:$0xff]
    %v3309 = vld [vmem:[#allocation14 + $0x9d4] sm:$0xf]
    %v3310 = vld [vmem:[#allocation14 + $0x9d8] sm:$0xff]
    %v3311 = vld [vmem:[#allocation14 + $0x9e0] sm:$0xff]
    %v3312 = vld [vmem:[#allocation14 + $0x9e8] sm:$0xff]
    %v3313 = vld [vmem:[#allocation14 + $0x9f0] sm:$0xff]
    %v3314 = vld [vmem:[#allocation14 + $0x9f8] sm:$0xf]
    %v3315 = vld [vmem:[#allocation14 + $0x9fc] sm:$0xff]
    %v3316 = vld [vmem:[#allocation14 + $0xa04] sm:$0xff]
    %v3317 = vld [vmem:[#allocation14 + $0xa0c] sm:$0xff]
    %v3318 = vld [vmem:[#allocation14 + $0xa14] sm:$0xff]
    %v3319 = vld [vmem:[#allocation14 + $0xa1c] sm:$0xf]
    %v3320 = vld [vmem:[#allocation14 + $0xa20] sm:$0xff]
    %v3321 = vld [vmem:[#allocation14 + $0xa28] sm:$0xff]
    %v3322 = vld [vmem:[#allocation14 + $0xa30] sm:$0xff]
    %v3323 = vld [vmem:[#allocation14 + $0xa38] sm:$0xff]
    %v3324 = vld [vmem:[#allocation14 + $0xa40] sm:$0xf]
    %v3325 = vld [vmem:[#allocation14 + $0xa44] sm:$0xff]
    %v3326 = vld [vmem:[#allocation14 + $0xa4c] sm:$0xff]
    %v3327 = vld [vmem:[#allocation14 + $0xa54] sm:$0xff]
    %v3328 = vld [vmem:[#allocation14 + $0xa5c] sm:$0xff]
    %v3329 = vld [vmem:[#allocation14 + $0xa64] sm:$0xf]
    %v3330 = vld [vmem:[#allocation14 + $0xa68] sm:$0xff]
    %v3331 = vld [vmem:[#allocation14 + $0xa70] sm:$0xff]
    %v3332 = vld [vmem:[#allocation14 + $0xa78] sm:$0xff]
    %v3333 = vld [vmem:[#allocation14 + $0xa80] sm:$0xff]
    %v3334 = vld [vmem:[#allocation14 + $0xa88] sm:$0xf]
    %v3335 = vld [vmem:[#allocation14 + $0xa8c] sm:$0xff]
    %v3336 = vld [vmem:[#allocation14 + $0xa94] sm:$0xff]
    %v3337 = vld [vmem:[#allocation14 + $0xa9c] sm:$0xff]
    %v3338 = vld [vmem:[#allocation14 + $0xaa4] sm:$0xff]
    %v3339 = vld [vmem:[#allocation14 + $0xaac] sm:$0xf]
    %v3340 = vld [vmem:[#allocation14 + $0xab0] sm:$0xff]
    %v3341 = vld [vmem:[#allocation14 + $0xab8] sm:$0xff]
    %v3342 = vld [vmem:[#allocation14 + $0xac0] sm:$0xff]
    %v3343 = vld [vmem:[#allocation14 + $0xac8] sm:$0xff]
    %v3344 = vld [vmem:[#allocation14 + $0xad0] sm:$0xf]
    %v3345 = vld [vmem:[#allocation14 + $0xad4] sm:$0xff]
    %v3346 = vld [vmem:[#allocation14 + $0xadc] sm:$0xff]
    %v3347 = vld [vmem:[#allocation14 + $0xae4] sm:$0xff]
    %v3348 = vld [vmem:[#allocation14 + $0xaec] sm:$0xff]
    %v3349 = vld [vmem:[#allocation14 + $0xaf4] sm:$0xf]
    %v3350 = vld [vmem:[#allocation14 + $0xaf8] sm:$0xff]
    %v3351 = vld [vmem:[#allocation14 + $0xb00] sm:$0xff]
    %v3352 = vld [vmem:[#allocation14 + $0xb08] sm:$0xff]
    %v3353 = vld [vmem:[#allocation14 + $0xb10] sm:$0xff]
    %v3354 = vld [vmem:[#allocation14 + $0xb18] sm:$0xf]
    %v3355 = vld [vmem:[#allocation14 + $0xb1c] sm:$0xff]
    %v3356 = vld [vmem:[#allocation14 + $0xb24] sm:$0xff]
    %v3357 = vld [vmem:[#allocation14 + $0xb2c] sm:$0xff]
    %v3358 = vld [vmem:[#allocation14 + $0xb34] sm:$0xff]
    %v3359 = vld [vmem:[#allocation14 + $0xb3c] sm:$0xf]
    %v3360 = vld [vmem:[#allocation14 + $0xb40] sm:$0xff]
    %v3361 = vld [vmem:[#allocation14 + $0xb48] sm:$0xff]
    %v3362 = vld [vmem:[#allocation14 + $0xb50] sm:$0xff]
    %v3363 = vld [vmem:[#allocation14 + $0xb58] sm:$0xff]
    %v3364 = vld [vmem:[#allocation14 + $0xb60] sm:$0xf]
    %v3365 = vld [vmem:[#allocation14 + $0xb64] sm:$0xff]
    %v3366 = vld [vmem:[#allocation14 + $0xb6c] sm:$0xff]
    %v3367 = vld [vmem:[#allocation14 + $0xb74] sm:$0xff]
    %v3368 = vld [vmem:[#allocation14 + $0xb7c] sm:$0xff]
    %v3369 = vld [vmem:[#allocation14 + $0xb84] sm:$0xf]
    %v3370 = vld [vmem:[#allocation14 + $0xb88] sm:$0xff]
    %v3371 = vld [vmem:[#allocation14 + $0xb90] sm:$0xff]
    %v3372 = vld [vmem:[#allocation14 + $0xb98] sm:$0xff]
    %v3373 = vld [vmem:[#allocation14 + $0xba0] sm:$0xff]
    %v3374 = vld [vmem:[#allocation14 + $0xba8] sm:$0xf]
    %v3375 = vld [vmem:[#allocation14 + $0xbac] sm:$0xff]
    %v3376 = vld [vmem:[#allocation14 + $0xbb4] sm:$0xff]
    %v3377 = vld [vmem:[#allocation14 + $0xbbc] sm:$0xff]
    %v3378 = vld [vmem:[#allocation14 + $0xbc4] sm:$0xff]
    %v3379 = vld [vmem:[#allocation14 + $0xbcc] sm:$0xf]
    %v3380 = vld [vmem:[#allocation14 + $0xbd0] sm:$0xff]
    %v3381 = vld [vmem:[#allocation14 + $0xbd8] sm:$0xff]
    %v3382 = vld [vmem:[#allocation14 + $0xbe0] sm:$0xff]
    %v3383 = vld [vmem:[#allocation14 + $0xbe8] sm:$0xff]
    %v3384 = vld [vmem:[#allocation14 + $0xbf0] sm:$0xf]
    %v3385 = vld [vmem:[#allocation14 + $0xbf4] sm:$0xff]
    %v3386 = vld [vmem:[#allocation14 + $0xbfc] sm:$0xff]
    %v3387 = vld [vmem:[#allocation14 + $0xc04] sm:$0xff]
    %v3388 = vld [vmem:[#allocation14 + $0xc0c] sm:$0xff]
    %v3389 = vld [vmem:[#allocation14 + $0xc14] sm:$0xf]
    %v3390 = vld [vmem:[#allocation14 + $0xc18] sm:$0xff]
    %v3391 = vld [vmem:[#allocation14 + $0xc20] sm:$0xff]
    %v3392 = vld [vmem:[#allocation14 + $0xc28] sm:$0xff]
    %v3393 = vld [vmem:[#allocation14 + $0xc30] sm:$0xff]
    %v3394 = vld [vmem:[#allocation14 + $0xc38] sm:$0xf]
    %v3395 = vld [vmem:[#allocation14 + $0xc3c] sm:$0xff]
    %v3396 = vld [vmem:[#allocation14 + $0xc44] sm:$0xff]
    %v3397 = vld [vmem:[#allocation14 + $0xc4c] sm:$0xff]
    %v3398 = vld [vmem:[#allocation14 + $0xc54] sm:$0xff]
    %v3399 = vld [vmem:[#allocation14 + $0xc5c] sm:$0xf]
    %v3400 = vld [vmem:[#allocation14 + $0xc60] sm:$0xff]
    %v3401 = vld [vmem:[#allocation14 + $0xc68] sm:$0xff]
    %v3402 = vld [vmem:[#allocation14 + $0xc70] sm:$0xff]
    %v3403 = vld [vmem:[#allocation14 + $0xc78] sm:$0xff]
    %v3404 = vld [vmem:[#allocation14 + $0xc80] sm:$0xf]
    %v3405 = vld [vmem:[#allocation14 + $0xc84] sm:$0xff]
    %v3406 = vld [vmem:[#allocation14 + $0xc8c] sm:$0xff]
    %v3407 = vld [vmem:[#allocation14 + $0xc94] sm:$0xff]
    %v3408 = vld [vmem:[#allocation14 + $0xc9c] sm:$0xff]
    %v3409 = vld [vmem:[#allocation14 + $0xca4] sm:$0xf]
    %v3410 = vld [vmem:[#allocation14 + $0xca8] sm:$0xff]
    %v3411 = vld [vmem:[#allocation14 + $0xcb0] sm:$0xff]
    %v3412 = vld [vmem:[#allocation14 + $0xcb8] sm:$0xff]
    %v3413 = vld [vmem:[#allocation14 + $0xcc0] sm:$0xff]
    %v3414 = vld [vmem:[#allocation14 + $0xcc8] sm:$0xf]
    %v3415 = vld [vmem:[#allocation14 + $0xccc] sm:$0xff]
    %v3416 = vld [vmem:[#allocation14 + $0xcd4] sm:$0xff]
    %v3417 = vld [vmem:[#allocation14 + $0xcdc] sm:$0xff]
    %v3418 = vld [vmem:[#allocation14 + $0xce4] sm:$0xff]
    %v3419 = vld [vmem:[#allocation14 + $0xcec] sm:$0xf]
    %v3420 = vld [vmem:[#allocation14 + $0xcf0] sm:$0xff]
    %v3421 = vld [vmem:[#allocation14 + $0xcf8] sm:$0xff]
    %v3422 = vld [vmem:[#allocation14 + $0xd00] sm:$0xff]
    %v3423 = vld [vmem:[#allocation14 + $0xd08] sm:$0xff]
    %v3424 = vld [vmem:[#allocation14 + $0xd10] sm:$0xf]
    %v3425 = vld [vmem:[#allocation14 + $0xd14] sm:$0xff]
    %v3426 = vld [vmem:[#allocation14 + $0xd1c] sm:$0xff]
    %v3427 = vld [vmem:[#allocation14 + $0xd24] sm:$0xff]
    %v3428 = vld [vmem:[#allocation14 + $0xd2c] sm:$0xff]
    %v3429 = vld [vmem:[#allocation14 + $0xd34] sm:$0xf]
    %v3430 = vld [vmem:[#allocation14 + $0xd38] sm:$0xff]
    %v3431 = vld [vmem:[#allocation14 + $0xd40] sm:$0xff]
    %v3432 = vld [vmem:[#allocation14 + $0xd48] sm:$0xff]
    %v3433 = vld [vmem:[#allocation14 + $0xd50] sm:$0xff]
    %v3434 = vld [vmem:[#allocation14 + $0xd58] sm:$0xf]
    %v3435 = vld [vmem:[#allocation14 + $0xd5c] sm:$0xff]
    %v3436 = vld [vmem:[#allocation14 + $0xd64] sm:$0xff]
    %v3437 = vld [vmem:[#allocation14 + $0xd6c] sm:$0xff]
    %v3438 = vld [vmem:[#allocation14 + $0xd74] sm:$0xff]
    %v3439 = vld [vmem:[#allocation14 + $0xd7c] sm:$0xf]
    %v3440 = vld [vmem:[#allocation14 + $0xd80] sm:$0xff]
    %v3441 = vld [vmem:[#allocation14 + $0xd88] sm:$0xff]
    %v3442 = vld [vmem:[#allocation14 + $0xd90] sm:$0xff]
    %v3443 = vld [vmem:[#allocation14 + $0xd98] sm:$0xff]
    %v3444 = vld [vmem:[#allocation14 + $0xda0] sm:$0xf]
    %v3445 = vld [vmem:[#allocation14 + $0xda4] sm:$0xff]
    %v3446 = vld [vmem:[#allocation14 + $0xdac] sm:$0xff]
    %v3447 = vld [vmem:[#allocation14 + $0xdb4] sm:$0xff]
    %v3448 = vld [vmem:[#allocation14 + $0xdbc] sm:$0xff]
    %v3449 = vld [vmem:[#allocation14 + $0xdc4] sm:$0xf]
    %v3450 = vld [vmem:[#allocation14 + $0xdc8] sm:$0xff]
    %v3451 = vld [vmem:[#allocation14 + $0xdd0] sm:$0xff]
    %v3452 = vld [vmem:[#allocation14 + $0xdd8] sm:$0xff]
    %v3453 = vld [vmem:[#allocation14 + $0xde0] sm:$0xff]
    %v3454 = vld [vmem:[#allocation14 + $0xde8] sm:$0xf]
    %v3455 = vld [vmem:[#allocation14 + $0xdec] sm:$0xff]
    %v3456 = vld [vmem:[#allocation14 + $0xdf4] sm:$0xff]
    %v3457 = vld [vmem:[#allocation14 + $0xdfc] sm:$0xff]
    %v3458 = vld [vmem:[#allocation14 + $0xe04] sm:$0xff]
    %v3459 = vld [vmem:[#allocation14 + $0xe0c] sm:$0xf]
    %v3460 = vld [vmem:[#allocation14 + $0xe10] sm:$0xff]
    %v3461 = vld [vmem:[#allocation14 + $0xe18] sm:$0xff]
    %v3462 = vld [vmem:[#allocation14 + $0xe20] sm:$0xff]
    %v3463 = vld [vmem:[#allocation14 + $0xe28] sm:$0xff]
    %v3464 = vld [vmem:[#allocation14 + $0xe30] sm:$0xf]
    %v3465 = vld [vmem:[#allocation14 + $0xe34] sm:$0xff]
    %v3466 = vld [vmem:[#allocation14 + $0xe3c] sm:$0xff]
    %v3467 = vld [vmem:[#allocation14 + $0xe44] sm:$0xff]
    %v3468 = vld [vmem:[#allocation14 + $0xe4c] sm:$0xff]
    %v3469 = vld [vmem:[#allocation14 + $0xe54] sm:$0xf]
    %v3470 = vld [vmem:[#allocation14 + $0xe58] sm:$0xff]
    %v3471 = vld [vmem:[#allocation14 + $0xe60] sm:$0xff]
    %v3472 = vld [vmem:[#allocation14 + $0xe68] sm:$0xff]
    %v3473 = vld [vmem:[#allocation14 + $0xe70] sm:$0xff]
    %v3474 = vld [vmem:[#allocation14 + $0xe78] sm:$0xf]
    %v3475 = vld [vmem:[#allocation14 + $0xe7c] sm:$0xff]
    %v3476 = vld [vmem:[#allocation14 + $0xe84] sm:$0xff]
    %v3477 = vld [vmem:[#allocation14 + $0xe8c] sm:$0xff]
    %v3478 = vld [vmem:[#allocation14 + $0xe94] sm:$0xff]
    %v3479 = vld [vmem:[#allocation14 + $0xe9c] sm:$0xf]
    %v3480 = vld [vmem:[#allocation14 + $0xea0] sm:$0xff]
    %v3481 = vld [vmem:[#allocation14 + $0xea8] sm:$0xff]
    %v3482 = vld [vmem:[#allocation14 + $0xeb0] sm:$0xff]
    %v3483 = vld [vmem:[#allocation14 + $0xeb8] sm:$0xff]
    %v3484 = vld [vmem:[#allocation14 + $0xec0] sm:$0xf]
    %v3485 = vld [vmem:[#allocation14 + $0xec4] sm:$0xff]
    %v3486 = vld [vmem:[#allocation14 + $0xecc] sm:$0xff]
    %v3487 = vld [vmem:[#allocation14 + $0xed4] sm:$0xff]
    %v3488 = vld [vmem:[#allocation14 + $0xedc] sm:$0xff]
    %v3489 = vld [vmem:[#allocation14 + $0xee4] sm:$0xf]
    %v3490 = vld [vmem:[#allocation14 + $0xee8] sm:$0xff]
    %v3491 = vld [vmem:[#allocation14 + $0xef0] sm:$0xff]
    %v3492 = vld [vmem:[#allocation14 + $0xef8] sm:$0xff]
    %v3493 = vld [vmem:[#allocation14 + $0xf00] sm:$0xff]
    %v3494 = vld [vmem:[#allocation14 + $0xf08] sm:$0xf]
    %v3495 = vld [vmem:[#allocation14 + $0xf0c] sm:$0xff]
    %v3496 = vld [vmem:[#allocation14 + $0xf14] sm:$0xff]
    %v3497 = vld [vmem:[#allocation14 + $0xf1c] sm:$0xff]
    %v3498 = vld [vmem:[#allocation14 + $0xf24] sm:$0xff]
    %v3499 = vld [vmem:[#allocation14 + $0xf2c] sm:$0xf]
    %v3500 = vld [vmem:[#allocation14 + $0xf30] sm:$0xff]
    %v3501 = vld [vmem:[#allocation14 + $0xf38] sm:$0xff]
    %v3502 = vld [vmem:[#allocation14 + $0xf40] sm:$0xff]
    %v3503 = vld [vmem:[#allocation14 + $0xf48] sm:$0xff]
    %v3504 = vld [vmem:[#allocation14 + $0xf50] sm:$0xf]
    %v3505 = vld [vmem:[#allocation14 + $0xf54] sm:$0xff]
    %v3506 = vld [vmem:[#allocation14 + $0xf5c] sm:$0xff]
    %v3507 = vld [vmem:[#allocation14 + $0xf64] sm:$0xff]
    %v3508 = vld [vmem:[#allocation14 + $0xf6c] sm:$0xff]
    %v3509 = vld [vmem:[#allocation14 + $0xf74] sm:$0xf]
    %v3510 = vld [vmem:[#allocation14 + $0xf78] sm:$0xff]
    %v3511 = vld [vmem:[#allocation14 + $0xf80] sm:$0xff]
    %v3512 = vld [vmem:[#allocation14 + $0xf88] sm:$0xff]
    %v3513 = vld [vmem:[#allocation14 + $0xf90] sm:$0xff]
    %v3514 = vld [vmem:[#allocation14 + $0xf98] sm:$0xf]
    %v3515 = vld [vmem:[#allocation14 + $0xf9c] sm:$0xff]
    %v3516 = vld [vmem:[#allocation14 + $0xfa4] sm:$0xff]
    %v3517 = vld [vmem:[#allocation14 + $0xfac] sm:$0xff]
    %v3518 = vld [vmem:[#allocation14 + $0xfb4] sm:$0xff]
    %v3519 = vld [vmem:[#allocation14 + $0xfbc] sm:$0xf]
    %v3520 = vld [vmem:[#allocation16] sm:$0xff]
    %v3521 = vld [vmem:[#allocation16 + $0x8] sm:$0x1]
    %v3524 = vlaneseq
    %v3525 = vshrl.u32 %v3524, 7
    %v3526 = vsub.s32 0, %v3525
    %v3527 = vrot.slane %v3520, %v3526
    %v3528 = vlaneseq
    %v3529 = vshrl.u32 %v3528, 7
    %v3530 = vsub.s32 1, %v3529
    %v3531 = vrot.slane %v3520, %v3530
    %v3532 = vlaneseq
    %v3533 = vshrl.u32 %v3532, 7
    %v3534 = vsub.s32 2, %v3533
    %v3535 = vrot.slane %v3520, %v3534
    %v3536 = vlaneseq
    %v3537 = vshrl.u32 %v3536, 7
    %v3538 = vsub.s32 3, %v3537
    %v3539 = vrot.slane %v3520, %v3538
    %v3540 = vlaneseq
    %v3541 = vshrl.u32 %v3540, 7
    %v3542 = vsub.s32 4, %v3541
    %v3543 = vrot.slane %v3520, %v3542
    %v3544 = vlaneseq
    %v3545 = vshrl.u32 %v3544, 7
    %v3546 = vsub.s32 5, %v3545
    %v3547 = vrot.slane %v3520, %v3546
    %v3548 = vlaneseq
    %v3549 = vshrl.u32 %v3548, 7
    %v3550 = vsub.s32 6, %v3549
    %v3551 = vrot.slane %v3520, %v3550
    %v3552 = vlaneseq
    %v3553 = vshrl.u32 %v3552, 7
    %v3554 = vsub.s32 7, %v3553
    %v3555 = vrot.slane %v3520, %v3554
    %v3556 = vlaneseq
    %v3557 = vshrl.u32 %v3556, 7
    %v3558 = vsub.s32 0, %v3557
    %v3559 = vrot.slane %v3521, %v3558
    %v4129 = vunpack.c.l.b16 %v2960
    %v4130 = vunpack.c.h.b16 %v2960
    %v4131 = vunpack.c.l.b16 %v2961
    %v4132 = vunpack.c.h.b16 %v2961
    %v4133 = vunpack.c.l.b16 %v2962
    %v4134 = vunpack.c.h.b16 %v2962
    %v4135 = vunpack.c.l.b16 %v2963
    %v4136 = vunpack.c.h.b16 %v2963
    %v4137 = vunpack.c.l.b16 %v2964
    %v4138 = vunpack.c.l.b16 %v2965
    %v4139 = vunpack.c.h.b16 %v2965
    %v4140 = vunpack.c.l.b16 %v2966
    %v4141 = vunpack.c.h.b16 %v2966
    %v4142 = vunpack.c.l.b16 %v2967
    %v4143 = vunpack.c.h.b16 %v2967
    %v4144 = vunpack.c.l.b16 %v2968
    %v4145 = vunpack.c.h.b16 %v2968
    %v4146 = vunpack.c.l.b16 %v2969
    %v4147 = vunpack.c.l.b16 %v2970
    %v4148 = vunpack.c.h.b16 %v2970
    %v4149 = vunpack.c.l.b16 %v2971
    %v4150 = vunpack.c.h.b16 %v2971
    %v4151 = vunpack.c.l.b16 %v2972
    %v4152 = vunpack.c.h.b16 %v2972
    %v4153 = vunpack.c.l.b16 %v2973
    %v4154 = vunpack.c.h.b16 %v2973
    %v4155 = vunpack.c.l.b16 %v2974
    %v4156 = vunpack.c.l.b16 %v2975
    %v4157 = vunpack.c.h.b16 %v2975
    %v4158 = vunpack.c.l.b16 %v2976
    %v4159 = vunpack.c.h.b16 %v2976
    %v4160 = vunpack.c.l.b16 %v2977
    %v4161 = vunpack.c.h.b16 %v2977
    %v4162 = vunpack.c.l.b16 %v2978
    %v4163 = vunpack.c.h.b16 %v2978
    %v4164 = vunpack.c.l.b16 %v2979
    %v4165 = vunpack.c.l.b16 %v2980
    %v4166 = vunpack.c.h.b16 %v2980
    %v4167 = vunpack.c.l.b16 %v2981
    %v4168 = vunpack.c.h.b16 %v2981
    %v4169 = vunpack.c.l.b16 %v2982
    %v4170 = vunpack.c.h.b16 %v2982
    %v4171 = vunpack.c.l.b16 %v2983
    %v4172 = vunpack.c.h.b16 %v2983
    %v4173 = vunpack.c.l.b16 %v2984
    %v4174 = vunpack.c.l.b16 %v2985
    %v4175 = vunpack.c.h.b16 %v2985
    %v4176 = vunpack.c.l.b16 %v2986
    %v4177 = vunpack.c.h.b16 %v2986
    %v4178 = vunpack.c.l.b16 %v2987
    %v4179 = vunpack.c.h.b16 %v2987
    %v4180 = vunpack.c.l.b16 %v2988
    %v4181 = vunpack.c.h.b16 %v2988
    %v4182 = vunpack.c.l.b16 %v2989
    %v4183 = vunpack.c.l.b16 %v2990
    %v4184 = vunpack.c.h.b16 %v2990
    %v4185 = vunpack.c.l.b16 %v2991
    %v4186 = vunpack.c.h.b16 %v2991
    %v4187 = vunpack.c.l.b16 %v2992
    %v4188 = vunpack.c.h.b16 %v2992
    %v4189 = vunpack.c.l.b16 %v2993
    %v4190 = vunpack.c.h.b16 %v2993
    %v4191 = vunpack.c.l.b16 %v2994
    %v4192 = vunpack.c.l.b16 %v2995
    %v4193 = vunpack.c.h.b16 %v2995
    %v4194 = vunpack.c.l.b16 %v2996
    %v4195 = vunpack.c.h.b16 %v2996
    %v4196 = vunpack.c.l.b16 %v2997
    %v4197 = vunpack.c.h.b16 %v2997
    %v4198 = vunpack.c.l.b16 %v2998
    %v4199 = vunpack.c.h.b16 %v2998
    %v4200 = vunpack.c.l.b16 %v2999
    %v4201 = vunpack.c.l.b16 %v3000
    %v4202 = vunpack.c.h.b16 %v3000
    %v4203 = vunpack.c.l.b16 %v3001
    %v4204 = vunpack.c.h.b16 %v3001
    %v4205 = vunpack.c.l.b16 %v3002
    %v4206 = vunpack.c.h.b16 %v3002
    %v4207 = vunpack.c.l.b16 %v3003
    %v4208 = vunpack.c.h.b16 %v3003
    %v4209 = vunpack.c.l.b16 %v3004
    %v4210 = vunpack.c.l.b16 %v3005
    %v4211 = vunpack.c.h.b16 %v3005
    %v4212 = vunpack.c.l.b16 %v3006
    %v4213 = vunpack.c.h.b16 %v3006
    %v4214 = vunpack.c.l.b16 %v3007
    %v4215 = vunpack.c.h.b16 %v3007
    %v4216 = vunpack.c.l.b16 %v3008
    %v4217 = vunpack.c.h.b16 %v3008
    %v4218 = vunpack.c.l.b16 %v3009
    %v4219 = vunpack.c.l.b16 %v3010
    %v4220 = vunpack.c.h.b16 %v3010
    %v4221 = vunpack.c.l.b16 %v3011
    %v4222 = vunpack.c.h.b16 %v3011
    %v4223 = vunpack.c.l.b16 %v3012
    %v4224 = vunpack.c.h.b16 %v3012
    %v4225 = vunpack.c.l.b16 %v3013
    %v4226 = vunpack.c.h.b16 %v3013
    %v4227 = vunpack.c.l.b16 %v3014
    %v4228 = vunpack.c.l.b16 %v3015
    %v4229 = vunpack.c.h.b16 %v3015
    %v4230 = vunpack.c.l.b16 %v3016
    %v4231 = vunpack.c.h.b16 %v3016
    %v4232 = vunpack.c.l.b16 %v3017
    %v4233 = vunpack.c.h.b16 %v3017
    %v4234 = vunpack.c.l.b16 %v3018
    %v4235 = vunpack.c.h.b16 %v3018
    %v4236 = vunpack.c.l.b16 %v3019
    %v4237 = vunpack.c.l.b16 %v3020
    %v4238 = vunpack.c.h.b16 %v3020
    %v4239 = vunpack.c.l.b16 %v3021
    %v4240 = vunpack.c.h.b16 %v3021
    %v4241 = vunpack.c.l.b16 %v3022
    %v4242 = vunpack.c.h.b16 %v3022
    %v4243 = vunpack.c.l.b16 %v3023
    %v4244 = vunpack.c.h.b16 %v3023
    %v4245 = vunpack.c.l.b16 %v3024
    %v4246 = vunpack.c.l.b16 %v3025
    %v4247 = vunpack.c.h.b16 %v3025
    %v4248 = vunpack.c.l.b16 %v3026
    %v4249 = vunpack.c.h.b16 %v3026
    %v4250 = vunpack.c.l.b16 %v3027
    %v4251 = vunpack.c.h.b16 %v3027
    %v4252 = vunpack.c.l.b16 %v3028
    %v4253 = vunpack.c.h.b16 %v3028
    %v4254 = vunpack.c.l.b16 %v3029
    %v4255 = vunpack.c.l.b16 %v3030
    %v4256 = vunpack.c.h.b16 %v3030
    %v4257 = vunpack.c.l.b16 %v3031
    %v4258 = vunpack.c.h.b16 %v3031
    %v4259 = vunpack.c.l.b16 %v3032
    %v4260 = vunpack.c.h.b16 %v3032
    %v4261 = vunpack.c.l.b16 %v3033
    %v4262 = vunpack.c.h.b16 %v3033
    %v4263 = vunpack.c.l.b16 %v3034
    %v4264 = vunpack.c.l.b16 %v3035
    %v4265 = vunpack.c.h.b16 %v3035
    %v4266 = vunpack.c.l.b16 %v3036
    %v4267 = vunpack.c.h.b16 %v3036
    %v4268 = vunpack.c.l.b16 %v3037
    %v4269 = vunpack.c.h.b16 %v3037
    %v4270 = vunpack.c.l.b16 %v3038
    %v4271 = vunpack.c.h.b16 %v3038
    %v4272 = vunpack.c.l.b16 %v3039
    %v4273 = vunpack.c.l.b16 %v3040
    %v4274 = vunpack.c.h.b16 %v3040
    %v4275 = vunpack.c.l.b16 %v3041
    %v4276 = vunpack.c.h.b16 %v3041
    %v4277 = vunpack.c.l.b16 %v3042
    %v4278 = vunpack.c.h.b16 %v3042
    %v4279 = vunpack.c.l.b16 %v3043
    %v4280 = vunpack.c.h.b16 %v3043
    %v4281 = vunpack.c.l.b16 %v3044
    %v4282 = vunpack.c.l.b16 %v3045
    %v4283 = vunpack.c.h.b16 %v3045
    %v4284 = vunpack.c.l.b16 %v3046
    %v4285 = vunpack.c.h.b16 %v3046
    %v4286 = vunpack.c.l.b16 %v3047
    %v4287 = vunpack.c.h.b16 %v3047
    %v4288 = vunpack.c.l.b16 %v3048
    %v4289 = vunpack.c.h.b16 %v3048
    %v4290 = vunpack.c.l.b16 %v3049
    %v4291 = vunpack.c.l.b16 %v3050
    %v4292 = vunpack.c.h.b16 %v3050
    %v4293 = vunpack.c.l.b16 %v3051
    %v4294 = vunpack.c.h.b16 %v3051
    %v4295 = vunpack.c.l.b16 %v3052
    %v4296 = vunpack.c.h.b16 %v3052
    %v4297 = vunpack.c.l.b16 %v3053
    %v4298 = vunpack.c.h.b16 %v3053
    %v4299 = vunpack.c.l.b16 %v3054
    %v4300 = vunpack.c.l.b16 %v3055
    %v4301 = vunpack.c.h.b16 %v3055
    %v4302 = vunpack.c.l.b16 %v3056
    %v4303 = vunpack.c.h.b16 %v3056
    %v4304 = vunpack.c.l.b16 %v3057
    %v4305 = vunpack.c.h.b16 %v3057
    %v4306 = vunpack.c.l.b16 %v3058
    %v4307 = vunpack.c.h.b16 %v3058
    %v4308 = vunpack.c.l.b16 %v3059
    %v4309 = vunpack.c.l.b16 %v3060
    %v4310 = vunpack.c.h.b16 %v3060
    %v4311 = vunpack.c.l.b16 %v3061
    %v4312 = vunpack.c.h.b16 %v3061
    %v4313 = vunpack.c.l.b16 %v3062
    %v4314 = vunpack.c.h.b16 %v3062
    %v4315 = vunpack.c.l.b16 %v3063
    %v4316 = vunpack.c.h.b16 %v3063
    %v4317 = vunpack.c.l.b16 %v3064
    %v4318 = vunpack.c.l.b16 %v3065
    %v4319 = vunpack.c.h.b16 %v3065
    %v4320 = vunpack.c.l.b16 %v3066
    %v4321 = vunpack.c.h.b16 %v3066
    %v4322 = vunpack.c.l.b16 %v3067
    %v4323 = vunpack.c.h.b16 %v3067
    %v4324 = vunpack.c.l.b16 %v3068
    %v4325 = vunpack.c.h.b16 %v3068
    %v4326 = vunpack.c.l.b16 %v3069
    %v4327 = vunpack.c.l.b16 %v3070
    %v4328 = vunpack.c.h.b16 %v3070
    %v4329 = vunpack.c.l.b16 %v3071
    %v4330 = vunpack.c.h.b16 %v3071
    %v4331 = vunpack.c.l.b16 %v3072
    %v4332 = vunpack.c.h.b16 %v3072
    %v4333 = vunpack.c.l.b16 %v3073
    %v4334 = vunpack.c.h.b16 %v3073
    %v4335 = vunpack.c.l.b16 %v3074
    %v4336 = vunpack.c.l.b16 %v3075
    %v4337 = vunpack.c.h.b16 %v3075
    %v4338 = vunpack.c.l.b16 %v3076
    %v4339 = vunpack.c.h.b16 %v3076
    %v4340 = vunpack.c.l.b16 %v3077
    %v4341 = vunpack.c.h.b16 %v3077
    %v4342 = vunpack.c.l.b16 %v3078
    %v4343 = vunpack.c.h.b16 %v3078
    %v4344 = vunpack.c.l.b16 %v3079
    %v4345 = vunpack.c.l.b16 %v3080
    %v4346 = vunpack.c.h.b16 %v3080
    %v4347 = vunpack.c.l.b16 %v3081
    %v4348 = vunpack.c.h.b16 %v3081
    %v4349 = vunpack.c.l.b16 %v3082
    %v4350 = vunpack.c.h.b16 %v3082
    %v4351 = vunpack.c.l.b16 %v3083
    %v4352 = vunpack.c.h.b16 %v3083
    %v4353 = vunpack.c.l.b16 %v3084
    %v4354 = vunpack.c.l.b16 %v3085
    %v4355 = vunpack.c.h.b16 %v3085
    %v4356 = vunpack.c.l.b16 %v3086
    %v4357 = vunpack.c.h.b16 %v3086
    %v4358 = vunpack.c.l.b16 %v3087
    %v4359 = vunpack.c.h.b16 %v3087
    %v4360 = vunpack.c.l.b16 %v3088
    %v4361 = vunpack.c.h.b16 %v3088
    %v4362 = vunpack.c.l.b16 %v3089
    %v4363 = vunpack.c.l.b16 %v3090
    %v4364 = vunpack.c.h.b16 %v3090
    %v4365 = vunpack.c.l.b16 %v3091
    %v4366 = vunpack.c.h.b16 %v3091
    %v4367 = vunpack.c.l.b16 %v3092
    %v4368 = vunpack.c.h.b16 %v3092
    %v4369 = vunpack.c.l.b16 %v3093
    %v4370 = vunpack.c.h.b16 %v3093
    %v4371 = vunpack.c.l.b16 %v3094
    %v4372 = vunpack.c.l.b16 %v3095
    %v4373 = vunpack.c.h.b16 %v3095
    %v4374 = vunpack.c.l.b16 %v3096
    %v4375 = vunpack.c.h.b16 %v3096
    %v4376 = vunpack.c.l.b16 %v3097
    %v4377 = vunpack.c.h.b16 %v3097
    %v4378 = vunpack.c.l.b16 %v3098
    %v4379 = vunpack.c.h.b16 %v3098
    %v4380 = vunpack.c.l.b16 %v3099
    %v4381 = vunpack.c.l.b16 %v3100
    %v4382 = vunpack.c.h.b16 %v3100
    %v4383 = vunpack.c.l.b16 %v3101
    %v4384 = vunpack.c.h.b16 %v3101
    %v4385 = vunpack.c.l.b16 %v3102
    %v4386 = vunpack.c.h.b16 %v3102
    %v4387 = vunpack.c.l.b16 %v3103
    %v4388 = vunpack.c.h.b16 %v3103
    %v4389 = vunpack.c.l.b16 %v3104
    %v4390 = vunpack.c.l.b16 %v3105
    %v4391 = vunpack.c.h.b16 %v3105
    %v4392 = vunpack.c.l.b16 %v3106
    %v4393 = vunpack.c.h.b16 %v3106
    %v4394 = vunpack.c.l.b16 %v3107
    %v4395 = vunpack.c.h.b16 %v3107
    %v4396 = vunpack.c.l.b16 %v3108
    %v4397 = vunpack.c.h.b16 %v3108
    %v4398 = vunpack.c.l.b16 %v3109
    %v4399 = vunpack.c.l.b16 %v3110
    %v4400 = vunpack.c.h.b16 %v3110
    %v4401 = vunpack.c.l.b16 %v3111
    %v4402 = vunpack.c.h.b16 %v3111
    %v4403 = vunpack.c.l.b16 %v3112
    %v4404 = vunpack.c.h.b16 %v3112
    %v4405 = vunpack.c.l.b16 %v3113
    %v4406 = vunpack.c.h.b16 %v3113
    %v4407 = vunpack.c.l.b16 %v3114
    %v4408 = vunpack.c.l.b16 %v3115
    %v4409 = vunpack.c.h.b16 %v3115
    %v4410 = vunpack.c.l.b16 %v3116
    %v4411 = vunpack.c.h.b16 %v3116
    %v4412 = vunpack.c.l.b16 %v3117
    %v4413 = vunpack.c.h.b16 %v3117
    %v4414 = vunpack.c.l.b16 %v3118
    %v4415 = vunpack.c.h.b16 %v3118
    %v4416 = vunpack.c.l.b16 %v3119
    %v4417 = vunpack.c.l.b16 %v3120
    %v4418 = vunpack.c.h.b16 %v3120
    %v4419 = vunpack.c.l.b16 %v3121
    %v4420 = vunpack.c.h.b16 %v3121
    %v4421 = vunpack.c.l.b16 %v3122
    %v4422 = vunpack.c.h.b16 %v3122
    %v4423 = vunpack.c.l.b16 %v3123
    %v4424 = vunpack.c.h.b16 %v3123
    %v4425 = vunpack.c.l.b16 %v3124
    %v4426 = vunpack.c.l.b16 %v3125
    %v4427 = vunpack.c.h.b16 %v3125
    %v4428 = vunpack.c.l.b16 %v3126
    %v4429 = vunpack.c.h.b16 %v3126
    %v4430 = vunpack.c.l.b16 %v3127
    %v4431 = vunpack.c.h.b16 %v3127
    %v4432 = vunpack.c.l.b16 %v3128
    %v4433 = vunpack.c.h.b16 %v3128
    %v4434 = vunpack.c.l.b16 %v3129
    %v4435 = vunpack.c.l.b16 %v3130
    %v4436 = vunpack.c.h.b16 %v3130
    %v4437 = vunpack.c.l.b16 %v3131
    %v4438 = vunpack.c.h.b16 %v3131
    %v4439 = vunpack.c.l.b16 %v3132
    %v4440 = vunpack.c.h.b16 %v3132
    %v4441 = vunpack.c.l.b16 %v3133
    %v4442 = vunpack.c.h.b16 %v3133
    %v4443 = vunpack.c.l.b16 %v3134
    %v4444 = vunpack.c.l.b16 %v3135
    %v4445 = vunpack.c.h.b16 %v3135
    %v4446 = vunpack.c.l.b16 %v3136
    %v4447 = vunpack.c.h.b16 %v3136
    %v4448 = vunpack.c.l.b16 %v3137
    %v4449 = vunpack.c.h.b16 %v3137
    %v4450 = vunpack.c.l.b16 %v3138
    %v4451 = vunpack.c.h.b16 %v3138
    %v4452 = vunpack.c.l.b16 %v3139
    %v4453 = vunpack.c.l.b16 %v3140
    %v4454 = vunpack.c.h.b16 %v3140
    %v4455 = vunpack.c.l.b16 %v3141
    %v4456 = vunpack.c.h.b16 %v3141
    %v4457 = vunpack.c.l.b16 %v3142
    %v4458 = vunpack.c.h.b16 %v3142
    %v4459 = vunpack.c.l.b16 %v3143
    %v4460 = vunpack.c.h.b16 %v3143
    %v4461 = vunpack.c.l.b16 %v3144
    %v4462 = vunpack.c.l.b16 %v3145
    %v4463 = vunpack.c.h.b16 %v3145
    %v4464 = vunpack.c.l.b16 %v3146
    %v4465 = vunpack.c.h.b16 %v3146
    %v4466 = vunpack.c.l.b16 %v3147
    %v4467 = vunpack.c.h.b16 %v3147
    %v4468 = vunpack.c.l.b16 %v3148
    %v4469 = vunpack.c.h.b16 %v3148
    %v4470 = vunpack.c.l.b16 %v3149
    %v4471 = vunpack.c.l.b16 %v3150
    %v4472 = vunpack.c.h.b16 %v3150
    %v4473 = vunpack.c.l.b16 %v3151
    %v4474 = vunpack.c.h.b16 %v3151
    %v4475 = vunpack.c.l.b16 %v3152
    %v4476 = vunpack.c.h.b16 %v3152
    %v4477 = vunpack.c.l.b16 %v3153
    %v4478 = vunpack.c.h.b16 %v3153
    %v4479 = vunpack.c.l.b16 %v3154
    %v4480 = vunpack.c.l.b16 %v3155
    %v4481 = vunpack.c.h.b16 %v3155
    %v4482 = vunpack.c.l.b16 %v3156
    %v4483 = vunpack.c.h.b16 %v3156
    %v4484 = vunpack.c.l.b16 %v3157
    %v4485 = vunpack.c.h.b16 %v3157
    %v4486 = vunpack.c.l.b16 %v3158
    %v4487 = vunpack.c.h.b16 %v3158
    %v4488 = vunpack.c.l.b16 %v3159
    %v4489 = vunpack.c.l.b16 %v3160
    %v4490 = vunpack.c.h.b16 %v3160
    %v4491 = vunpack.c.l.b16 %v3161
    %v4492 = vunpack.c.h.b16 %v3161
    %v4493 = vunpack.c.l.b16 %v3162
    %v4494 = vunpack.c.h.b16 %v3162
    %v4495 = vunpack.c.l.b16 %v3163
    %v4496 = vunpack.c.h.b16 %v3163
    %v4497 = vunpack.c.l.b16 %v3164
    %v4498 = vunpack.c.l.b16 %v3165
    %v4499 = vunpack.c.h.b16 %v3165
    %v4500 = vunpack.c.l.b16 %v3166
    %v4501 = vunpack.c.h.b16 %v3166
    %v4502 = vunpack.c.l.b16 %v3167
    %v4503 = vunpack.c.h.b16 %v3167
    %v4504 = vunpack.c.l.b16 %v3168
    %v4505 = vunpack.c.h.b16 %v3168
    %v4506 = vunpack.c.l.b16 %v3169
    %v4507 = vunpack.c.l.b16 %v3170
    %v4508 = vunpack.c.h.b16 %v3170
    %v4509 = vunpack.c.l.b16 %v3171
    %v4510 = vunpack.c.h.b16 %v3171
    %v4511 = vunpack.c.l.b16 %v3172
    %v4512 = vunpack.c.h.b16 %v3172
    %v4513 = vunpack.c.l.b16 %v3173
    %v4514 = vunpack.c.h.b16 %v3173
    %v4515 = vunpack.c.l.b16 %v3174
    %v4516 = vunpack.c.l.b16 %v3175
    %v4517 = vunpack.c.h.b16 %v3175
    %v4518 = vunpack.c.l.b16 %v3176
    %v4519 = vunpack.c.h.b16 %v3176
    %v4520 = vunpack.c.l.b16 %v3177
    %v4521 = vunpack.c.h.b16 %v3177
    %v4522 = vunpack.c.l.b16 %v3178
    %v4523 = vunpack.c.h.b16 %v3178
    %v4524 = vunpack.c.l.b16 %v3179
    %v4525 = vunpack.c.l.b16 %v3180
    %v4526 = vunpack.c.h.b16 %v3180
    %v4527 = vunpack.c.l.b16 %v3181
    %v4528 = vunpack.c.h.b16 %v3181
    %v4529 = vunpack.c.l.b16 %v3182
    %v4530 = vunpack.c.h.b16 %v3182
    %v4531 = vunpack.c.l.b16 %v3183
    %v4532 = vunpack.c.h.b16 %v3183
    %v4533 = vunpack.c.l.b16 %v3184
    %v4534 = vunpack.c.l.b16 %v3185
    %v4535 = vunpack.c.h.b16 %v3185
    %v4536 = vunpack.c.l.b16 %v3186
    %v4537 = vunpack.c.h.b16 %v3186
    %v4538 = vunpack.c.l.b16 %v3187
    %v4539 = vunpack.c.h.b16 %v3187
    %v4540 = vunpack.c.l.b16 %v3188
    %v4541 = vunpack.c.h.b16 %v3188
    %v4542 = vunpack.c.l.b16 %v3189
    %v4543 = vunpack.c.l.b16 %v3190
    %v4544 = vunpack.c.h.b16 %v3190
    %v4545 = vunpack.c.l.b16 %v3191
    %v4546 = vunpack.c.h.b16 %v3191
    %v4547 = vunpack.c.l.b16 %v3192
    %v4548 = vunpack.c.h.b16 %v3192
    %v4549 = vunpack.c.l.b16 %v3193
    %v4550 = vunpack.c.h.b16 %v3193
    %v4551 = vunpack.c.l.b16 %v3194
    %v4552 = vunpack.c.l.b16 %v3195
    %v4553 = vunpack.c.h.b16 %v3195
    %v4554 = vunpack.c.l.b16 %v3196
    %v4555 = vunpack.c.h.b16 %v3196
    %v4556 = vunpack.c.l.b16 %v3197
    %v4557 = vunpack.c.h.b16 %v3197
    %v4558 = vunpack.c.l.b16 %v3198
    %v4559 = vunpack.c.h.b16 %v3198
    %v4560 = vunpack.c.l.b16 %v3199
    %v4561 = vunpack.c.l.b16 %v3200
    %v4562 = vunpack.c.h.b16 %v3200
    %v4563 = vunpack.c.l.b16 %v3201
    %v4564 = vunpack.c.h.b16 %v3201
    %v4565 = vunpack.c.l.b16 %v3202
    %v4566 = vunpack.c.h.b16 %v3202
    %v4567 = vunpack.c.l.b16 %v3203
    %v4568 = vunpack.c.h.b16 %v3203
    %v4569 = vunpack.c.l.b16 %v3204
    %v4570 = vunpack.c.l.b16 %v3205
    %v4571 = vunpack.c.h.b16 %v3205
    %v4572 = vunpack.c.l.b16 %v3206
    %v4573 = vunpack.c.h.b16 %v3206
    %v4574 = vunpack.c.l.b16 %v3207
    %v4575 = vunpack.c.h.b16 %v3207
    %v4576 = vunpack.c.l.b16 %v3208
    %v4577 = vunpack.c.h.b16 %v3208
    %v4578 = vunpack.c.l.b16 %v3209
    %v4579 = vunpack.c.l.b16 %v3210
    %v4580 = vunpack.c.h.b16 %v3210
    %v4581 = vunpack.c.l.b16 %v3211
    %v4582 = vunpack.c.h.b16 %v3211
    %v4583 = vunpack.c.l.b16 %v3212
    %v4584 = vunpack.c.h.b16 %v3212
    %v4585 = vunpack.c.l.b16 %v3213
    %v4586 = vunpack.c.h.b16 %v3213
    %v4587 = vunpack.c.l.b16 %v3214
    %v4588 = vunpack.c.l.b16 %v3215
    %v4589 = vunpack.c.h.b16 %v3215
    %v4590 = vunpack.c.l.b16 %v3216
    %v4591 = vunpack.c.h.b16 %v3216
    %v4592 = vunpack.c.l.b16 %v3217
    %v4593 = vunpack.c.h.b16 %v3217
    %v4594 = vunpack.c.l.b16 %v3218
    %v4595 = vunpack.c.h.b16 %v3218
    %v4596 = vunpack.c.l.b16 %v3219
    %v4597 = vunpack.c.l.b16 %v3220
    %v4598 = vunpack.c.h.b16 %v3220
    %v4599 = vunpack.c.l.b16 %v3221
    %v4600 = vunpack.c.h.b16 %v3221
    %v4601 = vunpack.c.l.b16 %v3222
    %v4602 = vunpack.c.h.b16 %v3222
    %v4603 = vunpack.c.l.b16 %v3223
    %v4604 = vunpack.c.h.b16 %v3223
    %v4605 = vunpack.c.l.b16 %v3224
    %v4606 = vunpack.c.l.b16 %v3225
    %v4607 = vunpack.c.h.b16 %v3225
    %v4608 = vunpack.c.l.b16 %v3226
    %v4609 = vunpack.c.h.b16 %v3226
    %v4610 = vunpack.c.l.b16 %v3227
    %v4611 = vunpack.c.h.b16 %v3227
    %v4612 = vunpack.c.l.b16 %v3228
    %v4613 = vunpack.c.h.b16 %v3228
    %v4614 = vunpack.c.l.b16 %v3229
    %v4615 = vunpack.c.l.b16 %v3230
    %v4616 = vunpack.c.h.b16 %v3230
    %v4617 = vunpack.c.l.b16 %v3231
    %v4618 = vunpack.c.h.b16 %v3231
    %v4619 = vunpack.c.l.b16 %v3232
    %v4620 = vunpack.c.h.b16 %v3232
    %v4621 = vunpack.c.l.b16 %v3233
    %v4622 = vunpack.c.h.b16 %v3233
    %v4623 = vunpack.c.l.b16 %v3234
    %v4624 = vunpack.c.l.b16 %v3235
    %v4625 = vunpack.c.h.b16 %v3235
    %v4626 = vunpack.c.l.b16 %v3236
    %v4627 = vunpack.c.h.b16 %v3236
    %v4628 = vunpack.c.l.b16 %v3237
    %v4629 = vunpack.c.h.b16 %v3237
    %v4630 = vunpack.c.l.b16 %v3238
    %v4631 = vunpack.c.h.b16 %v3238
    %v4632 = vunpack.c.l.b16 %v3239
    %v4633 = vunpack.c.l.b16 %v3240
    %v4634 = vunpack.c.h.b16 %v3240
    %v4635 = vunpack.c.l.b16 %v3241
    %v4636 = vunpack.c.h.b16 %v3241
    %v4637 = vunpack.c.l.b16 %v3242
    %v4638 = vunpack.c.h.b16 %v3242
    %v4639 = vunpack.c.l.b16 %v3243
    %v4640 = vunpack.c.h.b16 %v3243
    %v4641 = vunpack.c.l.b16 %v3244
    %v4642 = vunpack.c.l.b16 %v3245
    %v4643 = vunpack.c.h.b16 %v3245
    %v4644 = vunpack.c.l.b16 %v3246
    %v4645 = vunpack.c.h.b16 %v3246
    %v4646 = vunpack.c.l.b16 %v3247
    %v4647 = vunpack.c.h.b16 %v3247
    %v4648 = vunpack.c.l.b16 %v3248
    %v4649 = vunpack.c.h.b16 %v3248
    %v4650 = vunpack.c.l.b16 %v3249
    %v4651 = vunpack.c.l.b16 %v3250
    %v4652 = vunpack.c.h.b16 %v3250
    %v4653 = vunpack.c.l.b16 %v3251
    %v4654 = vunpack.c.h.b16 %v3251
    %v4655 = vunpack.c.l.b16 %v3252
    %v4656 = vunpack.c.h.b16 %v3252
    %v4657 = vunpack.c.l.b16 %v3253
    %v4658 = vunpack.c.h.b16 %v3253
    %v4659 = vunpack.c.l.b16 %v3254
    %v4660 = vunpack.c.l.b16 %v3255
    %v4661 = vunpack.c.h.b16 %v3255
    %v4662 = vunpack.c.l.b16 %v3256
    %v4663 = vunpack.c.h.b16 %v3256
    %v4664 = vunpack.c.l.b16 %v3257
    %v4665 = vunpack.c.h.b16 %v3257
    %v4666 = vunpack.c.l.b16 %v3258
    %v4667 = vunpack.c.h.b16 %v3258
    %v4668 = vunpack.c.l.b16 %v3259
    %v4669 = vunpack.c.l.b16 %v3260
    %v4670 = vunpack.c.h.b16 %v3260
    %v4671 = vunpack.c.l.b16 %v3261
    %v4672 = vunpack.c.h.b16 %v3261
    %v4673 = vunpack.c.l.b16 %v3262
    %v4674 = vunpack.c.h.b16 %v3262
    %v4675 = vunpack.c.l.b16 %v3263
    %v4676 = vunpack.c.h.b16 %v3263
    %v4677 = vunpack.c.l.b16 %v3264
    %v4678 = vunpack.c.l.b16 %v3265
    %v4679 = vunpack.c.h.b16 %v3265
    %v4680 = vunpack.c.l.b16 %v3266
    %v4681 = vunpack.c.h.b16 %v3266
    %v4682 = vunpack.c.l.b16 %v3267
    %v4683 = vunpack.c.h.b16 %v3267
    %v4684 = vunpack.c.l.b16 %v3268
    %v4685 = vunpack.c.h.b16 %v3268
    %v4686 = vunpack.c.l.b16 %v3269
    %v4687 = vunpack.c.l.b16 %v3270
    %v4688 = vunpack.c.h.b16 %v3270
    %v4689 = vunpack.c.l.b16 %v3271
    %v4690 = vunpack.c.h.b16 %v3271
    %v4691 = vunpack.c.l.b16 %v3272
    %v4692 = vunpack.c.h.b16 %v3272
    %v4693 = vunpack.c.l.b16 %v3273
    %v4694 = vunpack.c.h.b16 %v3273
    %v4695 = vunpack.c.l.b16 %v3274
    %v4696 = vunpack.c.l.b16 %v3275
    %v4697 = vunpack.c.h.b16 %v3275
    %v4698 = vunpack.c.l.b16 %v3276
    %v4699 = vunpack.c.h.b16 %v3276
    %v4700 = vunpack.c.l.b16 %v3277
    %v4701 = vunpack.c.h.b16 %v3277
    %v4702 = vunpack.c.l.b16 %v3278
    %v4703 = vunpack.c.h.b16 %v3278
    %v4704 = vunpack.c.l.b16 %v3279
    %v4705 = vunpack.c.l.b16 %v3280
    %v4706 = vunpack.c.h.b16 %v3280
    %v4707 = vunpack.c.l.b16 %v3281
    %v4708 = vunpack.c.h.b16 %v3281
    %v4709 = vunpack.c.l.b16 %v3282
    %v4710 = vunpack.c.h.b16 %v3282
    %v4711 = vunpack.c.l.b16 %v3283
    %v4712 = vunpack.c.h.b16 %v3283
    %v4713 = vunpack.c.l.b16 %v3284
    %v4714 = vunpack.c.l.b16 %v3285
    %v4715 = vunpack.c.h.b16 %v3285
    %v4716 = vunpack.c.l.b16 %v3286
    %v4717 = vunpack.c.h.b16 %v3286
    %v4718 = vunpack.c.l.b16 %v3287
    %v4719 = vunpack.c.h.b16 %v3287
    %v4720 = vunpack.c.l.b16 %v3288
    %v4721 = vunpack.c.h.b16 %v3288
    %v4722 = vunpack.c.l.b16 %v3289
    %v4723 = vunpack.c.l.b16 %v3290
    %v4724 = vunpack.c.h.b16 %v3290
    %v4725 = vunpack.c.l.b16 %v3291
    %v4726 = vunpack.c.h.b16 %v3291
    %v4727 = vunpack.c.l.b16 %v3292
    %v4728 = vunpack.c.h.b16 %v3292
    %v4729 = vunpack.c.l.b16 %v3293
    %v4730 = vunpack.c.h.b16 %v3293
    %v4731 = vunpack.c.l.b16 %v3294
    %v4732 = vunpack.c.l.b16 %v3295
    %v4733 = vunpack.c.h.b16 %v3295
    %v4734 = vunpack.c.l.b16 %v3296
    %v4735 = vunpack.c.h.b16 %v3296
    %v4736 = vunpack.c.l.b16 %v3297
    %v4737 = vunpack.c.h.b16 %v3297
    %v4738 = vunpack.c.l.b16 %v3298
    %v4739 = vunpack.c.h.b16 %v3298
    %v4740 = vunpack.c.l.b16 %v3299
    %v4741 = vunpack.c.l.b16 %v3300
    %v4742 = vunpack.c.h.b16 %v3300
    %v4743 = vunpack.c.l.b16 %v3301
    %v4744 = vunpack.c.h.b16 %v3301
    %v4745 = vunpack.c.l.b16 %v3302
    %v4746 = vunpack.c.h.b16 %v3302
    %v4747 = vunpack.c.l.b16 %v3303
    %v4748 = vunpack.c.h.b16 %v3303
    %v4749 = vunpack.c.l.b16 %v3304
    %v4750 = vunpack.c.l.b16 %v3305
    %v4751 = vunpack.c.h.b16 %v3305
    %v4752 = vunpack.c.l.b16 %v3306
    %v4753 = vunpack.c.h.b16 %v3306
    %v4754 = vunpack.c.l.b16 %v3307
    %v4755 = vunpack.c.h.b16 %v3307
    %v4756 = vunpack.c.l.b16 %v3308
    %v4757 = vunpack.c.h.b16 %v3308
    %v4758 = vunpack.c.l.b16 %v3309
    %v4759 = vunpack.c.l.b16 %v3310
    %v4760 = vunpack.c.h.b16 %v3310
    %v4761 = vunpack.c.l.b16 %v3311
    %v4762 = vunpack.c.h.b16 %v3311
    %v4763 = vunpack.c.l.b16 %v3312
    %v4764 = vunpack.c.h.b16 %v3312
    %v4765 = vunpack.c.l.b16 %v3313
    %v4766 = vunpack.c.h.b16 %v3313
    %v4767 = vunpack.c.l.b16 %v3314
    %v4768 = vunpack.c.l.b16 %v3315
    %v4769 = vunpack.c.h.b16 %v3315
    %v4770 = vunpack.c.l.b16 %v3316
    %v4771 = vunpack.c.h.b16 %v3316
    %v4772 = vunpack.c.l.b16 %v3317
    %v4773 = vunpack.c.h.b16 %v3317
    %v4774 = vunpack.c.l.b16 %v3318
    %v4775 = vunpack.c.h.b16 %v3318
    %v4776 = vunpack.c.l.b16 %v3319
    %v4777 = vunpack.c.l.b16 %v3320
    %v4778 = vunpack.c.h.b16 %v3320
    %v4779 = vunpack.c.l.b16 %v3321
    %v4780 = vunpack.c.h.b16 %v3321
    %v4781 = vunpack.c.l.b16 %v3322
    %v4782 = vunpack.c.h.b16 %v3322
    %v4783 = vunpack.c.l.b16 %v3323
    %v4784 = vunpack.c.h.b16 %v3323
    %v4785 = vunpack.c.l.b16 %v3324
    %v4786 = vunpack.c.l.b16 %v3325
    %v4787 = vunpack.c.h.b16 %v3325
    %v4788 = vunpack.c.l.b16 %v3326
    %v4789 = vunpack.c.h.b16 %v3326
    %v4790 = vunpack.c.l.b16 %v3327
    %v4791 = vunpack.c.h.b16 %v3327
    %v4792 = vunpack.c.l.b16 %v3328
    %v4793 = vunpack.c.h.b16 %v3328
    %v4794 = vunpack.c.l.b16 %v3329
    %v4795 = vunpack.c.l.b16 %v3330
    %v4796 = vunpack.c.h.b16 %v3330
    %v4797 = vunpack.c.l.b16 %v3331
    %v4798 = vunpack.c.h.b16 %v3331
    %v4799 = vunpack.c.l.b16 %v3332
    %v4800 = vunpack.c.h.b16 %v3332
    %v4801 = vunpack.c.l.b16 %v3333
    %v4802 = vunpack.c.h.b16 %v3333
    %v4803 = vunpack.c.l.b16 %v3334
    %v4804 = vunpack.c.l.b16 %v3335
    %v4805 = vunpack.c.h.b16 %v3335
    %v4806 = vunpack.c.l.b16 %v3336
    %v4807 = vunpack.c.h.b16 %v3336
    %v4808 = vunpack.c.l.b16 %v3337
    %v4809 = vunpack.c.h.b16 %v3337
    %v4810 = vunpack.c.l.b16 %v3338
    %v4811 = vunpack.c.h.b16 %v3338
    %v4812 = vunpack.c.l.b16 %v3339
    %v4813 = vunpack.c.l.b16 %v3340
    %v4814 = vunpack.c.h.b16 %v3340
    %v4815 = vunpack.c.l.b16 %v3341
    %v4816 = vunpack.c.h.b16 %v3341
    %v4817 = vunpack.c.l.b16 %v3342
    %v4818 = vunpack.c.h.b16 %v3342
    %v4819 = vunpack.c.l.b16 %v3343
    %v4820 = vunpack.c.h.b16 %v3343
    %v4821 = vunpack.c.l.b16 %v3344
    %v4822 = vunpack.c.l.b16 %v3345
    %v4823 = vunpack.c.h.b16 %v3345
    %v4824 = vunpack.c.l.b16 %v3346
    %v4825 = vunpack.c.h.b16 %v3346
    %v4826 = vunpack.c.l.b16 %v3347
    %v4827 = vunpack.c.h.b16 %v3347
    %v4828 = vunpack.c.l.b16 %v3348
    %v4829 = vunpack.c.h.b16 %v3348
    %v4830 = vunpack.c.l.b16 %v3349
    %v4831 = vunpack.c.l.b16 %v3350
    %v4832 = vunpack.c.h.b16 %v3350
    %v4833 = vunpack.c.l.b16 %v3351
    %v4834 = vunpack.c.h.b16 %v3351
    %v4835 = vunpack.c.l.b16 %v3352
    %v4836 = vunpack.c.h.b16 %v3352
    %v4837 = vunpack.c.l.b16 %v3353
    %v4838 = vunpack.c.h.b16 %v3353
    %v4839 = vunpack.c.l.b16 %v3354
    %v4840 = vunpack.c.l.b16 %v3355
    %v4841 = vunpack.c.h.b16 %v3355
    %v4842 = vunpack.c.l.b16 %v3356
    %v4843 = vunpack.c.h.b16 %v3356
    %v4844 = vunpack.c.l.b16 %v3357
    %v4845 = vunpack.c.h.b16 %v3357
    %v4846 = vunpack.c.l.b16 %v3358
    %v4847 = vunpack.c.h.b16 %v3358
    %v4848 = vunpack.c.l.b16 %v3359
    %v4849 = vunpack.c.l.b16 %v3360
    %v4850 = vunpack.c.h.b16 %v3360
    %v4851 = vunpack.c.l.b16 %v3361
    %v4852 = vunpack.c.h.b16 %v3361
    %v4853 = vunpack.c.l.b16 %v3362
    %v4854 = vunpack.c.h.b16 %v3362
    %v4855 = vunpack.c.l.b16 %v3363
    %v4856 = vunpack.c.h.b16 %v3363
    %v4857 = vunpack.c.l.b16 %v3364
    %v4858 = vunpack.c.l.b16 %v3365
    %v4859 = vunpack.c.h.b16 %v3365
    %v4860 = vunpack.c.l.b16 %v3366
    %v4861 = vunpack.c.h.b16 %v3366
    %v4862 = vunpack.c.l.b16 %v3367
    %v4863 = vunpack.c.h.b16 %v3367
    %v4864 = vunpack.c.l.b16 %v3368
    %v4865 = vunpack.c.h.b16 %v3368
    %v4866 = vunpack.c.l.b16 %v3369
    %v4867 = vunpack.c.l.b16 %v3370
    %v4868 = vunpack.c.h.b16 %v3370
    %v4869 = vunpack.c.l.b16 %v3371
    %v4870 = vunpack.c.h.b16 %v3371
    %v4871 = vunpack.c.l.b16 %v3372
    %v4872 = vunpack.c.h.b16 %v3372
    %v4873 = vunpack.c.l.b16 %v3373
    %v4874 = vunpack.c.h.b16 %v3373
    %v4875 = vunpack.c.l.b16 %v3374
    %v4876 = vunpack.c.l.b16 %v3375
    %v4877 = vunpack.c.h.b16 %v3375
    %v4878 = vunpack.c.l.b16 %v3376
    %v4879 = vunpack.c.h.b16 %v3376
    %v4880 = vunpack.c.l.b16 %v3377
    %v4881 = vunpack.c.h.b16 %v3377
    %v4882 = vunpack.c.l.b16 %v3378
    %v4883 = vunpack.c.h.b16 %v3378
    %v4884 = vunpack.c.l.b16 %v3379
    %v4885 = vunpack.c.l.b16 %v3380
    %v4886 = vunpack.c.h.b16 %v3380
    %v4887 = vunpack.c.l.b16 %v3381
    %v4888 = vunpack.c.h.b16 %v3381
    %v4889 = vunpack.c.l.b16 %v3382
    %v4890 = vunpack.c.h.b16 %v3382
    %v4891 = vunpack.c.l.b16 %v3383
    %v4892 = vunpack.c.h.b16 %v3383
    %v4893 = vunpack.c.l.b16 %v3384
    %v4894 = vunpack.c.l.b16 %v3385
    %v4895 = vunpack.c.h.b16 %v3385
    %v4896 = vunpack.c.l.b16 %v3386
    %v4897 = vunpack.c.h.b16 %v3386
    %v4898 = vunpack.c.l.b16 %v3387
    %v4899 = vunpack.c.h.b16 %v3387
    %v4900 = vunpack.c.l.b16 %v3388
    %v4901 = vunpack.c.h.b16 %v3388
    %v4902 = vunpack.c.l.b16 %v3389
    %v4903 = vunpack.c.l.b16 %v3390
    %v4904 = vunpack.c.h.b16 %v3390
    %v4905 = vunpack.c.l.b16 %v3391
    %v4906 = vunpack.c.h.b16 %v3391
    %v4907 = vunpack.c.l.b16 %v3392
    %v4908 = vunpack.c.h.b16 %v3392
    %v4909 = vunpack.c.l.b16 %v3393
    %v4910 = vunpack.c.h.b16 %v3393
    %v4911 = vunpack.c.l.b16 %v3394
    %v4912 = vunpack.c.l.b16 %v3395
    %v4913 = vunpack.c.h.b16 %v3395
    %v4914 = vunpack.c.l.b16 %v3396
    %v4915 = vunpack.c.h.b16 %v3396
    %v4916 = vunpack.c.l.b16 %v3397
    %v4917 = vunpack.c.h.b16 %v3397
    %v4918 = vunpack.c.l.b16 %v3398
    %v4919 = vunpack.c.h.b16 %v3398
    %v4920 = vunpack.c.l.b16 %v3399
    %v4921 = vunpack.c.l.b16 %v3400
    %v4922 = vunpack.c.h.b16 %v3400
    %v4923 = vunpack.c.l.b16 %v3401
    %v4924 = vunpack.c.h.b16 %v3401
    %v4925 = vunpack.c.l.b16 %v3402
    %v4926 = vunpack.c.h.b16 %v3402
    %v4927 = vunpack.c.l.b16 %v3403
    %v4928 = vunpack.c.h.b16 %v3403
    %v4929 = vunpack.c.l.b16 %v3404
    %v4930 = vunpack.c.l.b16 %v3405
    %v4931 = vunpack.c.h.b16 %v3405
    %v4932 = vunpack.c.l.b16 %v3406
    %v4933 = vunpack.c.h.b16 %v3406
    %v4934 = vunpack.c.l.b16 %v3407
    %v4935 = vunpack.c.h.b16 %v3407
    %v4936 = vunpack.c.l.b16 %v3408
    %v4937 = vunpack.c.h.b16 %v3408
    %v4938 = vunpack.c.l.b16 %v3409
    %v4939 = vunpack.c.l.b16 %v3410
    %v4940 = vunpack.c.h.b16 %v3410
    %v4941 = vunpack.c.l.b16 %v3411
    %v4942 = vunpack.c.h.b16 %v3411
    %v4943 = vunpack.c.l.b16 %v3412
    %v4944 = vunpack.c.h.b16 %v3412
    %v4945 = vunpack.c.l.b16 %v3413
    %v4946 = vunpack.c.h.b16 %v3413
    %v4947 = vunpack.c.l.b16 %v3414
    %v4948 = vunpack.c.l.b16 %v3415
    %v4949 = vunpack.c.h.b16 %v3415
    %v4950 = vunpack.c.l.b16 %v3416
    %v4951 = vunpack.c.h.b16 %v3416
    %v4952 = vunpack.c.l.b16 %v3417
    %v4953 = vunpack.c.h.b16 %v3417
    %v4954 = vunpack.c.l.b16 %v3418
    %v4955 = vunpack.c.h.b16 %v3418
    %v4956 = vunpack.c.l.b16 %v3419
    %v4957 = vunpack.c.l.b16 %v3420
    %v4958 = vunpack.c.h.b16 %v3420
    %v4959 = vunpack.c.l.b16 %v3421
    %v4960 = vunpack.c.h.b16 %v3421
    %v4961 = vunpack.c.l.b16 %v3422
    %v4962 = vunpack.c.h.b16 %v3422
    %v4963 = vunpack.c.l.b16 %v3423
    %v4964 = vunpack.c.h.b16 %v3423
    %v4965 = vunpack.c.l.b16 %v3424
    %v4966 = vunpack.c.l.b16 %v3425
    %v4967 = vunpack.c.h.b16 %v3425
    %v4968 = vunpack.c.l.b16 %v3426
    %v4969 = vunpack.c.h.b16 %v3426
    %v4970 = vunpack.c.l.b16 %v3427
    %v4971 = vunpack.c.h.b16 %v3427
    %v4972 = vunpack.c.l.b16 %v3428
    %v4973 = vunpack.c.h.b16 %v3428
    %v4974 = vunpack.c.l.b16 %v3429
    %v4975 = vunpack.c.l.b16 %v3430
    %v4976 = vunpack.c.h.b16 %v3430
    %v4977 = vunpack.c.l.b16 %v3431
    %v4978 = vunpack.c.h.b16 %v3431
    %v4979 = vunpack.c.l.b16 %v3432
    %v4980 = vunpack.c.h.b16 %v3432
    %v4981 = vunpack.c.l.b16 %v3433
    %v4982 = vunpack.c.h.b16 %v3433
    %v4983 = vunpack.c.l.b16 %v3434
    %v4984 = vunpack.c.l.b16 %v3435
    %v4985 = vunpack.c.h.b16 %v3435
    %v4986 = vunpack.c.l.b16 %v3436
    %v4987 = vunpack.c.h.b16 %v3436
    %v4988 = vunpack.c.l.b16 %v3437
    %v4989 = vunpack.c.h.b16 %v3437
    %v4990 = vunpack.c.l.b16 %v3438
    %v4991 = vunpack.c.h.b16 %v3438
    %v4992 = vunpack.c.l.b16 %v3439
    %v4993 = vunpack.c.l.b16 %v3440
    %v4994 = vunpack.c.h.b16 %v3440
    %v4995 = vunpack.c.l.b16 %v3441
    %v4996 = vunpack.c.h.b16 %v3441
    %v4997 = vunpack.c.l.b16 %v3442
    %v4998 = vunpack.c.h.b16 %v3442
    %v4999 = vunpack.c.l.b16 %v3443
    %v5000 = vunpack.c.h.b16 %v3443
    %v5001 = vunpack.c.l.b16 %v3444
    %v5002 = vunpack.c.l.b16 %v3445
    %v5003 = vunpack.c.h.b16 %v3445
    %v5004 = vunpack.c.l.b16 %v3446
    %v5005 = vunpack.c.h.b16 %v3446
    %v5006 = vunpack.c.l.b16 %v3447
    %v5007 = vunpack.c.h.b16 %v3447
    %v5008 = vunpack.c.l.b16 %v3448
    %v5009 = vunpack.c.h.b16 %v3448
    %v5010 = vunpack.c.l.b16 %v3449
    %v5011 = vunpack.c.l.b16 %v3450
    %v5012 = vunpack.c.h.b16 %v3450
    %v5013 = vunpack.c.l.b16 %v3451
    %v5014 = vunpack.c.h.b16 %v3451
    %v5015 = vunpack.c.l.b16 %v3452
    %v5016 = vunpack.c.h.b16 %v3452
    %v5017 = vunpack.c.l.b16 %v3453
    %v5018 = vunpack.c.h.b16 %v3453
    %v5019 = vunpack.c.l.b16 %v3454
    %v5020 = vunpack.c.l.b16 %v3455
    %v5021 = vunpack.c.h.b16 %v3455
    %v5022 = vunpack.c.l.b16 %v3456
    %v5023 = vunpack.c.h.b16 %v3456
    %v5024 = vunpack.c.l.b16 %v3457
    %v5025 = vunpack.c.h.b16 %v3457
    %v5026 = vunpack.c.l.b16 %v3458
    %v5027 = vunpack.c.h.b16 %v3458
    %v5028 = vunpack.c.l.b16 %v3459
    %v5029 = vunpack.c.l.b16 %v3460
    %v5030 = vunpack.c.h.b16 %v3460
    %v5031 = vunpack.c.l.b16 %v3461
    %v5032 = vunpack.c.h.b16 %v3461
    %v5033 = vunpack.c.l.b16 %v3462
    %v5034 = vunpack.c.h.b16 %v3462
    %v5035 = vunpack.c.l.b16 %v3463
    %v5036 = vunpack.c.h.b16 %v3463
    %v5037 = vunpack.c.l.b16 %v3464
    %v5038 = vunpack.c.l.b16 %v3465
    %v5039 = vunpack.c.h.b16 %v3465
    %v5040 = vunpack.c.l.b16 %v3466
    %v5041 = vunpack.c.h.b16 %v3466
    %v5042 = vunpack.c.l.b16 %v3467
    %v5043 = vunpack.c.h.b16 %v3467
    %v5044 = vunpack.c.l.b16 %v3468
    %v5045 = vunpack.c.h.b16 %v3468
    %v5046 = vunpack.c.l.b16 %v3469
    %v5047 = vunpack.c.l.b16 %v3470
    %v5048 = vunpack.c.h.b16 %v3470
    %v5049 = vunpack.c.l.b16 %v3471
    %v5050 = vunpack.c.h.b16 %v3471
    %v5051 = vunpack.c.l.b16 %v3472
    %v5052 = vunpack.c.h.b16 %v3472
    %v5053 = vunpack.c.l.b16 %v3473
    %v5054 = vunpack.c.h.b16 %v3473
    %v5055 = vunpack.c.l.b16 %v3474
    %v5056 = vunpack.c.l.b16 %v3475
    %v5057 = vunpack.c.h.b16 %v3475
    %v5058 = vunpack.c.l.b16 %v3476
    %v5059 = vunpack.c.h.b16 %v3476
    %v5060 = vunpack.c.l.b16 %v3477
    %v5061 = vunpack.c.h.b16 %v3477
    %v5062 = vunpack.c.l.b16 %v3478
    %v5063 = vunpack.c.h.b16 %v3478
    %v5064 = vunpack.c.l.b16 %v3479
    %v5065 = vunpack.c.l.b16 %v3480
    %v5066 = vunpack.c.h.b16 %v3480
    %v5067 = vunpack.c.l.b16 %v3481
    %v5068 = vunpack.c.h.b16 %v3481
    %v5069 = vunpack.c.l.b16 %v3482
    %v5070 = vunpack.c.h.b16 %v3482
    %v5071 = vunpack.c.l.b16 %v3483
    %v5072 = vunpack.c.h.b16 %v3483
    %v5073 = vunpack.c.l.b16 %v3484
    %v5074 = vunpack.c.l.b16 %v3485
    %v5075 = vunpack.c.h.b16 %v3485
    %v5076 = vunpack.c.l.b16 %v3486
    %v5077 = vunpack.c.h.b16 %v3486
    %v5078 = vunpack.c.l.b16 %v3487
    %v5079 = vunpack.c.h.b16 %v3487
    %v5080 = vunpack.c.l.b16 %v3488
    %v5081 = vunpack.c.h.b16 %v3488
    %v5082 = vunpack.c.l.b16 %v3489
    %v5083 = vunpack.c.l.b16 %v3490
    %v5084 = vunpack.c.h.b16 %v3490
    %v5085 = vunpack.c.l.b16 %v3491
    %v5086 = vunpack.c.h.b16 %v3491
    %v5087 = vunpack.c.l.b16 %v3492
    %v5088 = vunpack.c.h.b16 %v3492
    %v5089 = vunpack.c.l.b16 %v3493
    %v5090 = vunpack.c.h.b16 %v3493
    %v5091 = vunpack.c.l.b16 %v3494
    %v5092 = vunpack.c.l.b16 %v3495
    %v5093 = vunpack.c.h.b16 %v3495
    %v5094 = vunpack.c.l.b16 %v3496
    %v5095 = vunpack.c.h.b16 %v3496
    %v5096 = vunpack.c.l.b16 %v3497
    %v5097 = vunpack.c.h.b16 %v3497
    %v5098 = vunpack.c.l.b16 %v3498
    %v5099 = vunpack.c.h.b16 %v3498
    %v5100 = vunpack.c.l.b16 %v3499
    %v5101 = vunpack.c.l.b16 %v3500
    %v5102 = vunpack.c.h.b16 %v3500
    %v5103 = vunpack.c.l.b16 %v3501
    %v5104 = vunpack.c.h.b16 %v3501
    %v5105 = vunpack.c.l.b16 %v3502
    %v5106 = vunpack.c.h.b16 %v3502
    %v5107 = vunpack.c.l.b16 %v3503
    %v5108 = vunpack.c.h.b16 %v3503
    %v5109 = vunpack.c.l.b16 %v3504
    %v5110 = vunpack.c.l.b16 %v3505
    %v5111 = vunpack.c.h.b16 %v3505
    %v5112 = vunpack.c.l.b16 %v3506
    %v5113 = vunpack.c.h.b16 %v3506
    %v5114 = vunpack.c.l.b16 %v3507
    %v5115 = vunpack.c.h.b16 %v3507
    %v5116 = vunpack.c.l.b16 %v3508
    %v5117 = vunpack.c.h.b16 %v3508
    %v5118 = vunpack.c.l.b16 %v3509
    %v5119 = vunpack.c.l.b16 %v3510
    %v5120 = vunpack.c.h.b16 %v3510
    %v5121 = vunpack.c.l.b16 %v3511
    %v5122 = vunpack.c.h.b16 %v3511
    %v5123 = vunpack.c.l.b16 %v3512
    %v5124 = vunpack.c.h.b16 %v3512
    %v5125 = vunpack.c.l.b16 %v3513
    %v5126 = vunpack.c.h.b16 %v3513
    %v5127 = vunpack.c.l.b16 %v3514
    %v5128 = vunpack.c.l.b16 %v3515
    %v5129 = vunpack.c.h.b16 %v3515
    %v5130 = vunpack.c.l.b16 %v3516
    %v5131 = vunpack.c.h.b16 %v3516
    %v5132 = vunpack.c.l.b16 %v3517
    %v5133 = vunpack.c.h.b16 %v3517
    %v5134 = vunpack.c.l.b16 %v3518
    %v5135 = vunpack.c.h.b16 %v3518
    %v5136 = vunpack.c.l.b16 %v3519
    %v5137 = vpack.c.b16 %v4138, %v4129
    %v5138 = vpack.c.b16 %v4139, %v4130
    %v5139 = vpack.c.b16 %v4140, %v4131
    %v5140 = vpack.c.b16 %v4141, %v4132
    %v5141 = vpack.c.b16 %v4142, %v4133
    %v5142 = vpack.c.b16 %v4143, %v4134
    %v5143 = vpack.c.b16 %v4144, %v4135
    %v5144 = vpack.c.b16 %v4145, %v4136
    %v5145 = vpack.c.b16 %v4146, %v4137
    %v5146 = vpack.c.b16 %v4156, %v4147
    %v5147 = vpack.c.b16 %v4157, %v4148
    %v5148 = vpack.c.b16 %v4158, %v4149
    %v5149 = vpack.c.b16 %v4159, %v4150
    %v5150 = vpack.c.b16 %v4160, %v4151
    %v5151 = vpack.c.b16 %v4161, %v4152
    %v5152 = vpack.c.b16 %v4162, %v4153
    %v5153 = vpack.c.b16 %v4163, %v4154
    %v5154 = vpack.c.b16 %v4164, %v4155
    %v5155 = vpack.c.b16 %v4174, %v4165
    %v5156 = vpack.c.b16 %v4175, %v4166
    %v5157 = vpack.c.b16 %v4176, %v4167
    %v5158 = vpack.c.b16 %v4177, %v4168
    %v5159 = vpack.c.b16 %v4178, %v4169
    %v5160 = vpack.c.b16 %v4179, %v4170
    %v5161 = vpack.c.b16 %v4180, %v4171
    %v5162 = vpack.c.b16 %v4181, %v4172
    %v5163 = vpack.c.b16 %v4182, %v4173
    %v5164 = vpack.c.b16 %v4192, %v4183
    %v5165 = vpack.c.b16 %v4193, %v4184
    %v5166 = vpack.c.b16 %v4194, %v4185
    %v5167 = vpack.c.b16 %v4195, %v4186
    %v5168 = vpack.c.b16 %v4196, %v4187
    %v5169 = vpack.c.b16 %v4197, %v4188
    %v5170 = vpack.c.b16 %v4198, %v4189
    %v5171 = vpack.c.b16 %v4199, %v4190
    %v5172 = vpack.c.b16 %v4200, %v4191
    %v5173 = vpack.c.b16 %v4210, %v4201
    %v5174 = vpack.c.b16 %v4211, %v4202
    %v5175 = vpack.c.b16 %v4212, %v4203
    %v5176 = vpack.c.b16 %v4213, %v4204
    %v5177 = vpack.c.b16 %v4214, %v4205
    %v5178 = vpack.c.b16 %v4215, %v4206
    %v5179 = vpack.c.b16 %v4216, %v4207
    %v5180 = vpack.c.b16 %v4217, %v4208
    %v5181 = vpack.c.b16 %v4218, %v4209
    %v5182 = vpack.c.b16 %v4228, %v4219
    %v5183 = vpack.c.b16 %v4229, %v4220
    %v5184 = vpack.c.b16 %v4230, %v4221
    %v5185 = vpack.c.b16 %v4231, %v4222
    %v5186 = vpack.c.b16 %v4232, %v4223
    %v5187 = vpack.c.b16 %v4233, %v4224
    %v5188 = vpack.c.b16 %v4234, %v4225
    %v5189 = vpack.c.b16 %v4235, %v4226
    %v5190 = vpack.c.b16 %v4236, %v4227
    %v5191 = vpack.c.b16 %v4246, %v4237
    %v5192 = vpack.c.b16 %v4247, %v4238
    %v5193 = vpack.c.b16 %v4248, %v4239
    %v5194 = vpack.c.b16 %v4249, %v4240
    %v5195 = vpack.c.b16 %v4250, %v4241
    %v5196 = vpack.c.b16 %v4251, %v4242
    %v5197 = vpack.c.b16 %v4252, %v4243
    %v5198 = vpack.c.b16 %v4253, %v4244
    %v5199 = vpack.c.b16 %v4254, %v4245
    %v5200 = vpack.c.b16 %v4264, %v4255
    %v5201 = vpack.c.b16 %v4265, %v4256
    %v5202 = vpack.c.b16 %v4266, %v4257
    %v5203 = vpack.c.b16 %v4267, %v4258
    %v5204 = vpack.c.b16 %v4268, %v4259
    %v5205 = vpack.c.b16 %v4269, %v4260
    %v5206 = vpack.c.b16 %v4270, %v4261
    %v5207 = vpack.c.b16 %v4271, %v4262
    %v5208 = vpack.c.b16 %v4272, %v4263
    %v5209 = vpack.c.b16 %v4282, %v4273
    %v5210 = vpack.c.b16 %v4283, %v4274
    %v5211 = vpack.c.b16 %v4284, %v4275
    %v5212 = vpack.c.b16 %v4285, %v4276
    %v5213 = vpack.c.b16 %v4286, %v4277
    %v5214 = vpack.c.b16 %v4287, %v4278
    %v5215 = vpack.c.b16 %v4288, %v4279
    %v5216 = vpack.c.b16 %v4289, %v4280
    %v5217 = vpack.c.b16 %v4290, %v4281
    %v5218 = vpack.c.b16 %v4300, %v4291
    %v5219 = vpack.c.b16 %v4301, %v4292
    %v5220 = vpack.c.b16 %v4302, %v4293
    %v5221 = vpack.c.b16 %v4303, %v4294
    %v5222 = vpack.c.b16 %v4304, %v4295
    %v5223 = vpack.c.b16 %v4305, %v4296
    %v5224 = vpack.c.b16 %v4306, %v4297
    %v5225 = vpack.c.b16 %v4307, %v4298
    %v5226 = vpack.c.b16 %v4308, %v4299
    %v5227 = vpack.c.b16 %v4318, %v4309
    %v5228 = vpack.c.b16 %v4319, %v4310
    %v5229 = vpack.c.b16 %v4320, %v4311
    %v5230 = vpack.c.b16 %v4321, %v4312
    %v5231 = vpack.c.b16 %v4322, %v4313
    %v5232 = vpack.c.b16 %v4323, %v4314
    %v5233 = vpack.c.b16 %v4324, %v4315
    %v5234 = vpack.c.b16 %v4325, %v4316
    %v5235 = vpack.c.b16 %v4326, %v4317
    %v5236 = vpack.c.b16 %v4336, %v4327
    %v5237 = vpack.c.b16 %v4337, %v4328
    %v5238 = vpack.c.b16 %v4338, %v4329
    %v5239 = vpack.c.b16 %v4339, %v4330
    %v5240 = vpack.c.b16 %v4340, %v4331
    %v5241 = vpack.c.b16 %v4341, %v4332
    %v5242 = vpack.c.b16 %v4342, %v4333
    %v5243 = vpack.c.b16 %v4343, %v4334
    %v5244 = vpack.c.b16 %v4344, %v4335
    %v5245 = vpack.c.b16 %v4354, %v4345
    %v5246 = vpack.c.b16 %v4355, %v4346
    %v5247 = vpack.c.b16 %v4356, %v4347
    %v5248 = vpack.c.b16 %v4357, %v4348
    %v5249 = vpack.c.b16 %v4358, %v4349
    %v5250 = vpack.c.b16 %v4359, %v4350
    %v5251 = vpack.c.b16 %v4360, %v4351
    %v5252 = vpack.c.b16 %v4361, %v4352
    %v5253 = vpack.c.b16 %v4362, %v4353
    %v5254 = vpack.c.b16 %v4372, %v4363
    %v5255 = vpack.c.b16 %v4373, %v4364
    %v5256 = vpack.c.b16 %v4374, %v4365
    %v5257 = vpack.c.b16 %v4375, %v4366
    %v5258 = vpack.c.b16 %v4376, %v4367
    %v5259 = vpack.c.b16 %v4377, %v4368
    %v5260 = vpack.c.b16 %v4378, %v4369
    %v5261 = vpack.c.b16 %v4379, %v4370
    %v5262 = vpack.c.b16 %v4380, %v4371
    %v5263 = vpack.c.b16 %v4390, %v4381
    %v5264 = vpack.c.b16 %v4391, %v4382
    %v5265 = vpack.c.b16 %v4392, %v4383
    %v5266 = vpack.c.b16 %v4393, %v4384
    %v5267 = vpack.c.b16 %v4394, %v4385
    %v5268 = vpack.c.b16 %v4395, %v4386
    %v5269 = vpack.c.b16 %v4396, %v4387
    %v5270 = vpack.c.b16 %v4397, %v4388
    %v5271 = vpack.c.b16 %v4398, %v4389
    %v5272 = vpack.c.b16 %v4408, %v4399
    %v5273 = vpack.c.b16 %v4409, %v4400
    %v5274 = vpack.c.b16 %v4410, %v4401
    %v5275 = vpack.c.b16 %v4411, %v4402
    %v5276 = vpack.c.b16 %v4412, %v4403
    %v5277 = vpack.c.b16 %v4413, %v4404
    %v5278 = vpack.c.b16 %v4414, %v4405
    %v5279 = vpack.c.b16 %v4415, %v4406
    %v5280 = vpack.c.b16 %v4416, %v4407
    %v5281 = vpack.c.b16 %v4426, %v4417
    %v5282 = vpack.c.b16 %v4427, %v4418
    %v5283 = vpack.c.b16 %v4428, %v4419
    %v5284 = vpack.c.b16 %v4429, %v4420
    %v5285 = vpack.c.b16 %v4430, %v4421
    %v5286 = vpack.c.b16 %v4431, %v4422
    %v5287 = vpack.c.b16 %v4432, %v4423
    %v5288 = vpack.c.b16 %v4433, %v4424
    %v5289 = vpack.c.b16 %v4434, %v4425
    %v5290 = vpack.c.b16 %v4444, %v4435
    %v5291 = vpack.c.b16 %v4445, %v4436
    %v5292 = vpack.c.b16 %v4446, %v4437
    %v5293 = vpack.c.b16 %v4447, %v4438
    %v5294 = vpack.c.b16 %v4448, %v4439
    %v5295 = vpack.c.b16 %v4449, %v4440
    %v5296 = vpack.c.b16 %v4450, %v4441
    %v5297 = vpack.c.b16 %v4451, %v4442
    %v5298 = vpack.c.b16 %v4452, %v4443
    %v5299 = vpack.c.b16 %v4462, %v4453
    %v5300 = vpack.c.b16 %v4463, %v4454
    %v5301 = vpack.c.b16 %v4464, %v4455
    %v5302 = vpack.c.b16 %v4465, %v4456
    %v5303 = vpack.c.b16 %v4466, %v4457
    %v5304 = vpack.c.b16 %v4467, %v4458
    %v5305 = vpack.c.b16 %v4468, %v4459
    %v5306 = vpack.c.b16 %v4469, %v4460
    %v5307 = vpack.c.b16 %v4470, %v4461
    %v5308 = vpack.c.b16 %v4480, %v4471
    %v5309 = vpack.c.b16 %v4481, %v4472
    %v5310 = vpack.c.b16 %v4482, %v4473
    %v5311 = vpack.c.b16 %v4483, %v4474
    %v5312 = vpack.c.b16 %v4484, %v4475
    %v5313 = vpack.c.b16 %v4485, %v4476
    %v5314 = vpack.c.b16 %v4486, %v4477
    %v5315 = vpack.c.b16 %v4487, %v4478
    %v5316 = vpack.c.b16 %v4488, %v4479
    %v5317 = vpack.c.b16 %v4498, %v4489
    %v5318 = vpack.c.b16 %v4499, %v4490
    %v5319 = vpack.c.b16 %v4500, %v4491
    %v5320 = vpack.c.b16 %v4501, %v4492
    %v5321 = vpack.c.b16 %v4502, %v4493
    %v5322 = vpack.c.b16 %v4503, %v4494
    %v5323 = vpack.c.b16 %v4504, %v4495
    %v5324 = vpack.c.b16 %v4505, %v4496
    %v5325 = vpack.c.b16 %v4506, %v4497
    %v5326 = vpack.c.b16 %v4516, %v4507
    %v5327 = vpack.c.b16 %v4517, %v4508
    %v5328 = vpack.c.b16 %v4518, %v4509
    %v5329 = vpack.c.b16 %v4519, %v4510
    %v5330 = vpack.c.b16 %v4520, %v4511
    %v5331 = vpack.c.b16 %v4521, %v4512
    %v5332 = vpack.c.b16 %v4522, %v4513
    %v5333 = vpack.c.b16 %v4523, %v4514
    %v5334 = vpack.c.b16 %v4524, %v4515
    %v5335 = vpack.c.b16 %v4534, %v4525
    %v5336 = vpack.c.b16 %v4535, %v4526
    %v5337 = vpack.c.b16 %v4536, %v4527
    %v5338 = vpack.c.b16 %v4537, %v4528
    %v5339 = vpack.c.b16 %v4538, %v4529
    %v5340 = vpack.c.b16 %v4539, %v4530
    %v5341 = vpack.c.b16 %v4540, %v4531
    %v5342 = vpack.c.b16 %v4541, %v4532
    %v5343 = vpack.c.b16 %v4542, %v4533
    %v5344 = vpack.c.b16 %v4552, %v4543
    %v5345 = vpack.c.b16 %v4553, %v4544
    %v5346 = vpack.c.b16 %v4554, %v4545
    %v5347 = vpack.c.b16 %v4555, %v4546
    %v5348 = vpack.c.b16 %v4556, %v4547
    %v5349 = vpack.c.b16 %v4557, %v4548
    %v5350 = vpack.c.b16 %v4558, %v4549
    %v5351 = vpack.c.b16 %v4559, %v4550
    %v5352 = vpack.c.b16 %v4560, %v4551
    %v5353 = vpack.c.b16 %v4570, %v4561
    %v5354 = vpack.c.b16 %v4571, %v4562
    %v5355 = vpack.c.b16 %v4572, %v4563
    %v5356 = vpack.c.b16 %v4573, %v4564
    %v5357 = vpack.c.b16 %v4574, %v4565
    %v5358 = vpack.c.b16 %v4575, %v4566
    %v5359 = vpack.c.b16 %v4576, %v4567
    %v5360 = vpack.c.b16 %v4577, %v4568
    %v5361 = vpack.c.b16 %v4578, %v4569
    %v5362 = vpack.c.b16 %v4588, %v4579
    %v5363 = vpack.c.b16 %v4589, %v4580
    %v5364 = vpack.c.b16 %v4590, %v4581
    %v5365 = vpack.c.b16 %v4591, %v4582
    %v5366 = vpack.c.b16 %v4592, %v4583
    %v5367 = vpack.c.b16 %v4593, %v4584
    %v5368 = vpack.c.b16 %v4594, %v4585
    %v5369 = vpack.c.b16 %v4595, %v4586
    %v5370 = vpack.c.b16 %v4596, %v4587
    %v5371 = vpack.c.b16 %v4606, %v4597
    %v5372 = vpack.c.b16 %v4607, %v4598
    %v5373 = vpack.c.b16 %v4608, %v4599
    %v5374 = vpack.c.b16 %v4609, %v4600
    %v5375 = vpack.c.b16 %v4610, %v4601
    %v5376 = vpack.c.b16 %v4611, %v4602
    %v5377 = vpack.c.b16 %v4612, %v4603
    %v5378 = vpack.c.b16 %v4613, %v4604
    %v5379 = vpack.c.b16 %v4614, %v4605
    %v5380 = vpack.c.b16 %v4624, %v4615
    %v5381 = vpack.c.b16 %v4625, %v4616
    %v5382 = vpack.c.b16 %v4626, %v4617
    %v5383 = vpack.c.b16 %v4627, %v4618
    %v5384 = vpack.c.b16 %v4628, %v4619
    %v5385 = vpack.c.b16 %v4629, %v4620
    %v5386 = vpack.c.b16 %v4630, %v4621
    %v5387 = vpack.c.b16 %v4631, %v4622
    %v5388 = vpack.c.b16 %v4632, %v4623
    %v5389 = vpack.c.b16 %v4642, %v4633
    %v5390 = vpack.c.b16 %v4643, %v4634
    %v5391 = vpack.c.b16 %v4644, %v4635
    %v5392 = vpack.c.b16 %v4645, %v4636
    %v5393 = vpack.c.b16 %v4646, %v4637
    %v5394 = vpack.c.b16 %v4647, %v4638
    %v5395 = vpack.c.b16 %v4648, %v4639
    %v5396 = vpack.c.b16 %v4649, %v4640
    %v5397 = vpack.c.b16 %v4650, %v4641
    %v5398 = vpack.c.b16 %v4660, %v4651
    %v5399 = vpack.c.b16 %v4661, %v4652
    %v5400 = vpack.c.b16 %v4662, %v4653
    %v5401 = vpack.c.b16 %v4663, %v4654
    %v5402 = vpack.c.b16 %v4664, %v4655
    %v5403 = vpack.c.b16 %v4665, %v4656
    %v5404 = vpack.c.b16 %v4666, %v4657
    %v5405 = vpack.c.b16 %v4667, %v4658
    %v5406 = vpack.c.b16 %v4668, %v4659
    %v5407 = vpack.c.b16 %v4678, %v4669
    %v5408 = vpack.c.b16 %v4679, %v4670
    %v5409 = vpack.c.b16 %v4680, %v4671
    %v5410 = vpack.c.b16 %v4681, %v4672
    %v5411 = vpack.c.b16 %v4682, %v4673
    %v5412 = vpack.c.b16 %v4683, %v4674
    %v5413 = vpack.c.b16 %v4684, %v4675
    %v5414 = vpack.c.b16 %v4685, %v4676
    %v5415 = vpack.c.b16 %v4686, %v4677
    %v5416 = vpack.c.b16 %v4696, %v4687
    %v5417 = vpack.c.b16 %v4697, %v4688
    %v5418 = vpack.c.b16 %v4698, %v4689
    %v5419 = vpack.c.b16 %v4699, %v4690
    %v5420 = vpack.c.b16 %v4700, %v4691
    %v5421 = vpack.c.b16 %v4701, %v4692
    %v5422 = vpack.c.b16 %v4702, %v4693
    %v5423 = vpack.c.b16 %v4703, %v4694
    %v5424 = vpack.c.b16 %v4704, %v4695
    %v5425 = vpack.c.b16 %v4714, %v4705
    %v5426 = vpack.c.b16 %v4715, %v4706
    %v5427 = vpack.c.b16 %v4716, %v4707
    %v5428 = vpack.c.b16 %v4717, %v4708
    %v5429 = vpack.c.b16 %v4718, %v4709
    %v5430 = vpack.c.b16 %v4719, %v4710
    %v5431 = vpack.c.b16 %v4720, %v4711
    %v5432 = vpack.c.b16 %v4721, %v4712
    %v5433 = vpack.c.b16 %v4722, %v4713
    %v5434 = vpack.c.b16 %v4732, %v4723
    %v5435 = vpack.c.b16 %v4733, %v4724
    %v5436 = vpack.c.b16 %v4734, %v4725
    %v5437 = vpack.c.b16 %v4735, %v4726
    %v5438 = vpack.c.b16 %v4736, %v4727
    %v5439 = vpack.c.b16 %v4737, %v4728
    %v5440 = vpack.c.b16 %v4738, %v4729
    %v5441 = vpack.c.b16 %v4739, %v4730
    %v5442 = vpack.c.b16 %v4740, %v4731
    %v5443 = vpack.c.b16 %v4750, %v4741
    %v5444 = vpack.c.b16 %v4751, %v4742
    %v5445 = vpack.c.b16 %v4752, %v4743
    %v5446 = vpack.c.b16 %v4753, %v4744
    %v5447 = vpack.c.b16 %v4754, %v4745
    %v5448 = vpack.c.b16 %v4755, %v4746
    %v5449 = vpack.c.b16 %v4756, %v4747
    %v5450 = vpack.c.b16 %v4757, %v4748
    %v5451 = vpack.c.b16 %v4758, %v4749
    %v5452 = vpack.c.b16 %v4768, %v4759
    %v5453 = vpack.c.b16 %v4769, %v4760
    %v5454 = vpack.c.b16 %v4770, %v4761
    %v5455 = vpack.c.b16 %v4771, %v4762
    %v5456 = vpack.c.b16 %v4772, %v4763
    %v5457 = vpack.c.b16 %v4773, %v4764
    %v5458 = vpack.c.b16 %v4774, %v4765
    %v5459 = vpack.c.b16 %v4775, %v4766
    %v5460 = vpack.c.b16 %v4776, %v4767
    %v5461 = vpack.c.b16 %v4786, %v4777
    %v5462 = vpack.c.b16 %v4787, %v4778
    %v5463 = vpack.c.b16 %v4788, %v4779
    %v5464 = vpack.c.b16 %v4789, %v4780
    %v5465 = vpack.c.b16 %v4790, %v4781
    %v5466 = vpack.c.b16 %v4791, %v4782
    %v5467 = vpack.c.b16 %v4792, %v4783
    %v5468 = vpack.c.b16 %v4793, %v4784
    %v5469 = vpack.c.b16 %v4794, %v4785
    %v5470 = vpack.c.b16 %v4804, %v4795
    %v5471 = vpack.c.b16 %v4805, %v4796
    %v5472 = vpack.c.b16 %v4806, %v4797
    %v5473 = vpack.c.b16 %v4807, %v4798
    %v5474 = vpack.c.b16 %v4808, %v4799
    %v5475 = vpack.c.b16 %v4809, %v4800
    %v5476 = vpack.c.b16 %v4810, %v4801
    %v5477 = vpack.c.b16 %v4811, %v4802
    %v5478 = vpack.c.b16 %v4812, %v4803
    %v5479 = vpack.c.b16 %v4822, %v4813
    %v5480 = vpack.c.b16 %v4823, %v4814
    %v5481 = vpack.c.b16 %v4824, %v4815
    %v5482 = vpack.c.b16 %v4825, %v4816
    %v5483 = vpack.c.b16 %v4826, %v4817
    %v5484 = vpack.c.b16 %v4827, %v4818
    %v5485 = vpack.c.b16 %v4828, %v4819
    %v5486 = vpack.c.b16 %v4829, %v4820
    %v5487 = vpack.c.b16 %v4830, %v4821
    %v5488 = vpack.c.b16 %v4840, %v4831
    %v5489 = vpack.c.b16 %v4841, %v4832
    %v5490 = vpack.c.b16 %v4842, %v4833
    %v5491 = vpack.c.b16 %v4843, %v4834
    %v5492 = vpack.c.b16 %v4844, %v4835
    %v5493 = vpack.c.b16 %v4845, %v4836
    %v5494 = vpack.c.b16 %v4846, %v4837
    %v5495 = vpack.c.b16 %v4847, %v4838
    %v5496 = vpack.c.b16 %v4848, %v4839
    %v5497 = vpack.c.b16 %v4858, %v4849
    %v5498 = vpack.c.b16 %v4859, %v4850
    %v5499 = vpack.c.b16 %v4860, %v4851
    %v5500 = vpack.c.b16 %v4861, %v4852
    %v5501 = vpack.c.b16 %v4862, %v4853
    %v5502 = vpack.c.b16 %v4863, %v4854
    %v5503 = vpack.c.b16 %v4864, %v4855
    %v5504 = vpack.c.b16 %v4865, %v4856
    %v5505 = vpack.c.b16 %v4866, %v4857
    %v5506 = vpack.c.b16 %v4876, %v4867
    %v5507 = vpack.c.b16 %v4877, %v4868
    %v5508 = vpack.c.b16 %v4878, %v4869
    %v5509 = vpack.c.b16 %v4879, %v4870
    %v5510 = vpack.c.b16 %v4880, %v4871
    %v5511 = vpack.c.b16 %v4881, %v4872
    %v5512 = vpack.c.b16 %v4882, %v4873
    %v5513 = vpack.c.b16 %v4883, %v4874
    %v5514 = vpack.c.b16 %v4884, %v4875
    %v5515 = vpack.c.b16 %v4894, %v4885
    %v5516 = vpack.c.b16 %v4895, %v4886
    %v5517 = vpack.c.b16 %v4896, %v4887
    %v5518 = vpack.c.b16 %v4897, %v4888
    %v5519 = vpack.c.b16 %v4898, %v4889
    %v5520 = vpack.c.b16 %v4899, %v4890
    %v5521 = vpack.c.b16 %v4900, %v4891
    %v5522 = vpack.c.b16 %v4901, %v4892
    %v5523 = vpack.c.b16 %v4902, %v4893
    %v5524 = vpack.c.b16 %v4912, %v4903
    %v5525 = vpack.c.b16 %v4913, %v4904
    %v5526 = vpack.c.b16 %v4914, %v4905
    %v5527 = vpack.c.b16 %v4915, %v4906
    %v5528 = vpack.c.b16 %v4916, %v4907
    %v5529 = vpack.c.b16 %v4917, %v4908
    %v5530 = vpack.c.b16 %v4918, %v4909
    %v5531 = vpack.c.b16 %v4919, %v4910
    %v5532 = vpack.c.b16 %v4920, %v4911
    %v5533 = vpack.c.b16 %v4930, %v4921
    %v5534 = vpack.c.b16 %v4931, %v4922
    %v5535 = vpack.c.b16 %v4932, %v4923
    %v5536 = vpack.c.b16 %v4933, %v4924
    %v5537 = vpack.c.b16 %v4934, %v4925
    %v5538 = vpack.c.b16 %v4935, %v4926
    %v5539 = vpack.c.b16 %v4936, %v4927
    %v5540 = vpack.c.b16 %v4937, %v4928
    %v5541 = vpack.c.b16 %v4938, %v4929
    %v5542 = vpack.c.b16 %v4948, %v4939
    %v5543 = vpack.c.b16 %v4949, %v4940
    %v5544 = vpack.c.b16 %v4950, %v4941
    %v5545 = vpack.c.b16 %v4951, %v4942
    %v5546 = vpack.c.b16 %v4952, %v4943
    %v5547 = vpack.c.b16 %v4953, %v4944
    %v5548 = vpack.c.b16 %v4954, %v4945
    %v5549 = vpack.c.b16 %v4955, %v4946
    %v5550 = vpack.c.b16 %v4956, %v4947
    %v5551 = vpack.c.b16 %v4966, %v4957
    %v5552 = vpack.c.b16 %v4967, %v4958
    %v5553 = vpack.c.b16 %v4968, %v4959
    %v5554 = vpack.c.b16 %v4969, %v4960
    %v5555 = vpack.c.b16 %v4970, %v4961
    %v5556 = vpack.c.b16 %v4971, %v4962
    %v5557 = vpack.c.b16 %v4972, %v4963
    %v5558 = vpack.c.b16 %v4973, %v4964
    %v5559 = vpack.c.b16 %v4974, %v4965
    %v5560 = vpack.c.b16 %v4984, %v4975
    %v5561 = vpack.c.b16 %v4985, %v4976
    %v5562 = vpack.c.b16 %v4986, %v4977
    %v5563 = vpack.c.b16 %v4987, %v4978
    %v5564 = vpack.c.b16 %v4988, %v4979
    %v5565 = vpack.c.b16 %v4989, %v4980
    %v5566 = vpack.c.b16 %v4990, %v4981
    %v5567 = vpack.c.b16 %v4991, %v4982
    %v5568 = vpack.c.b16 %v4992, %v4983
    %v5569 = vpack.c.b16 %v5002, %v4993
    %v5570 = vpack.c.b16 %v5003, %v4994
    %v5571 = vpack.c.b16 %v5004, %v4995
    %v5572 = vpack.c.b16 %v5005, %v4996
    %v5573 = vpack.c.b16 %v5006, %v4997
    %v5574 = vpack.c.b16 %v5007, %v4998
    %v5575 = vpack.c.b16 %v5008, %v4999
    %v5576 = vpack.c.b16 %v5009, %v5000
    %v5577 = vpack.c.b16 %v5010, %v5001
    %v5578 = vpack.c.b16 %v5020, %v5011
    %v5579 = vpack.c.b16 %v5021, %v5012
    %v5580 = vpack.c.b16 %v5022, %v5013
    %v5581 = vpack.c.b16 %v5023, %v5014
    %v5582 = vpack.c.b16 %v5024, %v5015
    %v5583 = vpack.c.b16 %v5025, %v5016
    %v5584 = vpack.c.b16 %v5026, %v5017
    %v5585 = vpack.c.b16 %v5027, %v5018
    %v5586 = vpack.c.b16 %v5028, %v5019
    %v5587 = vpack.c.b16 %v5038, %v5029
    %v5588 = vpack.c.b16 %v5039, %v5030
    %v5589 = vpack.c.b16 %v5040, %v5031
    %v5590 = vpack.c.b16 %v5041, %v5032
    %v5591 = vpack.c.b16 %v5042, %v5033
    %v5592 = vpack.c.b16 %v5043, %v5034
    %v5593 = vpack.c.b16 %v5044, %v5035
    %v5594 = vpack.c.b16 %v5045, %v5036
    %v5595 = vpack.c.b16 %v5046, %v5037
    %v5596 = vpack.c.b16 %v5056, %v5047
    %v5597 = vpack.c.b16 %v5057, %v5048
    %v5598 = vpack.c.b16 %v5058, %v5049
    %v5599 = vpack.c.b16 %v5059, %v5050
    %v5600 = vpack.c.b16 %v5060, %v5051
    %v5601 = vpack.c.b16 %v5061, %v5052
    %v5602 = vpack.c.b16 %v5062, %v5053
    %v5603 = vpack.c.b16 %v5063, %v5054
    %v5604 = vpack.c.b16 %v5064, %v5055
    %v5605 = vpack.c.b16 %v5074, %v5065
    %v5606 = vpack.c.b16 %v5075, %v5066
    %v5607 = vpack.c.b16 %v5076, %v5067
    %v5608 = vpack.c.b16 %v5077, %v5068
    %v5609 = vpack.c.b16 %v5078, %v5069
    %v5610 = vpack.c.b16 %v5079, %v5070
    %v5611 = vpack.c.b16 %v5080, %v5071
    %v5612 = vpack.c.b16 %v5081, %v5072
    %v5613 = vpack.c.b16 %v5082, %v5073
    %v5614 = vpack.c.b16 %v5092, %v5083
    %v5615 = vpack.c.b16 %v5093, %v5084
    %v5616 = vpack.c.b16 %v5094, %v5085
    %v5617 = vpack.c.b16 %v5095, %v5086
    %v5618 = vpack.c.b16 %v5096, %v5087
    %v5619 = vpack.c.b16 %v5097, %v5088
    %v5620 = vpack.c.b16 %v5098, %v5089
    %v5621 = vpack.c.b16 %v5099, %v5090
    %v5622 = vpack.c.b16 %v5100, %v5091
    %v5623 = vpack.c.b16 %v5110, %v5101
    %v5624 = vpack.c.b16 %v5111, %v5102
    %v5625 = vpack.c.b16 %v5112, %v5103
    %v5626 = vpack.c.b16 %v5113, %v5104
    %v5627 = vpack.c.b16 %v5114, %v5105
    %v5628 = vpack.c.b16 %v5115, %v5106
    %v5629 = vpack.c.b16 %v5116, %v5107
    %v5630 = vpack.c.b16 %v5117, %v5108
    %v5631 = vpack.c.b16 %v5118, %v5109
    %v5632 = vpack.c.b16 %v5128, %v5119
    %v5633 = vpack.c.b16 %v5129, %v5120
    %v5634 = vpack.c.b16 %v5130, %v5121
    %v5635 = vpack.c.b16 %v5131, %v5122
    %v5636 = vpack.c.b16 %v5132, %v5123
    %v5637 = vpack.c.b16 %v5133, %v5124
    %v5638 = vpack.c.b16 %v5134, %v5125
    %v5639 = vpack.c.b16 %v5135, %v5126
    %v5640 = vpack.c.b16 %v5136, %v5127
    %6145 = vmatprep.subr.bf16.mxu0 %v5138
    %6146 = vmatpush1.bf16.msra.mxu0 %v5137
    %6147 = vmatprep.subr.bf16.mxu0 %v5147
    %6148 = vmatpush1.bf16.msra.mxu0 %v5146
    %6149 = vmatprep.subr.bf16.mxu0 %v5156
    %6150 = vmatpush1.bf16.msra.mxu0 %v5155
    %6151 = vmatprep.subr.bf16.mxu0 %v5165
    %6152 = vmatpush1.bf16.msra.mxu0 %v5164
    %6153 = vmatprep.subr.bf16.mxu0 %v5174
    %6154 = vmatpush1.bf16.msra.mxu0 %v5173
    %6155 = vmatprep.subr.bf16.mxu0 %v5183
    %6156 = vmatpush1.bf16.msra.mxu0 %v5182
    %6157 = vmatprep.subr.bf16.mxu0 %v5192
    %6158 = vmatpush1.bf16.msra.mxu0 %v5191
    %6159 = vmatprep.subr.bf16.mxu0 %v5201
    %6160 = vmatpush1.bf16.msra.mxu0 %v5200
    %6161 = vmatprep.subr.bf16.mxu0 %v5210
    %6162 = vmatpush1.bf16.msra.mxu0 %v5209
    %6163 = vmatprep.subr.bf16.mxu0 %v5219
    %6164 = vmatpush1.bf16.msra.mxu0 %v5218
    %6165 = vmatprep.subr.bf16.mxu0 %v5228
    %6166 = vmatpush1.bf16.msra.mxu0 %v5227
    %6167 = vmatprep.subr.bf16.mxu0 %v5237
    %6168 = vmatpush1.bf16.msra.mxu0 %v5236
    %6169 = vmatprep.subr.bf16.mxu0 %v5246
    %6170 = vmatpush1.bf16.msra.mxu0 %v5245
    %6171 = vmatprep.subr.bf16.mxu0 %v5255
    %6172 = vmatpush1.bf16.msra.mxu0 %v5254
    %6173 = vmatprep.subr.bf16.mxu0 %v5264
    %6174 = vmatpush1.bf16.msra.mxu0 %v5263
    %6175 = vmatprep.subr.bf16.mxu0 %v5273
    %6176 = vmatpush1.bf16.msra.mxu0 %v5272
    %6177 = vmatprep.mubr.bf16.mxu0 %v2954
    %6178 = vmatmul.mubr.bf16.gmra.mrb[0].mxu0 %v2953
    %v6179 = vpop.f32.mrb[0].mxu0
    %v6180 = vadd.f32 %v3527, %v6179
    %v6181 = vpop.f32.mrb[0].mxu0
    %v6182 = vadd.f32 %v3531, %v6181
    %v6183 = vpop.f32.mrb[0].mxu0
    %v6184 = vpop.f32.mrb[0].mxu0
    %6185 = vdwg.mxu0
    %6186 = vmatprep.subr.bf16.mxu0 %v5282
    %6187 = vmatpush1.bf16.msra.mxu0 %v5281
    %6188 = vmatprep.subr.bf16.mxu0 %v5291
    %6189 = vmatpush1.bf16.msra.mxu0 %v5290
    %6190 = vmatprep.subr.bf16.mxu0 %v5300
    %6191 = vmatpush1.bf16.msra.mxu0 %v5299
    %6192 = vmatprep.subr.bf16.mxu0 %v5309
    %6193 = vmatpush1.bf16.msra.mxu0 %v5308
    %6194 = vmatprep.subr.bf16.mxu0 %v5318
    %6195 = vmatpush1.bf16.msra.mxu0 %v5317
    %6196 = vmatprep.subr.bf16.mxu0 %v5327
    %6197 = vmatpush1.bf16.msra.mxu0 %v5326
    %6198 = vmatprep.subr.bf16.mxu0 %v5336
    %6199 = vmatpush1.bf16.msra.mxu0 %v5335
    %6200 = vmatprep.subr.bf16.mxu0 %v5345
    %6201 = vmatpush1.bf16.msra.mxu0 %v5344
    %6202 = vmatprep.subr.bf16.mxu0 %v5354
    %6203 = vmatpush1.bf16.msra.mxu0 %v5353
    %6204 = vmatprep.subr.bf16.mxu0 %v5363
    %6205 = vmatpush1.bf16.msra.mxu0 %v5362
    %6206 = vmatprep.subr.bf16.mxu0 %v5372
    %6207 = vmatpush1.bf16.msra.mxu0 %v5371
    %6208 = vmatprep.subr.bf16.mxu0 %v5381
    %6209 = vmatpush1.bf16.msra.mxu0 %v5380
    %6210 = vmatprep.subr.bf16.mxu0 %v5390
    %6211 = vmatpush1.bf16.msra.mxu0 %v5389
    %6212 = vmatprep.subr.bf16.mxu0 %v5399
    %6213 = vmatpush1.bf16.msra.mxu0 %v5398
    %6214 = vmatprep.subr.bf16.mxu0 %v5408
    %6215 = vmatpush1.bf16.msra.mxu0 %v5407
    %6216 = vmatprep.subr.bf16.mxu0 %v5417
    %6217 = vmatpush1.bf16.msra.mxu0 %v5416
    %6218 = vmatprep.mubr.bf16.mxu0 %v2956
    %6219 = vmatmul.mubr.bf16.gmra.mrb[0].mxu0 %v2955
    %v6220 = vpop.f32.mrb[0].mxu0
    %v6221 = vadd.f32 %v6180, %v6220
    %v6222 = vpop.f32.mrb[0].mxu0
    %v6223 = vadd.f32 %v6182, %v6222
    %v6224 = vpop.f32.mrb[0].mxu0
    %v6225 = vpop.f32.mrb[0].mxu0
    %6226 = vdwg.mxu0
    %6227 = vmatprep.subr.bf16.mxu0 %v5426
    %6228 = vmatpush1.bf16.msra.mxu0 %v5425
    %6229 = vmatprep.subr.bf16.mxu0 %v5435
    %6230 = vmatpush1.bf16.msra.mxu0 %v5434
    %6231 = vmatprep.subr.bf16.mxu0 %v5444
    %6232 = vmatpush1.bf16.msra.mxu0 %v5443
    %6233 = vmatprep.subr.bf16.mxu0 %v5453
    %6234 = vmatpush1.bf16.msra.mxu0 %v5452
    %6235 = vmatprep.subr.bf16.mxu0 %v5462
    %6236 = vmatpush1.bf16.msra.mxu0 %v5461
    %6237 = vmatprep.subr.bf16.mxu0 %v5471
    %6238 = vmatpush1.bf16.msra.mxu0 %v5470
    %6239 = vmatprep.subr.bf16.mxu0 %v5480
    %6240 = vmatpush1.bf16.msra.mxu0 %v5479
    %6241 = vmatprep.subr.bf16.mxu0 %v5489
    %6242 = vmatpush1.bf16.msra.mxu0 %v5488
    %6243 = vmatprep.subr.bf16.mxu0 %v5498
    %6244 = vmatpush1.bf16.msra.mxu0 %v5497
    %6245 = vmatprep.subr.bf16.mxu0 %v5507
    %6246 = vmatpush1.bf16.msra.mxu0 %v5506
    %6247 = vmatprep.subr.bf16.mxu0 %v5516
    %6248 = vmatpush1.bf16.msra.mxu0 %v5515
    %6249 = vmatprep.subr.bf16.mxu0 %v5525
    %6250 = vmatpush1.bf16.msra.mxu0 %v5524
    %6251 = vmatprep.subr.bf16.mxu0 %v5534
    %6252 = vmatpush1.bf16.msra.mxu0 %v5533
    %6253 = vmatprep.subr.bf16.mxu0 %v5543
    %6254 = vmatpush1.bf16.msra.mxu0 %v5542
    %6255 = vmatprep.subr.bf16.mxu0 %v5552
    %6256 = vmatpush1.bf16.msra.mxu0 %v5551
    %6257 = vmatprep.subr.bf16.mxu0 %v5561
    %6258 = vmatpush1.bf16.msra.mxu0 %v5560
    %6259 = vmatprep.mubr.bf16.mxu0 %v2958
    %6260 = vmatmul.mubr.bf16.gmra.mrb[0].mxu0 %v2957
    %v6261 = vpop.f32.mrb[0].mxu0
    %v6262 = vadd.f32 %v6221, %v6261
    %v6263 = vpop.f32.mrb[0].mxu0
    %v6264 = vadd.f32 %v6223, %v6263
    %v6265 = vpop.f32.mrb[0].mxu0
    %v6266 = vpop.f32.mrb[0].mxu0
    %6267 = vdwg.mxu0
    %6268 = vmatprep.subr.bf16.mxu0 %v5570
    %6269 = vmatpush1.bf16.msra.mxu0 %v5569
    %6270 = vmatprep.subr.bf16.mxu0 %v5579
    %6271 = vmatpush1.bf16.msra.mxu0 %v5578
    %6272 = vmatprep.subr.bf16.mxu0 %v5588
    %6273 = vmatpush1.bf16.msra.mxu0 %v5587
    %6274 = vmatprep.subr.bf16.mxu0 %v5597
    %6275 = vmatpush1.bf16.msra.mxu0 %v5596
    %6276 = vmatprep.subr.bf16.mxu0 %v5606
    %6277 = vmatpush1.bf16.msra.mxu0 %v5605
    %6278 = vmatprep.subr.bf16.mxu0 %v5615
    %6279 = vmatpush1.bf16.msra.mxu0 %v5614
    %6280 = vmatprep.subr.bf16.mxu0 %v5624
    %6281 = vmatpush1.bf16.msra.mxu0 %v5623
    %6282 = vmatprep.subr.bf16.mxu0 %v5633
    %6283 = vmatpush1.bf16.msra.mxu0 %v5632
    %6284 = vmatprep.subr.bf16.mxu0 0
    %6285 = vmatpush1.bf16.msra.mxu0 0
    %6286 = vmatprep.subr.bf16.mxu0 0
    %6287 = vmatpush1.bf16.msra.mxu0 0
    %6288 = vmatprep.subr.bf16.mxu0 0
    %6289 = vmatpush1.bf16.msra.mxu0 0
    %6290 = vmatprep.subr.bf16.mxu0 0
    %6291 = vmatpush1.bf16.msra.mxu0 0
    %6292 = vmatprep.subr.bf16.mxu0 0
    %6293 = vmatpush1.bf16.msra.mxu0 0
    %6294 = vmatprep.subr.bf16.mxu0 0
    %6295 = vmatpush1.bf16.msra.mxu0 0
    %6296 = vmatprep.subr.bf16.mxu0 0
    %6297 = vmatpush1.bf16.msra.mxu0 0
    %6298 = vmatprep.subr.bf16.mxu0 0
    %6299 = vmatpush1.bf16.msra.mxu0 0
    %6300 = vmatprep.mubr.bf16.mxu0 0
    %6301 = vmatmul.mubr.bf16.gmra.mrb[0].mxu0 %v2959
    %v6302 = vpop.f32.mrb[0].mxu0
    %v6303 = vadd.f32 %v6262, %v6302
    %v6304 = vpop.f32.mrb[0].mxu0
    %v6305 = vadd.f32 %v6264, %v6304
    %v6306 = vpop.f32.mrb[0].mxu0
    %v6307 = vpop.f32.mrb[0].mxu0
    %6308 = vdwg.mxu0
    %6309 = vmatprep.subr.bf16.mxu0 %v5140
    %6310 = vmatpush1.bf16.msra.mxu0 %v5139
    %6311 = vmatprep.subr.bf16.mxu0 %v5149
    %6312 = vmatpush1.bf16.msra.mxu0 %v5148
    %6313 = vmatprep.subr.bf16.mxu0 %v5158
    %6314 = vmatpush1.bf16.msra.mxu0 %v5157
    %6315 = vmatprep.subr.bf16.mxu0 %v5167
    %6316 = vmatpush1.bf16.msra.mxu0 %v5166
    %6317 = vmatprep.subr.bf16.mxu0 %v5176
    %6318 = vmatpush1.bf16.msra.mxu0 %v5175
    %6319 = vmatprep.subr.bf16.mxu0 %v5185
    %6320 = vmatpush1.bf16.msra.mxu0 %v5184
    %6321 = vmatprep.subr.bf16.mxu0 %v5194
    %6322 = vmatpush1.bf16.msra.mxu0 %v5193
    %6323 = vmatprep.subr.bf16.mxu0 %v5203
    %6324 = vmatpush1.bf16.msra.mxu0 %v5202
    %6325 = vmatprep.subr.bf16.mxu0 %v5212
    %6326 = vmatpush1.bf16.msra.mxu0 %v5211
    %6327 = vmatprep.subr.bf16.mxu0 %v5221
    %6328 = vmatpush1.bf16.msra.mxu0 %v5220
    %6329 = vmatprep.subr.bf16.mxu0 %v5230
    %6330 = vmatpush1.bf16.msra.mxu0 %v5229
    %6331 = vmatprep.subr.bf16.mxu0 %v5239
    %6332 = vmatpush1.bf16.msra.mxu0 %v5238
    %6333 = vmatprep.subr.bf16.mxu0 %v5248
    %6334 = vmatpush1.bf16.msra.mxu0 %v5247
    %6335 = vmatprep.subr.bf16.mxu0 %v5257
    %6336 = vmatpush1.bf16.msra.mxu0 %v5256
    %6337 = vmatprep.subr.bf16.mxu0 %v5266
    %6338 = vmatpush1.bf16.msra.mxu0 %v5265
    %6339 = vmatprep.subr.bf16.mxu0 %v5275
    %6340 = vmatpush1.bf16.msra.mxu0 %v5274
    %6341 = vmatprep.mubr.bf16.mxu0 %v2954
    %6342 = vmatmul.mubr.bf16.gmra.mrb[0].mxu0 %v2953
    %v6343 = vpop.f32.mrb[0].mxu0
    %v6344 = vadd.f32 %v3535, %v6343
    %v6345 = vpop.f32.mrb[0].mxu0
    %v6346 = vadd.f32 %v3539, %v6345
    %v6347 = vpop.f32.mrb[0].mxu0
    %v6348 = vpop.f32.mrb[0].mxu0
    %6349 = vdwg.mxu0
    %6350 = vmatprep.subr.bf16.mxu0 %v5284
    %6351 = vmatpush1.bf16.msra.mxu0 %v5283
    %6352 = vmatprep.subr.bf16.mxu0 %v5293
    %6353 = vmatpush1.bf16.msra.mxu0 %v5292
    %6354 = vmatprep.subr.bf16.mxu0 %v5302
    %6355 = vmatpush1.bf16.msra.mxu0 %v5301
    %6356 = vmatprep.subr.bf16.mxu0 %v5311
    %6357 = vmatpush1.bf16.msra.mxu0 %v5310
    %6358 = vmatprep.subr.bf16.mxu0 %v5320
    %6359 = vmatpush1.bf16.msra.mxu0 %v5319
    %6360 = vmatprep.subr.bf16.mxu0 %v5329
    %6361 = vmatpush1.bf16.msra.mxu0 %v5328
    %6362 = vmatprep.subr.bf16.mxu0 %v5338
    %6363 = vmatpush1.bf16.msra.mxu0 %v5337
    %6364 = vmatprep.subr.bf16.mxu0 %v5347
    %6365 = vmatpush1.bf16.msra.mxu0 %v5346
    %6366 = vmatprep.subr.bf16.mxu0 %v5356
    %6367 = vmatpush1.bf16.msra.mxu0 %v5355
    %6368 = vmatprep.subr.bf16.mxu0 %v5365
    %6369 = vmatpush1.bf16.msra.mxu0 %v5364
    %6370 = vmatprep.subr.bf16.mxu0 %v5374
    %6371 = vmatpush1.bf16.msra.mxu0 %v5373
    %6372 = vmatprep.subr.bf16.mxu0 %v5383
    %6373 = vmatpush1.bf16.msra.mxu0 %v5382
    %6374 = vmatprep.subr.bf16.mxu0 %v5392
    %6375 = vmatpush1.bf16.msra.mxu0 %v5391
    %6376 = vmatprep.subr.bf16.mxu0 %v5401
    %6377 = vmatpush1.bf16.msra.mxu0 %v5400
    %6378 = vmatprep.subr.bf16.mxu0 %v5410
    %6379 = vmatpush1.bf16.msra.mxu0 %v5409
    %6380 = vmatprep.subr.bf16.mxu0 %v5419
    %6381 = vmatpush1.bf16.msra.mxu0 %v5418
    %6382 = vmatprep.mubr.bf16.mxu0 %v2956
    %6383 = vmatmul.mubr.bf16.gmra.mrb[0].mxu0 %v2955
    %v6384 = vpop.f32.mrb[0].mxu0
    %v6385 = vadd.f32 %v6344, %v6384
    %v6386 = vpop.f32.mrb[0].mxu0
    %v6387 = vadd.f32 %v6346, %v6386
    %v6388 = vpop.f32.mrb[0].mxu0
    %v6389 = vpop.f32.mrb[0].mxu0
    %6390 = vdwg.mxu0
    %6391 = vmatprep.subr.bf16.mxu0 %v5428
    %6392 = vmatpush1.bf16.msra.mxu0 %v5427
    %6393 = vmatprep.subr.bf16.mxu0 %v5437
    %6394 = vmatpush1.bf16.msra.mxu0 %v5436
    %6395 = vmatprep.subr.bf16.mxu0 %v5446
    %6396 = vmatpush1.bf16.msra.mxu0 %v5445
    %6397 = vmatprep.subr.bf16.mxu0 %v5455
    %6398 = vmatpush1.bf16.msra.mxu0 %v5454
    %6399 = vmatprep.subr.bf16.mxu0 %v5464
    %6400 = vmatpush1.bf16.msra.mxu0 %v5463
    %6401 = vmatprep.subr.bf16.mxu0 %v5473
    %6402 = vmatpush1.bf16.msra.mxu0 %v5472
    %6403 = vmatprep.subr.bf16.mxu0 %v5482
    %6404 = vmatpush1.bf16.msra.mxu0 %v5481
    %6405 = vmatprep.subr.bf16.mxu0 %v5491
    %6406 = vmatpush1.bf16.msra.mxu0 %v5490
    %6407 = vmatprep.subr.bf16.mxu0 %v5500
    %6408 = vmatpush1.bf16.msra.mxu0 %v5499
    %6409 = vmatprep.subr.bf16.mxu0 %v5509
    %6410 = vmatpush1.bf16.msra.mxu0 %v5508
    %6411 = vmatprep.subr.bf16.mxu0 %v5518
    %6412 = vmatpush1.bf16.msra.mxu0 %v5517
    %6413 = vmatprep.subr.bf16.mxu0 %v5527
    %6414 = vmatpush1.bf16.msra.mxu0 %v5526
    %6415 = vmatprep.subr.bf16.mxu0 %v5536
    %6416 = vmatpush1.bf16.msra.mxu0 %v5535
    %6417 = vmatprep.subr.bf16.mxu0 %v5545
    %6418 = vmatpush1.bf16.msra.mxu0 %v5544
    %6419 = vmatprep.subr.bf16.mxu0 %v5554
    %6420 = vmatpush1.bf16.msra.mxu0 %v5553
    %6421 = vmatprep.subr.bf16.mxu0 %v5563
    %6422 = vmatpush1.bf16.msra.mxu0 %v5562
    %6423 = vmatprep.mubr.bf16.mxu0 %v2958
    %6424 = vmatmul.mubr.bf16.gmra.mrb[0].mxu0 %v2957
    %v6425 = vpop.f32.mrb[0].mxu0
    %v6426 = vadd.f32 %v6385, %v6425
    %v6427 = vpop.f32.mrb[0].mxu0
    %v6428 = vadd.f32 %v6387, %v6427
    %v6429 = vpop.f32.mrb[0].mxu0
    %v6430 = vpop.f32.mrb[0].mxu0
    %6431 = vdwg.mxu0
    %6432 = vmatprep.subr.bf16.mxu0 %v5572
    %6433 = vmatpush1.bf16.msra.mxu0 %v5571
    %6434 = vmatprep.subr.bf16.mxu0 %v5581
    %6435 = vmatpush1.bf16.msra.mxu0 %v5580
    %6436 = vmatprep.subr.bf16.mxu0 %v5590
    %6437 = vmatpush1.bf16.msra.mxu0 %v5589
    %6438 = vmatprep.subr.bf16.mxu0 %v5599
    %6439 = vmatpush1.bf16.msra.mxu0 %v5598
    %6440 = vmatprep.subr.bf16.mxu0 %v5608
    %6441 = vmatpush1.bf16.msra.mxu0 %v5607
    %6442 = vmatprep.subr.bf16.mxu0 %v5617
    %6443 = vmatpush1.bf16.msra.mxu0 %v5616
    %6444 = vmatprep.subr.bf16.mxu0 %v5626
    %6445 = vmatpush1.bf16.msra.mxu0 %v5625
    %6446 = vmatprep.subr.bf16.mxu0 %v5635
    %6447 = vmatpush1.bf16.msra.mxu0 %v5634
    %6448 = vmatprep.subr.bf16.mxu0 0
    %6449 = vmatpush1.bf16.msra.mxu0 0
    %6450 = vmatprep.subr.bf16.mxu0 0
    %6451 = vmatpush1.bf16.msra.mxu0 0
    %6452 = vmatprep.subr.bf16.mxu0 0
    %6453 = vmatpush1.bf16.msra.mxu0 0
    %6454 = vmatprep.subr.bf16.mxu0 0
    %6455 = vmatpush1.bf16.msra.mxu0 0
    %6456 = vmatprep.subr.bf16.mxu0 0
    %6457 = vmatpush1.bf16.msra.mxu0 0
    %6458 = vmatprep.subr.bf16.mxu0 0
    %6459 = vmatpush1.bf16.msra.mxu0 0
    %6460 = vmatprep.subr.bf16.mxu0 0
    %6461 = vmatpush1.bf16.msra.mxu0 0
    %6462 = vmatprep.subr.bf16.mxu0 0
    %6463 = vmatpush1.bf16.msra.mxu0 0
    %6464 = vmatprep.mubr.bf16.mxu0 0
    %6465 = vmatmul.mubr.bf16.gmra.mrb[0].mxu0 %v2959
    %v6466 = vpop.f32.mrb[0].mxu0
    %v6467 = vadd.f32 %v6426, %v6466
    %v6468 = vpop.f32.mrb[0].mxu0
    %v6469 = vadd.f32 %v6428, %v6468
    %v6470 = vpop.f32.mrb[0].mxu0
    %v6471 = vpop.f32.mrb[0].mxu0
    %6472 = vdwg.mxu0
    %6473 = vmatprep.subr.bf16.mxu0 %v5142
    %6474 = vmatpush1.bf16.msra.mxu0 %v5141
    %6475 = vmatprep.subr.bf16.mxu0 %v5151
    %6476 = vmatpush1.bf16.msra.mxu0 %v5150
    %6477 = vmatprep.subr.bf16.mxu0 %v5160
    %6478 = vmatpush1.bf16.msra.mxu0 %v5159
    %6479 = vmatprep.subr.bf16.mxu0 %v5169
    %6480 = vmatpush1.bf16.msra.mxu0 %v5168
    %6481 = vmatprep.subr.bf16.mxu0 %v5178
    %6482 = vmatpush1.bf16.msra.mxu0 %v5177
    %6483 = vmatprep.subr.bf16.mxu0 %v5187
    %6484 = vmatpush1.bf16.msra.mxu0 %v5186
    %6485 = vmatprep.subr.bf16.mxu0 %v5196
    %6486 = vmatpush1.bf16.msra.mxu0 %v5195
    %6487 = vmatprep.subr.bf16.mxu0 %v5205
    %6488 = vmatpush1.bf16.msra.mxu0 %v5204
    %6489 = vmatprep.subr.bf16.mxu0 %v5214
    %6490 = vmatpush1.bf16.msra.mxu0 %v5213
    %6491 = vmatprep.subr.bf16.mxu0 %v5223
    %6492 = vmatpush1.bf16.msra.mxu0 %v5222
    %6493 = vmatprep.subr.bf16.mxu0 %v5232
    %6494 = vmatpush1.bf16.msra.mxu0 %v5231
    %6495 = vmatprep.subr.bf16.mxu0 %v5241
    %6496 = vmatpush1.bf16.msra.mxu0 %v5240
    %6497 = vmatprep.subr.bf16.mxu0 %v5250
    %6498 = vmatpush1.bf16.msra.mxu0 %v5249
    %6499 = vmatprep.subr.bf16.mxu0 %v5259
    %6500 = vmatpush1.bf16.msra.mxu0 %v5258
    %6501 = vmatprep.subr.bf16.mxu0 %v5268
    %6502 = vmatpush1.bf16.msra.mxu0 %v5267
    %6503 = vmatprep.subr.bf16.mxu0 %v5277
    %6504 = vmatpush1.bf16.msra.mxu0 %v5276
    %6505 = vmatprep.mubr.bf16.mxu0 %v2954
    %6506 = vmatmul.mubr.bf16.gmra.mrb[0].mxu0 %v2953
    %v6507 = vpop.f32.mrb[0].mxu0
    %v6508 = vadd.f32 %v3543, %v6507
    %v6509 = vpop.f32.mrb[0].mxu0
    %v6510 = vadd.f32 %v3547, %v6509
    %v6511 = vpop.f32.mrb[0].mxu0
    %v6512 = vpop.f32.mrb[0].mxu0
    %6513 = vdwg.mxu0
    %6514 = vmatprep.subr.bf16.mxu0 %v5286
    %6515 = vmatpush1.bf16.msra.mxu0 %v5285
    %6516 = vmatprep.subr.bf16.mxu0 %v5295
    %6517 = vmatpush1.bf16.msra.mxu0 %v5294
    %6518 = vmatprep.subr.bf16.mxu0 %v5304
    %6519 = vmatpush1.bf16.msra.mxu0 %v5303
    %6520 = vmatprep.subr.bf16.mxu0 %v5313
    %6521 = vmatpush1.bf16.msra.mxu0 %v5312
    %6522 = vmatprep.subr.bf16.mxu0 %v5322
    %6523 = vmatpush1.bf16.msra.mxu0 %v5321
    %6524 = vmatprep.subr.bf16.mxu0 %v5331
    %6525 = vmatpush1.bf16.msra.mxu0 %v5330
    %6526 = vmatprep.subr.bf16.mxu0 %v5340
    %6527 = vmatpush1.bf16.msra.mxu0 %v5339
    %6528 = vmatprep.subr.bf16.mxu0 %v5349
    %6529 = vmatpush1.bf16.msra.mxu0 %v5348
    %6530 = vmatprep.subr.bf16.mxu0 %v5358
    %6531 = vmatpush1.bf16.msra.mxu0 %v5357
    %6532 = vmatprep.subr.bf16.mxu0 %v5367
    %6533 = vmatpush1.bf16.msra.mxu0 %v5366
    %6534 = vmatprep.subr.bf16.mxu0 %v5376
    %6535 = vmatpush1.bf16.msra.mxu0 %v5375
    %6536 = vmatprep.subr.bf16.mxu0 %v5385
    %6537 = vmatpush1.bf16.msra.mxu0 %v5384
    %6538 = vmatprep.subr.bf16.mxu0 %v5394
    %6539 = vmatpush1.bf16.msra.mxu0 %v5393
    %6540 = vmatprep.subr.bf16.mxu0 %v5403
    %6541 = vmatpush1.bf16.msra.mxu0 %v5402
    %6542 = vmatprep.subr.bf16.mxu0 %v5412
    %6543 = vmatpush1.bf16.msra.mxu0 %v5411
    %6544 = vmatprep.subr.bf16.mxu0 %v5421
    %6545 = vmatpush1.bf16.msra.mxu0 %v5420
    %6546 = vmatprep.mubr.bf16.mxu0 %v2956
    %6547 = vmatmul.mubr.bf16.gmra.mrb[0].mxu0 %v2955
    %v6548 = vpop.f32.mrb[0].mxu0
    %v6549 = vadd.f32 %v6508, %v6548
    %v6550 = vpop.f32.mrb[0].mxu0
    %v6551 = vadd.f32 %v6510, %v6550
    %v6552 = vpop.f32.mrb[0].mxu0
    %v6553 = vpop.f32.mrb[0].mxu0
    %6554 = vdwg.mxu0
    %6555 = vmatprep.subr.bf16.mxu0 %v5430
    %6556 = vmatpush1.bf16.msra.mxu0 %v5429
    %6557 = vmatprep.subr.bf16.mxu0 %v5439
    %6558 = vmatpush1.bf16.msra.mxu0 %v5438
    %6559 = vmatprep.subr.bf16.mxu0 %v5448
    %6560 = vmatpush1.bf16.msra.mxu0 %v5447
    %6561 = vmatprep.subr.bf16.mxu0 %v5457
    %6562 = vmatpush1.bf16.msra.mxu0 %v5456
    %6563 = vmatprep.subr.bf16.mxu0 %v5466
    %6564 = vmatpush1.bf16.msra.mxu0 %v5465
    %6565 = vmatprep.subr.bf16.mxu0 %v5475
    %6566 = vmatpush1.bf16.msra.mxu0 %v5474
    %6567 = vmatprep.subr.bf16.mxu0 %v5484
    %6568 = vmatpush1.bf16.msra.mxu0 %v5483
    %6569 = vmatprep.subr.bf16.mxu0 %v5493
    %6570 = vmatpush1.bf16.msra.mxu0 %v5492
    %6571 = vmatprep.subr.bf16.mxu0 %v5502
    %6572 = vmatpush1.bf16.msra.mxu0 %v5501
    %6573 = vmatprep.subr.bf16.mxu0 %v5511
    %6574 = vmatpush1.bf16.msra.mxu0 %v5510
    %6575 = vmatprep.subr.bf16.mxu0 %v5520
    %6576 = vmatpush1.bf16.msra.mxu0 %v5519
    %6577 = vmatprep.subr.bf16.mxu0 %v5529
    %6578 = vmatpush1.bf16.msra.mxu0 %v5528
    %6579 = vmatprep.subr.bf16.mxu0 %v5538
    %6580 = vmatpush1.bf16.msra.mxu0 %v5537
    %6581 = vmatprep.subr.bf16.mxu0 %v5547
    %6582 = vmatpush1.bf16.msra.mxu0 %v5546
    %6583 = vmatprep.subr.bf16.mxu0 %v5556
    %6584 = vmatpush1.bf16.msra.mxu0 %v5555
    %6585 = vmatprep.subr.bf16.mxu0 %v5565
    %6586 = vmatpush1.bf16.msra.mxu0 %v5564
    %6587 = vmatprep.mubr.bf16.mxu0 %v2958
    %6588 = vmatmul.mubr.bf16.gmra.mrb[0].mxu0 %v2957
    %v6589 = vpop.f32.mrb[0].mxu0
    %v6590 = vadd.f32 %v6549, %v6589
    %v6591 = vpop.f32.mrb[0].mxu0
    %v6592 = vadd.f32 %v6551, %v6591
    %v6593 = vpop.f32.mrb[0].mxu0
    %v6594 = vpop.f32.mrb[0].mxu0
    %6595 = vdwg.mxu0
    %6596 = vmatprep.subr.bf16.mxu0 %v5574
    %6597 = vmatpush1.bf16.msra.mxu0 %v5573
    %6598 = vmatprep.subr.bf16.mxu0 %v5583
    %6599 = vmatpush1.bf16.msra.mxu0 %v5582
    %6600 = vmatprep.subr.bf16.mxu0 %v5592
    %6601 = vmatpush1.bf16.msra.mxu0 %v5591
    %6602 = vmatprep.subr.bf16.mxu0 %v5601
    %6603 = vmatpush1.bf16.msra.mxu0 %v5600
    %6604 = vmatprep.subr.bf16.mxu0 %v5610
    %6605 = vmatpush1.bf16.msra.mxu0 %v5609
    %6606 = vmatprep.subr.bf16.mxu0 %v5619
    %6607 = vmatpush1.bf16.msra.mxu0 %v5618
    %6608 = vmatprep.subr.bf16.mxu0 %v5628
    %6609 = vmatpush1.bf16.msra.mxu0 %v5627
    %6610 = vmatprep.subr.bf16.mxu0 %v5637
    %6611 = vmatpush1.bf16.msra.mxu0 %v5636
    %6612 = vmatprep.subr.bf16.mxu0 0
    %6613 = vmatpush1.bf16.msra.mxu0 0
    %6614 = vmatprep.subr.bf16.mxu0 0
    %6615 = vmatpush1.bf16.msra.mxu0 0
    %6616 = vmatprep.subr.bf16.mxu0 0
    %6617 = vmatpush1.bf16.msra.mxu0 0
    %6618 = vmatprep.subr.bf16.mxu0 0
    %6619 = vmatpush1.bf16.msra.mxu0 0
    %6620 = vmatprep.subr.bf16.mxu0 0
    %6621 = vmatpush1.bf16.msra.mxu0 0
    %6622 = vmatprep.subr.bf16.mxu0 0
    %6623 = vmatpush1.bf16.msra.mxu0 0
    %6624 = vmatprep.subr.bf16.mxu0 0
    %6625 = vmatpush1.bf16.msra.mxu0 0
    %6626 = vmatprep.subr.bf16.mxu0 0
    %6627 = vmatpush1.bf16.msra.mxu0 0
    %6628 = vmatprep.mubr.bf16.mxu0 0
    %6629 = vmatmul.mubr.bf16.gmra.mrb[0].mxu0 %v2959
    %v6630 = vpop.f32.mrb[0].mxu0
    %v6631 = vadd.f32 %v6590, %v6630
    %v6632 = vpop.f32.mrb[0].mxu0
    %v6633 = vadd.f32 %v6592, %v6632
    %v6634 = vpop.f32.mrb[0].mxu0
    %v6635 = vpop.f32.mrb[0].mxu0
    %6636 = vdwg.mxu0
    %6637 = vmatprep.subr.bf16.mxu0 %v5144
    %6638 = vmatpush1.bf16.msra.mxu0 %v5143
    %6639 = vmatprep.subr.bf16.mxu0 %v5153
    %6640 = vmatpush1.bf16.msra.mxu0 %v5152
    %6641 = vmatprep.subr.bf16.mxu0 %v5162
    %6642 = vmatpush1.bf16.msra.mxu0 %v5161
    %6643 = vmatprep.subr.bf16.mxu0 %v5171
    %6644 = vmatpush1.bf16.msra.mxu0 %v5170
    %6645 = vmatprep.subr.bf16.mxu0 %v5180
    %6646 = vmatpush1.bf16.msra.mxu0 %v5179
    %6647 = vmatprep.subr.bf16.mxu0 %v5189
    %6648 = vmatpush1.bf16.msra.mxu0 %v5188
    %6649 = vmatprep.subr.bf16.mxu0 %v5198
    %6650 = vmatpush1.bf16.msra.mxu0 %v5197
    %6651 = vmatprep.subr.bf16.mxu0 %v5207
    %6652 = vmatpush1.bf16.msra.mxu0 %v5206
    %6653 = vmatprep.subr.bf16.mxu0 %v5216
    %6654 = vmatpush1.bf16.msra.mxu0 %v5215
    %6655 = vmatprep.subr.bf16.mxu0 %v5225
    %6656 = vmatpush1.bf16.msra.mxu0 %v5224
    %6657 = vmatprep.subr.bf16.mxu0 %v5234
    %6658 = vmatpush1.bf16.msra.mxu0 %v5233
    %6659 = vmatprep.subr.bf16.mxu0 %v5243
    %6660 = vmatpush1.bf16.msra.mxu0 %v5242
    %6661 = vmatprep.subr.bf16.mxu0 %v5252
    %6662 = vmatpush1.bf16.msra.mxu0 %v5251
    %6663 = vmatprep.subr.bf16.mxu0 %v5261
    %6664 = vmatpush1.bf16.msra.mxu0 %v5260
    %6665 = vmatprep.subr.bf16.mxu0 %v5270
    %6666 = vmatpush1.bf16.msra.mxu0 %v5269
    %6667 = vmatprep.subr.bf16.mxu0 %v5279
    %6668 = vmatpush1.bf16.msra.mxu0 %v5278
    %6669 = vmatprep.mubr.bf16.mxu0 %v2954
    %6670 = vmatmul.mubr.bf16.gmra.mrb[0].mxu0 %v2953
    %v6671 = vpop.f32.mrb[0].mxu0
    %v6672 = vadd.f32 %v3551, %v6671
    %v6673 = vpop.f32.mrb[0].mxu0
    %v6674 = vadd.f32 %v3555, %v6673
    %v6675 = vpop.f32.mrb[0].mxu0
    %v6676 = vpop.f32.mrb[0].mxu0
    %6677 = vdwg.mxu0
    %6678 = vmatprep.subr.bf16.mxu0 %v5288
    %6679 = vmatpush1.bf16.msra.mxu0 %v5287
    %6680 = vmatprep.subr.bf16.mxu0 %v5297
    %6681 = vmatpush1.bf16.msra.mxu0 %v5296
    %6682 = vmatprep.subr.bf16.mxu0 %v5306
    %6683 = vmatpush1.bf16.msra.mxu0 %v5305
    %6684 = vmatprep.subr.bf16.mxu0 %v5315
    %6685 = vmatpush1.bf16.msra.mxu0 %v5314
    %6686 = vmatprep.subr.bf16.mxu0 %v5324
    %6687 = vmatpush1.bf16.msra.mxu0 %v5323
    %6688 = vmatprep.subr.bf16.mxu0 %v5333
    %6689 = vmatpush1.bf16.msra.mxu0 %v5332
    %6690 = vmatprep.subr.bf16.mxu0 %v5342
    %6691 = vmatpush1.bf16.msra.mxu0 %v5341
    %6692 = vmatprep.subr.bf16.mxu0 %v5351
    %6693 = vmatpush1.bf16.msra.mxu0 %v5350
    %6694 = vmatprep.subr.bf16.mxu0 %v5360
    %6695 = vmatpush1.bf16.msra.mxu0 %v5359
    %6696 = vmatprep.subr.bf16.mxu0 %v5369
    %6697 = vmatpush1.bf16.msra.mxu0 %v5368
    %6698 = vmatprep.subr.bf16.mxu0 %v5378
    %6699 = vmatpush1.bf16.msra.mxu0 %v5377
    %6700 = vmatprep.subr.bf16.mxu0 %v5387
    %6701 = vmatpush1.bf16.msra.mxu0 %v5386
    %6702 = vmatprep.subr.bf16.mxu0 %v5396
    %6703 = vmatpush1.bf16.msra.mxu0 %v5395
    %6704 = vmatprep.subr.bf16.mxu0 %v5405
    %6705 = vmatpush1.bf16.msra.mxu0 %v5404
    %6706 = vmatprep.subr.bf16.mxu0 %v5414
    %6707 = vmatpush1.bf16.msra.mxu0 %v5413
    %6708 = vmatprep.subr.bf16.mxu0 %v5423
    %6709 = vmatpush1.bf16.msra.mxu0 %v5422
    %6710 = vmatprep.mubr.bf16.mxu0 %v2956
    %6711 = vmatmul.mubr.bf16.gmra.mrb[0].mxu0 %v2955
    %v6712 = vpop.f32.mrb[0].mxu0
    %v6713 = vadd.f32 %v6672, %v6712
    %v6714 = vpop.f32.mrb[0].mxu0
    %v6715 = vadd.f32 %v6674, %v6714
    %v6716 = vpop.f32.mrb[0].mxu0
    %v6717 = vpop.f32.mrb[0].mxu0
    %6718 = vdwg.mxu0
    %6719 = vmatprep.subr.bf16.mxu0 %v5432
    %6720 = vmatpush1.bf16.msra.mxu0 %v5431
    %6721 = vmatprep.subr.bf16.mxu0 %v5441
    %6722 = vmatpush1.bf16.msra.mxu0 %v5440
    %6723 = vmatprep.subr.bf16.mxu0 %v5450
    %6724 = vmatpush1.bf16.msra.mxu0 %v5449
    %6725 = vmatprep.subr.bf16.mxu0 %v5459
    %6726 = vmatpush1.bf16.msra.mxu0 %v5458
    %6727 = vmatprep.subr.bf16.mxu0 %v5468
    %6728 = vmatpush1.bf16.msra.mxu0 %v5467
    %6729 = vmatprep.subr.bf16.mxu0 %v5477
    %6730 = vmatpush1.bf16.msra.mxu0 %v5476
    %6731 = vmatprep.subr.bf16.mxu0 %v5486
    %6732 = vmatpush1.bf16.msra.mxu0 %v5485
    %6733 = vmatprep.subr.bf16.mxu0 %v5495
    %6734 = vmatpush1.bf16.msra.mxu0 %v5494
    %6735 = vmatprep.subr.bf16.mxu0 %v5504
    %6736 = vmatpush1.bf16.msra.mxu0 %v5503
    %6737 = vmatprep.subr.bf16.mxu0 %v5513
    %6738 = vmatpush1.bf16.msra.mxu0 %v5512
    %6739 = vmatprep.subr.bf16.mxu0 %v5522
    %6740 = vmatpush1.bf16.msra.mxu0 %v5521
    %6741 = vmatprep.subr.bf16.mxu0 %v5531
    %6742 = vmatpush1.bf16.msra.mxu0 %v5530
    %6743 = vmatprep.subr.bf16.mxu0 %v5540
    %6744 = vmatpush1.bf16.msra.mxu0 %v5539
    %6745 = vmatprep.subr.bf16.mxu0 %v5549
    %6746 = vmatpush1.bf16.msra.mxu0 %v5548
    %6747 = vmatprep.subr.bf16.mxu0 %v5558
    %6748 = vmatpush1.bf16.msra.mxu0 %v5557
    %6749 = vmatprep.subr.bf16.mxu0 %v5567
    %6750 = vmatpush1.bf16.msra.mxu0 %v5566
    %6751 = vmatprep.mubr.bf16.mxu0 %v2958
    %6752 = vmatmul.mubr.bf16.gmra.mrb[0].mxu0 %v2957
    %v6753 = vpop.f32.mrb[0].mxu0
    %v6754 = vadd.f32 %v6713, %v6753
    %v6755 = vpop.f32.mrb[0].mxu0
    %v6756 = vadd.f32 %v6715, %v6755
    %v6757 = vpop.f32.mrb[0].mxu0
    %v6758 = vpop.f32.mrb[0].mxu0
    %6759 = vdwg.mxu0
    %6760 = vmatprep.subr.bf16.mxu0 %v5576
    %6761 = vmatpush1.bf16.msra.mxu0 %v5575
    %6762 = vmatprep.subr.bf16.mxu0 %v5585
    %6763 = vmatpush1.bf16.msra.mxu0 %v5584
    %6764 = vmatprep.subr.bf16.mxu0 %v5594
    %6765 = vmatpush1.bf16.msra.mxu0 %v5593
    %6766 = vmatprep.subr.bf16.mxu0 %v5603
    %6767 = vmatpush1.bf16.msra.mxu0 %v5602
    %6768 = vmatprep.subr.bf16.mxu0 %v5612
    %6769 = vmatpush1.bf16.msra.mxu0 %v5611
    %6770 = vmatprep.subr.bf16.mxu0 %v5621
    %6771 = vmatpush1.bf16.msra.mxu0 %v5620
    %6772 = vmatprep.subr.bf16.mxu0 %v5630
    %6773 = vmatpush1.bf16.msra.mxu0 %v5629
    %6774 = vmatprep.subr.bf16.mxu0 %v5639
    %6775 = vmatpush1.bf16.msra.mxu0 %v5638
    %6776 = vmatprep.subr.bf16.mxu0 0
    %6777 = vmatpush1.bf16.msra.mxu0 0
    %6778 = vmatprep.subr.bf16.mxu0 0
    %6779 = vmatpush1.bf16.msra.mxu0 0
    %6780 = vmatprep.subr.bf16.mxu0 0
    %6781 = vmatpush1.bf16.msra.mxu0 0
    %6782 = vmatprep.subr.bf16.mxu0 0
    %6783 = vmatpush1.bf16.msra.mxu0 0
    %6784 = vmatprep.subr.bf16.mxu0 0
    %6785 = vmatpush1.bf16.msra.mxu0 0
    %6786 = vmatprep.subr.bf16.mxu0 0
    %6787 = vmatpush1.bf16.msra.mxu0 0
    %6788 = vmatprep.subr.bf16.mxu0 0
    %6789 = vmatpush1.bf16.msra.mxu0 0
    %6790 = vmatprep.subr.bf16.mxu0 0
    %6791 = vmatpush1.bf16.msra.mxu0 0
    %6792 = vmatprep.mubr.bf16.mxu0 0
    %6793 = vmatmul.mubr.bf16.gmra.mrb[0].mxu0 %v2959
    %v6794 = vpop.f32.mrb[0].mxu0
    %v6795 = vadd.f32 %v6754, %v6794
    %v6796 = vpop.f32.mrb[0].mxu0
    %v6797 = vadd.f32 %v6756, %v6796
    %v6798 = vpop.f32.mrb[0].mxu0
    %v6799 = vpop.f32.mrb[0].mxu0
    %6800 = vdwg.mxu0
    %6801 = vmatprep.subr.bf16.mxu0 0
    %6802 = vmatpush1.bf16.msra.mxu0 %v5145
    %6803 = vmatprep.subr.bf16.mxu0 0
    %6804 = vmatpush1.bf16.msra.mxu0 %v5154
    %6805 = vmatprep.subr.bf16.mxu0 0
    %6806 = vmatpush1.bf16.msra.mxu0 %v5163
    %6807 = vmatprep.subr.bf16.mxu0 0
    %6808 = vmatpush1.bf16.msra.mxu0 %v5172
    %6809 = vmatprep.subr.bf16.mxu0 0
    %6810 = vmatpush1.bf16.msra.mxu0 %v5181
    %6811 = vmatprep.subr.bf16.mxu0 0
    %6812 = vmatpush1.bf16.msra.mxu0 %v5190
    %6813 = vmatprep.subr.bf16.mxu0 0
    %6814 = vmatpush1.bf16.msra.mxu0 %v5199
    %6815 = vmatprep.subr.bf16.mxu0 0
    %6816 = vmatpush1.bf16.msra.mxu0 %v5208
    %6817 = vmatprep.subr.bf16.mxu0 0
    %6818 = vmatpush1.bf16.msra.mxu0 %v5217
    %6819 = vmatprep.subr.bf16.mxu0 0
    %6820 = vmatpush1.bf16.msra.mxu0 %v5226
    %6821 = vmatprep.subr.bf16.mxu0 0
    %6822 = vmatpush1.bf16.msra.mxu0 %v5235
    %6823 = vmatprep.subr.bf16.mxu0 0
    %6824 = vmatpush1.bf16.msra.mxu0 %v5244
    %6825 = vmatprep.subr.bf16.mxu0 0
    %6826 = vmatpush1.bf16.msra.mxu0 %v5253
    %6827 = vmatprep.subr.bf16.mxu0 0
    %6828 = vmatpush1.bf16.msra.mxu0 %v5262
    %6829 = vmatprep.subr.bf16.mxu0 0
    %6830 = vmatpush1.bf16.msra.mxu0 %v5271
    %6831 = vmatprep.subr.bf16.mxu0 0
    %6832 = vmatpush1.bf16.msra.mxu0 %v5280
    %6833 = vmatprep.mubr.bf16.mxu0 %v2954
    %6834 = vmatmul.mubr.bf16.gmra.mrb[0].mxu0 %v2953
    %v6835 = vpop.f32.mrb[0].mxu0
    %v6836 = vadd.f32 %v3559, %v6835
    %v6837 = vpop.f32.mrb[0].mxu0
    %v6838 = vpop.f32.mrb[0].mxu0
    %v6839 = vpop.f32.mrb[0].mxu0
    %6840 = vdwg.mxu0
    %6841 = vmatprep.subr.bf16.mxu0 0
    %6842 = vmatpush1.bf16.msra.mxu0 %v5289
    %6843 = vmatprep.subr.bf16.mxu0 0
    %6844 = vmatpush1.bf16.msra.mxu0 %v5298
    %6845 = vmatprep.subr.bf16.mxu0 0
    %6846 = vmatpush1.bf16.msra.mxu0 %v5307
    %6847 = vmatprep.subr.bf16.mxu0 0
    %6848 = vmatpush1.bf16.msra.mxu0 %v5316
    %6849 = vmatprep.subr.bf16.mxu0 0
    %6850 = vmatpush1.bf16.msra.mxu0 %v5325
    %6851 = vmatprep.subr.bf16.mxu0 0
    %6852 = vmatpush1.bf16.msra.mxu0 %v5334
    %6853 = vmatprep.subr.bf16.mxu0 0
    %6854 = vmatpush1.bf16.msra.mxu0 %v5343
    %6855 = vmatprep.subr.bf16.mxu0 0
    %6856 = vmatpush1.bf16.msra.mxu0 %v5352
    %6857 = vmatprep.subr.bf16.mxu0 0
    %6858 = vmatpush1.bf16.msra.mxu0 %v5361
    %6859 = vmatprep.subr.bf16.mxu0 0
    %6860 = vmatpush1.bf16.msra.mxu0 %v5370
    %6861 = vmatprep.subr.bf16.mxu0 0
    %6862 = vmatpush1.bf16.msra.mxu0 %v5379
    %6863 = vmatprep.subr.bf16.mxu0 0
    %6864 = vmatpush1.bf16.msra.mxu0 %v5388
    %6865 = vmatprep.subr.bf16.mxu0 0
    %6866 = vmatpush1.bf16.msra.mxu0 %v5397
    %6867 = vmatprep.subr.bf16.mxu0 0
    %6868 = vmatpush1.bf16.msra.mxu0 %v5406
    %6869 = vmatprep.subr.bf16.mxu0 0
    %6870 = vmatpush1.bf16.msra.mxu0 %v5415
    %6871 = vmatprep.subr.bf16.mxu0 0
    %6872 = vmatpush1.bf16.msra.mxu0 %v5424
    %6873 = vmatprep.mubr.bf16.mxu0 %v2956
    %6874 = vmatmul.mubr.bf16.gmra.mrb[0].mxu0 %v2955
    %v6875 = vpop.f32.mrb[0].mxu0
    %v6876 = vadd.f32 %v6836, %v6875
    %v6877 = vpop.f32.mrb[0].mxu0
    %v6878 = vpop.f32.mrb[0].mxu0
    %v6879 = vpop.f32.mrb[0].mxu0
    %6880 = vdwg.mxu0
    %6881 = vmatprep.subr.bf16.mxu0 0
    %6882 = vmatpush1.bf16.msra.mxu0 %v5433
    %6883 = vmatprep.subr.bf16.mxu0 0
    %6884 = vmatpush1.bf16.msra.mxu0 %v5442
    %6885 = vmatprep.subr.bf16.mxu0 0
    %6886 = vmatpush1.bf16.msra.mxu0 %v5451
    %6887 = vmatprep.subr.bf16.mxu0 0
    %6888 = vmatpush1.bf16.msra.mxu0 %v5460
    %6889 = vmatprep.subr.bf16.mxu0 0
    %6890 = vmatpush1.bf16.msra.mxu0 %v5469
    %6891 = vmatprep.subr.bf16.mxu0 0
    %6892 = vmatpush1.bf16.msra.mxu0 %v5478
    %6893 = vmatprep.subr.bf16.mxu0 0
    %6894 = vmatpush1.bf16.msra.mxu0 %v5487
    %6895 = vmatprep.subr.bf16.mxu0 0
    %6896 = vmatpush1.bf16.msra.mxu0 %v5496
    %6897 = vmatprep.subr.bf16.mxu0 0
    %6898 = vmatpush1.bf16.msra.mxu0 %v5505
    %6899 = vmatprep.subr.bf16.mxu0 0
    %6900 = vmatpush1.bf16.msra.mxu0 %v5514
    %6901 = vmatprep.subr.bf16.mxu0 0
    %6902 = vmatpush1.bf16.msra.mxu0 %v5523
    %6903 = vmatprep.subr.bf16.mxu0 0
    %6904 = vmatpush1.bf16.msra.mxu0 %v5532
    %6905 = vmatprep.subr.bf16.mxu0 0
    %6906 = vmatpush1.bf16.msra.mxu0 %v5541
    %6907 = vmatprep.subr.bf16.mxu0 0
    %6908 = vmatpush1.bf16.msra.mxu0 %v5550
    %6909 = vmatprep.subr.bf16.mxu0 0
    %6910 = vmatpush1.bf16.msra.mxu0 %v5559
    %6911 = vmatprep.subr.bf16.mxu0 0
    %6912 = vmatpush1.bf16.msra.mxu0 %v5568
    %6913 = vmatprep.mubr.bf16.mxu0 %v2958
    %6914 = vmatmul.mubr.bf16.gmra.mrb[0].mxu0 %v2957
    %v6915 = vpop.f32.mrb[0].mxu0
    %v6916 = vadd.f32 %v6876, %v6915
    %v6917 = vpop.f32.mrb[0].mxu0
    %v6918 = vpop.f32.mrb[0].mxu0
    %v6919 = vpop.f32.mrb[0].mxu0
    %6920 = vdwg.mxu0
    %6921 = vmatprep.subr.bf16.mxu0 0
    %6922 = vmatpush1.bf16.msra.mxu0 %v5577
    %6923 = vmatprep.subr.bf16.mxu0 0
    %6924 = vmatpush1.bf16.msra.mxu0 %v5586
    %6925 = vmatprep.subr.bf16.mxu0 0
    %6926 = vmatpush1.bf16.msra.mxu0 %v5595
    %6927 = vmatprep.subr.bf16.mxu0 0
    %6928 = vmatpush1.bf16.msra.mxu0 %v5604
    %6929 = vmatprep.subr.bf16.mxu0 0
    %6930 = vmatpush1.bf16.msra.mxu0 %v5613
    %6931 = vmatprep.subr.bf16.mxu0 0
    %6932 = vmatpush1.bf16.msra.mxu0 %v5622
    %6933 = vmatprep.subr.bf16.mxu0 0
    %6934 = vmatpush1.bf16.msra.mxu0 %v5631
    %6935 = vmatprep.subr.bf16.mxu0 0
    %6936 = vmatpush1.bf16.msra.mxu0 %v5640
    %6937 = vmatprep.subr.bf16.mxu0 0
    %6938 = vmatpush1.bf16.msra.mxu0 0
    %6939 = vmatprep.subr.bf16.mxu0 0
    %6940 = vmatpush1.bf16.msra.mxu0 0
    %6941 = vmatprep.subr.bf16.mxu0 0
    %6942 = vmatpush1.bf16.msra.mxu0 0
    %6943 = vmatprep.subr.bf16.mxu0 0
    %6944 = vmatpush1.bf16.msra.mxu0 0
    %6945 = vmatprep.subr.bf16.mxu0 0
    %6946 = vmatpush1.bf16.msra.mxu0 0
    %6947 = vmatprep.subr.bf16.mxu0 0
    %6948 = vmatpush1.bf16.msra.mxu0 0
    %6949 = vmatprep.subr.bf16.mxu0 0
    %6950 = vmatpush1.bf16.msra.mxu0 0
    %6951 = vmatprep.subr.bf16.mxu0 0
    %6952 = vmatpush1.bf16.msra.mxu0 0
    %6953 = vmatprep.mubr.bf16.mxu0 0
    %6954 = vmatmul.mubr.bf16.gmra.mrb[0].mxu0 %v2959
    %v6955 = vpop.f32.mrb[0].mxu0
    %v6956 = vadd.f32 %v6916, %v6955
    %v6957 = vpop.f32.mrb[0].mxu0
    %v6958 = vpop.f32.mrb[0].mxu0
    %v6959 = vpop.f32.mrb[0].mxu0
    %6960 = vdwg.mxu0
    %v6961 = vmul.f32 %v6303, 0.1
    %v6962 = vmul.f32 %v6305, 0.1
    %v6963 = vmul.f32 %v6467, 0.1
    %v6964 = vmul.f32 %v6469, 0.1
    %v6965 = vmul.f32 %v6631, 0.1
    %v6966 = vmul.f32 %v6633, 0.1
    %v6967 = vmul.f32 %v6795, 0.1
    %v6968 = vmul.f32 %v6797, 0.1
    %v6969 = vmul.f32 %v6956, 0.1
    %v6970 = vmax.f32 %v6303, %v6961
    %v6971 = vmax.f32 %v6305, %v6962
    %v6972 = vmax.f32 %v6467, %v6963
    %v6973 = vmax.f32 %v6469, %v6964
    %v6974 = vmax.f32 %v6631, %v6965
    %v6975 = vmax.f32 %v6633, %v6966
    %v6976 = vmax.f32 %v6795, %v6967
    %v6977 = vmax.f32 %v6797, %v6968
    %v6978 = vmax.f32 %v6956, %v6969
    %v6979 = vpack.c.bf16 %v6970, %v6970
    %v6980 = vpack.c.bf16 %v6971, %v6971
    %v6981 = vpack.c.bf16 %v6972, %v6972
    %v6982 = vpack.c.bf16 %v6973, %v6973
    %v6983 = vpack.c.bf16 %v6974, %v6974
    %v6984 = vpack.c.bf16 %v6975, %v6975
    %v6985 = vpack.c.bf16 %v6976, %v6976
    %v6986 = vpack.c.bf16 %v6977, %v6977
    %v6987 = vpack.c.bf16 %v6978, %v6978
    %v6988 = vld [vmem:[%s11] sm:$0xf]
    %v6989 = vld [vmem:[%s11 + $0x4] sm:$0xf]
    %v6990 = vld [vmem:[%s11 + $0x8] sm:$0xf]
    %v6991 = vld [vmem:[%s11 + $0xc] sm:$0xf]
    %v6992 = vld [vmem:[%s11 + $0x10] sm:$0xf]
    %v6993 = vld [vmem:[%s11 + $0x14] sm:$0xf]
    %v6994 = vld [vmem:[%s11 + $0x18] sm:$0xf]
    %v6995 = vld [vmem:[%s11 + $0x1c] sm:$0xf]
    %v6996 = vld [vmem:[%s11 + $0x20] sm:$0xf]
    %v6997 = vld [vmem:[%s11 + $0x24] sm:$0xf]
    %v6998 = vld [vmem:[%s11 + $0x28] sm:$0xf]
    %v6999 = vld [vmem:[%s11 + $0x2c] sm:$0xf]
    %v7000 = vld [vmem:[%s11 + $0x30] sm:$0xf]
    %v7001 = vld [vmem:[%s11 + $0x34] sm:$0xf]
    %v7002 = vld [vmem:[%s11 + $0x38] sm:$0xf]
    %v7003 = vld [vmem:[%s11 + $0x3c] sm:$0xf]
    %v7004 = vld [vmem:[%s11 + $0x40] sm:$0xf]
    %v7005 = vld [vmem:[%s11 + $0x44] sm:$0xf]
    %v7006 = vld [vmem:[%s11 + $0x48] sm:$0xf]
    %v7007 = vld [vmem:[%s11 + $0x4c] sm:$0xf]
    %v7008 = vld [vmem:[%s11 + $0x50] sm:$0xf]
    %v7009 = vld [vmem:[%s11 + $0x54] sm:$0xf]
    %v7010 = vld [vmem:[%s11 + $0x58] sm:$0xf]
    %v7011 = vld [vmem:[%s11 + $0x5c] sm:$0xf]
    %v7012 = vld [vmem:[%s11 + $0x60] sm:$0xf]
    %v7013 = vld [vmem:[%s11 + $0x64] sm:$0xf]
    %v7014 = vld [vmem:[%s11 + $0x68] sm:$0xf]
    %v7015 = vld [vmem:[%s11 + $0x6c] sm:$0xf]
    %v7016 = vld [vmem:[%s11 + $0x70] sm:$0xf]
    %v7017 = vld [vmem:[%s11 + $0x74] sm:$0xf]
    %v7018 = vld [vmem:[%s11 + $0x78] sm:$0xf]
    %v7019 = vld [vmem:[%s11 + $0x7c] sm:$0xf]
    %v7020 = vld [vmem:[%s11 + $0x80] sm:$0xf]
    %v7021 = vld [vmem:[%s11 + $0x84] sm:$0xf]
    %v7022 = vld [vmem:[%s11 + $0x88] sm:$0xf]
    %v7023 = vld [vmem:[%s11 + $0x8c] sm:$0xf]
    %v7024 = vld [vmem:[%s11 + $0x90] sm:$0xf]
    %v7025 = vld [vmem:[%s11 + $0x94] sm:$0xf]
    %v7026 = vld [vmem:[%s11 + $0x98] sm:$0xf]
    %v7027 = vld [vmem:[%s11 + $0x9c] sm:$0xf]
    %v7028 = vld [vmem:[%s11 + $0xa0] sm:$0xf]
    %v7029 = vld [vmem:[%s11 + $0xa4] sm:$0xf]
    %v7030 = vld [vmem:[%s11 + $0xa8] sm:$0xf]
    %v7031 = vld [vmem:[%s11 + $0xac] sm:$0xf]
    %v7032 = vld [vmem:[%s11 + $0xb0] sm:$0xf]
    %v7033 = vld [vmem:[%s11 + $0xb4] sm:$0xf]
    %v7034 = vld [vmem:[%s11 + $0xb8] sm:$0xf]
    %v7035 = vld [vmem:[%s11 + $0xbc] sm:$0xf]
    %v7036 = vld [vmem:[%s11 + $0xc0] sm:$0xf]
    %v7037 = vld [vmem:[%s11 + $0xc4] sm:$0xf]
    %v7038 = vld [vmem:[%s11 + $0xc8] sm:$0xf]
    %v7039 = vld [vmem:[%s11 + $0xcc] sm:$0xf]
    %v7040 = vld [vmem:[%s11 + $0xd0] sm:$0xf]
    %v7041 = vld [vmem:[%s11 + $0xd4] sm:$0xf]
    %v7042 = vld [vmem:[%s11 + $0xd8] sm:$0xf]
    %v7043 = vld [vmem:[%s11 + $0xdc] sm:$0xf]
    %v7044 = vld [vmem:[%s11 + $0xe0] sm:$0xf]
    %v7045 = vld [vmem:[%s11 + $0xe4] sm:$0xf]
    %v7046 = vld [vmem:[%s11 + $0xe8] sm:$0xf]
    %v7047 = vld [vmem:[%s11 + $0xec] sm:$0xf]
    %v7048 = vld [vmem:[%s11 + $0xf0] sm:$0xf]
    %v7049 = vld [vmem:[%s11 + $0xf4] sm:$0xf]
    %v7050 = vld [vmem:[%s11 + $0xf8] sm:$0xf]
    %v7051 = vld [vmem:[%s11 + $0xfc] sm:$0xf]
    %v7052 = vld [vmem:[%s11 + $0x100] sm:$0xf]
    %v7053 = vld [vmem:[%s11 + $0x104] sm:$0xf]
    %v7054 = vld [vmem:[%s11 + $0x108] sm:$0xf]
    %v7055 = vld [vmem:[%s11 + $0x10c] sm:$0xf]
    %v7056 = vld [vmem:[%s11 + $0x110] sm:$0xf]
    %v7057 = vld [vmem:[%s11 + $0x114] sm:$0xf]
    %v7058 = vld [vmem:[%s11 + $0x118] sm:$0xf]
    %v7059 = vld [vmem:[%s11 + $0x11c] sm:$0xf]
    %v7060 = vld [vmem:[%s11 + $0x120] sm:$0xf]
    %v7061 = vld [vmem:[%s11 + $0x124] sm:$0xf]
    %v7062 = vld [vmem:[%s11 + $0x128] sm:$0xf]
    %v7063 = vld [vmem:[%s11 + $0x12c] sm:$0xf]
    %v7064 = vld [vmem:[%s11 + $0x130] sm:$0xf]
    %v7065 = vld [vmem:[%s11 + $0x134] sm:$0xf]
    %v7066 = vld [vmem:[%s11 + $0x138] sm:$0xf]
    %v7067 = vld [vmem:[%s11 + $0x13c] sm:$0xf]
    %v7068 = vld [vmem:[%s11 + $0x140] sm:$0xf]
    %v7069 = vld [vmem:[%s11 + $0x144] sm:$0xf]
    %v7070 = vld [vmem:[%s11 + $0x148] sm:$0xf]
    %v7071 = vld [vmem:[%s11 + $0x14c] sm:$0xf]
    %v7072 = vld [vmem:[%s11 + $0x150] sm:$0xf]
    %v7073 = vld [vmem:[%s11 + $0x154] sm:$0xf]
    %v7074 = vld [vmem:[%s11 + $0x158] sm:$0xf]
    %v7075 = vld [vmem:[%s11 + $0x15c] sm:$0xf]
    %v7076 = vld [vmem:[%s11 + $0x160] sm:$0xf]
    %v7077 = vld [vmem:[%s11 + $0x164] sm:$0xf]
    %v7078 = vld [vmem:[%s11 + $0x168] sm:$0xf]
    %v7079 = vld [vmem:[%s11 + $0x16c] sm:$0xf]
    %v7080 = vld [vmem:[%s11 + $0x170] sm:$0xf]
    %v7081 = vld [vmem:[%s11 + $0x174] sm:$0xf]
    %v7082 = vld [vmem:[%s11 + $0x178] sm:$0xf]
    %v7083 = vld [vmem:[%s11 + $0x17c] sm:$0xf]
    %v7084 = vld [vmem:[%s11 + $0x180] sm:$0xf]
    %v7085 = vld [vmem:[%s11 + $0x184] sm:$0xf]
    %v7086 = vld [vmem:[%s11 + $0x188] sm:$0xf]
    %v7087 = vld [vmem:[%s11 + $0x18c] sm:$0xf]
    %v7088 = vld [vmem:[%s11 + $0x190] sm:$0xf]
    %v7089 = vld [vmem:[%s11 + $0x194] sm:$0xf]
    %v7090 = vld [vmem:[%s11 + $0x198] sm:$0xf]
    %v7091 = vld [vmem:[%s11 + $0x19c] sm:$0xf]
    %v7092 = vld [vmem:[%s11 + $0x1a0] sm:$0xf]
    %v7093 = vld [vmem:[%s11 + $0x1a4] sm:$0xf]
    %v7094 = vld [vmem:[%s11 + $0x1a8] sm:$0xf]
    %v7095 = vld [vmem:[%s11 + $0x1ac] sm:$0xf]
    %v7096 = vld [vmem:[%s11 + $0x1b0] sm:$0xf]
    %v7097 = vld [vmem:[%s11 + $0x1b4] sm:$0xf]
    %v7098 = vld [vmem:[%s11 + $0x1b8] sm:$0xf]
    %v7099 = vld [vmem:[%s11 + $0x1bc] sm:$0xf]
    %v7100 = vld [vmem:[%s11 + $0x1c0] sm:$0xf]
    %v7101 = vld [vmem:[%s11 + $0x1c4] sm:$0xf]
    %v7102 = vld [vmem:[%s11 + $0x1c8] sm:$0xf]
    %v7103 = vld [vmem:[%s11 + $0x1cc] sm:$0xf]
    %v7104 = vld [vmem:[%s11 + $0x1d0] sm:$0xf]
    %v7105 = vld [vmem:[%s11 + $0x1d4] sm:$0xf]
    %v7106 = vld [vmem:[%s11 + $0x1d8] sm:$0xf]
    %v7107 = vld [vmem:[%s11 + $0x1dc] sm:$0xf]
    %v7108 = vld [vmem:[%s11 + $0x1e0] sm:$0xf]
    %v7109 = vld [vmem:[%s11 + $0x1e4] sm:$0xf]
    %v7110 = vld [vmem:[%s11 + $0x1e8] sm:$0xf]
    %v7111 = vld [vmem:[%s11 + $0x1ec] sm:$0xf]
    %v7112 = vld [vmem:[%s11 + $0x1f0] sm:$0xf]
    %v7113 = vld [vmem:[%s11 + $0x1f4] sm:$0xf]
    %v7114 = vld [vmem:[%s11 + $0x1f8] sm:$0xf]
    %v7115 = vld [vmem:[%s11 + $0x1fc] sm:$0xf]
    %v7116 = vld [vmem:[%s11 + $0x200] sm:$0xf]
    %v7117 = vld [vmem:[%s11 + $0x204] sm:$0xf]
    %v7118 = vld [vmem:[%s11 + $0x208] sm:$0xf]
    %v7119 = vld [vmem:[%s11 + $0x20c] sm:$0xf]
    %v7120 = vld [vmem:[%s11 + $0x210] sm:$0xf]
    %v7121 = vld [vmem:[%s11 + $0x214] sm:$0xf]
    %v7122 = vld [vmem:[%s11 + $0x218] sm:$0xf]
    %v7123 = vld [vmem:[%s11 + $0x21c] sm:$0xf]
    %v7124 = vld [vmem:[%s11 + $0x220] sm:$0xf]
    %v7125 = vld [vmem:[%s11 + $0x224] sm:$0xf]
    %v7126 = vld [vmem:[%s11 + $0x228] sm:$0xf]
    %v7127 = vld [vmem:[%s11 + $0x22c] sm:$0xf]
    %v7128 = vld [vmem:[%s11 + $0x230] sm:$0xf]
    %v7129 = vld [vmem:[%s11 + $0x234] sm:$0xf]
    %v7130 = vld [vmem:[%s11 + $0x238] sm:$0xf]
    %v7131 = vld [vmem:[%s11 + $0x23c] sm:$0xf]
    %v7276 = vunpack.c.l.b16 %v6988
    %v7277 = vunpack.c.l.b16 %v6989
    %v7278 = vunpack.c.l.b16 %v6990
    %v7279 = vunpack.c.l.b16 %v6991
    %v7280 = vunpack.c.l.b16 %v6992
    %v7281 = vunpack.c.l.b16 %v6993
    %v7282 = vunpack.c.l.b16 %v6994
    %v7283 = vunpack.c.l.b16 %v6995
    %v7284 = vunpack.c.l.b16 %v6996
    %v7285 = vunpack.c.l.b16 %v6997
    %v7286 = vunpack.c.l.b16 %v6998
    %v7287 = vunpack.c.l.b16 %v6999
    %v7288 = vunpack.c.l.b16 %v7000
    %v7289 = vunpack.c.l.b16 %v7001
    %v7290 = vunpack.c.l.b16 %v7002
    %v7291 = vunpack.c.l.b16 %v7003
    %v7292 = vunpack.c.l.b16 %v7004
    %v7293 = vunpack.c.l.b16 %v7005
    %v7294 = vunpack.c.l.b16 %v7006
    %v7295 = vunpack.c.l.b16 %v7007
    %v7296 = vunpack.c.l.b16 %v7008
    %v7297 = vunpack.c.l.b16 %v7009
    %v7298 = vunpack.c.l.b16 %v7010
    %v7299 = vunpack.c.l.b16 %v7011
    %v7300 = vunpack.c.l.b16 %v7012
    %v7301 = vunpack.c.l.b16 %v7013
    %v7302 = vunpack.c.l.b16 %v7014
    %v7303 = vunpack.c.l.b16 %v7015
    %v7304 = vunpack.c.l.b16 %v7016
    %v7305 = vunpack.c.l.b16 %v7017
    %v7306 = vunpack.c.l.b16 %v7018
    %v7307 = vunpack.c.l.b16 %v7019
    %v7308 = vunpack.c.l.b16 %v7020
    %v7309 = vunpack.c.l.b16 %v7021
    %v7310 = vunpack.c.l.b16 %v7022
    %v7311 = vunpack.c.l.b16 %v7023
    %v7312 = vunpack.c.l.b16 %v7024
    %v7313 = vunpack.c.l.b16 %v7025
    %v7314 = vunpack.c.l.b16 %v7026
    %v7315 = vunpack.c.l.b16 %v7027
    %v7316 = vunpack.c.l.b16 %v7028
    %v7317 = vunpack.c.l.b16 %v7029
    %v7318 = vunpack.c.l.b16 %v7030
    %v7319 = vunpack.c.l.b16 %v7031
    %v7320 = vunpack.c.l.b16 %v7032
    %v7321 = vunpack.c.l.b16 %v7033
    %v7322 = vunpack.c.l.b16 %v7034
    %v7323 = vunpack.c.l.b16 %v7035
    %v7324 = vunpack.c.l.b16 %v7036
    %v7325 = vunpack.c.l.b16 %v7037
    %v7326 = vunpack.c.l.b16 %v7038
    %v7327 = vunpack.c.l.b16 %v7039
    %v7328 = vunpack.c.l.b16 %v7040
    %v7329 = vunpack.c.l.b16 %v7041
    %v7330 = vunpack.c.l.b16 %v7042
    %v7331 = vunpack.c.l.b16 %v7043
    %v7332 = vunpack.c.l.b16 %v7044
    %v7333 = vunpack.c.l.b16 %v7045
    %v7334 = vunpack.c.l.b16 %v7046
    %v7335 = vunpack.c.l.b16 %v7047
    %v7336 = vunpack.c.l.b16 %v7048
    %v7337 = vunpack.c.l.b16 %v7049
    %v7338 = vunpack.c.l.b16 %v7050
    %v7339 = vunpack.c.l.b16 %v7051
    %v7340 = vunpack.c.l.b16 %v7052
    %v7341 = vunpack.c.l.b16 %v7053
    %v7342 = vunpack.c.l.b16 %v7054
    %v7343 = vunpack.c.l.b16 %v7055
    %v7344 = vunpack.c.l.b16 %v7056
    %v7345 = vunpack.c.l.b16 %v7057
    %v7346 = vunpack.c.l.b16 %v7058
    %v7347 = vunpack.c.l.b16 %v7059
    %v7348 = vunpack.c.l.b16 %v7060
    %v7349 = vunpack.c.l.b16 %v7061
    %v7350 = vunpack.c.l.b16 %v7062
    %v7351 = vunpack.c.l.b16 %v7063
    %v7352 = vunpack.c.l.b16 %v7064
    %v7353 = vunpack.c.l.b16 %v7065
    %v7354 = vunpack.c.l.b16 %v7066
    %v7355 = vunpack.c.l.b16 %v7067
    %v7356 = vunpack.c.l.b16 %v7068
    %v7357 = vunpack.c.l.b16 %v7069
    %v7358 = vunpack.c.l.b16 %v7070
    %v7359 = vunpack.c.l.b16 %v7071
    %v7360 = vunpack.c.l.b16 %v7072
    %v7361 = vunpack.c.l.b16 %v7073
    %v7362 = vunpack.c.l.b16 %v7074
    %v7363 = vunpack.c.l.b16 %v7075
    %v7364 = vunpack.c.l.b16 %v7076
    %v7365 = vunpack.c.l.b16 %v7077
    %v7366 = vunpack.c.l.b16 %v7078
    %v7367 = vunpack.c.l.b16 %v7079
    %v7368 = vunpack.c.l.b16 %v7080
    %v7369 = vunpack.c.l.b16 %v7081
    %v7370 = vunpack.c.l.b16 %v7082
    %v7371 = vunpack.c.l.b16 %v7083
    %v7372 = vunpack.c.l.b16 %v7084
    %v7373 = vunpack.c.l.b16 %v7085
    %v7374 = vunpack.c.l.b16 %v7086
    %v7375 = vunpack.c.l.b16 %v7087
    %v7376 = vunpack.c.l.b16 %v7088
    %v7377 = vunpack.c.l.b16 %v7089
    %v7378 = vunpack.c.l.b16 %v7090
    %v7379 = vunpack.c.l.b16 %v7091
    %v7380 = vunpack.c.l.b16 %v7092
    %v7381 = vunpack.c.l.b16 %v7093
    %v7382 = vunpack.c.l.b16 %v7094
    %v7383 = vunpack.c.l.b16 %v7095
    %v7384 = vunpack.c.l.b16 %v7096
    %v7385 = vunpack.c.l.b16 %v7097
    %v7386 = vunpack.c.l.b16 %v7098
    %v7387 = vunpack.c.l.b16 %v7099
    %v7388 = vunpack.c.l.b16 %v7100
    %v7389 = vunpack.c.l.b16 %v7101
    %v7390 = vunpack.c.l.b16 %v7102
    %v7391 = vunpack.c.l.b16 %v7103
    %v7392 = vunpack.c.l.b16 %v7104
    %v7393 = vunpack.c.l.b16 %v7105
    %v7394 = vunpack.c.l.b16 %v7106
    %v7395 = vunpack.c.l.b16 %v7107
    %v7396 = vunpack.c.l.b16 %v7108
    %v7397 = vunpack.c.l.b16 %v7109
    %v7398 = vunpack.c.l.b16 %v7110
    %v7399 = vunpack.c.l.b16 %v7111
    %v7400 = vunpack.c.l.b16 %v7112
    %v7401 = vunpack.c.l.b16 %v7113
    %v7402 = vunpack.c.l.b16 %v7114
    %v7403 = vunpack.c.l.b16 %v7115
    %v7404 = vunpack.c.l.b16 %v7116
    %v7405 = vunpack.c.l.b16 %v7117
    %v7406 = vunpack.c.l.b16 %v7118
    %v7407 = vunpack.c.l.b16 %v7119
    %v7408 = vunpack.c.l.b16 %v7120
    %v7409 = vunpack.c.l.b16 %v7121
    %v7410 = vunpack.c.l.b16 %v7122
    %v7411 = vunpack.c.l.b16 %v7123
    %v7412 = vunpack.c.l.b16 %v7124
    %v7413 = vunpack.c.l.b16 %v7125
    %v7414 = vunpack.c.l.b16 %v7126
    %v7415 = vunpack.c.l.b16 %v7127
    %v7416 = vunpack.c.l.b16 %v7128
    %v7417 = vunpack.c.l.b16 %v7129
    %v7418 = vunpack.c.l.b16 %v7130
    %v7419 = vunpack.c.l.b16 %v7131
    %v7420 = vpack.c.b16 %v7277, %v7276
    %v7421 = vpack.c.b16 %v7279, %v7278
    %v7422 = vpack.c.b16 %v7281, %v7280
    %v7423 = vpack.c.b16 %v7283, %v7282
    %v7424 = vpack.c.b16 %v7285, %v7284
    %v7425 = vpack.c.b16 %v7287, %v7286
    %v7426 = vpack.c.b16 %v7289, %v7288
    %v7427 = vpack.c.b16 %v7291, %v7290
    %v7428 = vpack.c.b16 %v7293, %v7292
    %v7429 = vpack.c.b16 %v7295, %v7294
    %v7430 = vpack.c.b16 %v7297, %v7296
    %v7431 = vpack.c.b16 %v7299, %v7298
    %v7432 = vpack.c.b16 %v7301, %v7300
    %v7433 = vpack.c.b16 %v7303, %v7302
    %v7434 = vpack.c.b16 %v7305, %v7304
    %v7435 = vpack.c.b16 %v7307, %v7306
    %v7436 = vpack.c.b16 %v7309, %v7308
    %v7437 = vpack.c.b16 %v7311, %v7310
    %v7438 = vpack.c.b16 %v7313, %v7312
    %v7439 = vpack.c.b16 %v7315, %v7314
    %v7440 = vpack.c.b16 %v7317, %v7316
    %v7441 = vpack.c.b16 %v7319, %v7318
    %v7442 = vpack.c.b16 %v7321, %v7320
    %v7443 = vpack.c.b16 %v7323, %v7322
    %v7444 = vpack.c.b16 %v7325, %v7324
    %v7445 = vpack.c.b16 %v7327, %v7326
    %v7446 = vpack.c.b16 %v7329, %v7328
    %v7447 = vpack.c.b16 %v7331, %v7330
    %v7448 = vpack.c.b16 %v7333, %v7332
    %v7449 = vpack.c.b16 %v7335, %v7334
    %v7450 = vpack.c.b16 %v7337, %v7336
    %v7451 = vpack.c.b16 %v7339, %v7338
    %v7452 = vpack.c.b16 %v7341, %v7340
    %v7453 = vpack.c.b16 %v7343, %v7342
    %v7454 = vpack.c.b16 %v7345, %v7344
    %v7455 = vpack.c.b16 %v7347, %v7346
    %v7456 = vpack.c.b16 %v7349, %v7348
    %v7457 = vpack.c.b16 %v7351, %v7350
    %v7458 = vpack.c.b16 %v7353, %v7352
    %v7459 = vpack.c.b16 %v7355, %v7354
    %v7460 = vpack.c.b16 %v7357, %v7356
    %v7461 = vpack.c.b16 %v7359, %v7358
    %v7462 = vpack.c.b16 %v7361, %v7360
    %v7463 = vpack.c.b16 %v7363, %v7362
    %v7464 = vpack.c.b16 %v7365, %v7364
    %v7465 = vpack.c.b16 %v7367, %v7366
    %v7466 = vpack.c.b16 %v7369, %v7368
    %v7467 = vpack.c.b16 %v7371, %v7370
    %v7468 = vpack.c.b16 %v7373, %v7372
    %v7469 = vpack.c.b16 %v7375, %v7374
    %v7470 = vpack.c.b16 %v7377, %v7376
    %v7471 = vpack.c.b16 %v7379, %v7378
    %v7472 = vpack.c.b16 %v7381, %v7380
    %v7473 = vpack.c.b16 %v7383, %v7382
    %v7474 = vpack.c.b16 %v7385, %v7384
    %v7475 = vpack.c.b16 %v7387, %v7386
    %v7476 = vpack.c.b16 %v7389, %v7388
    %v7477 = vpack.c.b16 %v7391, %v7390
    %v7478 = vpack.c.b16 %v7393, %v7392
    %v7479 = vpack.c.b16 %v7395, %v7394
    %v7480 = vpack.c.b16 %v7397, %v7396
    %v7481 = vpack.c.b16 %v7399, %v7398
    %v7482 = vpack.c.b16 %v7401, %v7400
    %v7483 = vpack.c.b16 %v7403, %v7402
    %v7484 = vpack.c.b16 %v7405, %v7404
    %v7485 = vpack.c.b16 %v7407, %v7406
    %v7486 = vpack.c.b16 %v7409, %v7408
    %v7487 = vpack.c.b16 %v7411, %v7410
    %v7488 = vpack.c.b16 %v7413, %v7412
    %v7489 = vpack.c.b16 %v7415, %v7414
    %v7490 = vpack.c.b16 %v7417, %v7416
    %v7491 = vpack.c.b16 %v7419, %v7418
    %7564 = vmatprep.subr.bf16.mxu0 0
    %7565 = vmatpush1.bf16.msra.mxu0 %v7420
    %7566 = vmatprep.subr.bf16.mxu0 0
    %7567 = vmatpush1.bf16.msra.mxu0 %v7421
    %7568 = vmatprep.subr.bf16.mxu0 0
    %7569 = vmatpush1.bf16.msra.mxu0 %v7422
    %7570 = vmatprep.subr.bf16.mxu0 0
    %7571 = vmatpush1.bf16.msra.mxu0 %v7423
    %7572 = vmatprep.subr.bf16.mxu0 0
    %7573 = vmatpush1.bf16.msra.mxu0 %v7424
    %7574 = vmatprep.subr.bf16.mxu0 0
    %7575 = vmatpush1.bf16.msra.mxu0 %v7425
    %7576 = vmatprep.subr.bf16.mxu0 0
    %7577 = vmatpush1.bf16.msra.mxu0 %v7426
    %7578 = vmatprep.subr.bf16.mxu0 0
    %7579 = vmatpush1.bf16.msra.mxu0 %v7427
    %7580 = vmatprep.subr.bf16.mxu0 0
    %7581 = vmatpush1.bf16.msra.mxu0 %v7428
    %7582 = vmatprep.subr.bf16.mxu0 0
    %7583 = vmatpush1.bf16.msra.mxu0 %v7429
    %7584 = vmatprep.subr.bf16.mxu0 0
    %7585 = vmatpush1.bf16.msra.mxu0 %v7430
    %7586 = vmatprep.subr.bf16.mxu0 0
    %7587 = vmatpush1.bf16.msra.mxu0 %v7431
    %7588 = vmatprep.subr.bf16.mxu0 0
    %7589 = vmatpush1.bf16.msra.mxu0 %v7432
    %7590 = vmatprep.subr.bf16.mxu0 0
    %7591 = vmatpush1.bf16.msra.mxu0 %v7433
    %7592 = vmatprep.subr.bf16.mxu0 0
    %7593 = vmatpush1.bf16.msra.mxu0 %v7434
    %7594 = vmatprep.subr.bf16.mxu0 0
    %7595 = vmatpush1.bf16.msra.mxu0 %v7435
    %7596 = vmatprep.mubr.bf16.mxu0 %v6980
    %7597 = vmatmul.mubr.bf16.gmra.mrb[0].mxu0 %v6979
    %v7598 = vpop.f32.mrb[0].mxu0
    %v7599 = vadd.f32 0.0, %v7598
    %v7600 = vpop.f32.mrb[0].mxu0
    %v7601 = vpop.f32.mrb[0].mxu0
    %v7602 = vpop.f32.mrb[0].mxu0
    %7603 = vdwg.mxu0
    %7604 = vmatprep.subr.bf16.mxu0 0
    %7605 = vmatpush1.bf16.msra.mxu0 %v7436
    %7606 = vmatprep.subr.bf16.mxu0 0
    %7607 = vmatpush1.bf16.msra.mxu0 %v7437
    %7608 = vmatprep.subr.bf16.mxu0 0
    %7609 = vmatpush1.bf16.msra.mxu0 %v7438
    %7610 = vmatprep.subr.bf16.mxu0 0
    %7611 = vmatpush1.bf16.msra.mxu0 %v7439
    %7612 = vmatprep.subr.bf16.mxu0 0
    %7613 = vmatpush1.bf16.msra.mxu0 %v7440
    %7614 = vmatprep.subr.bf16.mxu0 0
    %7615 = vmatpush1.bf16.msra.mxu0 %v7441
    %7616 = vmatprep.subr.bf16.mxu0 0
    %7617 = vmatpush1.bf16.msra.mxu0 %v7442
    %7618 = vmatprep.subr.bf16.mxu0 0
    %7619 = vmatpush1.bf16.msra.mxu0 %v7443
    %7620 = vmatprep.subr.bf16.mxu0 0
    %7621 = vmatpush1.bf16.msra.mxu0 %v7444
    %7622 = vmatprep.subr.bf16.mxu0 0
    %7623 = vmatpush1.bf16.msra.mxu0 %v7445
    %7624 = vmatprep.subr.bf16.mxu0 0
    %7625 = vmatpush1.bf16.msra.mxu0 %v7446
    %7626 = vmatprep.subr.bf16.mxu0 0
    %7627 = vmatpush1.bf16.msra.mxu0 %v7447
    %7628 = vmatprep.subr.bf16.mxu0 0
    %7629 = vmatpush1.bf16.msra.mxu0 %v7448
    %7630 = vmatprep.subr.bf16.mxu0 0
    %7631 = vmatpush1.bf16.msra.mxu0 %v7449
    %7632 = vmatprep.subr.bf16.mxu0 0
    %7633 = vmatpush1.bf16.msra.mxu0 %v7450
    %7634 = vmatprep.subr.bf16.mxu0 0
    %7635 = vmatpush1.bf16.msra.mxu0 %v7451
    %7636 = vmatprep.mubr.bf16.mxu0 %v6982
    %7637 = vmatmul.mubr.bf16.gmra.mrb[0].mxu0 %v6981
    %v7638 = vpop.f32.mrb[0].mxu0
    %v7639 = vadd.f32 %v7599, %v7638
    %v7640 = vpop.f32.mrb[0].mxu0
    %v7641 = vpop.f32.mrb[0].mxu0
    %v7642 = vpop.f32.mrb[0].mxu0
    %7643 = vdwg.mxu0
    %7644 = vmatprep.subr.bf16.mxu0 0
    %7645 = vmatpush1.bf16.msra.mxu0 %v7452
    %7646 = vmatprep.subr.bf16.mxu0 0
    %7647 = vmatpush1.bf16.msra.mxu0 %v7453
    %7648 = vmatprep.subr.bf16.mxu0 0
    %7649 = vmatpush1.bf16.msra.mxu0 %v7454
    %7650 = vmatprep.subr.bf16.mxu0 0
    %7651 = vmatpush1.bf16.msra.mxu0 %v7455
    %7652 = vmatprep.subr.bf16.mxu0 0
    %7653 = vmatpush1.bf16.msra.mxu0 %v7456
    %7654 = vmatprep.subr.bf16.mxu0 0
    %7655 = vmatpush1.bf16.msra.mxu0 %v7457
    %7656 = vmatprep.subr.bf16.mxu0 0
    %7657 = vmatpush1.bf16.msra.mxu0 %v7458
    %7658 = vmatprep.subr.bf16.mxu0 0
    %7659 = vmatpush1.bf16.msra.mxu0 %v7459
    %7660 = vmatprep.subr.bf16.mxu0 0
    %7661 = vmatpush1.bf16.msra.mxu0 %v7460
    %7662 = vmatprep.subr.bf16.mxu0 0
    %7663 = vmatpush1.bf16.msra.mxu0 %v7461
    %7664 = vmatprep.subr.bf16.mxu0 0
    %7665 = vmatpush1.bf16.msra.mxu0 %v7462
    %7666 = vmatprep.subr.bf16.mxu0 0
    %7667 = vmatpush1.bf16.msra.mxu0 %v7463
    %7668 = vmatprep.subr.bf16.mxu0 0
    %7669 = vmatpush1.bf16.msra.mxu0 %v7464
    %7670 = vmatprep.subr.bf16.mxu0 0
    %7671 = vmatpush1.bf16.msra.mxu0 %v7465
    %7672 = vmatprep.subr.bf16.mxu0 0
    %7673 = vmatpush1.bf16.msra.mxu0 %v7466
    %7674 = vmatprep.subr.bf16.mxu0 0
    %7675 = vmatpush1.bf16.msra.mxu0 %v7467
    %7676 = vmatprep.mubr.bf16.mxu0 %v6984
    %7677 = vmatmul.mubr.bf16.gmra.mrb[0].mxu0 %v6983
    %v7678 = vpop.f32.mrb[0].mxu0
    %v7679 = vadd.f32 %v7639, %v7678
    %v7680 = vpop.f32.mrb[0].mxu0
    %v7681 = vpop.f32.mrb[0].mxu0
    %v7682 = vpop.f32.mrb[0].mxu0
    %7683 = vdwg.mxu0
    %7684 = vmatprep.subr.bf16.mxu0 0
    %7685 = vmatpush1.bf16.msra.mxu0 %v7468
    %7686 = vmatprep.subr.bf16.mxu0 0
    %7687 = vmatpush1.bf16.msra.mxu0 %v7469
    %7688 = vmatprep.subr.bf16.mxu0 0
    %7689 = vmatpush1.bf16.msra.mxu0 %v7470
    %7690 = vmatprep.subr.bf16.mxu0 0
    %7691 = vmatpush1.bf16.msra.mxu0 %v7471
    %7692 = vmatprep.subr.bf16.mxu0 0
    %7693 = vmatpush1.bf16.msra.mxu0 %v7472
    %7694 = vmatprep.subr.bf16.mxu0 0
    %7695 = vmatpush1.bf16.msra.mxu0 %v7473
    %7696 = vmatprep.subr.bf16.mxu0 0
    %7697 = vmatpush1.bf16.msra.mxu0 %v7474
    %7698 = vmatprep.subr.bf16.mxu0 0
    %7699 = vmatpush1.bf16.msra.mxu0 %v7475
    %7700 = vmatprep.subr.bf16.mxu0 0
    %7701 = vmatpush1.bf16.msra.mxu0 %v7476
    %7702 = vmatprep.subr.bf16.mxu0 0
    %7703 = vmatpush1.bf16.msra.mxu0 %v7477
    %7704 = vmatprep.subr.bf16.mxu0 0
    %7705 = vmatpush1.bf16.msra.mxu0 %v7478
    %7706 = vmatprep.subr.bf16.mxu0 0
    %7707 = vmatpush1.bf16.msra.mxu0 %v7479
    %7708 = vmatprep.subr.bf16.mxu0 0
    %7709 = vmatpush1.bf16.msra.mxu0 %v7480
    %7710 = vmatprep.subr.bf16.mxu0 0
    %7711 = vmatpush1.bf16.msra.mxu0 %v7481
    %7712 = vmatprep.subr.bf16.mxu0 0
    %7713 = vmatpush1.bf16.msra.mxu0 %v7482
    %7714 = vmatprep.subr.bf16.mxu0 0
    %7715 = vmatpush1.bf16.msra.mxu0 %v7483
    %7716 = vmatprep.mubr.bf16.mxu0 %v6986
    %7717 = vmatmul.mubr.bf16.gmra.mrb[0].mxu0 %v6985
    %v7718 = vpop.f32.mrb[0].mxu0
    %v7719 = vadd.f32 %v7679, %v7718
    %v7720 = vpop.f32.mrb[0].mxu0
    %v7721 = vpop.f32.mrb[0].mxu0
    %v7722 = vpop.f32.mrb[0].mxu0
    %7723 = vdwg.mxu0
    %7724 = vmatprep.subr.bf16.mxu0 0
    %7725 = vmatpush1.bf16.msra.mxu0 %v7484
    %7726 = vmatprep.subr.bf16.mxu0 0
    %7727 = vmatpush1.bf16.msra.mxu0 %v7485
    %7728 = vmatprep.subr.bf16.mxu0 0
    %7729 = vmatpush1.bf16.msra.mxu0 %v7486
    %7730 = vmatprep.subr.bf16.mxu0 0
    %7731 = vmatpush1.bf16.msra.mxu0 %v7487
    %7732 = vmatprep.subr.bf16.mxu0 0
    %7733 = vmatpush1.bf16.msra.mxu0 %v7488
    %7734 = vmatprep.subr.bf16.mxu0 0
    %7735 = vmatpush1.bf16.msra.mxu0 %v7489
    %7736 = vmatprep.subr.bf16.mxu0 0
    %7737 = vmatpush1.bf16.msra.mxu0 %v7490
    %7738 = vmatprep.subr.bf16.mxu0 0
    %7739 = vmatpush1.bf16.msra.mxu0 %v7491
    %7740 = vmatprep.subr.bf16.mxu0 0
    %7741 = vmatpush1.bf16.msra.mxu0 0
    %7742 = vmatprep.subr.bf16.mxu0 0
    %7743 = vmatpush1.bf16.msra.mxu0 0
    %7744 = vmatprep.subr.bf16.mxu0 0
    %7745 = vmatpush1.bf16.msra.mxu0 0
    %7746 = vmatprep.subr.bf16.mxu0 0
    %7747 = vmatpush1.bf16.msra.mxu0 0
    %7748 = vmatprep.subr.bf16.mxu0 0
    %7749 = vmatpush1.bf16.msra.mxu0 0
    %7750 = vmatprep.subr.bf16.mxu0 0
    %7751 = vmatpush1.bf16.msra.mxu0 0
    %7752 = vmatprep.subr.bf16.mxu0 0
    %7753 = vmatpush1.bf16.msra.mxu0 0
    %7754 = vmatprep.subr.bf16.mxu0 0
    %7755 = vmatpush1.bf16.msra.mxu0 0
    %7756 = vmatprep.mubr.bf16.mxu0 0
    %7757 = vmatmul.mubr.bf16.gmra.mrb[0].mxu0 %v6987
    %v7758 = vpop.f32.mrb[0].mxu0
    %v7759 = vadd.f32 %v7719, %v7758
    %v7760 = vpop.f32.mrb[0].mxu0
    %v7761 = vpop.f32.mrb[0].mxu0
    %v7762 = vpop.f32.mrb[0].mxu0
    %7763 = vdwg.mxu0
    %v7764 = vmul.f32 %v7759, 0.0069444445
    %v7765 = vpack.c.bf16 %v7764, %v7764
    %v7766 = vld [vmem:[#allocation17] sm:$0xff]
    %v7767 = vld [vmem:[#allocation17 + $0x8] sm:$0xff]
    %v7768 = vld [vmem:[#allocation17 + $0x10] sm:$0xff]
    %v7769 = vld [vmem:[#allocation17 + $0x18] sm:$0xff]
    %v7770 = vld [vmem:[#allocation17 + $0x20] sm:$0xf]
    %v7776 = vunpack.c.l.b16 %v7766
    %v7777 = vunpack.c.h.b16 %v7766
    %v7778 = vunpack.c.l.b16 %v7767
    %v7779 = vunpack.c.h.b16 %v7767
    %v7780 = vunpack.c.l.b16 %v7768
    %v7781 = vunpack.c.h.b16 %v7768
    %v7782 = vunpack.c.l.b16 %v7769
    %v7783 = vunpack.c.h.b16 %v7769
    %v7784 = vunpack.c.l.b16 %v7770
    %v7785 = vpack.c.b16 %v7776, %v7776
    %v7786 = vpack.c.b16 %v7777, %v7777
    %v7787 = vpack.c.b16 %v7778, %v7778
    %v7788 = vpack.c.b16 %v7779, %v7779
    %v7789 = vpack.c.b16 %v7780, %v7780
    %v7790 = vpack.c.b16 %v7781, %v7781
    %v7791 = vpack.c.b16 %v7782, %v7782
    %v7792 = vpack.c.b16 %v7783, %v7783
    %v7793 = vpack.c.b16 %v7784, %v7784
    %vm7794 = vcmask 64512
    %v7796 = vsel %vm7794, %v7765, 0
    %vm7798 = vcmask 1043456
    %v7800 = vsel %vm7798, %v7785, 0
    %v7803 = vsel %vm7798, %v7786, 0
    %v7806 = vsel %vm7798, %v7787, 0
    %v7809 = vsel %vm7798, %v7788, 0
    %v7812 = vsel %vm7798, %v7789, 0
    %v7815 = vsel %vm7798, %v7790, 0
    %v7818 = vsel %vm7798, %v7791, 0
    %v7821 = vsel %vm7798, %v7792, 0
    %v7824 = vsel %vm7798, %v7793, 0
    %7826 = vmatprep.subr.bf16.mxu0 %v7803
    %7827 = vmatpush1.bf16.msra.mxu0 %v7800
    %7828 = vmatprep.subr.bf16.mxu0 0
    %7829 = vmatpush1.bf16.msra.mxu0 0
    %7830 = vmatprep.subr.bf16.mxu0 0
    %7831 = vmatpush1.bf16.msra.mxu0 0
    %7832 = vmatprep.subr.bf16.mxu0 0
    %7833 = vmatpush1.bf16.msra.mxu0 0
    %7834 = vmatprep.subr.bf16.mxu0 0
    %7835 = vmatpush1.bf16.msra.mxu0 0
    %7836 = vmatprep.subr.bf16.mxu0 0
    %7837 = vmatpush1.bf16.msra.mxu0 0
    %7838 = vmatprep.subr.bf16.mxu0 0
    %7839 = vmatpush1.bf16.msra.mxu0 0
    %7840 = vmatprep.subr.bf16.mxu0 0
    %7841 = vmatpush1.bf16.msra.mxu0 0
    %7842 = vmatprep.subr.bf16.mxu0 0
    %7843 = vmatpush1.bf16.msra.mxu0 0
    %7844 = vmatprep.subr.bf16.mxu0 0
    %7845 = vmatpush1.bf16.msra.mxu0 0
    %7846 = vmatprep.subr.bf16.mxu0 0
    %7847 = vmatpush1.bf16.msra.mxu0 0
    %7848 = vmatprep.subr.bf16.mxu0 0
    %7849 = vmatpush1.bf16.msra.mxu0 0
    %7850 = vmatprep.subr.bf16.mxu0 0
    %7851 = vmatpush1.bf16.msra.mxu0 0
    %7852 = vmatprep.subr.bf16.mxu0 0
    %7853 = vmatpush1.bf16.msra.mxu0 0
    %7854 = vmatprep.subr.bf16.mxu0 0
    %7855 = vmatpush1.bf16.msra.mxu0 0
    %7856 = vmatprep.subr.bf16.mxu0 0
    %7857 = vmatpush1.bf16.msra.mxu0 0
    %7858 = vmatprep.mubr.bf16.mxu0 0
    %7859 = vmatmul.mubr.bf16.gmra.mrb[0].mxu0 %v7796
    %v7860 = vpop.f32.mrb[0].mxu0
    %v7861 = vadd.f32 0.0, %v7860
    %v7862 = vpop.f32.mrb[0].mxu0
    %v7863 = vadd.f32 0.0, %v7862
    %v7864 = vpop.f32.mrb[0].mxu0
    %v7865 = vpop.f32.mrb[0].mxu0
    %7866 = vdwg.mxu0
    %7867 = vmatprep.subr.bf16.mxu0 %v7809
    %7868 = vmatpush1.bf16.msra.mxu0 %v7806
    %7869 = vmatprep.subr.bf16.mxu0 0
    %7870 = vmatpush1.bf16.msra.mxu0 0
    %7871 = vmatprep.subr.bf16.mxu0 0
    %7872 = vmatpush1.bf16.msra.mxu0 0
    %7873 = vmatprep.subr.bf16.mxu0 0
    %7874 = vmatpush1.bf16.msra.mxu0 0
    %7875 = vmatprep.subr.bf16.mxu0 0
    %7876 = vmatpush1.bf16.msra.mxu0 0
    %7877 = vmatprep.subr.bf16.mxu0 0
    %7878 = vmatpush1.bf16.msra.mxu0 0
    %7879 = vmatprep.subr.bf16.mxu0 0
    %7880 = vmatpush1.bf16.msra.mxu0 0
    %7881 = vmatprep.subr.bf16.mxu0 0
    %7882 = vmatpush1.bf16.msra.mxu0 0
    %7883 = vmatprep.subr.bf16.mxu0 0
    %7884 = vmatpush1.bf16.msra.mxu0 0
    %7885 = vmatprep.subr.bf16.mxu0 0
    %7886 = vmatpush1.bf16.msra.mxu0 0
    %7887 = vmatprep.subr.bf16.mxu0 0
    %7888 = vmatpush1.bf16.msra.mxu0 0
    %7889 = vmatprep.subr.bf16.mxu0 0
    %7890 = vmatpush1.bf16.msra.mxu0 0
    %7891 = vmatprep.subr.bf16.mxu0 0
    %7892 = vmatpush1.bf16.msra.mxu0 0
    %7893 = vmatprep.subr.bf16.mxu0 0
    %7894 = vmatpush1.bf16.msra.mxu0 0
    %7895 = vmatprep.subr.bf16.mxu0 0
    %7896 = vmatpush1.bf16.msra.mxu0 0
    %7897 = vmatprep.subr.bf16.mxu0 0
    %7898 = vmatpush1.bf16.msra.mxu0 0
    %7899 = vmatprep.mubr.bf16.mxu0 0
    %7900 = vmatmul.mubr.bf16.gmra.mrb[0].mxu0 %v7796
    %v7901 = vpop.f32.mrb[0].mxu0
    %v7902 = vadd.f32 0.0, %v7901
    %v7903 = vpop.f32.mrb[0].mxu0
    %v7904 = vadd.f32 0.0, %v7903
    %v7905 = vpop.f32.mrb[0].mxu0
    %v7906 = vpop.f32.mrb[0].mxu0
    %7907 = vdwg.mxu0
    %7908 = vmatprep.subr.bf16.mxu0 %v7815
    %7909 = vmatpush1.bf16.msra.mxu0 %v7812
    %7910 = vmatprep.subr.bf16.mxu0 0
    %7911 = vmatpush1.bf16.msra.mxu0 0
    %7912 = vmatprep.subr.bf16.mxu0 0
    %7913 = vmatpush1.bf16.msra.mxu0 0
    %7914 = vmatprep.subr.bf16.mxu0 0
    %7915 = vmatpush1.bf16.msra.mxu0 0
    %7916 = vmatprep.subr.bf16.mxu0 0
    %7917 = vmatpush1.bf16.msra.mxu0 0
    %7918 = vmatprep.subr.bf16.mxu0 0
    %7919 = vmatpush1.bf16.msra.mxu0 0
    %7920 = vmatprep.subr.bf16.mxu0 0
    %7921 = vmatpush1.bf16.msra.mxu0 0
    %7922 = vmatprep.subr.bf16.mxu0 0
    %7923 = vmatpush1.bf16.msra.mxu0 0
    %7924 = vmatprep.subr.bf16.mxu0 0
    %7925 = vmatpush1.bf16.msra.mxu0 0
    %7926 = vmatprep.subr.bf16.mxu0 0
    %7927 = vmatpush1.bf16.msra.mxu0 0
    %7928 = vmatprep.subr.bf16.mxu0 0
    %7929 = vmatpush1.bf16.msra.mxu0 0
    %7930 = vmatprep.subr.bf16.mxu0 0
    %7931 = vmatpush1.bf16.msra.mxu0 0
    %7932 = vmatprep.subr.bf16.mxu0 0
    %7933 = vmatpush1.bf16.msra.mxu0 0
    %7934 = vmatprep.subr.bf16.mxu0 0
    %7935 = vmatpush1.bf16.msra.mxu0 0
    %7936 = vmatprep.subr.bf16.mxu0 0
    %7937 = vmatpush1.bf16.msra.mxu0 0
    %7938 = vmatprep.subr.bf16.mxu0 0
    %7939 = vmatpush1.bf16.msra.mxu0 0
    %7940 = vmatprep.mubr.bf16.mxu0 0
    %7941 = vmatmul.mubr.bf16.gmra.mrb[0].mxu0 %v7796
    %v7942 = vpop.f32.mrb[0].mxu0
    %v7943 = vadd.f32 0.0, %v7942
    %v7944 = vpop.f32.mrb[0].mxu0
    %v7945 = vadd.f32 0.0, %v7944
    %v7946 = vpop.f32.mrb[0].mxu0
    %v7947 = vpop.f32.mrb[0].mxu0
    %7948 = vdwg.mxu0
    %7949 = vmatprep.subr.bf16.mxu0 %v7821
    %7950 = vmatpush1.bf16.msra.mxu0 %v7818
    %7951 = vmatprep.subr.bf16.mxu0 0
    %7952 = vmatpush1.bf16.msra.mxu0 0
    %7953 = vmatprep.subr.bf16.mxu0 0
    %7954 = vmatpush1.bf16.msra.mxu0 0
    %7955 = vmatprep.subr.bf16.mxu0 0
    %7956 = vmatpush1.bf16.msra.mxu0 0
    %7957 = vmatprep.subr.bf16.mxu0 0
    %7958 = vmatpush1.bf16.msra.mxu0 0
    %7959 = vmatprep.subr.bf16.mxu0 0
    %7960 = vmatpush1.bf16.msra.mxu0 0
    %7961 = vmatprep.subr.bf16.mxu0 0
    %7962 = vmatpush1.bf16.msra.mxu0 0
    %7963 = vmatprep.subr.bf16.mxu0 0
    %7964 = vmatpush1.bf16.msra.mxu0 0
    %7965 = vmatprep.subr.bf16.mxu0 0
    %7966 = vmatpush1.bf16.msra.mxu0 0
    %7967 = vmatprep.subr.bf16.mxu0 0
    %7968 = vmatpush1.bf16.msra.mxu0 0
    %7969 = vmatprep.subr.bf16.mxu0 0
    %7970 = vmatpush1.bf16.msra.mxu0 0
    %7971 = vmatprep.subr.bf16.mxu0 0
    %7972 = vmatpush1.bf16.msra.mxu0 0
    %7973 = vmatprep.subr.bf16.mxu0 0
    %7974 = vmatpush1.bf16.msra.mxu0 0
    %7975 = vmatprep.subr.bf16.mxu0 0
    %7976 = vmatpush1.bf16.msra.mxu0 0
    %7977 = vmatprep.subr.bf16.mxu0 0
    %7978 = vmatpush1.bf16.msra.mxu0 0
    %7979 = vmatprep.subr.bf16.mxu0 0
    %7980 = vmatpush1.bf16.msra.mxu0 0
    %7981 = vmatprep.mubr.bf16.mxu0 0
    %7982 = vmatmul.mubr.bf16.gmra.mrb[0].mxu0 %v7796
    %v7983 = vpop.f32.mrb[0].mxu0
    %v7984 = vadd.f32 0.0, %v7983
    %v7985 = vpop.f32.mrb[0].mxu0
    %v7986 = vadd.f32 0.0, %v7985
    %v7987 = vpop.f32.mrb[0].mxu0
    %v7988 = vpop.f32.mrb[0].mxu0
    %7989 = vdwg.mxu0
    %7990 = vmatprep.subr.bf16.mxu0 0
    %7991 = vmatpush1.bf16.msra.mxu0 %v7824
    %7992 = vmatprep.subr.bf16.mxu0 0
    %7993 = vmatpush1.bf16.msra.mxu0 0
    %7994 = vmatprep.subr.bf16.mxu0 0
    %7995 = vmatpush1.bf16.msra.mxu0 0
    %7996 = vmatprep.subr.bf16.mxu0 0
    %7997 = vmatpush1.bf16.msra.mxu0 0
    %7998 = vmatprep.subr.bf16.mxu0 0
    %7999 = vmatpush1.bf16.msra.mxu0 0
    %8000 = vmatprep.subr.bf16.mxu0 0
    %8001 = vmatpush1.bf16.msra.mxu0 0
    %8002 = vmatprep.subr.bf16.mxu0 0
    %8003 = vmatpush1.bf16.msra.mxu0 0
    %8004 = vmatprep.subr.bf16.mxu0 0
    %8005 = vmatpush1.bf16.msra.mxu0 0
    %8006 = vmatprep.subr.bf16.mxu0 0
    %8007 = vmatpush1.bf16.msra.mxu0 0
    %8008 = vmatprep.subr.bf16.mxu0 0
    %8009 = vmatpush1.bf16.msra.mxu0 0
    %8010 = vmatprep.subr.bf16.mxu0 0
    %8011 = vmatpush1.bf16.msra.mxu0 0
    %8012 = vmatprep.subr.bf16.mxu0 0
    %8013 = vmatpush1.bf16.msra.mxu0 0
    %8014 = vmatprep.subr.bf16.mxu0 0
    %8015 = vmatpush1.bf16.msra.mxu0 0
    %8016 = vmatprep.subr.bf16.mxu0 0
    %8017 = vmatpush1.bf16.msra.mxu0 0
    %8018 = vmatprep.subr.bf16.mxu0 0
    %8019 = vmatpush1.bf16.msra.mxu0 0
    %8020 = vmatprep.subr.bf16.mxu0 0
    %8021 = vmatpush1.bf16.msra.mxu0 0
    %8022 = vmatprep.mubr.bf16.mxu0 0
    %8023 = vmatmul.mubr.bf16.gmra.mrb[0].mxu0 %v7796
    %v8024 = vpop.f32.mrb[0].mxu0
    %v8025 = vadd.f32 0.0, %v8024
    %v8026 = vpop.f32.mrb[0].mxu0
    %v8027 = vpop.f32.mrb[0].mxu0
    %v8028 = vpop.f32.mrb[0].mxu0
    %8029 = vdwg.mxu0
    %v8030 = vsub.f32 %v6970, %v7861
    %v8031 = vsub.f32 %v6971, %v7863
    %v8032 = vsub.f32 %v6972, %v7902
    %v8033 = vsub.f32 %v6973, %v7904
    %v8034 = vsub.f32 %v6974, %v7943
    %v8035 = vsub.f32 %v6975, %v7945
    %v8036 = vsub.f32 %v6976, %v7984
    %v8037 = vsub.f32 %v6977, %v7986
    %v8038 = vsub.f32 %v6978, %v8025
    %v8039 = vmul.f32 %v8030, %v8030
    %v8040 = vmul.f32 %v8031, %v8031
    %v8041 = vmul.f32 %v8032, %v8032
    %v8042 = vmul.f32 %v8033, %v8033
    %v8043 = vmul.f32 %v8034, %v8034
    %v8044 = vmul.f32 %v8035, %v8035
    %v8045 = vmul.f32 %v8036, %v8036
    %v8046 = vmul.f32 %v8037, %v8037
    %v8047 = vmul.f32 %v8038, %v8038
    %v8048 = vpack.c.bf16 %v8039, %v8039
    %v8049 = vpack.c.bf16 %v8040, %v8040
    %v8050 = vpack.c.bf16 %v8041, %v8041
    %v8051 = vpack.c.bf16 %v8042, %v8042
    %v8052 = vpack.c.bf16 %v8043, %v8043
    %v8053 = vpack.c.bf16 %v8044, %v8044
    %v8054 = vpack.c.bf16 %v8045, %v8045
    %v8055 = vpack.c.bf16 %v8046, %v8046
    %v8056 = vpack.c.bf16 %v8047, %v8047
    %8057 = vmatprep.subr.bf16.mxu0 0
    %8058 = vmatpush1.bf16.msra.mxu0 %v7420
    %8059 = vmatprep.subr.bf16.mxu0 0
    %8060 = vmatpush1.bf16.msra.mxu0 %v7421
    %8061 = vmatprep.subr.bf16.mxu0 0
    %8062 = vmatpush1.bf16.msra.mxu0 %v7422
    %8063 = vmatprep.subr.bf16.mxu0 0
    %8064 = vmatpush1.bf16.msra.mxu0 %v7423
    %8065 = vmatprep.subr.bf16.mxu0 0
    %8066 = vmatpush1.bf16.msra.mxu0 %v7424
    %8067 = vmatprep.subr.bf16.mxu0 0
    %8068 = vmatpush1.bf16.msra.mxu0 %v7425
    %8069 = vmatprep.subr.bf16.mxu0 0
    %8070 = vmatpush1.bf16.msra.mxu0 %v7426
    %8071 = vmatprep.subr.bf16.mxu0 0
    %8072 = vmatpush1.bf16.msra.mxu0 %v7427
    %8073 = vmatprep.subr.bf16.mxu0 0
    %8074 = vmatpush1.bf16.msra.mxu0 %v7428
    %8075 = vmatprep.subr.bf16.mxu0 0
    %8076 = vmatpush1.bf16.msra.mxu0 %v7429
    %8077 = vmatprep.subr.bf16.mxu0 0
    %8078 = vmatpush1.bf16.msra.mxu0 %v7430
    %8079 = vmatprep.subr.bf16.mxu0 0
    %8080 = vmatpush1.bf16.msra.mxu0 %v7431
    %8081 = vmatprep.subr.bf16.mxu0 0
    %8082 = vmatpush1.bf16.msra.mxu0 %v7432
    %8083 = vmatprep.subr.bf16.mxu0 0
    %8084 = vmatpush1.bf16.msra.mxu0 %v7433
    %8085 = vmatprep.subr.bf16.mxu0 0
    %8086 = vmatpush1.bf16.msra.mxu0 %v7434
    %8087 = vmatprep.subr.bf16.mxu0 0
    %8088 = vmatpush1.bf16.msra.mxu0 %v7435
    %8089 = vmatprep.mubr.bf16.mxu0 %v8049
    %8090 = vmatmul.mubr.bf16.gmra.mrb[0].mxu0 %v8048
    %v8091 = vpop.f32.mrb[0].mxu0
    %v8092 = vadd.f32 0.0, %v8091
    %v8093 = vpop.f32.mrb[0].mxu0
    %v8094 = vpop.f32.mrb[0].mxu0
    %v8095 = vpop.f32.mrb[0].mxu0
    %8096 = vdwg.mxu0
    %8097 = vmatprep.subr.bf16.mxu0 0
    %8098 = vmatpush1.bf16.msra.mxu0 %v7436
    %8099 = vmatprep.subr.bf16.mxu0 0
    %8100 = vmatpush1.bf16.msra.mxu0 %v7437
    %8101 = vmatprep.subr.bf16.mxu0 0
    %8102 = vmatpush1.bf16.msra.mxu0 %v7438
    %8103 = vmatprep.subr.bf16.mxu0 0
    %8104 = vmatpush1.bf16.msra.mxu0 %v7439
    %8105 = vmatprep.subr.bf16.mxu0 0
    %8106 = vmatpush1.bf16.msra.mxu0 %v7440
    %8107 = vmatprep.subr.bf16.mxu0 0
    %8108 = vmatpush1.bf16.msra.mxu0 %v7441
    %8109 = vmatprep.subr.bf16.mxu0 0
    %8110 = vmatpush1.bf16.msra.mxu0 %v7442
    %8111 = vmatprep.subr.bf16.mxu0 0
    %8112 = vmatpush1.bf16.msra.mxu0 %v7443
    %8113 = vmatprep.subr.bf16.mxu0 0
    %8114 = vmatpush1.bf16.msra.mxu0 %v7444
    %8115 = vmatprep.subr.bf16.mxu0 0
    %8116 = vmatpush1.bf16.msra.mxu0 %v7445
    %8117 = vmatprep.subr.bf16.mxu0 0
    %8118 = vmatpush1.bf16.msra.mxu0 %v7446
    %8119 = vmatprep.subr.bf16.mxu0 0
    %8120 = vmatpush1.bf16.msra.mxu0 %v7447
    %8121 = vmatprep.subr.bf16.mxu0 0
    %8122 = vmatpush1.bf16.msra.mxu0 %v7448
    %8123 = vmatprep.subr.bf16.mxu0 0
    %8124 = vmatpush1.bf16.msra.mxu0 %v7449
    %8125 = vmatprep.subr.bf16.mxu0 0
    %8126 = vmatpush1.bf16.msra.mxu0 %v7450
    %8127 = vmatprep.subr.bf16.mxu0 0
    %8128 = vmatpush1.bf16.msra.mxu0 %v7451
    %8129 = vmatprep.mubr.bf16.mxu0 %v8051
    %8130 = vmatmul.mubr.bf16.gmra.mrb[0].mxu0 %v8050
    %v8131 = vpop.f32.mrb[0].mxu0
    %v8132 = vadd.f32 %v8092, %v8131
    %v8133 = vpop.f32.mrb[0].mxu0
    %v8134 = vpop.f32.mrb[0].mxu0
    %v8135 = vpop.f32.mrb[0].mxu0
    %8136 = vdwg.mxu0
    %8137 = vmatprep.subr.bf16.mxu0 0
    %8138 = vmatpush1.bf16.msra.mxu0 %v7452
    %8139 = vmatprep.subr.bf16.mxu0 0
    %8140 = vmatpush1.bf16.msra.mxu0 %v7453
    %8141 = vmatprep.subr.bf16.mxu0 0
    %8142 = vmatpush1.bf16.msra.mxu0 %v7454
    %8143 = vmatprep.subr.bf16.mxu0 0
    %8144 = vmatpush1.bf16.msra.mxu0 %v7455
    %8145 = vmatprep.subr.bf16.mxu0 0
    %8146 = vmatpush1.bf16.msra.mxu0 %v7456
    %8147 = vmatprep.subr.bf16.mxu0 0
    %8148 = vmatpush1.bf16.msra.mxu0 %v7457
    %8149 = vmatprep.subr.bf16.mxu0 0
    %8150 = vmatpush1.bf16.msra.mxu0 %v7458
    %8151 = vmatprep.subr.bf16.mxu0 0
    %8152 = vmatpush1.bf16.msra.mxu0 %v7459
    %8153 = vmatprep.subr.bf16.mxu0 0
    %8154 = vmatpush1.bf16.msra.mxu0 %v7460
    %8155 = vmatprep.subr.bf16.mxu0 0
    %8156 = vmatpush1.bf16.msra.mxu0 %v7461
    %8157 = vmatprep.subr.bf16.mxu0 0
    %8158 = vmatpush1.bf16.msra.mxu0 %v7462
    %8159 = vmatprep.subr.bf16.mxu0 0
    %8160 = vmatpush1.bf16.msra.mxu0 %v7463
    %8161 = vmatprep.subr.bf16.mxu0 0
    %8162 = vmatpush1.bf16.msra.mxu0 %v7464
    %8163 = vmatprep.subr.bf16.mxu0 0
    %8164 = vmatpush1.bf16.msra.mxu0 %v7465
    %8165 = vmatprep.subr.bf16.mxu0 0
    %8166 = vmatpush1.bf16.msra.mxu0 %v7466
    %8167 = vmatprep.subr.bf16.mxu0 0
    %8168 = vmatpush1.bf16.msra.mxu0 %v7467
    %8169 = vmatprep.mubr.bf16.mxu0 %v8053
    %8170 = vmatmul.mubr.bf16.gmra.mrb[0].mxu0 %v8052
    %v8171 = vpop.f32.mrb[0].mxu0
    %v8172 = vadd.f32 %v8132, %v8171
    %v8173 = vpop.f32.mrb[0].mxu0
    %v8174 = vpop.f32.mrb[0].mxu0
    %v8175 = vpop.f32.mrb[0].mxu0
    %8176 = vdwg.mxu0
    %8177 = vmatprep.subr.bf16.mxu0 0
    %8178 = vmatpush1.bf16.msra.mxu0 %v7468
    %8179 = vmatprep.subr.bf16.mxu0 0
    %8180 = vmatpush1.bf16.msra.mxu0 %v7469
    %8181 = vmatprep.subr.bf16.mxu0 0
    %8182 = vmatpush1.bf16.msra.mxu0 %v7470
    %8183 = vmatprep.subr.bf16.mxu0 0
    %8184 = vmatpush1.bf16.msra.mxu0 %v7471
    %8185 = vmatprep.subr.bf16.mxu0 0
    %8186 = vmatpush1.bf16.msra.mxu0 %v7472
    %8187 = vmatprep.subr.bf16.mxu0 0
    %8188 = vmatpush1.bf16.msra.mxu0 %v7473
    %8189 = vmatprep.subr.bf16.mxu0 0
    %8190 = vmatpush1.bf16.msra.mxu0 %v7474
    %8191 = vmatprep.subr.bf16.mxu0 0
    %8192 = vmatpush1.bf16.msra.mxu0 %v7475
    %8193 = vmatprep.subr.bf16.mxu0 0
    %8194 = vmatpush1.bf16.msra.mxu0 %v7476
    %8195 = vmatprep.subr.bf16.mxu0 0
    %8196 = vmatpush1.bf16.msra.mxu0 %v7477
    %8197 = vmatprep.subr.bf16.mxu0 0
    %8198 = vmatpush1.bf16.msra.mxu0 %v7478
    %8199 = vmatprep.subr.bf16.mxu0 0
    %8200 = vmatpush1.bf16.msra.mxu0 %v7479
    %8201 = vmatprep.subr.bf16.mxu0 0
    %8202 = vmatpush1.bf16.msra.mxu0 %v7480
    %8203 = vmatprep.subr.bf16.mxu0 0
    %8204 = vmatpush1.bf16.msra.mxu0 %v7481
    %8205 = vmatprep.subr.bf16.mxu0 0
    %8206 = vmatpush1.bf16.msra.mxu0 %v7482
    %8207 = vmatprep.subr.bf16.mxu0 0
    %8208 = vmatpush1.bf16.msra.mxu0 %v7483
    %8209 = vmatprep.mubr.bf16.mxu0 %v8055
    %8210 = vmatmul.mubr.bf16.gmra.mrb[0].mxu0 %v8054
    %v8211 = vpop.f32.mrb[0].mxu0
    %v8212 = vadd.f32 %v8172, %v8211
    %v8213 = vpop.f32.mrb[0].mxu0
    %v8214 = vpop.f32.mrb[0].mxu0
    %v8215 = vpop.f32.mrb[0].mxu0
    %8216 = vdwg.mxu0
    %8217 = vmatprep.subr.bf16.mxu0 0
    %8218 = vmatpush1.bf16.msra.mxu0 %v7484
    %8219 = vmatprep.subr.bf16.mxu0 0
    %8220 = vmatpush1.bf16.msra.mxu0 %v7485
    %8221 = vmatprep.subr.bf16.mxu0 0
    %8222 = vmatpush1.bf16.msra.mxu0 %v7486
    %8223 = vmatprep.subr.bf16.mxu0 0
    %8224 = vmatpush1.bf16.msra.mxu0 %v7487
    %8225 = vmatprep.subr.bf16.mxu0 0
    %8226 = vmatpush1.bf16.msra.mxu0 %v7488
    %8227 = vmatprep.subr.bf16.mxu0 0
    %8228 = vmatpush1.bf16.msra.mxu0 %v7489
    %8229 = vmatprep.subr.bf16.mxu0 0
    %8230 = vmatpush1.bf16.msra.mxu0 %v7490
    %8231 = vmatprep.subr.bf16.mxu0 0
    %8232 = vmatpush1.bf16.msra.mxu0 %v7491
    %8233 = vmatprep.subr.bf16.mxu0 0
    %8234 = vmatpush1.bf16.msra.mxu0 0
    %8235 = vmatprep.subr.bf16.mxu0 0
    %8236 = vmatpush1.bf16.msra.mxu0 0
    %8237 = vmatprep.subr.bf16.mxu0 0
    %8238 = vmatpush1.bf16.msra.mxu0 0
    %8239 = vmatprep.subr.bf16.mxu0 0
    %8240 = vmatpush1.bf16.msra.mxu0 0
    %8241 = vmatprep.subr.bf16.mxu0 0
    %8242 = vmatpush1.bf16.msra.mxu0 0
    %8243 = vmatprep.subr.bf16.mxu0 0
    %8244 = vmatpush1.bf16.msra.mxu0 0
    %8245 = vmatprep.subr.bf16.mxu0 0
    %8246 = vmatpush1.bf16.msra.mxu0 0
    %8247 = vmatprep.subr.bf16.mxu0 0
    %8248 = vmatpush1.bf16.msra.mxu0 0
    %8249 = vmatprep.mubr.bf16.mxu0 0
    %8250 = vmatmul.mubr.bf16.gmra.mrb[0].mxu0 %v8056
    %v8251 = vpop.f32.mrb[0].mxu0
    %v8252 = vadd.f32 %v8212, %v8251
    %v8253 = vpop.f32.mrb[0].mxu0
    %v8254 = vpop.f32.mrb[0].mxu0
    %v8255 = vpop.f32.mrb[0].mxu0
    %8256 = vdwg.mxu0
    %v8257 = vmul.f32 %v8252, 0.0069444445
    %v8258 = vadd.f32 %v8257, 1e-05
    %v8259 = vrsqrt.pop %v8258
    %v8260 = vpack.c.bf16 %v8259, %v8259
    %v8262 = vsel %vm7794, %v8260, 0
    %8264 = vmatprep.subr.bf16.mxu0 %v7803
    %8265 = vmatpush1.bf16.msra.mxu0 %v7800
    %8266 = vmatprep.subr.bf16.mxu0 0
    %8267 = vmatpush1.bf16.msra.mxu0 0
    %8268 = vmatprep.subr.bf16.mxu0 0
    %8269 = vmatpush1.bf16.msra.mxu0 0
    %8270 = vmatprep.subr.bf16.mxu0 0
    %8271 = vmatpush1.bf16.msra.mxu0 0
    %8272 = vmatprep.subr.bf16.mxu0 0
    %8273 = vmatpush1.bf16.msra.mxu0 0
    %8274 = vmatprep.subr.bf16.mxu0 0
    %8275 = vmatpush1.bf16.msra.mxu0 0
    %8276 = vmatprep.subr.bf16.mxu0 0
    %8277 = vmatpush1.bf16.msra.mxu0 0
    %8278 = vmatprep.subr.bf16.mxu0 0
    %8279 = vmatpush1.bf16.msra.mxu0 0
    %8280 = vmatprep.subr.bf16.mxu0 0
    %8281 = vmatpush1.bf16.msra.mxu0 0
    %8282 = vmatprep.subr.bf16.mxu0 0
    %8283 = vmatpush1.bf16.msra.mxu0 0
    %8284 = vmatprep.subr.bf16.mxu0 0
    %8285 = vmatpush1.bf16.msra.mxu0 0
    %8286 = vmatprep.subr.bf16.mxu0 0
    %8287 = vmatpush1.bf16.msra.mxu0 0
    %8288 = vmatprep.subr.bf16.mxu0 0
    %8289 = vmatpush1.bf16.msra.mxu0 0
    %8290 = vmatprep.subr.bf16.mxu0 0
    %8291 = vmatpush1.bf16.msra.mxu0 0
    %8292 = vmatprep.subr.bf16.mxu0 0
    %8293 = vmatpush1.bf16.msra.mxu0 0
    %8294 = vmatprep.subr.bf16.mxu0 0
    %8295 = vmatpush1.bf16.msra.mxu0 0
    %8296 = vmatprep.mubr.bf16.mxu0 0
    %8297 = vmatmul.mubr.bf16.gmra.mrb[0].mxu0 %v8262
    %v8298 = vpop.f32.mrb[0].mxu0
    %v8299 = vadd.f32 0.0, %v8298
    %v8300 = vpop.f32.mrb[0].mxu0
    %v8301 = vadd.f32 0.0, %v8300
    %v8302 = vpop.f32.mrb[0].mxu0
    %v8303 = vpop.f32.mrb[0].mxu0
    %8304 = vdwg.mxu0
    %8305 = vmatprep.subr.bf16.mxu0 %v7809
    %8306 = vmatpush1.bf16.msra.mxu0 %v7806
    %8307 = vmatprep.subr.bf16.mxu0 0
    %8308 = vmatpush1.bf16.msra.mxu0 0
    %8309 = vmatprep.subr.bf16.mxu0 0
    %8310 = vmatpush1.bf16.msra.mxu0 0
    %8311 = vmatprep.subr.bf16.mxu0 0
    %8312 = vmatpush1.bf16.msra.mxu0 0
    %8313 = vmatprep.subr.bf16.mxu0 0
    %8314 = vmatpush1.bf16.msra.mxu0 0
    %8315 = vmatprep.subr.bf16.mxu0 0
    %8316 = vmatpush1.bf16.msra.mxu0 0
    %8317 = vmatprep.subr.bf16.mxu0 0
    %8318 = vmatpush1.bf16.msra.mxu0 0
    %8319 = vmatprep.subr.bf16.mxu0 0
    %8320 = vmatpush1.bf16.msra.mxu0 0
    %8321 = vmatprep.subr.bf16.mxu0 0
    %8322 = vmatpush1.bf16.msra.mxu0 0
    %8323 = vmatprep.subr.bf16.mxu0 0
    %8324 = vmatpush1.bf16.msra.mxu0 0
    %8325 = vmatprep.subr.bf16.mxu0 0
    %8326 = vmatpush1.bf16.msra.mxu0 0
    %8327 = vmatprep.subr.bf16.mxu0 0
    %8328 = vmatpush1.bf16.msra.mxu0 0
    %8329 = vmatprep.subr.bf16.mxu0 0
    %8330 = vmatpush1.bf16.msra.mxu0 0
    %8331 = vmatprep.subr.bf16.mxu0 0
    %8332 = vmatpush1.bf16.msra.mxu0 0
    %8333 = vmatprep.subr.bf16.mxu0 0
    %8334 = vmatpush1.bf16.msra.mxu0 0
    %8335 = vmatprep.subr.bf16.mxu0 0
    %8336 = vmatpush1.bf16.msra.mxu0 0
    %8337 = vmatprep.mubr.bf16.mxu0 0
    %8338 = vmatmul.mubr.bf16.gmra.mrb[0].mxu0 %v8262
    %v8339 = vpop.f32.mrb[0].mxu0
    %v8340 = vadd.f32 0.0, %v8339
    %v8341 = vpop.f32.mrb[0].mxu0
    %v8342 = vadd.f32 0.0, %v8341
    %v8343 = vpop.f32.mrb[0].mxu0
    %v8344 = vpop.f32.mrb[0].mxu0
    %8345 = vdwg.mxu0
    %8346 = vmatprep.subr.bf16.mxu0 %v7815
    %8347 = vmatpush1.bf16.msra.mxu0 %v7812
    %8348 = vmatprep.subr.bf16.mxu0 0
    %8349 = vmatpush1.bf16.msra.mxu0 0
    %8350 = vmatprep.subr.bf16.mxu0 0
    %8351 = vmatpush1.bf16.msra.mxu0 0
    %8352 = vmatprep.subr.bf16.mxu0 0
    %8353 = vmatpush1.bf16.msra.mxu0 0
    %8354 = vmatprep.subr.bf16.mxu0 0
    %8355 = vmatpush1.bf16.msra.mxu0 0
    %8356 = vmatprep.subr.bf16.mxu0 0
    %8357 = vmatpush1.bf16.msra.mxu0 0
    %8358 = vmatprep.subr.bf16.mxu0 0
    %8359 = vmatpush1.bf16.msra.mxu0 0
    %8360 = vmatprep.subr.bf16.mxu0 0
    %8361 = vmatpush1.bf16.msra.mxu0 0
    %8362 = vmatprep.subr.bf16.mxu0 0
    %8363 = vmatpush1.bf16.msra.mxu0 0
    %8364 = vmatprep.subr.bf16.mxu0 0
    %8365 = vmatpush1.bf16.msra.mxu0 0
    %8366 = vmatprep.subr.bf16.mxu0 0
    %8367 = vmatpush1.bf16.msra.mxu0 0
    %8368 = vmatprep.subr.bf16.mxu0 0
    %8369 = vmatpush1.bf16.msra.mxu0 0
    %8370 = vmatprep.subr.bf16.mxu0 0
    %8371 = vmatpush1.bf16.msra.mxu0 0
    %8372 = vmatprep.subr.bf16.mxu0 0
    %8373 = vmatpush1.bf16.msra.mxu0 0
    %8374 = vmatprep.subr.bf16.mxu0 0
    %8375 = vmatpush1.bf16.msra.mxu0 0
    %8376 = vmatprep.subr.bf16.mxu0 0
    %8377 = vmatpush1.bf16.msra.mxu0 0
    %8378 = vmatprep.mubr.bf16.mxu0 0
    %8379 = vmatmul.mubr.bf16.gmra.mrb[0].mxu0 %v8262
    %v8380 = vpop.f32.mrb[0].mxu0
    %v8381 = vadd.f32 0.0, %v8380
    %v8382 = vpop.f32.mrb[0].mxu0
    %v8383 = vadd.f32 0.0, %v8382
    %v8384 = vpop.f32.mrb[0].mxu0
    %v8385 = vpop.f32.mrb[0].mxu0
    %8386 = vdwg.mxu0
    %8387 = vmatprep.subr.bf16.mxu0 %v7821
    %8388 = vmatpush1.bf16.msra.mxu0 %v7818
    %8389 = vmatprep.subr.bf16.mxu0 0
    %8390 = vmatpush1.bf16.msra.mxu0 0
    %8391 = vmatprep.subr.bf16.mxu0 0
    %8392 = vmatpush1.bf16.msra.mxu0 0
    %8393 = vmatprep.subr.bf16.mxu0 0
    %8394 = vmatpush1.bf16.msra.mxu0 0
    %8395 = vmatprep.subr.bf16.mxu0 0
    %8396 = vmatpush1.bf16.msra.mxu0 0
    %8397 = vmatprep.subr.bf16.mxu0 0
    %8398 = vmatpush1.bf16.msra.mxu0 0
    %8399 = vmatprep.subr.bf16.mxu0 0
    %8400 = vmatpush1.bf16.msra.mxu0 0
    %8401 = vmatprep.subr.bf16.mxu0 0
    %8402 = vmatpush1.bf16.msra.mxu0 0
    %8403 = vmatprep.subr.bf16.mxu0 0
    %8404 = vmatpush1.bf16.msra.mxu0 0
    %8405 = vmatprep.subr.bf16.mxu0 0
    %8406 = vmatpush1.bf16.msra.mxu0 0
    %8407 = vmatprep.subr.bf16.mxu0 0
    %8408 = vmatpush1.bf16.msra.mxu0 0
    %8409 = vmatprep.subr.bf16.mxu0 0
    %8410 = vmatpush1.bf16.msra.mxu0 0
    %8411 = vmatprep.subr.bf16.mxu0 0
    %8412 = vmatpush1.bf16.msra.mxu0 0
    %8413 = vmatprep.subr.bf16.mxu0 0
    %8414 = vmatpush1.bf16.msra.mxu0 0
    %8415 = vmatprep.subr.bf16.mxu0 0
    %8416 = vmatpush1.bf16.msra.mxu0 0
    %8417 = vmatprep.subr.bf16.mxu0 0
    %8418 = vmatpush1.bf16.msra.mxu0 0
    %8419 = vmatprep.mubr.bf16.mxu0 0
    %8420 = vmatmul.mubr.bf16.gmra.mrb[0].mxu0 %v8262
    %v8421 = vpop.f32.mrb[0].mxu0
    %v8422 = vadd.f32 0.0, %v8421
    %v8423 = vpop.f32.mrb[0].mxu0
    %v8424 = vadd.f32 0.0, %v8423
    %v8425 = vpop.f32.mrb[0].mxu0
    %v8426 = vpop.f32.mrb[0].mxu0
    %8427 = vdwg.mxu0
    %8428 = vmatprep.subr.bf16.mxu0 0
    %8429 = vmatpush1.bf16.msra.mxu0 %v7824
    %8430 = vmatprep.subr.bf16.mxu0 0
    %8431 = vmatpush1.bf16.msra.mxu0 0
    %8432 = vmatprep.subr.bf16.mxu0 0
    %8433 = vmatpush1.bf16.msra.mxu0 0
    %8434 = vmatprep.subr.bf16.mxu0 0
    %8435 = vmatpush1.bf16.msra.mxu0 0
    %8436 = vmatprep.subr.bf16.mxu0 0
    %8437 = vmatpush1.bf16.msra.mxu0 0
    %8438 = vmatprep.subr.bf16.mxu0 0
    %8439 = vmatpush1.bf16.msra.mxu0 0
    %8440 = vmatprep.subr.bf16.mxu0 0
    %8441 = vmatpush1.bf16.msra.mxu0 0
    %8442 = vmatprep.subr.bf16.mxu0 0
    %8443 = vmatpush1.bf16.msra.mxu0 0
    %8444 = vmatprep.subr.bf16.mxu0 0
    %8445 = vmatpush1.bf16.msra.mxu0 0
    %8446 = vmatprep.subr.bf16.mxu0 0
    %8447 = vmatpush1.bf16.msra.mxu0 0
    %8448 = vmatprep.subr.bf16.mxu0 0
    %8449 = vmatpush1.bf16.msra.mxu0 0
    %8450 = vmatprep.subr.bf16.mxu0 0
    %8451 = vmatpush1.bf16.msra.mxu0 0
    %8452 = vmatprep.subr.bf16.mxu0 0
    %8453 = vmatpush1.bf16.msra.mxu0 0
    %8454 = vmatprep.subr.bf16.mxu0 0
    %8455 = vmatpush1.bf16.msra.mxu0 0
    %8456 = vmatprep.subr.bf16.mxu0 0
    %8457 = vmatpush1.bf16.msra.mxu0 0
    %8458 = vmatprep.subr.bf16.mxu0 0
    %8459 = vmatpush1.bf16.msra.mxu0 0
    %8460 = vmatprep.mubr.bf16.mxu0 0
    %8461 = vmatmul.mubr.bf16.gmra.mrb[0].mxu0 %v8262
    %v8462 = vpop.f32.mrb[0].mxu0
    %v8463 = vadd.f32 0.0, %v8462
    %v8464 = vpop.f32.mrb[0].mxu0
    %v8465 = vpop.f32.mrb[0].mxu0
    %v8466 = vpop.f32.mrb[0].mxu0
    %8467 = vdwg.mxu0
    %v8468 = vmul.f32 %v8030, %v8299
    %v8469 = vmul.f32 %v8031, %v8301
    %v8470 = vmul.f32 %v8032, %v8340
    %v8471 = vmul.f32 %v8033, %v8342
    %v8472 = vmul.f32 %v8034, %v8381
    %v8473 = vmul.f32 %v8035, %v8383
    %v8474 = vmul.f32 %v8036, %v8422
    %v8475 = vmul.f32 %v8037, %v8424
    %v8476 = vmul.f32 %v8038, %v8463
    %v8477 = vpack.c.bf16 %v8468, %v8468
    %v8478 = vpack.c.bf16 %v8469, %v8469
    %v8479 = vpack.c.bf16 %v8470, %v8470
    %v8480 = vpack.c.bf16 %v8471, %v8471
    %v8481 = vpack.c.bf16 %v8472, %v8472
    %v8482 = vpack.c.bf16 %v8473, %v8473
    %v8483 = vpack.c.bf16 %v8474, %v8474
    %v8484 = vpack.c.bf16 %v8475, %v8475
    %v8485 = vpack.c.bf16 %v8476, %v8476
    %v8486 = vld [vmem:[%s13] sm:$0xff]
    %v8487 = vld [vmem:[%s13 + $0x8] sm:$0xff]
    %v8488 = vld [vmem:[%s13 + $0x10] sm:$0xff]
    %v8489 = vld [vmem:[%s13 + $0x18] sm:$0xff]
    %v8490 = vld [vmem:[%s13 + $0x20] sm:$0xff]
    %v8491 = vld [vmem:[%s13 + $0x28] sm:$0xff]
    %v8492 = vld [vmem:[%s13 + $0x30] sm:$0xff]
    %v8493 = vld [vmem:[%s13 + $0x38] sm:$0xff]
    %v8494 = vld [vmem:[%s13 + $0x40] sm:$0xff]
    %v8495 = vld [vmem:[%s13 + $0x48] sm:$0xff]
    %v8496 = vld [vmem:[%s13 + $0x50] sm:$0xff]
    %v8497 = vld [vmem:[%s13 + $0x58] sm:$0xff]
    %v8498 = vld [vmem:[%s13 + $0x60] sm:$0xff]
    %v8499 = vld [vmem:[%s13 + $0x68] sm:$0xff]
    %v8500 = vld [vmem:[%s13 + $0x70] sm:$0xff]
    %v8501 = vld [vmem:[%s13 + $0x78] sm:$0xff]
    %v8502 = vld [vmem:[%s13 + $0x80] sm:$0xff]
    %v8503 = vld [vmem:[%s13 + $0x88] sm:$0xff]
    %v8504 = vld [vmem:[%s13 + $0x90] sm:$0xff]
    %v8505 = vld [vmem:[%s13 + $0x98] sm:$0xff]
    %v8506 = vld [vmem:[%s13 + $0xa0] sm:$0xff]
    %v8507 = vld [vmem:[%s13 + $0xa8] sm:$0xff]
    %v8508 = vld [vmem:[%s13 + $0xb0] sm:$0xff]
    %v8509 = vld [vmem:[%s13 + $0xb8] sm:$0xff]
    %v8510 = vld [vmem:[%s13 + $0xc0] sm:$0xff]
    %v8511 = vld [vmem:[%s13 + $0xc8] sm:$0xff]
    %v8512 = vld [vmem:[%s13 + $0xd0] sm:$0xff]
    %v8513 = vld [vmem:[%s13 + $0xd8] sm:$0xff]
    %v8514 = vld [vmem:[%s13 + $0xe0] sm:$0xff]
    %v8515 = vld [vmem:[%s13 + $0xe8] sm:$0xff]
    %v8516 = vld [vmem:[%s13 + $0xf0] sm:$0xff]
    %v8517 = vld [vmem:[%s13 + $0xf8] sm:$0xff]
    %v8518 = vld [vmem:[%s13 + $0x100] sm:$0xff]
    %v8519 = vld [vmem:[%s13 + $0x108] sm:$0xff]
    %v8520 = vld [vmem:[%s13 + $0x110] sm:$0xff]
    %v8521 = vld [vmem:[%s13 + $0x118] sm:$0xff]
    %v8522 = vld [vmem:[%s13 + $0x120] sm:$0xff]
    %v8523 = vld [vmem:[%s13 + $0x128] sm:$0xff]
    %v8524 = vld [vmem:[%s13 + $0x130] sm:$0xff]
    %v8525 = vld [vmem:[%s13 + $0x138] sm:$0xff]
    %v8526 = vld [vmem:[%s13 + $0x140] sm:$0xff]
    %v8527 = vld [vmem:[%s13 + $0x148] sm:$0xff]
    %v8528 = vld [vmem:[%s13 + $0x150] sm:$0xff]
    %v8529 = vld [vmem:[%s13 + $0x158] sm:$0xff]
    %v8530 = vld [vmem:[%s13 + $0x160] sm:$0xff]
    %v8531 = vld [vmem:[%s13 + $0x168] sm:$0xff]
    %v8532 = vld [vmem:[%s13 + $0x170] sm:$0xff]
    %v8533 = vld [vmem:[%s13 + $0x178] sm:$0xff]
    %v8534 = vld [vmem:[%s13 + $0x180] sm:$0xff]
    %v8535 = vld [vmem:[%s13 + $0x188] sm:$0xff]
    %v8536 = vld [vmem:[%s13 + $0x190] sm:$0xff]
    %v8537 = vld [vmem:[%s13 + $0x198] sm:$0xff]
    %v8538 = vld [vmem:[%s13 + $0x1a0] sm:$0xff]
    %v8539 = vld [vmem:[%s13 + $0x1a8] sm:$0xff]
    %v8540 = vld [vmem:[%s13 + $0x1b0] sm:$0xff]
    %v8541 = vld [vmem:[%s13 + $0x1b8] sm:$0xff]
    %v8542 = vld [vmem:[%s13 + $0x1c0] sm:$0xff]
    %v8543 = vld [vmem:[%s13 + $0x1c8] sm:$0xff]
    %v8544 = vld [vmem:[%s13 + $0x1d0] sm:$0xff]
    %v8545 = vld [vmem:[%s13 + $0x1d8] sm:$0xff]
    %v8546 = vld [vmem:[%s13 + $0x1e0] sm:$0xff]
    %v8547 = vld [vmem:[%s13 + $0x1e8] sm:$0xff]
    %v8548 = vld [vmem:[%s13 + $0x1f0] sm:$0xff]
    %v8549 = vld [vmem:[%s13 + $0x1f8] sm:$0xff]
    %v8550 = vld [vmem:[%s13 + $0x200] sm:$0xff]
    %v8551 = vld [vmem:[%s13 + $0x208] sm:$0xff]
    %v8552 = vld [vmem:[%s13 + $0x210] sm:$0xff]
    %v8553 = vld [vmem:[%s13 + $0x218] sm:$0xff]
    %v8554 = vld [vmem:[%s13 + $0x220] sm:$0xff]
    %v8555 = vld [vmem:[%s13 + $0x228] sm:$0xff]
    %v8556 = vld [vmem:[%s13 + $0x230] sm:$0xff]
    %v8557 = vld [vmem:[%s13 + $0x238] sm:$0xff]
    %v8558 = vld [vmem:[%s13 + $0x240] sm:$0xff]
    %v8559 = vld [vmem:[%s13 + $0x248] sm:$0xff]
    %v8560 = vld [vmem:[%s13 + $0x250] sm:$0xff]
    %v8561 = vld [vmem:[%s13 + $0x258] sm:$0xff]
    %v8562 = vld [vmem:[%s13 + $0x260] sm:$0xff]
    %v8563 = vld [vmem:[%s13 + $0x268] sm:$0xff]
    %v8564 = vld [vmem:[%s13 + $0x270] sm:$0xff]
    %v8565 = vld [vmem:[%s13 + $0x278] sm:$0xff]
    %v8566 = vld [vmem:[%s13 + $0x280] sm:$0xff]
    %v8567 = vld [vmem:[%s13 + $0x288] sm:$0xff]
    %v8568 = vld [vmem:[%s13 + $0x290] sm:$0xff]
    %v8569 = vld [vmem:[%s13 + $0x298] sm:$0xff]
    %v8570 = vld [vmem:[%s13 + $0x2a0] sm:$0xff]
    %v8571 = vld [vmem:[%s13 + $0x2a8] sm:$0xff]
    %v8572 = vld [vmem:[%s13 + $0x2b0] sm:$0xff]
    %v8573 = vld [vmem:[%s13 + $0x2b8] sm:$0xff]
    %v8574 = vld [vmem:[%s13 + $0x2c0] sm:$0xff]
    %v8575 = vld [vmem:[%s13 + $0x2c8] sm:$0xff]
    %v8576 = vld [vmem:[%s13 + $0x2d0] sm:$0xff]
    %v8577 = vld [vmem:[%s13 + $0x2d8] sm:$0xff]
    %v8578 = vld [vmem:[%s13 + $0x2e0] sm:$0xff]
    %v8579 = vld [vmem:[%s13 + $0x2e8] sm:$0xff]
    %v8580 = vld [vmem:[%s13 + $0x2f0] sm:$0xff]
    %v8581 = vld [vmem:[%s13 + $0x2f8] sm:$0xff]
    %v8582 = vld [vmem:[%s13 + $0x300] sm:$0xff]
    %v8583 = vld [vmem:[%s13 + $0x308] sm:$0xff]
    %v8584 = vld [vmem:[%s13 + $0x310] sm:$0xff]
    %v8585 = vld [vmem:[%s13 + $0x318] sm:$0xff]
    %v8586 = vld [vmem:[%s13 + $0x320] sm:$0xff]
    %v8587 = vld [vmem:[%s13 + $0x328] sm:$0xff]
    %v8588 = vld [vmem:[%s13 + $0x330] sm:$0xff]
    %v8589 = vld [vmem:[%s13 + $0x338] sm:$0xff]
    %v8590 = vld [vmem:[%s13 + $0x340] sm:$0xff]
    %v8591 = vld [vmem:[%s13 + $0x348] sm:$0xff]
    %v8592 = vld [vmem:[%s13 + $0x350] sm:$0xff]
    %v8593 = vld [vmem:[%s13 + $0x358] sm:$0xff]
    %v8594 = vld [vmem:[%s13 + $0x360] sm:$0xff]
    %v8595 = vld [vmem:[%s13 + $0x368] sm:$0xff]
    %v8596 = vld [vmem:[%s13 + $0x370] sm:$0xff]
    %v8597 = vld [vmem:[%s13 + $0x378] sm:$0xff]
    %v8598 = vld [vmem:[%s13 + $0x380] sm:$0xff]
    %v8599 = vld [vmem:[%s13 + $0x388] sm:$0xff]
    %v8600 = vld [vmem:[%s13 + $0x390] sm:$0xff]
    %v8601 = vld [vmem:[%s13 + $0x398] sm:$0xff]
    %v8602 = vld [vmem:[%s13 + $0x3a0] sm:$0xff]
    %v8603 = vld [vmem:[%s13 + $0x3a8] sm:$0xff]
    %v8604 = vld [vmem:[%s13 + $0x3b0] sm:$0xff]
    %v8605 = vld [vmem:[%s13 + $0x3b8] sm:$0xff]
    %v8606 = vld [vmem:[%s13 + $0x3c0] sm:$0xff]
    %v8607 = vld [vmem:[%s13 + $0x3c8] sm:$0xff]
    %v8608 = vld [vmem:[%s13 + $0x3d0] sm:$0xff]
    %v8609 = vld [vmem:[%s13 + $0x3d8] sm:$0xff]
    %v8610 = vld [vmem:[%s13 + $0x3e0] sm:$0xff]
    %v8611 = vld [vmem:[%s13 + $0x3e8] sm:$0xff]
    %v8612 = vld [vmem:[%s13 + $0x3f0] sm:$0xff]
    %v8613 = vld [vmem:[%s13 + $0x3f8] sm:$0xff]
    %v8614 = vld [vmem:[%s13 + $0x400] sm:$0xff]
    %v8615 = vld [vmem:[%s13 + $0x408] sm:$0xff]
    %v8616 = vld [vmem:[%s13 + $0x410] sm:$0xff]
    %v8617 = vld [vmem:[%s13 + $0x418] sm:$0xff]
    %v8618 = vld [vmem:[%s13 + $0x420] sm:$0xff]
    %v8619 = vld [vmem:[%s13 + $0x428] sm:$0xff]
    %v8620 = vld [vmem:[%s13 + $0x430] sm:$0xff]
    %v8621 = vld [vmem:[%s13 + $0x438] sm:$0xff]
    %v8622 = vld [vmem:[%s13 + $0x440] sm:$0xff]
    %v8623 = vld [vmem:[%s13 + $0x448] sm:$0xff]
    %v8624 = vld [vmem:[%s13 + $0x450] sm:$0xff]
    %v8625 = vld [vmem:[%s13 + $0x458] sm:$0xff]
    %v8626 = vld [vmem:[%s13 + $0x460] sm:$0xff]
    %v8627 = vld [vmem:[%s13 + $0x468] sm:$0xff]
    %v8628 = vld [vmem:[%s13 + $0x470] sm:$0xff]
    %v8629 = vld [vmem:[%s13 + $0x478] sm:$0xff]
    %v8630 = vld [vmem:[#allocation19] sm:$0x3]
    %v8632 = vlaneseq
    %v8633 = vshrl.u32 %v8632, 7
    %v8634 = vsub.s32 0, %v8633
    %v8635 = vrot.slane %v8630, %v8634
    %v8636 = vlaneseq
    %v8637 = vshrl.u32 %v8636, 7
    %v8638 = vsub.s32 1, %v8637
    %v8639 = vrot.slane %v8630, %v8638
    %v8786 = vunpack.c.l.b16 %v8486
    %v8787 = vunpack.c.h.b16 %v8486
    %v8788 = vunpack.c.l.b16 %v8487
    %v8789 = vunpack.c.h.b16 %v8487
    %v8790 = vunpack.c.l.b16 %v8488
    %v8791 = vunpack.c.h.b16 %v8488
    %v8792 = vunpack.c.l.b16 %v8489
    %v8793 = vunpack.c.h.b16 %v8489
    %v8794 = vunpack.c.l.b16 %v8490
    %v8795 = vunpack.c.h.b16 %v8490
    %v8796 = vunpack.c.l.b16 %v8491
    %v8797 = vunpack.c.h.b16 %v8491
    %v8798 = vunpack.c.l.b16 %v8492
    %v8799 = vunpack.c.h.b16 %v8492
    %v8800 = vunpack.c.l.b16 %v8493
    %v8801 = vunpack.c.h.b16 %v8493
    %v8802 = vunpack.c.l.b16 %v8494
    %v8803 = vunpack.c.h.b16 %v8494
    %v8804 = vunpack.c.l.b16 %v8495
    %v8805 = vunpack.c.h.b16 %v8495
    %v8806 = vunpack.c.l.b16 %v8496
    %v8807 = vunpack.c.h.b16 %v8496
    %v8808 = vunpack.c.l.b16 %v8497
    %v8809 = vunpack.c.h.b16 %v8497
    %v8810 = vunpack.c.l.b16 %v8498
    %v8811 = vunpack.c.h.b16 %v8498
    %v8812 = vunpack.c.l.b16 %v8499
    %v8813 = vunpack.c.h.b16 %v8499
    %v8814 = vunpack.c.l.b16 %v8500
    %v8815 = vunpack.c.h.b16 %v8500
    %v8816 = vunpack.c.l.b16 %v8501
    %v8817 = vunpack.c.h.b16 %v8501
    %v8818 = vunpack.c.l.b16 %v8502
    %v8819 = vunpack.c.h.b16 %v8502
    %v8820 = vunpack.c.l.b16 %v8503
    %v8821 = vunpack.c.h.b16 %v8503
    %v8822 = vunpack.c.l.b16 %v8504
    %v8823 = vunpack.c.h.b16 %v8504
    %v8824 = vunpack.c.l.b16 %v8505
    %v8825 = vunpack.c.h.b16 %v8505
    %v8826 = vunpack.c.l.b16 %v8506
    %v8827 = vunpack.c.h.b16 %v8506
    %v8828 = vunpack.c.l.b16 %v8507
    %v8829 = vunpack.c.h.b16 %v8507
    %v8830 = vunpack.c.l.b16 %v8508
    %v8831 = vunpack.c.h.b16 %v8508
    %v8832 = vunpack.c.l.b16 %v8509
    %v8833 = vunpack.c.h.b16 %v8509
    %v8834 = vunpack.c.l.b16 %v8510
    %v8835 = vunpack.c.h.b16 %v8510
    %v8836 = vunpack.c.l.b16 %v8511
    %v8837 = vunpack.c.h.b16 %v8511
    %v8838 = vunpack.c.l.b16 %v8512
    %v8839 = vunpack.c.h.b16 %v8512
    %v8840 = vunpack.c.l.b16 %v8513
    %v8841 = vunpack.c.h.b16 %v8513
    %v8842 = vunpack.c.l.b16 %v8514
    %v8843 = vunpack.c.h.b16 %v8514
    %v8844 = vunpack.c.l.b16 %v8515
    %v8845 = vunpack.c.h.b16 %v8515
    %v8846 = vunpack.c.l.b16 %v8516
    %v8847 = vunpack.c.h.b16 %v8516
    %v8848 = vunpack.c.l.b16 %v8517
    %v8849 = vunpack.c.h.b16 %v8517
    %v8850 = vunpack.c.l.b16 %v8518
    %v8851 = vunpack.c.h.b16 %v8518
    %v8852 = vunpack.c.l.b16 %v8519
    %v8853 = vunpack.c.h.b16 %v8519
    %v8854 = vunpack.c.l.b16 %v8520
    %v8855 = vunpack.c.h.b16 %v8520
    %v8856 = vunpack.c.l.b16 %v8521
    %v8857 = vunpack.c.h.b16 %v8521
    %v8858 = vunpack.c.l.b16 %v8522
    %v8859 = vunpack.c.h.b16 %v8522
    %v8860 = vunpack.c.l.b16 %v8523
    %v8861 = vunpack.c.h.b16 %v8523
    %v8862 = vunpack.c.l.b16 %v8524
    %v8863 = vunpack.c.h.b16 %v8524
    %v8864 = vunpack.c.l.b16 %v8525
    %v8865 = vunpack.c.h.b16 %v8525
    %v8866 = vunpack.c.l.b16 %v8526
    %v8867 = vunpack.c.h.b16 %v8526
    %v8868 = vunpack.c.l.b16 %v8527
    %v8869 = vunpack.c.h.b16 %v8527
    %v8870 = vunpack.c.l.b16 %v8528
    %v8871 = vunpack.c.h.b16 %v8528
    %v8872 = vunpack.c.l.b16 %v8529
    %v8873 = vunpack.c.h.b16 %v8529
    %v8874 = vunpack.c.l.b16 %v8530
    %v8875 = vunpack.c.h.b16 %v8530
    %v8876 = vunpack.c.l.b16 %v8531
    %v8877 = vunpack.c.h.b16 %v8531
    %v8878 = vunpack.c.l.b16 %v8532
    %v8879 = vunpack.c.h.b16 %v8532
    %v8880 = vunpack.c.l.b16 %v8533
    %v8881 = vunpack.c.h.b16 %v8533
    %v8882 = vunpack.c.l.b16 %v8534
    %v8883 = vunpack.c.h.b16 %v8534
    %v8884 = vunpack.c.l.b16 %v8535
    %v8885 = vunpack.c.h.b16 %v8535
    %v8886 = vunpack.c.l.b16 %v8536
    %v8887 = vunpack.c.h.b16 %v8536
    %v8888 = vunpack.c.l.b16 %v8537
    %v8889 = vunpack.c.h.b16 %v8537
    %v8890 = vunpack.c.l.b16 %v8538
    %v8891 = vunpack.c.h.b16 %v8538
    %v8892 = vunpack.c.l.b16 %v8539
    %v8893 = vunpack.c.h.b16 %v8539
    %v8894 = vunpack.c.l.b16 %v8540
    %v8895 = vunpack.c.h.b16 %v8540
    %v8896 = vunpack.c.l.b16 %v8541
    %v8897 = vunpack.c.h.b16 %v8541
    %v8898 = vunpack.c.l.b16 %v8542
    %v8899 = vunpack.c.h.b16 %v8542
    %v8900 = vunpack.c.l.b16 %v8543
    %v8901 = vunpack.c.h.b16 %v8543
    %v8902 = vunpack.c.l.b16 %v8544
    %v8903 = vunpack.c.h.b16 %v8544
    %v8904 = vunpack.c.l.b16 %v8545
    %v8905 = vunpack.c.h.b16 %v8545
    %v8906 = vunpack.c.l.b16 %v8546
    %v8907 = vunpack.c.h.b16 %v8546
    %v8908 = vunpack.c.l.b16 %v8547
    %v8909 = vunpack.c.h.b16 %v8547
    %v8910 = vunpack.c.l.b16 %v8548
    %v8911 = vunpack.c.h.b16 %v8548
    %v8912 = vunpack.c.l.b16 %v8549
    %v8913 = vunpack.c.h.b16 %v8549
    %v8914 = vunpack.c.l.b16 %v8550
    %v8915 = vunpack.c.h.b16 %v8550
    %v8916 = vunpack.c.l.b16 %v8551
    %v8917 = vunpack.c.h.b16 %v8551
    %v8918 = vunpack.c.l.b16 %v8552
    %v8919 = vunpack.c.h.b16 %v8552
    %v8920 = vunpack.c.l.b16 %v8553
    %v8921 = vunpack.c.h.b16 %v8553
    %v8922 = vunpack.c.l.b16 %v8554
    %v8923 = vunpack.c.h.b16 %v8554
    %v8924 = vunpack.c.l.b16 %v8555
    %v8925 = vunpack.c.h.b16 %v8555
    %v8926 = vunpack.c.l.b16 %v8556
    %v8927 = vunpack.c.h.b16 %v8556
    %v8928 = vunpack.c.l.b16 %v8557
    %v8929 = vunpack.c.h.b16 %v8557
    %v8930 = vunpack.c.l.b16 %v8558
    %v8931 = vunpack.c.h.b16 %v8558
    %v8932 = vunpack.c.l.b16 %v8559
    %v8933 = vunpack.c.h.b16 %v8559
    %v8934 = vunpack.c.l.b16 %v8560
    %v8935 = vunpack.c.h.b16 %v8560
    %v8936 = vunpack.c.l.b16 %v8561
    %v8937 = vunpack.c.h.b16 %v8561
    %v8938 = vunpack.c.l.b16 %v8562
    %v8939 = vunpack.c.h.b16 %v8562
    %v8940 = vunpack.c.l.b16 %v8563
    %v8941 = vunpack.c.h.b16 %v8563
    %v8942 = vunpack.c.l.b16 %v8564
    %v8943 = vunpack.c.h.b16 %v8564
    %v8944 = vunpack.c.l.b16 %v8565
    %v8945 = vunpack.c.h.b16 %v8565
    %v8946 = vunpack.c.l.b16 %v8566
    %v8947 = vunpack.c.h.b16 %v8566
    %v8948 = vunpack.c.l.b16 %v8567
    %v8949 = vunpack.c.h.b16 %v8567
    %v8950 = vunpack.c.l.b16 %v8568
    %v8951 = vunpack.c.h.b16 %v8568
    %v8952 = vunpack.c.l.b16 %v8569
    %v8953 = vunpack.c.h.b16 %v8569
    %v8954 = vunpack.c.l.b16 %v8570
    %v8955 = vunpack.c.h.b16 %v8570
    %v8956 = vunpack.c.l.b16 %v8571
    %v8957 = vunpack.c.h.b16 %v8571
    %v8958 = vunpack.c.l.b16 %v8572
    %v8959 = vunpack.c.h.b16 %v8572
    %v8960 = vunpack.c.l.b16 %v8573
    %v8961 = vunpack.c.h.b16 %v8573
    %v8962 = vunpack.c.l.b16 %v8574
    %v8963 = vunpack.c.h.b16 %v8574
    %v8964 = vunpack.c.l.b16 %v8575
    %v8965 = vunpack.c.h.b16 %v8575
    %v8966 = vunpack.c.l.b16 %v8576
    %v8967 = vunpack.c.h.b16 %v8576
    %v8968 = vunpack.c.l.b16 %v8577
    %v8969 = vunpack.c.h.b16 %v8577
    %v8970 = vunpack.c.l.b16 %v8578
    %v8971 = vunpack.c.h.b16 %v8578
    %v8972 = vunpack.c.l.b16 %v8579
    %v8973 = vunpack.c.h.b16 %v8579
    %v8974 = vunpack.c.l.b16 %v8580
    %v8975 = vunpack.c.h.b16 %v8580
    %v8976 = vunpack.c.l.b16 %v8581
    %v8977 = vunpack.c.h.b16 %v8581
    %v8978 = vunpack.c.l.b16 %v8582
    %v8979 = vunpack.c.h.b16 %v8582
    %v8980 = vunpack.c.l.b16 %v8583
    %v8981 = vunpack.c.h.b16 %v8583
    %v8982 = vunpack.c.l.b16 %v8584
    %v8983 = vunpack.c.h.b16 %v8584
    %v8984 = vunpack.c.l.b16 %v8585
    %v8985 = vunpack.c.h.b16 %v8585
    %v8986 = vunpack.c.l.b16 %v8586
    %v8987 = vunpack.c.h.b16 %v8586
    %v8988 = vunpack.c.l.b16 %v8587
    %v8989 = vunpack.c.h.b16 %v8587
    %v8990 = vunpack.c.l.b16 %v8588
    %v8991 = vunpack.c.h.b16 %v8588
    %v8992 = vunpack.c.l.b16 %v8589
    %v8993 = vunpack.c.h.b16 %v8589
    %v8994 = vunpack.c.l.b16 %v8590
    %v8995 = vunpack.c.h.b16 %v8590
    %v8996 = vunpack.c.l.b16 %v8591
    %v8997 = vunpack.c.h.b16 %v8591
    %v8998 = vunpack.c.l.b16 %v8592
    %v8999 = vunpack.c.h.b16 %v8592
    %v9000 = vunpack.c.l.b16 %v8593
    %v9001 = vunpack.c.h.b16 %v8593
    %v9002 = vunpack.c.l.b16 %v8594
    %v9003 = vunpack.c.h.b16 %v8594
    %v9004 = vunpack.c.l.b16 %v8595
    %v9005 = vunpack.c.h.b16 %v8595
    %v9006 = vunpack.c.l.b16 %v8596
    %v9007 = vunpack.c.h.b16 %v8596
    %v9008 = vunpack.c.l.b16 %v8597
    %v9009 = vunpack.c.h.b16 %v8597
    %v9010 = vunpack.c.l.b16 %v8598
    %v9011 = vunpack.c.h.b16 %v8598
    %v9012 = vunpack.c.l.b16 %v8599
    %v9013 = vunpack.c.h.b16 %v8599
    %v9014 = vunpack.c.l.b16 %v8600
    %v9015 = vunpack.c.h.b16 %v8600
    %v9016 = vunpack.c.l.b16 %v8601
    %v9017 = vunpack.c.h.b16 %v8601
    %v9018 = vunpack.c.l.b16 %v8602
    %v9019 = vunpack.c.h.b16 %v8602
    %v9020 = vunpack.c.l.b16 %v8603
    %v9021 = vunpack.c.h.b16 %v8603
    %v9022 = vunpack.c.l.b16 %v8604
    %v9023 = vunpack.c.h.b16 %v8604
    %v9024 = vunpack.c.l.b16 %v8605
    %v9025 = vunpack.c.h.b16 %v8605
    %v9026 = vunpack.c.l.b16 %v8606
    %v9027 = vunpack.c.h.b16 %v8606
    %v9028 = vunpack.c.l.b16 %v8607
    %v9029 = vunpack.c.h.b16 %v8607
    %v9030 = vunpack.c.l.b16 %v8608
    %v9031 = vunpack.c.h.b16 %v8608
    %v9032 = vunpack.c.l.b16 %v8609
    %v9033 = vunpack.c.h.b16 %v8609
    %v9034 = vunpack.c.l.b16 %v8610
    %v9035 = vunpack.c.h.b16 %v8610
    %v9036 = vunpack.c.l.b16 %v8611
    %v9037 = vunpack.c.h.b16 %v8611
    %v9038 = vunpack.c.l.b16 %v8612
    %v9039 = vunpack.c.h.b16 %v8612
    %v9040 = vunpack.c.l.b16 %v8613
    %v9041 = vunpack.c.h.b16 %v8613
    %v9042 = vunpack.c.l.b16 %v8614
    %v9043 = vunpack.c.h.b16 %v8614
    %v9044 = vunpack.c.l.b16 %v8615
    %v9045 = vunpack.c.h.b16 %v8615
    %v9046 = vunpack.c.l.b16 %v8616
    %v9047 = vunpack.c.h.b16 %v8616
    %v9048 = vunpack.c.l.b16 %v8617
    %v9049 = vunpack.c.h.b16 %v8617
    %v9050 = vunpack.c.l.b16 %v8618
    %v9051 = vunpack.c.h.b16 %v8618
    %v9052 = vunpack.c.l.b16 %v8619
    %v9053 = vunpack.c.h.b16 %v8619
    %v9054 = vunpack.c.l.b16 %v8620
    %v9055 = vunpack.c.h.b16 %v8620
    %v9056 = vunpack.c.l.b16 %v8621
    %v9057 = vunpack.c.h.b16 %v8621
    %v9058 = vunpack.c.l.b16 %v8622
    %v9059 = vunpack.c.h.b16 %v8622
    %v9060 = vunpack.c.l.b16 %v8623
    %v9061 = vunpack.c.h.b16 %v8623
    %v9062 = vunpack.c.l.b16 %v8624
    %v9063 = vunpack.c.h.b16 %v8624
    %v9064 = vunpack.c.l.b16 %v8625
    %v9065 = vunpack.c.h.b16 %v8625
    %v9066 = vunpack.c.l.b16 %v8626
    %v9067 = vunpack.c.h.b16 %v8626
    %v9068 = vunpack.c.l.b16 %v8627
    %v9069 = vunpack.c.h.b16 %v8627
    %v9070 = vunpack.c.l.b16 %v8628
    %v9071 = vunpack.c.h.b16 %v8628
    %v9072 = vunpack.c.l.b16 %v8629
    %v9073 = vunpack.c.h.b16 %v8629
    %v9074 = vpack.c.b16 %v8788, %v8786
    %v9075 = vpack.c.b16 %v8789, %v8787
    %v9076 = vpack.c.b16 %v8792, %v8790
    %v9077 = vpack.c.b16 %v8793, %v8791
    %v9078 = vpack.c.b16 %v8796, %v8794
    %v9079 = vpack.c.b16 %v8797, %v8795
    %v9080 = vpack.c.b16 %v8800, %v8798
    %v9081 = vpack.c.b16 %v8801, %v8799
    %v9082 = vpack.c.b16 %v8804, %v8802
    %v9083 = vpack.c.b16 %v8805, %v8803
    %v9084 = vpack.c.b16 %v8808, %v8806
    %v9085 = vpack.c.b16 %v8809, %v8807
    %v9086 = vpack.c.b16 %v8812, %v8810
    %v9087 = vpack.c.b16 %v8813, %v8811
    %v9088 = vpack.c.b16 %v8816, %v8814
    %v9089 = vpack.c.b16 %v8817, %v8815
    %v9090 = vpack.c.b16 %v8820, %v8818
    %v9091 = vpack.c.b16 %v8821, %v8819
    %v9092 = vpack.c.b16 %v8824, %v8822
    %v9093 = vpack.c.b16 %v8825, %v8823
    %v9094 = vpack.c.b16 %v8828, %v8826
    %v9095 = vpack.c.b16 %v8829, %v8827
    %v9096 = vpack.c.b16 %v8832, %v8830
    %v9097 = vpack.c.b16 %v8833, %v8831
    %v9098 = vpack.c.b16 %v8836, %v8834
    %v9099 = vpack.c.b16 %v8837, %v8835
    %v9100 = vpack.c.b16 %v8840, %v8838
    %v9101 = vpack.c.b16 %v8841, %v8839
    %v9102 = vpack.c.b16 %v8844, %v8842
    %v9103 = vpack.c.b16 %v8845, %v8843
    %v9104 = vpack.c.b16 %v8848, %v8846
    %v9105 = vpack.c.b16 %v8849, %v8847
    %v9106 = vpack.c.b16 %v8852, %v8850
    %v9107 = vpack.c.b16 %v8853, %v8851
    %v9108 = vpack.c.b16 %v8856, %v8854
    %v9109 = vpack.c.b16 %v8857, %v8855
    %v9110 = vpack.c.b16 %v8860, %v8858
    %v9111 = vpack.c.b16 %v8861, %v8859
    %v9112 = vpack.c.b16 %v8864, %v8862
    %v9113 = vpack.c.b16 %v8865, %v8863
    %v9114 = vpack.c.b16 %v8868, %v8866
    %v9115 = vpack.c.b16 %v8869, %v8867
    %v9116 = vpack.c.b16 %v8872, %v8870
    %v9117 = vpack.c.b16 %v8873, %v8871
    %v9118 = vpack.c.b16 %v8876, %v8874
    %v9119 = vpack.c.b16 %v8877, %v8875
    %v9120 = vpack.c.b16 %v8880, %v8878
    %v9121 = vpack.c.b16 %v8881, %v8879
    %v9122 = vpack.c.b16 %v8884, %v8882
    %v9123 = vpack.c.b16 %v8885, %v8883
    %v9124 = vpack.c.b16 %v8888, %v8886
    %v9125 = vpack.c.b16 %v8889, %v8887
    %v9126 = vpack.c.b16 %v8892, %v8890
    %v9127 = vpack.c.b16 %v8893, %v8891
    %v9128 = vpack.c.b16 %v8896, %v8894
    %v9129 = vpack.c.b16 %v8897, %v8895
    %v9130 = vpack.c.b16 %v8900, %v8898
    %v9131 = vpack.c.b16 %v8901, %v8899
    %v9132 = vpack.c.b16 %v8904, %v8902
    %v9133 = vpack.c.b16 %v8905, %v8903
    %v9134 = vpack.c.b16 %v8908, %v8906
    %v9135 = vpack.c.b16 %v8909, %v8907
    %v9136 = vpack.c.b16 %v8912, %v8910
    %v9137 = vpack.c.b16 %v8913, %v8911
    %v9138 = vpack.c.b16 %v8916, %v8914
    %v9139 = vpack.c.b16 %v8917, %v8915
    %v9140 = vpack.c.b16 %v8920, %v8918
    %v9141 = vpack.c.b16 %v8921, %v8919
    %v9142 = vpack.c.b16 %v8924, %v8922
    %v9143 = vpack.c.b16 %v8925, %v8923
    %v9144 = vpack.c.b16 %v8928, %v8926
    %v9145 = vpack.c.b16 %v8929, %v8927
    %v9146 = vpack.c.b16 %v8932, %v8930
    %v9147 = vpack.c.b16 %v8933, %v8931
    %v9148 = vpack.c.b16 %v8936, %v8934
    %v9149 = vpack.c.b16 %v8937, %v8935
    %v9150 = vpack.c.b16 %v8940, %v8938
    %v9151 = vpack.c.b16 %v8941, %v8939
    %v9152 = vpack.c.b16 %v8944, %v8942
    %v9153 = vpack.c.b16 %v8945, %v8943
    %v9154 = vpack.c.b16 %v8948, %v8946
    %v9155 = vpack.c.b16 %v8949, %v8947
    %v9156 = vpack.c.b16 %v8952, %v8950
    %v9157 = vpack.c.b16 %v8953, %v8951
    %v9158 = vpack.c.b16 %v8956, %v8954
    %v9159 = vpack.c.b16 %v8957, %v8955
    %v9160 = vpack.c.b16 %v8960, %v8958
    %v9161 = vpack.c.b16 %v8961, %v8959
    %v9162 = vpack.c.b16 %v8964, %v8962
    %v9163 = vpack.c.b16 %v8965, %v8963
    %v9164 = vpack.c.b16 %v8968, %v8966
    %v9165 = vpack.c.b16 %v8969, %v8967
    %v9166 = vpack.c.b16 %v8972, %v8970
    %v9167 = vpack.c.b16 %v8973, %v8971
    %v9168 = vpack.c.b16 %v8976, %v8974
    %v9169 = vpack.c.b16 %v8977, %v8975
    %v9170 = vpack.c.b16 %v8980, %v8978
    %v9171 = vpack.c.b16 %v8981, %v8979
    %v9172 = vpack.c.b16 %v8984, %v8982
    %v9173 = vpack.c.b16 %v8985, %v8983
    %v9174 = vpack.c.b16 %v8988, %v8986
    %v9175 = vpack.c.b16 %v8989, %v8987
    %v9176 = vpack.c.b16 %v8992, %v8990
    %v9177 = vpack.c.b16 %v8993, %v8991
    %v9178 = vpack.c.b16 %v8996, %v8994
    %v9179 = vpack.c.b16 %v8997, %v8995
    %v9180 = vpack.c.b16 %v9000, %v8998
    %v9181 = vpack.c.b16 %v9001, %v8999
    %v9182 = vpack.c.b16 %v9004, %v9002
    %v9183 = vpack.c.b16 %v9005, %v9003
    %v9184 = vpack.c.b16 %v9008, %v9006
    %v9185 = vpack.c.b16 %v9009, %v9007
    %v9186 = vpack.c.b16 %v9012, %v9010
    %v9187 = vpack.c.b16 %v9013, %v9011
    %v9188 = vpack.c.b16 %v9016, %v9014
    %v9189 = vpack.c.b16 %v9017, %v9015
    %v9190 = vpack.c.b16 %v9020, %v9018
    %v9191 = vpack.c.b16 %v9021, %v9019
    %v9192 = vpack.c.b16 %v9024, %v9022
    %v9193 = vpack.c.b16 %v9025, %v9023
    %v9194 = vpack.c.b16 %v9028, %v9026
    %v9195 = vpack.c.b16 %v9029, %v9027
    %v9196 = vpack.c.b16 %v9032, %v9030
    %v9197 = vpack.c.b16 %v9033, %v9031
    %v9198 = vpack.c.b16 %v9036, %v9034
    %v9199 = vpack.c.b16 %v9037, %v9035
    %v9200 = vpack.c.b16 %v9040, %v9038
    %v9201 = vpack.c.b16 %v9041, %v9039
    %v9202 = vpack.c.b16 %v9044, %v9042
    %v9203 = vpack.c.b16 %v9045, %v9043
    %v9204 = vpack.c.b16 %v9048, %v9046
    %v9205 = vpack.c.b16 %v9049, %v9047
    %v9206 = vpack.c.b16 %v9052, %v9050
    %v9207 = vpack.c.b16 %v9053, %v9051
    %v9208 = vpack.c.b16 %v9056, %v9054
    %v9209 = vpack.c.b16 %v9057, %v9055
    %v9210 = vpack.c.b16 %v9060, %v9058
    %v9211 = vpack.c.b16 %v9061, %v9059
    %v9212 = vpack.c.b16 %v9064, %v9062
    %v9213 = vpack.c.b16 %v9065, %v9063
    %v9214 = vpack.c.b16 %v9068, %v9066
    %v9215 = vpack.c.b16 %v9069, %v9067
    %v9216 = vpack.c.b16 %v9072, %v9070
    %v9217 = vpack.c.b16 %v9073, %v9071
    %9362 = vmatprep.subr.bf16.mxu0 %v9075
    %9363 = vmatpush1.bf16.msra.mxu0 %v9074
    %9364 = vmatprep.subr.bf16.mxu0 %v9077
    %9365 = vmatpush1.bf16.msra.mxu0 %v9076
    %9366 = vmatprep.subr.bf16.mxu0 %v9079
    %9367 = vmatpush1.bf16.msra.mxu0 %v9078
    %9368 = vmatprep.subr.bf16.mxu0 %v9081
    %9369 = vmatpush1.bf16.msra.mxu0 %v9080
    %9370 = vmatprep.subr.bf16.mxu0 %v9083
    %9371 = vmatpush1.bf16.msra.mxu0 %v9082
    %9372 = vmatprep.subr.bf16.mxu0 %v9085
    %9373 = vmatpush1.bf16.msra.mxu0 %v9084
    %9374 = vmatprep.subr.bf16.mxu0 %v9087
    %9375 = vmatpush1.bf16.msra.mxu0 %v9086
    %9376 = vmatprep.subr.bf16.mxu0 %v9089
    %9377 = vmatpush1.bf16.msra.mxu0 %v9088
    %9378 = vmatprep.subr.bf16.mxu0 %v9091
    %9379 = vmatpush1.bf16.msra.mxu0 %v9090
    %9380 = vmatprep.subr.bf16.mxu0 %v9093
    %9381 = vmatpush1.bf16.msra.mxu0 %v9092
    %9382 = vmatprep.subr.bf16.mxu0 %v9095
    %9383 = vmatpush1.bf16.msra.mxu0 %v9094
    %9384 = vmatprep.subr.bf16.mxu0 %v9097
    %9385 = vmatpush1.bf16.msra.mxu0 %v9096
    %9386 = vmatprep.subr.bf16.mxu0 %v9099
    %9387 = vmatpush1.bf16.msra.mxu0 %v9098
    %9388 = vmatprep.subr.bf16.mxu0 %v9101
    %9389 = vmatpush1.bf16.msra.mxu0 %v9100
    %9390 = vmatprep.subr.bf16.mxu0 %v9103
    %9391 = vmatpush1.bf16.msra.mxu0 %v9102
    %9392 = vmatprep.subr.bf16.mxu0 %v9105
    %9393 = vmatpush1.bf16.msra.mxu0 %v9104
    %9394 = vmatprep.mubr.bf16.mxu0 %v8478
    %9395 = vmatmul.mubr.bf16.gmra.mrb[0].mxu0 %v8477
    %v9396 = vpop.f32.mrb[0].mxu0
    %v9397 = vadd.f32 %v8635, %v9396
    %v9398 = vpop.f32.mrb[0].mxu0
    %v9399 = vadd.f32 %v8639, %v9398
    %v9400 = vpop.f32.mrb[0].mxu0
    %v9401 = vpop.f32.mrb[0].mxu0
    %9402 = vdwg.mxu0
    %9403 = vmatprep.subr.bf16.mxu0 %v9107
    %9404 = vmatpush1.bf16.msra.mxu0 %v9106
    %9405 = vmatprep.subr.bf16.mxu0 %v9109
    %9406 = vmatpush1.bf16.msra.mxu0 %v9108
    %9407 = vmatprep.subr.bf16.mxu0 %v9111
    %9408 = vmatpush1.bf16.msra.mxu0 %v9110
    %9409 = vmatprep.subr.bf16.mxu0 %v9113
    %9410 = vmatpush1.bf16.msra.mxu0 %v9112
    %9411 = vmatprep.subr.bf16.mxu0 %v9115
    %9412 = vmatpush1.bf16.msra.mxu0 %v9114
    %9413 = vmatprep.subr.bf16.mxu0 %v9117
    %9414 = vmatpush1.bf16.msra.mxu0 %v9116
    %9415 = vmatprep.subr.bf16.mxu0 %v9119
    %9416 = vmatpush1.bf16.msra.mxu0 %v9118
    %9417 = vmatprep.subr.bf16.mxu0 %v9121
    %9418 = vmatpush1.bf16.msra.mxu0 %v9120
    %9419 = vmatprep.subr.bf16.mxu0 %v9123
    %9420 = vmatpush1.bf16.msra.mxu0 %v9122
    %9421 = vmatprep.subr.bf16.mxu0 %v9125
    %9422 = vmatpush1.bf16.msra.mxu0 %v9124
    %9423 = vmatprep.subr.bf16.mxu0 %v9127
    %9424 = vmatpush1.bf16.msra.mxu0 %v9126
    %9425 = vmatprep.subr.bf16.mxu0 %v9129
    %9426 = vmatpush1.bf16.msra.mxu0 %v9128
    %9427 = vmatprep.subr.bf16.mxu0 %v9131
    %9428 = vmatpush1.bf16.msra.mxu0 %v9130
    %9429 = vmatprep.subr.bf16.mxu0 %v9133
    %9430 = vmatpush1.bf16.msra.mxu0 %v9132
    %9431 = vmatprep.subr.bf16.mxu0 %v9135
    %9432 = vmatpush1.bf16.msra.mxu0 %v9134
    %9433 = vmatprep.subr.bf16.mxu0 %v9137
    %9434 = vmatpush1.bf16.msra.mxu0 %v9136
    %9435 = vmatprep.mubr.bf16.mxu0 %v8480
    %9436 = vmatmul.mubr.bf16.gmra.mrb[0].mxu0 %v8479
    %v9437 = vpop.f32.mrb[0].mxu0
    %v9438 = vadd.f32 %v9397, %v9437
    %v9439 = vpop.f32.mrb[0].mxu0
    %v9440 = vadd.f32 %v9399, %v9439
    %v9441 = vpop.f32.mrb[0].mxu0
    %v9442 = vpop.f32.mrb[0].mxu0
    %9443 = vdwg.mxu0
    %9444 = vmatprep.subr.bf16.mxu0 %v9139
    %9445 = vmatpush1.bf16.msra.mxu0 %v9138
    %9446 = vmatprep.subr.bf16.mxu0 %v9141
    %9447 = vmatpush1.bf16.msra.mxu0 %v9140
    %9448 = vmatprep.subr.bf16.mxu0 %v9143
    %9449 = vmatpush1.bf16.msra.mxu0 %v9142
    %9450 = vmatprep.subr.bf16.mxu0 %v9145
    %9451 = vmatpush1.bf16.msra.mxu0 %v9144
    %9452 = vmatprep.subr.bf16.mxu0 %v9147
    %9453 = vmatpush1.bf16.msra.mxu0 %v9146
    %9454 = vmatprep.subr.bf16.mxu0 %v9149
    %9455 = vmatpush1.bf16.msra.mxu0 %v9148
    %9456 = vmatprep.subr.bf16.mxu0 %v9151
    %9457 = vmatpush1.bf16.msra.mxu0 %v9150
    %9458 = vmatprep.subr.bf16.mxu0 %v9153
    %9459 = vmatpush1.bf16.msra.mxu0 %v9152
    %9460 = vmatprep.subr.bf16.mxu0 %v9155
    %9461 = vmatpush1.bf16.msra.mxu0 %v9154
    %9462 = vmatprep.subr.bf16.mxu0 %v9157
    %9463 = vmatpush1.bf16.msra.mxu0 %v9156
    %9464 = vmatprep.subr.bf16.mxu0 %v9159
    %9465 = vmatpush1.bf16.msra.mxu0 %v9158
    %9466 = vmatprep.subr.bf16.mxu0 %v9161
    %9467 = vmatpush1.bf16.msra.mxu0 %v9160
    %9468 = vmatprep.subr.bf16.mxu0 %v9163
    %9469 = vmatpush1.bf16.msra.mxu0 %v9162
    %9470 = vmatprep.subr.bf16.mxu0 %v9165
    %9471 = vmatpush1.bf16.msra.mxu0 %v9164
    %9472 = vmatprep.subr.bf16.mxu0 %v9167
    %9473 = vmatpush1.bf16.msra.mxu0 %v9166
    %9474 = vmatprep.subr.bf16.mxu0 %v9169
    %9475 = vmatpush1.bf16.msra.mxu0 %v9168
    %9476 = vmatprep.mubr.bf16.mxu0 %v8482
    %9477 = vmatmul.mubr.bf16.gmra.mrb[0].mxu0 %v8481
    %v9478 = vpop.f32.mrb[0].mxu0
    %v9479 = vadd.f32 %v9438, %v9478
    %v9480 = vpop.f32.mrb[0].mxu0
    %v9481 = vadd.f32 %v9440, %v9480
    %v9482 = vpop.f32.mrb[0].mxu0
    %v9483 = vpop.f32.mrb[0].mxu0
    %9484 = vdwg.mxu0
    %9485 = vmatprep.subr.bf16.mxu0 %v9171
    %9486 = vmatpush1.bf16.msra.mxu0 %v9170
    %9487 = vmatprep.subr.bf16.mxu0 %v9173
    %9488 = vmatpush1.bf16.msra.mxu0 %v9172
    %9489 = vmatprep.subr.bf16.mxu0 %v9175
    %9490 = vmatpush1.bf16.msra.mxu0 %v9174
    %9491 = vmatprep.subr.bf16.mxu0 %v9177
    %9492 = vmatpush1.bf16.msra.mxu0 %v9176
    %9493 = vmatprep.subr.bf16.mxu0 %v9179
    %9494 = vmatpush1.bf16.msra.mxu0 %v9178
    %9495 = vmatprep.subr.bf16.mxu0 %v9181
    %9496 = vmatpush1.bf16.msra.mxu0 %v9180
    %9497 = vmatprep.subr.bf16.mxu0 %v9183
    %9498 = vmatpush1.bf16.msra.mxu0 %v9182
    %9499 = vmatprep.subr.bf16.mxu0 %v9185
    %9500 = vmatpush1.bf16.msra.mxu0 %v9184
    %9501 = vmatprep.subr.bf16.mxu0 %v9187
    %9502 = vmatpush1.bf16.msra.mxu0 %v9186
    %9503 = vmatprep.subr.bf16.mxu0 %v9189
    %9504 = vmatpush1.bf16.msra.mxu0 %v9188
    %9505 = vmatprep.subr.bf16.mxu0 %v9191
    %9506 = vmatpush1.bf16.msra.mxu0 %v9190
    %9507 = vmatprep.subr.bf16.mxu0 %v9193
    %9508 = vmatpush1.bf16.msra.mxu0 %v9192
    %9509 = vmatprep.subr.bf16.mxu0 %v9195
    %9510 = vmatpush1.bf16.msra.mxu0 %v9194
    %9511 = vmatprep.subr.bf16.mxu0 %v9197
    %9512 = vmatpush1.bf16.msra.mxu0 %v9196
    %9513 = vmatprep.subr.bf16.mxu0 %v9199
    %9514 = vmatpush1.bf16.msra.mxu0 %v9198
    %9515 = vmatprep.subr.bf16.mxu0 %v9201
    %9516 = vmatpush1.bf16.msra.mxu0 %v9200
    %9517 = vmatprep.mubr.bf16.mxu0 %v8484
    %9518 = vmatmul.mubr.bf16.gmra.mrb[0].mxu0 %v8483
    %v9519 = vpop.f32.mrb[0].mxu0
    %v9520 = vadd.f32 %v9479, %v9519
    %v9521 = vpop.f32.mrb[0].mxu0
    %v9522 = vadd.f32 %v9481, %v9521
    %v9523 = vpop.f32.mrb[0].mxu0
    %v9524 = vpop.f32.mrb[0].mxu0
    %9525 = vdwg.mxu0
    %9526 = vmatprep.subr.bf16.mxu0 %v9203
    %9527 = vmatpush1.bf16.msra.mxu0 %v9202
    %9528 = vmatprep.subr.bf16.mxu0 %v9205
    %9529 = vmatpush1.bf16.msra.mxu0 %v9204
    %9530 = vmatprep.subr.bf16.mxu0 %v9207
    %9531 = vmatpush1.bf16.msra.mxu0 %v9206
    %9532 = vmatprep.subr.bf16.mxu0 %v9209
    %9533 = vmatpush1.bf16.msra.mxu0 %v9208
    %9534 = vmatprep.subr.bf16.mxu0 %v9211
    %9535 = vmatpush1.bf16.msra.mxu0 %v9210
    %9536 = vmatprep.subr.bf16.mxu0 %v9213
    %9537 = vmatpush1.bf16.msra.mxu0 %v9212
    %9538 = vmatprep.subr.bf16.mxu0 %v9215
    %9539 = vmatpush1.bf16.msra.mxu0 %v9214
    %9540 = vmatprep.subr.bf16.mxu0 %v9217
    %9541 = vmatpush1.bf16.msra.mxu0 %v9216
    %9542 = vmatprep.subr.bf16.mxu0 0
    %9543 = vmatpush1.bf16.msra.mxu0 0
    %9544 = vmatprep.subr.bf16.mxu0 0
    %9545 = vmatpush1.bf16.msra.mxu0 0
    %9546 = vmatprep.subr.bf16.mxu0 0
    %9547 = vmatpush1.bf16.msra.mxu0 0
    %9548 = vmatprep.subr.bf16.mxu0 0
    %9549 = vmatpush1.bf16.msra.mxu0 0
    %9550 = vmatprep.subr.bf16.mxu0 0
    %9551 = vmatpush1.bf16.msra.mxu0 0
    %9552 = vmatprep.subr.bf16.mxu0 0
    %9553 = vmatpush1.bf16.msra.mxu0 0
    %9554 = vmatprep.subr.bf16.mxu0 0
    %9555 = vmatpush1.bf16.msra.mxu0 0
    %9556 = vmatprep.subr.bf16.mxu0 0
    %9557 = vmatpush1.bf16.msra.mxu0 0
    %9558 = vmatprep.mubr.bf16.mxu0 0
    %9559 = vmatmul.mubr.bf16.gmra.mrb[0].mxu0 %v8485
    %v9560 = vpop.f32.mrb[0].mxu0
    %v9561 = vadd.f32 %v9520, %v9560
    %v9562 = vpop.f32.mrb[0].mxu0
    %v9563 = vadd.f32 %v9522, %v9562
    %v9564 = vpop.f32.mrb[0].mxu0
    %v9565 = vpop.f32.mrb[0].mxu0
    %9566 = vdwg.mxu0
    %v9567 = vmul.f32 %v9561, 0.5
    %v9568 = vmul.f32 %v9563, 0.5
    %v9569 = vtanh.pop %v9567
    %v9570 = vtanh.pop %v9568
    %v9571 = vadd.f32 %v9569, 1.0
    %v9572 = vadd.f32 %v9570, 1.0
    %v9573 = vmul.f32 %v9571, 0.5
    %v9574 = vmul.f32 %v9572, 0.5
    %9575 = vst [vmem:[#allocation20] sm:$0xff] %v9573
    %vm9576 = vcmask 130048
    %9577 = vst.msk [vmem:[#allocation20 + $0x8] sm:$0xff] %vm9576, %v9574
    // Predicated region
    $region106: #{tpu_custom_call.1} parent=1 // pred_check
      _
    $region107: #{tpu_custom_call.1} parent=1 // pred_check_branch
      %9579 = sbr.rel (0) target = $region109
    $region108: #{tpu_custom_call.1} parent=1 // pred_region
      %s9581 = ssub.s32 256, 256
      %9582 = vsyncadd [#allocation4], %s9581
      %s9584 = sshll.u32 [#allocation20], 4
      %s9585 = int_to_ptr.vmem [resolvable:$true] %s9584
      %9587 = dma.vmem_to_hbm [thread:$0]  %s9585, 256, %s15, [#allocation4]
    $region109: #{tpu_custom_call.1} parent=1 // pred_fallthru
      _
    // Predicated region
    $region110: #{tpu_custom_call.1} parent=1 // pred_check
      _
    $region111: #{tpu_custom_call.1} parent=1 // pred_check_branch
      %9589 = sbr.rel (0) target = $region113
    $region112: #{tpu_custom_call.1} parent=1 // pred_region
      %9590 = dma.done [#allocation4], 256
    $region113: #{tpu_custom_call.1} parent=1 // pred_fallthru
      _
    %9591 = vsyncpa [#allocation3], 1
    %9592 = vsyncpa [#allocation6], 1
    %9593 = vsyncpa [#allocation9], 1
    %9594 = vsyncpa [#allocation12], 1
    %9595 = vsyncpa [#allocation15], 1
    %9596 = vsyncpa [#allocation18], 1
    %9597 = vsyncpa [#allocation4], 1

</llo_original>
